<compile_context>
chip_gen: v7x
topology: tpu7x:2x2x1
jax: 0.10.0
libtpu: 0.0.40
codegen_flags: <defaults>
</compile_context>

<pallas_src>
import functools

import numpy as np
import jax
import jax.numpy as jnp
from jax.experimental import pallas as pl
from jax.experimental.pallas import tpu as pltpu

BN_EPS = 1e-5
CP = 128  # channel padding -> full lane width, lane-dense loads/stores & MXU tiles


# ----------------------------- Pallas kernels ------------------------------

def _conv3x3_taps(window, w_ref, m):
    """3x3 conv as 9 shifted-window matmuls.  window(dh,dw) -> [1,Ho,Wo,CP] f32."""
    acc = jnp.zeros((m, CP), jnp.float32)
    for dh in range(3):
        for dw in range(3):
            lhs = window(dh, dw).reshape(m, CP).astype(jnp.bfloat16)
            acc = acc + jnp.dot(lhs, w_ref[dh * 3 + dw],
                                preferred_element_type=jnp.float32)
    return acc


def _preact_block_kernel(x_ref, w1_ref, w2_ref,
                         s1_ref, b1_ref, s2_ref, b2_ref,
                         o_ref, pad1, pad2, *, Ho, Wo):
    """Fused pre-act block, stride 1 (identity skip).  One image per grid step."""
    M = Ho * Wo
    # zero-padded scratch borders supply the conv zero padding
    pad1[...] = jnp.zeros(pad1.shape, pad1.dtype)
    pad2[...] = jnp.zeros(pad2.shape, pad2.dtype)

    x2 = x_ref[...].reshape(M, CP)                       # [M, CP] f32
    h1 = jnp.maximum(x2 * s1_ref[...] + b1_ref[...], 0.0)   # BN1 -> ReLU
    pad1[:, 1:Ho + 1, 1:Wo + 1, :] = h1.reshape(1, Ho, Wo, CP)

    z1 = _conv3x3_taps(lambda dh, dw: pad1[:, dh:dh + Ho, dw:dw + Wo, :],
                       w1_ref, M)
    h2 = jnp.maximum(z1 * s2_ref[...] + b2_ref[...], 0.0)   # BN2 -> ReLU
    pad2[:, 1:Ho + 1, 1:Wo + 1, :] = h2.reshape(1, Ho, Wo, CP)

    z2 = _conv3x3_taps(lambda dh, dw: pad2[:, dh:dh + Ho, dw:dw + Wo, :],
                       w2_ref, M)

    # identity residual (raw input), no activation after the add
    o_ref[...] = (z2 + x2).reshape(1, Ho, Wo, CP)


def _preact_block_subsample_kernel(xee_ref, xeo_ref, xoe_ref, xoo_ref,
                                   w1_ref, w2_ref, wd_ref,
                                   s1_ref, b1_ref, s2_ref, b2_ref, sd_ref, bd_ref,
                                   o_ref,
                                   p00, p01, p10, p11, pad2, *, Ho, Wo):
    """Fused pre-act block with stride-2 conv1 and 1x1/stride-2 downsample skip.

    The stride-2 3x3 conv over zero-padded h1 is rewritten with 4 spatial-parity
    planes:  plane[rho*2+gamma][e, f] == zeropad(relu(bn1(x)))[2e+rho, 2f+gamma],
    so that every tap (dh, dw) is a unit-stride [Ho, Wo] window of
    plane[(dh%2)*2 + dw%2] at offset (dh//2, dw//2).
    """
    M = Ho * Wo
    planes = [p00, p01, p10, p11]
    for pr in planes:
        pr[...] = jnp.zeros(pr.shape, pr.dtype)
    pad2[...] = jnp.zeros(pad2.shape, pad2.dtype)

    # x parity slices (computed in the wrapper, no byte expansion):
    #   xee = x[:,0::2,0::2], xeo = x[:,0::2,1::2], xoe = x[:,1::2,0::2], xoo = x[:,1::2,1::2]
    parity_src = {(0, 0): xoo_ref, (0, 1): xoe_ref,
                  (1, 0): xeo_ref, (1, 1): xee_ref}
    for rho in range(2):
        for gamma in range(2):
            v = parity_src[(rho, gamma)][...].reshape(M, CP)
            h = jnp.maximum(v * s1_ref[...] + b1_ref[...], 0.0)   # BN1 -> ReLU
            r0, c0 = 1 - rho, 1 - gamma
            planes[rho * 2 + gamma][:, r0:r0 + Ho, c0:c0 + Wo, :] = (
                h.reshape(1, Ho, Wo, CP))

    def win1(dh, dw):
        return planes[(dh % 2) * 2 + (dw % 2)][:, dh // 2:dh // 2 + Ho,
                                               dw // 2:dw // 2 + Wo, :]

    z1 = _conv3x3_taps(win1, w1_ref, M)
    h2 = jnp.maximum(z1 * s2_ref[...] + b2_ref[...], 0.0)        # BN2 -> ReLU
    pad2[:, 1:Ho + 1, 1:Wo + 1, :] = h2.reshape(1, Ho, Wo, CP)

    z2 = _conv3x3_taps(lambda dh, dw: pad2[:, dh:dh + Ho, dw:dw + Wo, :],
                       w2_ref, M)

    # downsample skip: BNd -> ReLU -> 1x1 stride-2 conv; the stride-2 selection
    # is exactly the even/even parity slice of x.
    hd = jnp.maximum(xee_ref[...].reshape(M, CP) * sd_ref[...] + bd_ref[...], 0.0)
    res = jnp.dot(hd.astype(jnp.bfloat16), wd_ref[...],
                  preferred_element_type=jnp.float32)

    o_ref[...] = (z2 + res).reshape(1, Ho, Wo, CP)


# --------------------------- trace-time glue --------------------------------

def _bn_fold(bn):
    """(gamma, beta, mean, var) -> per-channel (scale, bias), padded to CP lanes."""
    gamma, beta, mean, var = bn
    s = gamma / jnp.sqrt(var + BN_EPS)
    b = beta - mean * s
    c = s.shape[0]
    s = jnp.pad(s, (0, CP - c), constant_values=1.0)   # padded lanes: relu(0*1+0)=0
    b = jnp.pad(b, (0, CP - c))
    return s.reshape(1, CP), b.reshape(1, CP)


def _conv_w_taps(w):
    """PyTorch conv weight [co, ci, 3, 3] -> per-tap [9, CP, CP] bf16 (zero padded)."""
    co, ci, kh, kw = w.shape
    wt = jnp.transpose(w, (2, 3, 1, 0)).reshape(kh * kw, ci, co)
    wt = jnp.pad(wt, ((0, 0), (0, CP - ci), (0, CP - co)))
    return wt.astype(jnp.bfloat16)


def _conv1x1_w(w):
    """PyTorch conv weight [co, ci, 1, 1] -> [CP, CP] bf16 (zero padded)."""
    co, ci = w.shape[0], w.shape[1]
    wm = jnp.transpose(w[:, :, 0, 0], (1, 0))
    return jnp.pad(wm, ((0, CP - ci), (0, CP - co))).astype(jnp.bfloat16)


def preact_block_forward(x_nchw, params, *, subsample):
    """PreActResNetBlock forward.  x: NCHW (PyTorch layout), returns NCHW."""
    x = jnp.transpose(x_nchw, (0, 2, 3, 1)).astype(jnp.float32)   # NCHW -> NHWC
    B, H, W, c_in = x.shape
    c_out = params["w1"].shape[0]
    assert c_in <= CP and c_out <= CP
    Ho, Wo = (H // 2, W // 2) if subsample else (H, W)

    s1, b1 = _bn_fold(params["bn1"])
    s2, b2 = _bn_fold(params["bn2"])
    w1 = _conv_w_taps(params["w1"])
    w2 = _conv_w_taps(params["w2"])

    # lane-pad channels to 128 so every in-kernel op is on full (8,128) tiles
    xp = jnp.pad(x, ((0, 0), (0, 0), (0, 0), (0, CP - c_in)))

    def full_spec(shape):
        return pl.BlockSpec(shape, lambda i: (0,) * len(shape))

    def per_img(shape):
        return pl.BlockSpec(shape, lambda i: (i,) + (0,) * (len(shape) - 1))

    if not subsample:
        kernel = functools.partial(_preact_block_kernel, Ho=Ho, Wo=Wo)
        args = [xp, w1, w2, s1, b1, s2, b2]
        in_specs = ([per_img((1, H, W, CP)),
                     full_spec((9, CP, CP)), full_spec((9, CP, CP))] +
                    [full_spec((1, CP))] * 4)
        scratch = [pltpu.VMEM((1, Ho + 2, Wo + 2, CP), jnp.float32),
                   pltpu.VMEM((1, Ho + 2, Wo + 2, CP), jnp.float32)]
    else:
        assert H % 2 == 0 and W % 2 == 0
        sd, bd = _bn_fold(params["bnd"])
        wd = _conv1x1_w(params["wd"])
        xee = xp[:, 0::2, 0::2, :]
        xeo = xp[:, 0::2, 1::2, :]
        xoe = xp[:, 1::2, 0::2, :]
        xoo = xp[:, 1::2, 1::2, :]
        kernel = functools.partial(_preact_block_subsample_kernel, Ho=Ho, Wo=Wo)
        args = [xee, xeo, xoe, xoo, w1, w2, wd, s1, b1, s2, b2, sd, bd]
        in_specs = ([per_img((1, Ho, Wo, CP))] * 4 +
                    [full_spec((9, CP, CP)), full_spec((9, CP, CP)),
                     full_spec((CP, CP))] +
                    [full_spec((1, CP))] * 6)
        scratch = ([pltpu.VMEM((1, Ho + 1, Wo + 1, CP), jnp.float32)
                    for _ in range(4)] +
                   [pltpu.VMEM((1, Ho + 2, Wo + 2, CP), jnp.float32)])

    out = pl.pallas_call(
        kernel,
        grid=(B,),
        in_specs=in_specs,
        out_specs=per_img((1, Ho, Wo, CP)),
        out_shape=jax.ShapeDtypeStruct((B, Ho, Wo, CP), jnp.float32),
        scratch_shapes=scratch,
        compiler_params=pltpu.CompilerParams(
            dimension_semantics=("parallel",),          # megacore on v7x
            vmem_limit_bytes=32 * 1024 * 1024),
    )(*args)

    out = out[..., :c_out]                               # drop lane padding
    return jnp.transpose(out, (0, 3, 1, 2))              # NHWC -> NCHW


# --------------------------- parameters & reference --------------------------

def make_block_params(key, c_in, c_out, subsample):
    ks = jax.random.split(key, 8)

    def bn_params(k, c):
        k1, k2, k3, k4 = jax.random.split(k, 4)
        gamma = 1.0 + 0.2 * jax.random.normal(k1, (c,), jnp.float32)
        beta = 0.1 * jax.random.normal(k2, (c,), jnp.float32)
        mean = 0.1 * jax.random.normal(k3, (c,), jnp.float32)
        var = jax.random.uniform(k4, (c,), jnp.float32, 0.5, 1.5)
        return (gamma, beta, mean, var)

    def conv_w(k, co, ci, ksz):
        fan_in = ci * ksz * ksz
        return jax.random.normal(k, (co, ci, ksz, ksz), jnp.float32) * np.sqrt(2.0 / fan_in)

    p = {
        "bn1": bn_params(ks[0], c_in),
        "w1": conv_w(ks[1], c_out, c_in, 3),
        "bn2": bn_params(ks[2], c_out),
        "w2": conv_w(ks[3], c_out, c_out, 3),
    }
    if subsample:
        p["bnd"] = bn_params(ks[4], c_in)
        p["wd"] = conv_w(ks[5], c_out, c_in, 1)
    return p


def ref_block_forward(x_nchw, p, *, subsample):
    """Pure-JAX f32 reference of PreActResNetBlock.forward (eval-mode BN, ReLU)."""
    def bn(t, prm):
        g, b, m, v = (a.reshape(1, -1, 1, 1) for a in prm)
        return (t - m) / jnp.sqrt(v + BN_EPS) * g + b

    def conv(t, w, stride, pad):
        return jax.lax.conv_general_dilated(
            t, w, (stride, stride), [(pad, pad), (pad, pad)],
            dimension_numbers=("NCHW", "OIHW", "NCHW"),
            precision=jax.lax.Precision.HIGHEST)

    x = x_nchw.astype(jnp.float32)
    s = 2 if subsample else 1
    z = conv(jax.nn.relu(bn(x, p["bn1"])), p["w1"], s, 1)
    z = conv(jax.nn.relu(bn(z, p["bn2"])), p["w2"], 1, 1)
    r = conv(jax.nn.relu(bn(x, p["bnd"])), p["wd"], 2, 0) if subsample else x
    return z + r


# --------------------------------- main --------------------------------------

if __name__ == "__main__":
    root = jax.random.PRNGKey(0)
    kx, kp1, kp2 = jax.random.split(root, 3)

    B, C_IN, H, W = 2, 16, 16, 16
    x = jax.random.normal(kx, (B, C_IN, H, W), jnp.float32)   # NCHW, like PyTorch

    # Block 1: identity skip (subsample=False -> c_out == c_in)
    p1 = make_block_params(kp1, C_IN, C_IN, subsample=False)
    fwd1 = jax.jit(functools.partial(preact_block_forward, subsample=False))
    y1 = jax.block_until_ready(fwd1(x, p1))
    assert y1.shape == (B, C_IN, H, W)
    np.testing.assert_allclose(np.asarray(y1),
                               np.asarray(ref_block_forward(x, p1, subsample=False)),
                               rtol=2e-2, atol=2e-2)

    # Block 2: strided block with 1x1 downsample skip (16 -> 32 channels, /2 spatial)
    C_OUT2 = 32
    p2 = make_block_params(kp2, C_IN, C_OUT2, subsample=True)
    fwd2 = jax.jit(functools.partial(preact_block_forward, subsample=True))
    y2 = jax.block_until_ready(fwd2(x, p2))
    assert y2.shape == (B, C_OUT2, H // 2, W // 2)
    np.testing.assert_allclose(np.asarray(y2),
                               np.asarray(ref_block_forward(x, p2, subsample=True)),
                               rtol=2e-2, atol=2e-2)

    print("KERNEL_OK")
</pallas_src>

<mosaic_0001>
module attributes {stable_mosaic.version = 11 : i64} {
  func.func @_preact_block_kernel(%arg0: i32, %arg1: memref<1x16x16x128xf32, #tpu.memory_space<vmem>>, %arg2: memref<9x128x128xbf16, #tpu.memory_space<vmem>>, %arg3: memref<9x128x128xbf16, #tpu.memory_space<vmem>>, %arg4: memref<1x128xf32, #tpu.memory_space<vmem>>, %arg5: memref<1x128xf32, #tpu.memory_space<vmem>>, %arg6: memref<1x128xf32, #tpu.memory_space<vmem>>, %arg7: memref<1x128xf32, #tpu.memory_space<vmem>>, %arg8: memref<1x16x16x128xf32, #tpu.memory_space<vmem>>, %arg9: memref<1x18x18x128xf32, #tpu.memory_space<vmem>>, %arg10: memref<1x18x18x128xf32, #tpu.memory_space<vmem>>) attributes {dimension_semantics = [#tpu.dimension_semantics<parallel>], iteration_bounds = array<i64: 2>, scalar_prefetch = 0 : i64, scratch_operands = 2 : i64, tpu.core_type = #tpu.core_type<tc>, window_params = [{transform_indices = @transform_0, window_bounds = array<i64: 1, 16, 16, 128>}, {pipeline_mode = #tpu.pipeline_mode<synchronous>, transform_indices = @transform_1, window_bounds = array<i64: 9, 128, 128>}, {pipeline_mode = #tpu.pipeline_mode<synchronous>, transform_indices = @transform_2, window_bounds = array<i64: 9, 128, 128>}, {pipeline_mode = #tpu.pipeline_mode<synchronous>, transform_indices = @transform_3, window_bounds = array<i64: 1, 128>}, {pipeline_mode = #tpu.pipeline_mode<synchronous>, transform_indices = @transform_4, window_bounds = array<i64: 1, 128>}, {pipeline_mode = #tpu.pipeline_mode<synchronous>, transform_indices = @transform_5, window_bounds = array<i64: 1, 128>}, {pipeline_mode = #tpu.pipeline_mode<synchronous>, transform_indices = @transform_6, window_bounds = array<i64: 1, 128>}, {transform_indices = @transform_7, window_bounds = array<i64: 1, 16, 16, 128>}]} {
    %cst = arith.constant 0.000000e+00 : f32
    %0 = vector.broadcast %cst : f32 to vector<1x18x18x128xf32>
    %c0 = arith.constant 0 : index
    %c0_0 = arith.constant 0 : index
    %c0_1 = arith.constant 0 : index
    %c0_2 = arith.constant 0 : index
    %1 = vector.load %arg9[%c0, %c0_0, %c0_1, %c0_2] : memref<1x18x18x128xf32, #tpu.memory_space<vmem>>, vector<1x18x18x128xf32>
    tpu.vector_store %arg9[%c0, %c0_0, %c0_1, %c0_2], %0 {strides = array<i32>} : memref<1x18x18x128xf32, #tpu.memory_space<vmem>>, vector<1x18x18x128xf32>,
    %cst_3 = arith.constant 0.000000e+00 : f32
    %2 = vector.broadcast %cst_3 : f32 to vector<1x18x18x128xf32>
    %c0_4 = arith.constant 0 : index
    %c0_5 = arith.constant 0 : index
    %c0_6 = arith.constant 0 : index
    %c0_7 = arith.constant 0 : index
    %3 = vector.load %arg10[%c0_4, %c0_5, %c0_6, %c0_7] : memref<1x18x18x128xf32, #tpu.memory_space<vmem>>, vector<1x18x18x128xf32>
    tpu.vector_store %arg10[%c0_4, %c0_5, %c0_6, %c0_7], %2 {strides = array<i32>} : memref<1x18x18x128xf32, #tpu.memory_space<vmem>>, vector<1x18x18x128xf32>,
    %c0_8 = arith.constant 0 : index
    %c0_9 = arith.constant 0 : index
    %c0_10 = arith.constant 0 : index
    %c0_11 = arith.constant 0 : index
    %4 = vector.load %arg1[%c0_8, %c0_9, %c0_10, %c0_11] : memref<1x16x16x128xf32, #tpu.memory_space<vmem>>, vector<1x16x16x128xf32>
    %5 = vector.shape_cast %4 : vector<1x16x16x128xf32> to vector<256x128xf32>
    %c0_12 = arith.constant 0 : index
    %c0_13 = arith.constant 0 : index
    %6 = vector.load %arg4[%c0_12, %c0_13] : memref<1x128xf32, #tpu.memory_space<vmem>>, vector<1x128xf32>
    %7 = vector.broadcast %6 : vector<1x128xf32> to vector<256x128xf32>
    %8 = arith.mulf %5, %7 : vector<256x128xf32>
    %c0_14 = arith.constant 0 : index
    %c0_15 = arith.constant 0 : index
    %9 = vector.load %arg5[%c0_14, %c0_15] : memref<1x128xf32, #tpu.memory_space<vmem>>, vector<1x128xf32>
    %10 = vector.broadcast %9 : vector<1x128xf32> to vector<256x128xf32>
    %11 = arith.addf %8, %10 : vector<256x128xf32>
    %cst_16 = arith.constant 0.000000e+00 : f32
    %12 = vector.broadcast %cst_16 : f32 to vector<256x128xf32>
    %13 = arith.maximumf %11, %12 : vector<256x128xf32>
    %14 = vector.shape_cast %13 : vector<256x128xf32> to vector<1x16x16x128xf32>
    %c0_17 = arith.constant 0 : index
    %c1 = arith.constant 1 : index
    %c1_18 = arith.constant 1 : index
    %c0_19 = arith.constant 0 : index
    %15 = vector.load %arg9[%c0_17, %c1, %c1_18, %c0_19] : memref<1x18x18x128xf32, #tpu.memory_space<vmem>>, vector<1x16x16x128xf32>
    tpu.vector_store %arg9[%c0_17, %c1, %c1_18, %c0_19], %14 {strides = array<i32>} : memref<1x18x18x128xf32, #tpu.memory_space<vmem>>, vector<1x16x16x128xf32>,
    %cst_20 = arith.constant 0.000000e+00 : f32
    %16 = vector.broadcast %cst_20 : f32 to vector<256x128xf32>
    %c0_21 = arith.constant 0 : index
    %c0_22 = arith.constant 0 : index
    %c0_23 = arith.constant 0 : index
    %c0_24 = arith.constant 0 : index
    %17 = vector.load %arg9[%c0_21, %c0_22, %c0_23, %c0_24] : memref<1x18x18x128xf32, #tpu.memory_space<vmem>>, vector<1x16x16x128xf32>
    %18 = vector.shape_cast %17 : vector<1x16x16x128xf32> to vector<256x128xf32>
    %19 = arith.truncf %18 : vector<256x128xf32> to vector<256x128xbf16>
    %c0_25 = arith.constant 0 : index
    %c0_26 = arith.constant 0 : index
    %c0_27 = arith.constant 0 : index
    %20 = vector.load %arg2[%c0_25, %c0_26, %c0_27] : memref<9x128x128xbf16, #tpu.memory_space<vmem>>, vector<1x128x128xbf16>
    %21 = vector.shape_cast %20 : vector<1x128x128xbf16> to vector<128x128xbf16>
    %cst_28 = arith.constant dense<0.000000e+00> : vector<256x128xf32>
    %22 = tpu.matmul %19, %21, %cst_28 {dimension_numbers = #tpu.dot_dimension_numbers<[1], [0], [0], [1], [0, 0, 1, 1], [], []>} : vector<256x128xbf16>, vector<128x128xbf16>, vector<256x128xf32> -> vector<256x128xf32>
    %23 = arith.addf %16, %22 : vector<256x128xf32>
    %c0_29 = arith.constant 0 : index
    %c0_30 = arith.constant 0 : index
    %c1_31 = arith.constant 1 : index
    %c0_32 = arith.constant 0 : index
    %24 = vector.load %arg9[%c0_29, %c0_30, %c1_31, %c0_32] : memref<1x18x18x128xf32, #tpu.memory_space<vmem>>, vector<1x16x16x128xf32>
    %25 = vector.shape_cast %24 : vector<1x16x16x128xf32> to vector<256x128xf32>
    %26 = arith.truncf %25 : vector<256x128xf32> to vector<256x128xbf16>
    %c1_33 = arith.constant 1 : index
    %c0_34 = arith.constant 0 : index
    %c0_35 = arith.constant 0 : index
    %27 = vector.load %arg2[%c1_33, %c0_34, %c0_35] : memref<9x128x128xbf16, #tpu.memory_space<vmem>>, vector<1x128x128xbf16>
    %28 = vector.shape_cast %27 : vector<1x128x128xbf16> to vector<128x128xbf16>
    %cst_36 = arith.constant dense<0.000000e+00> : vector<256x128xf32>
    %29 = tpu.matmul %26, %28, %cst_36 {dimension_numbers = #tpu.dot_dimension_numbers<[1], [0], [0], [1], [0, 0, 1, 1], [], []>} : vector<256x128xbf16>, vector<128x128xbf16>, vector<256x128xf32> -> vector<256x128xf32>
    %30 = arith.addf %23, %29 : vector<256x128xf32>
    %c0_37 = arith.constant 0 : index
    %c0_38 = arith.constant 0 : index
    %c2 = arith.constant 2 : index
    %c0_39 = arith.constant 0 : index
    %31 = vector.load %arg9[%c0_37, %c0_38, %c2, %c0_39] : memref<1x18x18x128xf32, #tpu.memory_space<vmem>>, vector<1x16x16x128xf32>
    %32 = vector.shape_cast %31 : vector<1x16x16x128xf32> to vector<256x128xf32>
    %33 = arith.truncf %32 : vector<256x128xf32> to vector<256x128xbf16>
    %c2_40 = arith.constant 2 : index
    %c0_41 = arith.constant 0 : index
    %c0_42 = arith.constant 0 : index
    %34 = vector.load %arg2[%c2_40, %c0_41, %c0_42] : memref<9x128x128xbf16, #tpu.memory_space<vmem>>, vector<1x128x128xbf16>
    %35 = vector.shape_cast %34 : vector<1x128x128xbf16> to vector<128x128xbf16>
    %cst_43 = arith.constant dense<0.000000e+00> : vector<256x128xf32>
    %36 = tpu.matmul %33, %35, %cst_43 {dimension_numbers = #tpu.dot_dimension_numbers<[1], [0], [0], [1], [0, 0, 1, 1], [], []>} : vector<256x128xbf16>, vector<128x128xbf16>, vector<256x128xf32> -> vector<256x128xf32>
    %37 = arith.addf %30, %36 : vector<256x128xf32>
    %c0_44 = arith.constant 0 : index
    %c1_45 = arith.constant 1 : index
    %c0_46 = arith.constant 0 : index
    %c0_47 = arith.constant 0 : index
    %38 = vector.load %arg9[%c0_44, %c1_45, %c0_46, %c0_47] : memref<1x18x18x128xf32, #tpu.memory_space<vmem>>, vector<1x16x16x128xf32>
    %39 = vector.shape_cast %38 : vector<1x16x16x128xf32> to vector<256x128xf32>
    %40 = arith.truncf %39 : vector<256x128xf32> to vector<256x128xbf16>
    %c3 = arith.constant 3 : index
    %c0_48 = arith.constant 0 : index
    %c0_49 = arith.constant 0 : index
    %41 = vector.load %arg2[%c3, %c0_48, %c0_49] : memref<9x128x128xbf16, #tpu.memory_space<vmem>>, vector<1x128x128xbf16>
    %42 = vector.shape_cast %41 : vector<1x128x128xbf16> to vector<128x128xbf16>
    %cst_50 = arith.constant dense<0.000000e+00> : vector<256x128xf32>
    %43 = tpu.matmul %40, %42, %cst_50 {dimension_numbers = #tpu.dot_dimension_numbers<[1], [0], [0], [1], [0, 0, 1, 1], [], []>} : vector<256x128xbf16>, vector<128x128xbf16>, vector<256x128xf32> -> vector<256x128xf32>
    %44 = arith.addf %37, %43 : vector<256x128xf32>
    %c0_51 = arith.constant 0 : index
    %c1_52 = arith.constant 1 : index
    %c1_53 = arith.constant 1 : index
    %c0_54 = arith.constant 0 : index
    %45 = vector.load %arg9[%c0_51, %c1_52, %c1_53, %c0_54] : memref<1x18x18x128xf32, #tpu.memory_space<vmem>>, vector<1x16x16x128xf32>
    %46 = vector.shape_cast %45 : vector<1x16x16x128xf32> to vector<256x128xf32>
    %47 = arith.truncf %46 : vector<256x128xf32> to vector<256x128xbf16>
    %c4 = arith.constant 4 : index
    %c0_55 = arith.constant 0 : index
    %c0_56 = arith.constant 0 : index
    %48 = vector.load %arg2[%c4, %c0_55, %c0_56] : memref<9x128x128xbf16, #tpu.memory_space<vmem>>, vector<1x128x128xbf16>
    %49 = vector.shape_cast %48 : vector<1x128x128xbf16> to vector<128x128xbf16>
    %cst_57 = arith.constant dense<0.000000e+00> : vector<256x128xf32>
    %50 = tpu.matmul %47, %49, %cst_57 {dimension_numbers = #tpu.dot_dimension_numbers<[1], [0], [0], [1], [0, 0, 1, 1], [], []>} : vector<256x128xbf16>, vector<128x128xbf16>, vector<256x128xf32> -> vector<256x128xf32>
    %51 = arith.addf %44, %50 : vector<256x128xf32>
    %c0_58 = arith.constant 0 : index
    %c1_59 = arith.constant 1 : index
    %c2_60 = arith.constant 2 : index
    %c0_61 = arith.constant 0 : index
    %52 = vector.load %arg9[%c0_58, %c1_59, %c2_60, %c0_61] : memref<1x18x18x128xf32, #tpu.memory_space<vmem>>, vector<1x16x16x128xf32>
    %53 = vector.shape_cast %52 : vector<1x16x16x128xf32> to vector<256x128xf32>
    %54 = arith.truncf %53 : vector<256x128xf32> to vector<256x128xbf16>
    %c5 = arith.constant 5 : index
    %c0_62 = arith.constant 0 : index
    %c0_63 = arith.constant 0 : index
    %55 = vector.load %arg2[%c5, %c0_62, %c0_63] : memref<9x128x128xbf16, #tpu.memory_space<vmem>>, vector<1x128x128xbf16>
    %56 = vector.shape_cast %55 : vector<1x128x128xbf16> to vector<128x128xbf16>
    %cst_64 = arith.constant dense<0.000000e+00> : vector<256x128xf32>
    %57 = tpu.matmul %54, %56, %cst_64 {dimension_numbers = #tpu.dot_dimension_numbers<[1], [0], [0], [1], [0, 0, 1, 1], [], []>} : vector<256x128xbf16>, vector<128x128xbf16>, vector<256x128xf32> -> vector<256x128xf32>
    %58 = arith.addf %51, %57 : vector<256x128xf32>
    %c0_65 = arith.constant 0 : index
    %c2_66 = arith.constant 2 : index
    %c0_67 = arith.constant 0 : index
    %c0_68 = arith.constant 0 : index
    %59 = vector.load %arg9[%c0_65, %c2_66, %c0_67, %c0_68] : memref<1x18x18x128xf32, #tpu.memory_space<vmem>>, vector<1x16x16x128xf32>
    %60 = vector.shape_cast %59 : vector<1x16x16x128xf32> to vector<256x128xf32>
    %61 = arith.truncf %60 : vector<256x128xf32> to vector<256x128xbf16>
    %c6 = arith.constant 6 : index
    %c0_69 = arith.constant 0 : index
    %c0_70 = arith.constant 0 : index
    %62 = vector.load %arg2[%c6, %c0_69, %c0_70] : memref<9x128x128xbf16, #tpu.memory_space<vmem>>, vector<1x128x128xbf16>
    %63 = vector.shape_cast %62 : vector<1x128x128xbf16> to vector<128x128xbf16>
    %cst_71 = arith.constant dense<0.000000e+00> : vector<256x128xf32>
    %64 = tpu.matmul %61, %63, %cst_71 {dimension_numbers = #tpu.dot_dimension_numbers<[1], [0], [0], [1], [0, 0, 1, 1], [], []>} : vector<256x128xbf16>, vector<128x128xbf16>, vector<256x128xf32> -> vector<256x128xf32>
    %65 = arith.addf %58, %64 : vector<256x128xf32>
    %c0_72 = arith.constant 0 : index
    %c2_73 = arith.constant 2 : index
    %c1_74 = arith.constant 1 : index
    %c0_75 = arith.constant 0 : index
    %66 = vector.load %arg9[%c0_72, %c2_73, %c1_74, %c0_75] : memref<1x18x18x128xf32, #tpu.memory_space<vmem>>, vector<1x16x16x128xf32>
    %67 = vector.shape_cast %66 : vector<1x16x16x128xf32> to vector<256x128xf32>
    %68 = arith.truncf %67 : vector<256x128xf32> to vector<256x128xbf16>
    %c7 = arith.constant 7 : index
    %c0_76 = arith.constant 0 : index
    %c0_77 = arith.constant 0 : index
    %69 = vector.load %arg2[%c7, %c0_76, %c0_77] : memref<9x128x128xbf16, #tpu.memory_space<vmem>>, vector<1x128x128xbf16>
    %70 = vector.shape_cast %69 : vector<1x128x128xbf16> to vector<128x128xbf16>
    %cst_78 = arith.constant dense<0.000000e+00> : vector<256x128xf32>
    %71 = tpu.matmul %68, %70, %cst_78 {dimension_numbers = #tpu.dot_dimension_numbers<[1], [0], [0], [1], [0, 0, 1, 1], [], []>} : vector<256x128xbf16>, vector<128x128xbf16>, vector<256x128xf32> -> vector<256x128xf32>
    %72 = arith.addf %65, %71 : vector<256x128xf32>
    %c0_79 = arith.constant 0 : index
    %c2_80 = arith.constant 2 : index
    %c2_81 = arith.constant 2 : index
    %c0_82 = arith.constant 0 : index
    %73 = vector.load %arg9[%c0_79, %c2_80, %c2_81, %c0_82] : memref<1x18x18x128xf32, #tpu.memory_space<vmem>>, vector<1x16x16x128xf32>
    %74 = vector.shape_cast %73 : vector<1x16x16x128xf32> to vector<256x128xf32>
    %75 = arith.truncf %74 : vector<256x128xf32> to vector<256x128xbf16>
    %c8 = arith.constant 8 : index
    %c0_83 = arith.constant 0 : index
    %c0_84 = arith.constant 0 : index
    %76 = vector.load %arg2[%c8, %c0_83, %c0_84] : memref<9x128x128xbf16, #tpu.memory_space<vmem>>, vector<1x128x128xbf16>
    %77 = vector.shape_cast %76 : vector<1x128x128xbf16> to vector<128x128xbf16>
    %cst_85 = arith.constant dense<0.000000e+00> : vector<256x128xf32>
    %78 = tpu.matmul %75, %77, %cst_85 {dimension_numbers = #tpu.dot_dimension_numbers<[1], [0], [0], [1], [0, 0, 1, 1], [], []>} : vector<256x128xbf16>, vector<128x128xbf16>, vector<256x128xf32> -> vector<256x128xf32>
    %79 = arith.addf %72, %78 : vector<256x128xf32>
    %c0_86 = arith.constant 0 : index
    %c0_87 = arith.constant 0 : index
    %80 = vector.load %arg6[%c0_86, %c0_87] : memref<1x128xf32, #tpu.memory_space<vmem>>, vector<1x128xf32>
    %81 = vector.broadcast %80 : vector<1x128xf32> to vector<256x128xf32>
    %82 = arith.mulf %79, %81 : vector<256x128xf32>
    %c0_88 = arith.constant 0 : index
    %c0_89 = arith.constant 0 : index
    %83 = vector.load %arg7[%c0_88, %c0_89] : memref<1x128xf32, #tpu.memory_space<vmem>>, vector<1x128xf32>
    %84 = vector.broadcast %83 : vector<1x128xf32> to vector<256x128xf32>
    %85 = arith.addf %82, %84 : vector<256x128xf32>
    %cst_90 = arith.constant 0.000000e+00 : f32
    %86 = vector.broadcast %cst_90 : f32 to vector<256x128xf32>
    %87 = arith.maximumf %85, %86 : vector<256x128xf32>
    %88 = vector.shape_cast %87 : vector<256x128xf32> to vector<1x16x16x128xf32>
    %c0_91 = arith.constant 0 : index
    %c1_92 = arith.constant 1 : index
    %c1_93 = arith.constant 1 : index
    %c0_94 = arith.constant 0 : index
    %89 = vector.load %arg10[%c0_91, %c1_92, %c1_93, %c0_94] : memref<1x18x18x128xf32, #tpu.memory_space<vmem>>, vector<1x16x16x128xf32>
    tpu.vector_store %arg10[%c0_91, %c1_92, %c1_93, %c0_94], %88 {strides = array<i32>} : memref<1x18x18x128xf32, #tpu.memory_space<vmem>>, vector<1x16x16x128xf32>,
    %cst_95 = arith.constant 0.000000e+00 : f32
    %90 = vector.broadcast %cst_95 : f32 to vector<256x128xf32>
    %c0_96 = arith.constant 0 : index
    %c0_97 = arith.constant 0 : index
    %c0_98 = arith.constant 0 : index
    %c0_99 = arith.constant 0 : index
    %91 = vector.load %arg10[%c0_96, %c0_97, %c0_98, %c0_99] : memref<1x18x18x128xf32, #tpu.memory_space<vmem>>, vector<1x16x16x128xf32>
    %92 = vector.shape_cast %91 : vector<1x16x16x128xf32> to vector<256x128xf32>
    %93 = arith.truncf %92 : vector<256x128xf32> to vector<256x128xbf16>
    %c0_100 = arith.constant 0 : index
    %c0_101 = arith.constant 0 : index
    %c0_102 = arith.constant 0 : index
    %94 = vector.load %arg3[%c0_100, %c0_101, %c0_102] : memref<9x128x128xbf16, #tpu.memory_space<vmem>>, vector<1x128x128xbf16>
    %95 = vector.shape_cast %94 : vector<1x128x128xbf16> to vector<128x128xbf16>
    %cst_103 = arith.constant dense<0.000000e+00> : vector<256x128xf32>
    %96 = tpu.matmul %93, %95, %cst_103 {dimension_numbers = #tpu.dot_dimension_numbers<[1], [0], [0], [1], [0, 0, 1, 1], [], []>} : vector<256x128xbf16>, vector<128x128xbf16>, vector<256x128xf32> -> vector<256x128xf32>
    %97 = arith.addf %90, %96 : vector<256x128xf32>
    %c0_104 = arith.constant 0 : index
    %c0_105 = arith.constant 0 : index
    %c1_106 = arith.constant 1 : index
    %c0_107 = arith.constant 0 : index
    %98 = vector.load %arg10[%c0_104, %c0_105, %c1_106, %c0_107] : memref<1x18x18x128xf32, #tpu.memory_space<vmem>>, vector<1x16x16x128xf32>
    %99 = vector.shape_cast %98 : vector<1x16x16x128xf32> to vector<256x128xf32>
    %100 = arith.truncf %99 : vector<256x128xf32> to vector<256x128xbf16>
    %c1_108 = arith.constant 1 : index
    %c0_109 = arith.constant 0 : index
    %c0_110 = arith.constant 0 : index
    %101 = vector.load %arg3[%c1_108, %c0_109, %c0_110] : memref<9x128x128xbf16, #tpu.memory_space<vmem>>, vector<1x128x128xbf16>
    %102 = vector.shape_cast %101 : vector<1x128x128xbf16> to vector<128x128xbf16>
    %cst_111 = arith.constant dense<0.000000e+00> : vector<256x128xf32>
    %103 = tpu.matmul %100, %102, %cst_111 {dimension_numbers = #tpu.dot_dimension_numbers<[1], [0], [0], [1], [0, 0, 1, 1], [], []>} : vector<256x128xbf16>, vector<128x128xbf16>, vector<256x128xf32> -> vector<256x128xf32>
    %104 = arith.addf %97, %103 : vector<256x128xf32>
    %c0_112 = arith.constant 0 : index
    %c0_113 = arith.constant 0 : index
    %c2_114 = arith.constant 2 : index
    %c0_115 = arith.constant 0 : index
    %105 = vector.load %arg10[%c0_112, %c0_113, %c2_114, %c0_115] : memref<1x18x18x128xf32, #tpu.memory_space<vmem>>, vector<1x16x16x128xf32>
    %106 = vector.shape_cast %105 : vector<1x16x16x128xf32> to vector<256x128xf32>
    %107 = arith.truncf %106 : vector<256x128xf32> to vector<256x128xbf16>
    %c2_116 = arith.constant 2 : index
    %c0_117 = arith.constant 0 : index
    %c0_118 = arith.constant 0 : index
    %108 = vector.load %arg3[%c2_116, %c0_117, %c0_118] : memref<9x128x128xbf16, #tpu.memory_space<vmem>>, vector<1x128x128xbf16>
    %109 = vector.shape_cast %108 : vector<1x128x128xbf16> to vector<128x128xbf16>
    %cst_119 = arith.constant dense<0.000000e+00> : vector<256x128xf32>
    %110 = tpu.matmul %107, %109, %cst_119 {dimension_numbers = #tpu.dot_dimension_numbers<[1], [0], [0], [1], [0, 0, 1, 1], [], []>} : vector<256x128xbf16>, vector<128x128xbf16>, vector<256x128xf32> -> vector<256x128xf32>
    %111 = arith.addf %104, %110 : vector<256x128xf32>
    %c0_120 = arith.constant 0 : index
    %c1_121 = arith.constant 1 : index
    %c0_122 = arith.constant 0 : index
    %c0_123 = arith.constant 0 : index
    %112 = vector.load %arg10[%c0_120, %c1_121, %c0_122, %c0_123] : memref<1x18x18x128xf32, #tpu.memory_space<vmem>>, vector<1x16x16x128xf32>
    %113 = vector.shape_cast %112 : vector<1x16x16x128xf32> to vector<256x128xf32>
    %114 = arith.truncf %113 : vector<256x128xf32> to vector<256x128xbf16>
    %c3_124 = arith.constant 3 : index
    %c0_125 = arith.constant 0 : index
    %c0_126 = arith.constant 0 : index
    %115 = vector.load %arg3[%c3_124, %c0_125, %c0_126] : memref<9x128x128xbf16, #tpu.memory_space<vmem>>, vector<1x128x128xbf16>
    %116 = vector.shape_cast %115 : vector<1x128x128xbf16> to vector<128x128xbf16>
    %cst_127 = arith.constant dense<0.000000e+00> : vector<256x128xf32>
    %117 = tpu.matmul %114, %116, %cst_127 {dimension_numbers = #tpu.dot_dimension_numbers<[1], [0], [0], [1], [0, 0, 1, 1], [], []>} : vector<256x128xbf16>, vector<128x128xbf16>, vector<256x128xf32> -> vector<256x128xf32>
    %118 = arith.addf %111, %117 : vector<256x128xf32>
    %c0_128 = arith.constant 0 : index
    %c1_129 = arith.constant 1 : index
    %c1_130 = arith.constant 1 : index
    %c0_131 = arith.constant 0 : index
    %119 = vector.load %arg10[%c0_128, %c1_129, %c1_130, %c0_131] : memref<1x18x18x128xf32, #tpu.memory_space<vmem>>, vector<1x16x16x128xf32>
    %120 = vector.shape_cast %119 : vector<1x16x16x128xf32> to vector<256x128xf32>
    %121 = arith.truncf %120 : vector<256x128xf32> to vector<256x128xbf16>
    %c4_132 = arith.constant 4 : index
    %c0_133 = arith.constant 0 : index
    %c0_134 = arith.constant 0 : index
    %122 = vector.load %arg3[%c4_132, %c0_133, %c0_134] : memref<9x128x128xbf16, #tpu.memory_space<vmem>>, vector<1x128x128xbf16>
    %123 = vector.shape_cast %122 : vector<1x128x128xbf16> to vector<128x128xbf16>
    %cst_135 = arith.constant dense<0.000000e+00> : vector<256x128xf32>
    %124 = tpu.matmul %121, %123, %cst_135 {dimension_numbers = #tpu.dot_dimension_numbers<[1], [0], [0], [1], [0, 0, 1, 1], [], []>} : vector<256x128xbf16>, vector<128x128xbf16>, vector<256x128xf32> -> vector<256x128xf32>
    %125 = arith.addf %118, %124 : vector<256x128xf32>
    %c0_136 = arith.constant 0 : index
    %c1_137 = arith.constant 1 : index
    %c2_138 = arith.constant 2 : index
    %c0_139 = arith.constant 0 : index
    %126 = vector.load %arg10[%c0_136, %c1_137, %c2_138, %c0_139] : memref<1x18x18x128xf32, #tpu.memory_space<vmem>>, vector<1x16x16x128xf32>
    %127 = vector.shape_cast %126 : vector<1x16x16x128xf32> to vector<256x128xf32>
    %128 = arith.truncf %127 : vector<256x128xf32> to vector<256x128xbf16>
    %c5_140 = arith.constant 5 : index
    %c0_141 = arith.constant 0 : index
    %c0_142 = arith.constant 0 : index
    %129 = vector.load %arg3[%c5_140, %c0_141, %c0_142] : memref<9x128x128xbf16, #tpu.memory_space<vmem>>, vector<1x128x128xbf16>
    %130 = vector.shape_cast %129 : vector<1x128x128xbf16> to vector<128x128xbf16>
    %cst_143 = arith.constant dense<0.000000e+00> : vector<256x128xf32>
    %131 = tpu.matmul %128, %130, %cst_143 {dimension_numbers = #tpu.dot_dimension_numbers<[1], [0], [0], [1], [0, 0, 1, 1], [], []>} : vector<256x128xbf16>, vector<128x128xbf16>, vector<256x128xf32> -> vector<256x128xf32>
    %132 = arith.addf %125, %131 : vector<256x128xf32>
    %c0_144 = arith.constant 0 : index
    %c2_145 = arith.constant 2 : index
    %c0_146 = arith.constant 0 : index
    %c0_147 = arith.constant 0 : index
    %133 = vector.load %arg10[%c0_144, %c2_145, %c0_146, %c0_147] : memref<1x18x18x128xf32, #tpu.memory_space<vmem>>, vector<1x16x16x128xf32>
    %134 = vector.shape_cast %133 : vector<1x16x16x128xf32> to vector<256x128xf32>
    %135 = arith.truncf %134 : vector<256x128xf32> to vector<256x128xbf16>
    %c6_148 = arith.constant 6 : index
    %c0_149 = arith.constant 0 : index
    %c0_150 = arith.constant 0 : index
    %136 = vector.load %arg3[%c6_148, %c0_149, %c0_150] : memref<9x128x128xbf16, #tpu.memory_space<vmem>>, vector<1x128x128xbf16>
    %137 = vector.shape_cast %136 : vector<1x128x128xbf16> to vector<128x128xbf16>
    %cst_151 = arith.constant dense<0.000000e+00> : vector<256x128xf32>
    %138 = tpu.matmul %135, %137, %cst_151 {dimension_numbers = #tpu.dot_dimension_numbers<[1], [0], [0], [1], [0, 0, 1, 1], [], []>} : vector<256x128xbf16>, vector<128x128xbf16>, vector<256x128xf32> -> vector<256x128xf32>
    %139 = arith.addf %132, %138 : vector<256x128xf32>
    %c0_152 = arith.constant 0 : index
    %c2_153 = arith.constant 2 : index
    %c1_154 = arith.constant 1 : index
    %c0_155 = arith.constant 0 : index
    %140 = vector.load %arg10[%c0_152, %c2_153, %c1_154, %c0_155] : memref<1x18x18x128xf32, #tpu.memory_space<vmem>>, vector<1x16x16x128xf32>
    %141 = vector.shape_cast %140 : vector<1x16x16x128xf32> to vector<256x128xf32>
    %142 = arith.truncf %141 : vector<256x128xf32> to vector<256x128xbf16>
    %c7_156 = arith.constant 7 : index
    %c0_157 = arith.constant 0 : index
    %c0_158 = arith.constant 0 : index
    %143 = vector.load %arg3[%c7_156, %c0_157, %c0_158] : memref<9x128x128xbf16, #tpu.memory_space<vmem>>, vector<1x128x128xbf16>
    %144 = vector.shape_cast %143 : vector<1x128x128xbf16> to vector<128x128xbf16>
    %cst_159 = arith.constant dense<0.000000e+00> : vector<256x128xf32>
    %145 = tpu.matmul %142, %144, %cst_159 {dimension_numbers = #tpu.dot_dimension_numbers<[1], [0], [0], [1], [0, 0, 1, 1], [], []>} : vector<256x128xbf16>, vector<128x128xbf16>, vector<256x128xf32> -> vector<256x128xf32>
    %146 = arith.addf %139, %145 : vector<256x128xf32>
    %c0_160 = arith.constant 0 : index
    %c2_161 = arith.constant 2 : index
    %c2_162 = arith.constant 2 : index
    %c0_163 = arith.constant 0 : index
    %147 = vector.load %arg10[%c0_160, %c2_161, %c2_162, %c0_163] : memref<1x18x18x128xf32, #tpu.memory_space<vmem>>, vector<1x16x16x128xf32>
    %148 = vector.shape_cast %147 : vector<1x16x16x128xf32> to vector<256x128xf32>
    %149 = arith.truncf %148 : vector<256x128xf32> to vector<256x128xbf16>
    %c8_164 = arith.constant 8 : index
    %c0_165 = arith.constant 0 : index
    %c0_166 = arith.constant 0 : index
    %150 = vector.load %arg3[%c8_164, %c0_165, %c0_166] : memref<9x128x128xbf16, #tpu.memory_space<vmem>>, vector<1x128x128xbf16>
    %151 = vector.shape_cast %150 : vector<1x128x128xbf16> to vector<128x128xbf16>
    %cst_167 = arith.constant dense<0.000000e+00> : vector<256x128xf32>
    %152 = tpu.matmul %149, %151, %cst_167 {dimension_numbers = #tpu.dot_dimension_numbers<[1], [0], [0], [1], [0, 0, 1, 1], [], []>} : vector<256x128xbf16>, vector<128x128xbf16>, vector<256x128xf32> -> vector<256x128xf32>
    %153 = arith.addf %146, %152 : vector<256x128xf32>
    %154 = arith.addf %153, %5 : vector<256x128xf32>
    %155 = vector.shape_cast %154 : vector<256x128xf32> to vector<1x16x16x128xf32>
    %c0_168 = arith.constant 0 : index
    %c0_169 = arith.constant 0 : index
    %c0_170 = arith.constant 0 : index
    %c0_171 = arith.constant 0 : index
    %156 = vector.load %arg8[%c0_168, %c0_169, %c0_170, %c0_171] : memref<1x16x16x128xf32, #tpu.memory_space<vmem>>, vector<1x16x16x128xf32>
    tpu.vector_store %arg8[%c0_168, %c0_169, %c0_170, %c0_171], %155 {strides = array<i32>} : memref<1x16x16x128xf32, #tpu.memory_space<vmem>>, vector<1x16x16x128xf32>,
    return
  }
  func.func @transform_0(%arg0: i32) -> (i32, i32, i32, i32) {
    %c0_i32 = arith.constant 0 : i32
    %c0_i32_0 = arith.constant 0 : i32
    %c0_i32_1 = arith.constant 0 : i32
    %c0_i32_2 = arith.constant 0 : i32
    return %arg0, %c0_i32, %c0_i32_0, %c0_i32_1 : i32, i32, i32, i32
  }
  func.func @transform_1(%arg0: i32) -> (i32, i32, i32) {
    %c0_i32 = arith.constant 0 : i32
    %c0_i32_0 = arith.constant 0 : i32
    %c0_i32_1 = arith.constant 0 : i32
    %c0_i32_2 = arith.constant 0 : i32
    return %c0_i32, %c0_i32_0, %c0_i32_1 : i32, i32, i32
  }
  func.func @transform_2(%arg0: i32) -> (i32, i32, i32) {
    %c0_i32 = arith.constant 0 : i32
    %c0_i32_0 = arith.constant 0 : i32
    %c0_i32_1 = arith.constant 0 : i32
    %c0_i32_2 = arith.constant 0 : i32
    return %c0_i32, %c0_i32_0, %c0_i32_1 : i32, i32, i32
  }
  func.func @transform_3(%arg0: i32) -> (i32, i32) {
    %c0_i32 = arith.constant 0 : i32
    %c0_i32_0 = arith.constant 0 : i32
    %c0_i32_1 = arith.constant 0 : i32
    return %c0_i32, %c0_i32_0 : i32, i32
  }
  func.func @transform_4(%arg0: i32) -> (i32, i32) {
    %c0_i32 = arith.constant 0 : i32
    %c0_i32_0 = arith.constant 0 : i32
    %c0_i32_1 = arith.constant 0 : i32
    return %c0_i32, %c0_i32_0 : i32, i32
  }
  func.func @transform_5(%arg0: i32) -> (i32, i32) {
    %c0_i32 = arith.constant 0 : i32
    %c0_i32_0 = arith.constant 0 : i32
    %c0_i32_1 = arith.constant 0 : i32
    return %c0_i32, %c0_i32_0 : i32, i32
  }
  func.func @transform_6(%arg0: i32) -> (i32, i32) {
    %c0_i32 = arith.constant 0 : i32
    %c0_i32_0 = arith.constant 0 : i32
    %c0_i32_1 = arith.constant 0 : i32
    return %c0_i32, %c0_i32_0 : i32, i32
  }
  func.func @transform_7(%arg0: i32) -> (i32, i32, i32, i32) {
    %c0_i32 = arith.constant 0 : i32
    %c0_i32_0 = arith.constant 0 : i32
    %c0_i32_1 = arith.constant 0 : i32
    %c0_i32_2 = arith.constant 0 : i32
    return %arg0, %c0_i32, %c0_i32_0, %c0_i32_1 : i32, i32, i32, i32
  }
}

</mosaic_0001>

<llo_original>
// kernel: preact_block_forward.1
$region0: #{preact_block_forward.1}
  #allocation0 [shape = 'u32[]', space=smem, size = 0x4, offset = 0x4, fixed_abs, tag = 'smem constant byte address 0x4 - core index']
  #allocation1 [shape = 'u32[144,128]{1,0:T(1,128)}', space=vmem, size = 0x12000, scoped, tag = 'internal scratch']
  #allocation2 [shape = 'f32[1,18,18,128]{3,2,1,0:T(8,128)}', space=vmem, size = 0x36000, scoped, tag = 'scratch operand']
  #allocation3 [shape = 'f32[1,18,18,128]{3,2,1,0:T(8,128)}', space=vmem, size = 0x36000, scoped, tag = 'scratch operand']
  %s0 = inlined_call_operand.vmem [shape: f32[2,16,16,128], index: 0, kind: input, shape index: {}]
  %s1 = inlined_call_operand.vmem [shape: bf16[9,128,128], index: 1, kind: input, shape index: {}]
  %s2 = inlined_call_operand.vmem [shape: bf16[9,128,128], index: 2, kind: input, shape index: {}]
  %s3 = inlined_call_operand.vmem [shape: f32[1,128], index: 3, kind: input, shape index: {}]
  %s4 = inlined_call_operand.vmem [shape: f32[1,128], index: 4, kind: input, shape index: {}]
  %s5 = inlined_call_operand.vmem [shape: f32[1,128], index: 5, kind: input, shape index: {}]
  %s6 = inlined_call_operand.vmem [shape: f32[1,128], index: 6, kind: input, shape index: {}]
  %s7 = inlined_call_operand.vmem [shape: f32[2,16,16,128], index: 7, kind: output, shape index: {}]
  %s8 = sld [smem:[#allocation0]]
  $region61: #{preact_block_forward.1} parent=0
    _
  %s10 = ssub.s32 1, %s8
  %s11 = scalar_select 0, %s10, %s8
  loop: start=0, step=1, limit=4
  $region2: #{preact_block_forward.1} parent=0 // loop_pre_header
    _
  $region3: #{preact_block_forward.1} parent=0 // loop_header
    %s13 = sphi 0, %s17
    %p14 = scmp.ge.s32.totalorder %s13, 4
    %s23 = sphi 0, %s25
    %s26 = sphi 0, %s23
    %s27 = sphi 0, %s26
    %s43 = sphi 0, %s27
    %s47 = sphi 0, %s47
    %s49 = sphi 0, %s47
    %s50 = sphi 0, %s49
    %s64 = sphi 0, %s50
    %s68 = sphi 0, %s68
    %s70 = sphi 0, %s68
    %s71 = sphi 0, %s70
    %s85 = sphi 0, %s71
    %s89 = sphi 0, %s89
    %s91 = sphi 0, %s89
    %s92 = sphi 0, %s91
    %s106 = sphi 0, %s92
    %s110 = sphi 0, %s110
    %s112 = sphi 0, %s110
    %s113 = sphi 0, %s112
    %s127 = sphi 0, %s113
    %s131 = sphi 0, %s131
    %s133 = sphi 0, %s131
    %s134 = sphi 0, %s133
    %s148 = sphi 0, %s134
    %s152 = sphi 0, %s152
    %s154 = sphi 0, %s152
    %s155 = sphi 0, %s154
    %s169 = sphi 0, %s155
    %s175 = sphi 0, %s177
    %s178 = sphi 0, %s175
    %s179 = sphi 0, %s178
    %s195 = sphi 0, %s179
  $region4: #{preact_block_forward.1} parent=0 // loop_header_branch
    %16 = sbr.rel (%p14) target = $region8
  $region5: #{preact_block_forward.1} parent=0 // loop_body
    %s18 = ssub.s32 %s13, 1
    %s19 = ssub.s32 %s13, 2
    %s20 = sadd.s32 %s13, 1
    %s21 = ssub.s32 %s13, %s20
    %p22 = scmp.eq.s32.totalorder %s21, 0
    %s24 = sadd.s32 %s23, 1
    %s25 = scalar_select %p22, %s23, %s24
    %p28 = pneg %p22
    %p29 = scmp.eq.s32.totalorder %s13, 1
    %p30 = por %p28, %p29
    %p31 = scmp.ne.s32.totalorder %s23, %s26
    %p32 = scmp.eq.s32.totalorder %s13, 0
    %p33 = por %p31, %p32
    %p34 = scmp.ne.s32.totalorder %s23, %s26
    %p35 = scmp.eq.s32.totalorder %s18, 1
    %p36 = por %p34, %p35
    %p37 = scmp.ne.s32.totalorder %s26, %s27
    %p38 = scmp.eq.s32.totalorder %s18, 0
    %p39 = por %p37, %p38
    %p40 = scmp.ne.s32.totalorder %s26, %s27
    %p41 = scmp.eq.s32.totalorder %s19, 1
    %p42 = por %p40, %p41
    %p44 = scmp.ne.s32.totalorder %s27, %s43
    %p45 = scmp.eq.s32.totalorder %s19, 0
    %p46 = por %p44, %p45
    %s48 = sadd.s32 %s47, 1
    %p51 = scmp.eq.s32.totalorder %s13, 1
    %p52 = scmp.ne.s32.totalorder %s47, %s49
    %p53 = scmp.eq.s32.totalorder %s13, 0
    %p54 = por %p52, %p53
    %p55 = scmp.ne.s32.totalorder %s47, %s49
    %p56 = scmp.eq.s32.totalorder %s18, 1
    %p57 = por %p55, %p56
    %p58 = scmp.ne.s32.totalorder %s49, %s50
    %p59 = scmp.eq.s32.totalorder %s18, 0
    %p60 = por %p58, %p59
    %p61 = scmp.ne.s32.totalorder %s49, %s50
    %p62 = scmp.eq.s32.totalorder %s19, 1
    %p63 = por %p61, %p62
    %p65 = scmp.ne.s32.totalorder %s50, %s64
    %p66 = scmp.eq.s32.totalorder %s19, 0
    %p67 = por %p65, %p66
    %s69 = sadd.s32 %s68, 1
    %p72 = scmp.eq.s32.totalorder %s13, 1
    %p73 = scmp.ne.s32.totalorder %s68, %s70
    %p74 = scmp.eq.s32.totalorder %s13, 0
    %p75 = por %p73, %p74
    %p76 = scmp.ne.s32.totalorder %s68, %s70
    %p77 = scmp.eq.s32.totalorder %s18, 1
    %p78 = por %p76, %p77
    %p79 = scmp.ne.s32.totalorder %s70, %s71
    %p80 = scmp.eq.s32.totalorder %s18, 0
    %p81 = por %p79, %p80
    %p82 = scmp.ne.s32.totalorder %s70, %s71
    %p83 = scmp.eq.s32.totalorder %s19, 1
    %p84 = por %p82, %p83
    %p86 = scmp.ne.s32.totalorder %s71, %s85
    %p87 = scmp.eq.s32.totalorder %s19, 0
    %p88 = por %p86, %p87
    %s90 = sadd.s32 %s89, 1
    %p93 = scmp.eq.s32.totalorder %s13, 1
    %p94 = scmp.ne.s32.totalorder %s89, %s91
    %p95 = scmp.eq.s32.totalorder %s13, 0
    %p96 = por %p94, %p95
    %p97 = scmp.ne.s32.totalorder %s89, %s91
    %p98 = scmp.eq.s32.totalorder %s18, 1
    %p99 = por %p97, %p98
    %p100 = scmp.ne.s32.totalorder %s91, %s92
    %p101 = scmp.eq.s32.totalorder %s18, 0
    %p102 = por %p100, %p101
    %p103 = scmp.ne.s32.totalorder %s91, %s92
    %p104 = scmp.eq.s32.totalorder %s19, 1
    %p105 = por %p103, %p104
    %p107 = scmp.ne.s32.totalorder %s92, %s106
    %p108 = scmp.eq.s32.totalorder %s19, 0
    %p109 = por %p107, %p108
    %s111 = sadd.s32 %s110, 1
    %p114 = scmp.eq.s32.totalorder %s13, 1
    %p115 = scmp.ne.s32.totalorder %s110, %s112
    %p116 = scmp.eq.s32.totalorder %s13, 0
    %p117 = por %p115, %p116
    %p118 = scmp.ne.s32.totalorder %s110, %s112
    %p119 = scmp.eq.s32.totalorder %s18, 1
    %p120 = por %p118, %p119
    %p121 = scmp.ne.s32.totalorder %s112, %s113
    %p122 = scmp.eq.s32.totalorder %s18, 0
    %p123 = por %p121, %p122
    %p124 = scmp.ne.s32.totalorder %s112, %s113
    %p125 = scmp.eq.s32.totalorder %s19, 1
    %p126 = por %p124, %p125
    %p128 = scmp.ne.s32.totalorder %s113, %s127
    %p129 = scmp.eq.s32.totalorder %s19, 0
    %p130 = por %p128, %p129
    %s132 = sadd.s32 %s131, 1
    %p135 = scmp.eq.s32.totalorder %s13, 1
    %p136 = scmp.ne.s32.totalorder %s131, %s133
    %p137 = scmp.eq.s32.totalorder %s13, 0
    %p138 = por %p136, %p137
    %p139 = scmp.ne.s32.totalorder %s131, %s133
    %p140 = scmp.eq.s32.totalorder %s18, 1
    %p141 = por %p139, %p140
    %p142 = scmp.ne.s32.totalorder %s133, %s134
    %p143 = scmp.eq.s32.totalorder %s18, 0
    %p144 = por %p142, %p143
    %p145 = scmp.ne.s32.totalorder %s133, %s134
    %p146 = scmp.eq.s32.totalorder %s19, 1
    %p147 = por %p145, %p146
    %p149 = scmp.ne.s32.totalorder %s134, %s148
    %p150 = scmp.eq.s32.totalorder %s19, 0
    %p151 = por %p149, %p150
    %s153 = sadd.s32 %s152, 1
    %p156 = scmp.eq.s32.totalorder %s13, 1
    %p157 = scmp.ne.s32.totalorder %s152, %s154
    %p158 = scmp.eq.s32.totalorder %s13, 0
    %p159 = por %p157, %p158
    %p160 = scmp.ne.s32.totalorder %s152, %s154
    %p161 = scmp.eq.s32.totalorder %s18, 1
    %p162 = por %p160, %p161
    %p163 = scmp.ne.s32.totalorder %s154, %s155
    %p164 = scmp.eq.s32.totalorder %s18, 0
    %p165 = por %p163, %p164
    %p166 = scmp.ne.s32.totalorder %s154, %s155
    %p167 = scmp.eq.s32.totalorder %s19, 1
    %p168 = por %p166, %p167
    %p170 = scmp.ne.s32.totalorder %s155, %s169
    %p171 = scmp.eq.s32.totalorder %s19, 0
    %p172 = por %p170, %p171
    %s173 = ssub.s32 %s13, %s20
    %p174 = scmp.eq.s32.totalorder %s173, 0
    %s176 = sadd.s32 %s175, 1
    %s177 = scalar_select %p174, %s175, %s176
    %p180 = pneg %p174
    %p181 = scmp.eq.s32.totalorder %s13, 1
    %p182 = por %p180, %p181
    %p183 = scmp.ne.s32.totalorder %s175, %s178
    %p184 = scmp.eq.s32.totalorder %s13, 0
    %p185 = por %p183, %p184
    %p186 = scmp.ne.s32.totalorder %s175, %s178
    %p187 = scmp.eq.s32.totalorder %s18, 1
    %p188 = por %p186, %p187
    %p189 = scmp.ne.s32.totalorder %s178, %s179
    %p190 = scmp.eq.s32.totalorder %s18, 0
    %p191 = por %p189, %p190
    %p192 = scmp.ne.s32.totalorder %s178, %s179
    %p193 = scmp.eq.s32.totalorder %s19, 1
    %p194 = por %p192, %p193
    %p196 = scmp.ne.s32.totalorder %s179, %s195
    %p197 = scmp.eq.s32.totalorder %s19, 0
    %p198 = por %p196, %p197
    %p199 = scmp.le.s32.totalorder 1, %s13
    %p200 = scmp.lt.s32.totalorder %s13, 3
    %p201 = pnand %p199, %p200
    %p202 = pneg %p201
    // Predicated region
    $region9: #{preact_block_forward.1} parent=5 // pred_check
      _
    $region10: #{preact_block_forward.1} parent=5 // pred_check_branch
      %204 = sbr.rel (%p201) target = $region12
    $region11: #{preact_block_forward.1} parent=5 // pred_region
      %s205 = ssub.s32 %s13, 1
      // Predicated region
      $region13: #{preact_block_forward.1} parent=11 // pred_check
        %p206 = pneg %p60
      $region14: #{preact_block_forward.1} parent=11 // pred_check_branch
        %208 = sbr.rel (%p206) target = $region16
      $region15: #{preact_block_forward.1} parent=11 // pred_region
        _
      $region16: #{preact_block_forward.1} parent=11 // pred_fallthru
        _
      // Predicated region
      $region17: #{preact_block_forward.1} parent=11 // pred_check
        %p209 = pneg %p81
      $region18: #{preact_block_forward.1} parent=11 // pred_check_branch
        %211 = sbr.rel (%p209) target = $region20
      $region19: #{preact_block_forward.1} parent=11 // pred_region
        _
      $region20: #{preact_block_forward.1} parent=11 // pred_fallthru
        _
      // Predicated region
      $region21: #{preact_block_forward.1} parent=11 // pred_check
        %p212 = pneg %p102
      $region22: #{preact_block_forward.1} parent=11 // pred_check_branch
        %214 = sbr.rel (%p212) target = $region24
      $region23: #{preact_block_forward.1} parent=11 // pred_region
        _
      $region24: #{preact_block_forward.1} parent=11 // pred_fallthru
        _
      // Predicated region
      $region25: #{preact_block_forward.1} parent=11 // pred_check
        %p215 = pneg %p123
      $region26: #{preact_block_forward.1} parent=11 // pred_check_branch
        %217 = sbr.rel (%p215) target = $region28
      $region27: #{preact_block_forward.1} parent=11 // pred_region
        _
      $region28: #{preact_block_forward.1} parent=11 // pred_fallthru
        _
      // Predicated region
      $region29: #{preact_block_forward.1} parent=11 // pred_check
        %p218 = pneg %p144
      $region30: #{preact_block_forward.1} parent=11 // pred_check_branch
        %220 = sbr.rel (%p218) target = $region32
      $region31: #{preact_block_forward.1} parent=11 // pred_region
        _
      $region32: #{preact_block_forward.1} parent=11 // pred_fallthru
        _
      // Predicated region
      $region33: #{preact_block_forward.1} parent=11 // pred_check
        %p221 = pneg %p165
      $region34: #{preact_block_forward.1} parent=11 // pred_check_branch
        %223 = sbr.rel (%p221) target = $region36
      $region35: #{preact_block_forward.1} parent=11 // pred_region
        _
      $region36: #{preact_block_forward.1} parent=11 // pred_fallthru
        _
    $region12: #{preact_block_forward.1} parent=5 // pred_fallthru
      _
    %p224 = scmp.lt.s32.totalorder %s13, 2
    // Predicated region
    $region37: #{preact_block_forward.1} parent=5 // pred_check
      %p225 = pneg %p224
    $region38: #{preact_block_forward.1} parent=5 // pred_check_branch
      %227 = sbr.rel (%p225) target = $region40
    $region39: #{preact_block_forward.1} parent=5 // pred_region
      // Predicated region
      $region41: #{preact_block_forward.1} parent=39 // pred_check
        %p228 = pneg %p33
      $region42: #{preact_block_forward.1} parent=39 // pred_check_branch
        %230 = sbr.rel (%p228) target = $region44
      $region43: #{preact_block_forward.1} parent=39 // pred_region
        %p231 = scmp.lt.s32.totalorder %s13, 1
        %s232 = scalar_select %p231, %s13, 1
        %s233 = smul.addr %s232, 32
        %s234 = smul.addr %s233, 8
        %s235 = scalar_lea.vmem %s0, %s234
      $region44: #{preact_block_forward.1} parent=39 // pred_fallthru
        _
    $region40: #{preact_block_forward.1} parent=5 // pred_fallthru
      _
    %p236 = scmp.le.s32.totalorder 1, %s13
    %p237 = scmp.lt.s32.totalorder %s13, 3
    %p238 = pnand %p236, %p237
    %p239 = pneg %p238
    // Predicated region
    $region45: #{preact_block_forward.1} parent=5 // pred_check
      _
    $region46: #{preact_block_forward.1} parent=5 // pred_check_branch
      %241 = sbr.rel (%p238) target = $region48
    $region47: #{preact_block_forward.1} parent=5 // pred_region
      %s242 = ssub.s32 %s13, 1
      %p243 = scmp.lt.s32.totalorder %s18, 1
      %s244 = scalar_select %p243, %s18, 1
      %s245 = smul.addr %s244, 32
      %s246 = smul.addr %s245, 8
      %s247 = scalar_lea.vmem %s0, %s246
      %p248 = pneg %p39
      %p249 = pneg %p36
      %p250 = pneg %p60
      %p251 = pneg %p57
      %p252 = pneg %p81
      %p253 = pneg %p78
      %p254 = pneg %p102
      %p255 = pneg %p99
      %p256 = pneg %p123
      %p257 = pneg %p120
      %p258 = pneg %p144
      %p259 = pneg %p141
      %p260 = pneg %p165
      %p261 = pneg %p162
      %p262 = pneg %p191
      %p263 = pneg %p188
      %p264 = scmp.lt.s32.totalorder %s18, 1
      %s265 = scalar_select %p264, %s18, 1
      %s266 = smul.addr %s265, 32
      %s267 = smul.addr %s266, 8
      %s268 = scalar_lea.vmem %s7, %s267
      %p269 = scmp.lt.s32.totalorder %s18, 1
      %s270 = scalar_select %p269, %s18, 1
      %s271 = smul.addr %s270, 32
      %s272 = smul.addr %s271, 8
      %s273 = scalar_lea.vmem %s0, %s272
      %p274 = scmp.lt.s32.totalorder %s18, 1
      %s275 = scalar_select %p274, %s18, 1
      %s276 = smul.addr %s275, 32
      %s277 = smul.addr %s276, 8
      %s278 = scalar_lea.vmem %s7, %s277
      %280 = vst [vmem:[#allocation2] sm:$0xff] 0.0
      %281 = vst [vmem:[#allocation2 + $0x8] sm:$0xff] 0.0
      %282 = vst [vmem:[#allocation2 + $0x10] sm:$0x3] 0.0
      %283 = vst [vmem:[#allocation2 + $0x18] sm:$0xff] 0.0
      %284 = vst [vmem:[#allocation2 + $0x20] sm:$0xff] 0.0
      %285 = vst [vmem:[#allocation2 + $0x28] sm:$0x3] 0.0
      %286 = vst [vmem:[#allocation2 + $0x30] sm:$0xff] 0.0
      %287 = vst [vmem:[#allocation2 + $0x38] sm:$0xff] 0.0
      %288 = vst [vmem:[#allocation2 + $0x40] sm:$0x3] 0.0
      %289 = vst [vmem:[#allocation2 + $0x48] sm:$0xff] 0.0
      %290 = vst [vmem:[#allocation2 + $0x50] sm:$0xff] 0.0
      %291 = vst [vmem:[#allocation2 + $0x58] sm:$0x3] 0.0
      %292 = vst [vmem:[#allocation2 + $0x60] sm:$0xff] 0.0
      %293 = vst [vmem:[#allocation2 + $0x68] sm:$0xff] 0.0
      %294 = vst [vmem:[#allocation2 + $0x70] sm:$0x3] 0.0
      %295 = vst [vmem:[#allocation2 + $0x78] sm:$0xff] 0.0
      %296 = vst [vmem:[#allocation2 + $0x80] sm:$0xff] 0.0
      %297 = vst [vmem:[#allocation2 + $0x88] sm:$0x3] 0.0
      %298 = vst [vmem:[#allocation2 + $0x90] sm:$0xff] 0.0
      %299 = vst [vmem:[#allocation2 + $0x98] sm:$0xff] 0.0
      %300 = vst [vmem:[#allocation2 + $0xa0] sm:$0x3] 0.0
      %301 = vst [vmem:[#allocation2 + $0xa8] sm:$0xff] 0.0
      %302 = vst [vmem:[#allocation2 + $0xb0] sm:$0xff] 0.0
      %303 = vst [vmem:[#allocation2 + $0xb8] sm:$0x3] 0.0
      %304 = vst [vmem:[#allocation2 + $0xc0] sm:$0xff] 0.0
      %305 = vst [vmem:[#allocation2 + $0xc8] sm:$0xff] 0.0
      %306 = vst [vmem:[#allocation2 + $0xd0] sm:$0x3] 0.0
      %307 = vst [vmem:[#allocation2 + $0xd8] sm:$0xff] 0.0
      %308 = vst [vmem:[#allocation2 + $0xe0] sm:$0xff] 0.0
      %309 = vst [vmem:[#allocation2 + $0xe8] sm:$0x3] 0.0
      %310 = vst [vmem:[#allocation2 + $0xf0] sm:$0xff] 0.0
      %311 = vst [vmem:[#allocation2 + $0xf8] sm:$0xff] 0.0
      %312 = vst [vmem:[#allocation2 + $0x100] sm:$0x3] 0.0
      %313 = vst [vmem:[#allocation2 + $0x108] sm:$0xff] 0.0
      %314 = vst [vmem:[#allocation2 + $0x110] sm:$0xff] 0.0
      %315 = vst [vmem:[#allocation2 + $0x118] sm:$0x3] 0.0
      %316 = vst [vmem:[#allocation2 + $0x120] sm:$0xff] 0.0
      %317 = vst [vmem:[#allocation2 + $0x128] sm:$0xff] 0.0
      %318 = vst [vmem:[#allocation2 + $0x130] sm:$0x3] 0.0
      %319 = vst [vmem:[#allocation2 + $0x138] sm:$0xff] 0.0
      %320 = vst [vmem:[#allocation2 + $0x140] sm:$0xff] 0.0
      %321 = vst [vmem:[#allocation2 + $0x148] sm:$0x3] 0.0
      %322 = vst [vmem:[#allocation2 + $0x150] sm:$0xff] 0.0
      %323 = vst [vmem:[#allocation2 + $0x158] sm:$0xff] 0.0
      %324 = vst [vmem:[#allocation2 + $0x160] sm:$0x3] 0.0
      %325 = vst [vmem:[#allocation2 + $0x168] sm:$0xff] 0.0
      %326 = vst [vmem:[#allocation2 + $0x170] sm:$0xff] 0.0
      %327 = vst [vmem:[#allocation2 + $0x178] sm:$0x3] 0.0
      %328 = vst [vmem:[#allocation2 + $0x180] sm:$0xff] 0.0
      %329 = vst [vmem:[#allocation2 + $0x188] sm:$0xff] 0.0
      %330 = vst [vmem:[#allocation2 + $0x190] sm:$0x3] 0.0
      %331 = vst [vmem:[#allocation2 + $0x198] sm:$0xff] 0.0
      %332 = vst [vmem:[#allocation2 + $0x1a0] sm:$0xff] 0.0
      %333 = vst [vmem:[#allocation2 + $0x1a8] sm:$0x3] 0.0
      %334 = vst [vmem:[#allocation3] sm:$0xff] 0.0
      %335 = vst [vmem:[#allocation3 + $0x8] sm:$0xff] 0.0
      %336 = vst [vmem:[#allocation3 + $0x10] sm:$0x3] 0.0
      %337 = vst [vmem:[#allocation3 + $0x18] sm:$0xff] 0.0
      %338 = vst [vmem:[#allocation3 + $0x20] sm:$0xff] 0.0
      %339 = vst [vmem:[#allocation3 + $0x28] sm:$0x3] 0.0
      %340 = vst [vmem:[#allocation3 + $0x30] sm:$0xff] 0.0
      %341 = vst [vmem:[#allocation3 + $0x38] sm:$0xff] 0.0
      %342 = vst [vmem:[#allocation3 + $0x40] sm:$0x3] 0.0
      %343 = vst [vmem:[#allocation3 + $0x48] sm:$0xff] 0.0
      %344 = vst [vmem:[#allocation3 + $0x50] sm:$0xff] 0.0
      %345 = vst [vmem:[#allocation3 + $0x58] sm:$0x3] 0.0
      %346 = vst [vmem:[#allocation3 + $0x60] sm:$0xff] 0.0
      %347 = vst [vmem:[#allocation3 + $0x68] sm:$0xff] 0.0
      %348 = vst [vmem:[#allocation3 + $0x70] sm:$0x3] 0.0
      %349 = vst [vmem:[#allocation3 + $0x78] sm:$0xff] 0.0
      %350 = vst [vmem:[#allocation3 + $0x80] sm:$0xff] 0.0
      %351 = vst [vmem:[#allocation3 + $0x88] sm:$0x3] 0.0
      %352 = vst [vmem:[#allocation3 + $0x90] sm:$0xff] 0.0
      %353 = vst [vmem:[#allocation3 + $0x98] sm:$0xff] 0.0
      %354 = vst [vmem:[#allocation3 + $0xa0] sm:$0x3] 0.0
      %355 = vst [vmem:[#allocation3 + $0xa8] sm:$0xff] 0.0
      %356 = vst [vmem:[#allocation3 + $0xb0] sm:$0xff] 0.0
      %357 = vst [vmem:[#allocation3 + $0xb8] sm:$0x3] 0.0
      %358 = vst [vmem:[#allocation3 + $0xc0] sm:$0xff] 0.0
      %359 = vst [vmem:[#allocation3 + $0xc8] sm:$0xff] 0.0
      %360 = vst [vmem:[#allocation3 + $0xd0] sm:$0x3] 0.0
      %361 = vst [vmem:[#allocation3 + $0xd8] sm:$0xff] 0.0
      %362 = vst [vmem:[#allocation3 + $0xe0] sm:$0xff] 0.0
      %363 = vst [vmem:[#allocation3 + $0xe8] sm:$0x3] 0.0
      %364 = vst [vmem:[#allocation3 + $0xf0] sm:$0xff] 0.0
      %365 = vst [vmem:[#allocation3 + $0xf8] sm:$0xff] 0.0
      %366 = vst [vmem:[#allocation3 + $0x100] sm:$0x3] 0.0
      %367 = vst [vmem:[#allocation3 + $0x108] sm:$0xff] 0.0
      %368 = vst [vmem:[#allocation3 + $0x110] sm:$0xff] 0.0
      %369 = vst [vmem:[#allocation3 + $0x118] sm:$0x3] 0.0
      %370 = vst [vmem:[#allocation3 + $0x120] sm:$0xff] 0.0
      %371 = vst [vmem:[#allocation3 + $0x128] sm:$0xff] 0.0
      %372 = vst [vmem:[#allocation3 + $0x130] sm:$0x3] 0.0
      %373 = vst [vmem:[#allocation3 + $0x138] sm:$0xff] 0.0
      %374 = vst [vmem:[#allocation3 + $0x140] sm:$0xff] 0.0
      %375 = vst [vmem:[#allocation3 + $0x148] sm:$0x3] 0.0
      %376 = vst [vmem:[#allocation3 + $0x150] sm:$0xff] 0.0
      %377 = vst [vmem:[#allocation3 + $0x158] sm:$0xff] 0.0
      %378 = vst [vmem:[#allocation3 + $0x160] sm:$0x3] 0.0
      %379 = vst [vmem:[#allocation3 + $0x168] sm:$0xff] 0.0
      %380 = vst [vmem:[#allocation3 + $0x170] sm:$0xff] 0.0
      %381 = vst [vmem:[#allocation3 + $0x178] sm:$0x3] 0.0
      %382 = vst [vmem:[#allocation3 + $0x180] sm:$0xff] 0.0
      %383 = vst [vmem:[#allocation3 + $0x188] sm:$0xff] 0.0
      %384 = vst [vmem:[#allocation3 + $0x190] sm:$0x3] 0.0
      %385 = vst [vmem:[#allocation3 + $0x198] sm:$0xff] 0.0
      %386 = vst [vmem:[#allocation3 + $0x1a0] sm:$0xff] 0.0
      %387 = vst [vmem:[#allocation3 + $0x1a8] sm:$0x3] 0.0
      %v388 = vld [vmem:[%s273] sm:$0xff]
      %v389 = vld [vmem:[%s273 + $0x8] sm:$0xff]
      %v390 = vld [vmem:[%s273 + $0x10] sm:$0xff]
      %v391 = vld [vmem:[%s273 + $0x18] sm:$0xff]
      %v392 = vld [vmem:[%s273 + $0x20] sm:$0xff]
      %v393 = vld [vmem:[%s273 + $0x28] sm:$0xff]
      %v394 = vld [vmem:[%s273 + $0x30] sm:$0xff]
      %v395 = vld [vmem:[%s273 + $0x38] sm:$0xff]
      %v396 = vld [vmem:[%s273 + $0x40] sm:$0xff]
      %v397 = vld [vmem:[%s273 + $0x48] sm:$0xff]
      %v398 = vld [vmem:[%s273 + $0x50] sm:$0xff]
      %v399 = vld [vmem:[%s273 + $0x58] sm:$0xff]
      %v400 = vld [vmem:[%s273 + $0x60] sm:$0xff]
      %v401 = vld [vmem:[%s273 + $0x68] sm:$0xff]
      %v402 = vld [vmem:[%s273 + $0x70] sm:$0xff]
      %v403 = vld [vmem:[%s273 + $0x78] sm:$0xff]
      %v404 = vld [vmem:[%s273 + $0x80] sm:$0xff]
      %v405 = vld [vmem:[%s273 + $0x88] sm:$0xff]
      %v406 = vld [vmem:[%s273 + $0x90] sm:$0xff]
      %v407 = vld [vmem:[%s273 + $0x98] sm:$0xff]
      %v408 = vld [vmem:[%s273 + $0xa0] sm:$0xff]
      %v409 = vld [vmem:[%s273 + $0xa8] sm:$0xff]
      %v410 = vld [vmem:[%s273 + $0xb0] sm:$0xff]
      %v411 = vld [vmem:[%s273 + $0xb8] sm:$0xff]
      %v412 = vld [vmem:[%s273 + $0xc0] sm:$0xff]
      %v413 = vld [vmem:[%s273 + $0xc8] sm:$0xff]
      %v414 = vld [vmem:[%s273 + $0xd0] sm:$0xff]
      %v415 = vld [vmem:[%s273 + $0xd8] sm:$0xff]
      %v416 = vld [vmem:[%s273 + $0xe0] sm:$0xff]
      %v417 = vld [vmem:[%s273 + $0xe8] sm:$0xff]
      %v418 = vld [vmem:[%s273 + $0xf0] sm:$0xff]
      %v419 = vld [vmem:[%s273 + $0xf8] sm:$0xff]
      %v420 = vld [vmem:[%s3] sm:$0x1]
      %v422 = vlaneseq
      %v423 = vshrl.u32 %v422, 7
      %v424 = vsub.s32 0, %v423
      %v425 = vrot.slane %v420, %v424
      %v427 = vmul.f32 %v388, %v425
      %v428 = vmul.f32 %v389, %v425
      %v429 = vmul.f32 %v390, %v425
      %v430 = vmul.f32 %v391, %v425
      %v431 = vmul.f32 %v392, %v425
      %v432 = vmul.f32 %v393, %v425
      %v433 = vmul.f32 %v394, %v425
      %v434 = vmul.f32 %v395, %v425
      %v435 = vmul.f32 %v396, %v425
      %v436 = vmul.f32 %v397, %v425
      %v437 = vmul.f32 %v398, %v425
      %v438 = vmul.f32 %v399, %v425
      %v439 = vmul.f32 %v400, %v425
      %v440 = vmul.f32 %v401, %v425
      %v441 = vmul.f32 %v402, %v425
      %v442 = vmul.f32 %v403, %v425
      %v443 = vmul.f32 %v404, %v425
      %v444 = vmul.f32 %v405, %v425
      %v445 = vmul.f32 %v406, %v425
      %v446 = vmul.f32 %v407, %v425
      %v447 = vmul.f32 %v408, %v425
      %v448 = vmul.f32 %v409, %v425
      %v449 = vmul.f32 %v410, %v425
      %v450 = vmul.f32 %v411, %v425
      %v451 = vmul.f32 %v412, %v425
      %v452 = vmul.f32 %v413, %v425
      %v453 = vmul.f32 %v414, %v425
      %v454 = vmul.f32 %v415, %v425
      %v455 = vmul.f32 %v416, %v425
      %v456 = vmul.f32 %v417, %v425
      %v457 = vmul.f32 %v418, %v425
      %v458 = vmul.f32 %v419, %v425
      %v459 = vld [vmem:[%s4] sm:$0x1]
      %v461 = vlaneseq
      %v462 = vshrl.u32 %v461, 7
      %v463 = vsub.s32 0, %v462
      %v464 = vrot.slane %v459, %v463
      %v466 = vadd.f32 %v427, %v464
      %v467 = vadd.f32 %v428, %v464
      %v468 = vadd.f32 %v429, %v464
      %v469 = vadd.f32 %v430, %v464
      %v470 = vadd.f32 %v431, %v464
      %v471 = vadd.f32 %v432, %v464
      %v472 = vadd.f32 %v433, %v464
      %v473 = vadd.f32 %v434, %v464
      %v474 = vadd.f32 %v435, %v464
      %v475 = vadd.f32 %v436, %v464
      %v476 = vadd.f32 %v437, %v464
      %v477 = vadd.f32 %v438, %v464
      %v478 = vadd.f32 %v439, %v464
      %v479 = vadd.f32 %v440, %v464
      %v480 = vadd.f32 %v441, %v464
      %v481 = vadd.f32 %v442, %v464
      %v482 = vadd.f32 %v443, %v464
      %v483 = vadd.f32 %v444, %v464
      %v484 = vadd.f32 %v445, %v464
      %v485 = vadd.f32 %v446, %v464
      %v486 = vadd.f32 %v447, %v464
      %v487 = vadd.f32 %v448, %v464
      %v488 = vadd.f32 %v449, %v464
      %v489 = vadd.f32 %v450, %v464
      %v490 = vadd.f32 %v451, %v464
      %v491 = vadd.f32 %v452, %v464
      %v492 = vadd.f32 %v453, %v464
      %v493 = vadd.f32 %v454, %v464
      %v494 = vadd.f32 %v455, %v464
      %v495 = vadd.f32 %v456, %v464
      %v496 = vadd.f32 %v457, %v464
      %v497 = vadd.f32 %v458, %v464
      %v498 = vmax.f32 %v466, 0.0
      %v499 = vmax.f32 %v467, 0.0
      %v500 = vmax.f32 %v468, 0.0
      %v501 = vmax.f32 %v469, 0.0
      %v502 = vmax.f32 %v470, 0.0
      %v503 = vmax.f32 %v471, 0.0
      %v504 = vmax.f32 %v472, 0.0
      %v505 = vmax.f32 %v473, 0.0
      %v506 = vmax.f32 %v474, 0.0
      %v507 = vmax.f32 %v475, 0.0
      %v508 = vmax.f32 %v476, 0.0
      %v509 = vmax.f32 %v477, 0.0
      %v510 = vmax.f32 %v478, 0.0
      %v511 = vmax.f32 %v479, 0.0
      %v512 = vmax.f32 %v480, 0.0
      %v513 = vmax.f32 %v481, 0.0
      %v514 = vmax.f32 %v482, 0.0
      %v515 = vmax.f32 %v483, 0.0
      %v516 = vmax.f32 %v484, 0.0
      %v517 = vmax.f32 %v485, 0.0
      %v518 = vmax.f32 %v486, 0.0
      %v519 = vmax.f32 %v487, 0.0
      %v520 = vmax.f32 %v488, 0.0
      %v521 = vmax.f32 %v489, 0.0
      %v522 = vmax.f32 %v490, 0.0
      %v523 = vmax.f32 %v491, 0.0
      %v524 = vmax.f32 %v492, 0.0
      %v525 = vmax.f32 %v493, 0.0
      %v526 = vmax.f32 %v494, 0.0
      %v527 = vmax.f32 %v495, 0.0
      %v528 = vmax.f32 %v496, 0.0
      %v529 = vmax.f32 %v497, 0.0
      %s530 = scalar_lea.vmem [#allocation2], 24
      %531 = vst [vmem:[%s530 + $0x1] sm:$0xff] %v498
      %532 = vst [vmem:[%s530 + $0x9] sm:$0xff] %v499
      %533 = vst [vmem:[%s530 + $0x19] sm:$0xff] %v500
      %534 = vst [vmem:[%s530 + $0x21] sm:$0xff] %v501
      %535 = vst [vmem:[%s530 + $0x31] sm:$0xff] %v502
      %536 = vst [vmem:[%s530 + $0x39] sm:$0xff] %v503
      %537 = vst [vmem:[%s530 + $0x49] sm:$0xff] %v504
      %538 = vst [vmem:[%s530 + $0x51] sm:$0xff] %v505
      %539 = vst [vmem:[%s530 + $0x61] sm:$0xff] %v506
      %540 = vst [vmem:[%s530 + $0x69] sm:$0xff] %v507
      %541 = vst [vmem:[%s530 + $0x79] sm:$0xff] %v508
      %542 = vst [vmem:[%s530 + $0x81] sm:$0xff] %v509
      %543 = vst [vmem:[%s530 + $0x91] sm:$0xff] %v510
      %544 = vst [vmem:[%s530 + $0x99] sm:$0xff] %v511
      %545 = vst [vmem:[%s530 + $0xa9] sm:$0xff] %v512
      %546 = vst [vmem:[%s530 + $0xb1] sm:$0xff] %v513
      %547 = vst [vmem:[%s530 + $0xc1] sm:$0xff] %v514
      %548 = vst [vmem:[%s530 + $0xc9] sm:$0xff] %v515
      %549 = vst [vmem:[%s530 + $0xd9] sm:$0xff] %v516
      %550 = vst [vmem:[%s530 + $0xe1] sm:$0xff] %v517
      %551 = vst [vmem:[%s530 + $0xf1] sm:$0xff] %v518
      %552 = vst [vmem:[%s530 + $0xf9] sm:$0xff] %v519
      %553 = vst [vmem:[%s530 + $0x109] sm:$0xff] %v520
      %554 = vst [vmem:[%s530 + $0x111] sm:$0xff] %v521
      %555 = vst [vmem:[%s530 + $0x121] sm:$0xff] %v522
      %556 = vst [vmem:[%s530 + $0x129] sm:$0xff] %v523
      %557 = vst [vmem:[%s530 + $0x139] sm:$0xff] %v524
      %558 = vst [vmem:[%s530 + $0x141] sm:$0xff] %v525
      %559 = vst [vmem:[%s530 + $0x151] sm:$0xff] %v526
      %560 = vst [vmem:[%s530 + $0x159] sm:$0xff] %v527
      %561 = vst [vmem:[%s530 + $0x169] sm:$0xff] %v528
      %562 = vst [vmem:[%s530 + $0x171] sm:$0xff] %v529
      %v563 = vld [vmem:[#allocation2] sm:$0xff]
      %v564 = vld [vmem:[#allocation2 + $0x8] sm:$0xff]
      %v565 = vld [vmem:[#allocation2 + $0x18] sm:$0xff]
      %v566 = vld [vmem:[#allocation2 + $0x20] sm:$0xff]
      %v567 = vld [vmem:[#allocation2 + $0x30] sm:$0xff]
      %v568 = vld [vmem:[#allocation2 + $0x38] sm:$0xff]
      %v569 = vld [vmem:[#allocation2 + $0x48] sm:$0xff]
      %v570 = vld [vmem:[#allocation2 + $0x50] sm:$0xff]
      %v571 = vld [vmem:[#allocation2 + $0x60] sm:$0xff]
      %v572 = vld [vmem:[#allocation2 + $0x68] sm:$0xff]
      %v573 = vld [vmem:[#allocation2 + $0x78] sm:$0xff]
      %v574 = vld [vmem:[#allocation2 + $0x80] sm:$0xff]
      %v575 = vld [vmem:[#allocation2 + $0x90] sm:$0xff]
      %v576 = vld [vmem:[#allocation2 + $0x98] sm:$0xff]
      %v577 = vld [vmem:[#allocation2 + $0xa8] sm:$0xff]
      %v578 = vld [vmem:[#allocation2 + $0xb0] sm:$0xff]
      %v579 = vld [vmem:[#allocation2 + $0xc0] sm:$0xff]
      %v580 = vld [vmem:[#allocation2 + $0xc8] sm:$0xff]
      %v581 = vld [vmem:[#allocation2 + $0xd8] sm:$0xff]
      %v582 = vld [vmem:[#allocation2 + $0xe0] sm:$0xff]
      %v583 = vld [vmem:[#allocation2 + $0xf0] sm:$0xff]
      %v584 = vld [vmem:[#allocation2 + $0xf8] sm:$0xff]
      %v585 = vld [vmem:[#allocation2 + $0x108] sm:$0xff]
      %v586 = vld [vmem:[#allocation2 + $0x110] sm:$0xff]
      %v587 = vld [vmem:[#allocation2 + $0x120] sm:$0xff]
      %v588 = vld [vmem:[#allocation2 + $0x128] sm:$0xff]
      %v589 = vld [vmem:[#allocation2 + $0x138] sm:$0xff]
      %v590 = vld [vmem:[#allocation2 + $0x140] sm:$0xff]
      %v591 = vld [vmem:[#allocation2 + $0x150] sm:$0xff]
      %v592 = vld [vmem:[#allocation2 + $0x158] sm:$0xff]
      %v593 = vld [vmem:[#allocation2 + $0x168] sm:$0xff]
      %v594 = vld [vmem:[#allocation2 + $0x170] sm:$0xff]
      %v595 = vpack.c.bf16 %v564, %v563
      %v596 = vpack.c.bf16 %v566, %v565
      %v597 = vpack.c.bf16 %v568, %v567
      %v598 = vpack.c.bf16 %v570, %v569
      %v599 = vpack.c.bf16 %v572, %v571
      %v600 = vpack.c.bf16 %v574, %v573
      %v601 = vpack.c.bf16 %v576, %v575
      %v602 = vpack.c.bf16 %v578, %v577
      %v603 = vpack.c.bf16 %v580, %v579
      %v604 = vpack.c.bf16 %v582, %v581
      %v605 = vpack.c.bf16 %v584, %v583
      %v606 = vpack.c.bf16 %v586, %v585
      %v607 = vpack.c.bf16 %v588, %v587
      %v608 = vpack.c.bf16 %v590, %v589
      %v609 = vpack.c.bf16 %v592, %v591
      %v610 = vpack.c.bf16 %v594, %v593
      %v611 = vld [vmem:[%s1] sm:$0xf]
      %v612 = vld [vmem:[%s1 + $0x4] sm:$0xf]
      %v613 = vld [vmem:[%s1 + $0x8] sm:$0xf]
      %v614 = vld [vmem:[%s1 + $0xc] sm:$0xf]
      %v615 = vld [vmem:[%s1 + $0x10] sm:$0xf]
      %v616 = vld [vmem:[%s1 + $0x14] sm:$0xf]
      %v617 = vld [vmem:[%s1 + $0x18] sm:$0xf]
      %v618 = vld [vmem:[%s1 + $0x1c] sm:$0xf]
      %v619 = vld [vmem:[%s1 + $0x20] sm:$0xf]
      %v620 = vld [vmem:[%s1 + $0x24] sm:$0xf]
      %v621 = vld [vmem:[%s1 + $0x28] sm:$0xf]
      %v622 = vld [vmem:[%s1 + $0x2c] sm:$0xf]
      %v623 = vld [vmem:[%s1 + $0x30] sm:$0xf]
      %v624 = vld [vmem:[%s1 + $0x34] sm:$0xf]
      %v625 = vld [vmem:[%s1 + $0x38] sm:$0xf]
      %v626 = vld [vmem:[%s1 + $0x3c] sm:$0xf]
      %v627 = vld [vmem:[#allocation2 + $0x1] sm:$0xff]
      %v628 = vld [vmem:[#allocation2 + $0x9] sm:$0xff]
      %v629 = vld [vmem:[#allocation2 + $0x19] sm:$0xff]
      %v630 = vld [vmem:[#allocation2 + $0x21] sm:$0xff]
      %v631 = vld [vmem:[#allocation2 + $0x31] sm:$0xff]
      %v632 = vld [vmem:[#allocation2 + $0x39] sm:$0xff]
      %v633 = vld [vmem:[#allocation2 + $0x49] sm:$0xff]
      %v634 = vld [vmem:[#allocation2 + $0x51] sm:$0xff]
      %v635 = vld [vmem:[#allocation2 + $0x61] sm:$0xff]
      %v636 = vld [vmem:[#allocation2 + $0x69] sm:$0xff]
      %v637 = vld [vmem:[#allocation2 + $0x79] sm:$0xff]
      %v638 = vld [vmem:[#allocation2 + $0x81] sm:$0xff]
      %v639 = vld [vmem:[#allocation2 + $0x91] sm:$0xff]
      %v640 = vld [vmem:[#allocation2 + $0x99] sm:$0xff]
      %v641 = vld [vmem:[#allocation2 + $0xa9] sm:$0xff]
      %v642 = vld [vmem:[#allocation2 + $0xb1] sm:$0xff]
      %v643 = vld [vmem:[#allocation2 + $0xc1] sm:$0xff]
      %v644 = vld [vmem:[#allocation2 + $0xc9] sm:$0xff]
      %v645 = vld [vmem:[#allocation2 + $0xd9] sm:$0xff]
      %v646 = vld [vmem:[#allocation2 + $0xe1] sm:$0xff]
      %v647 = vld [vmem:[#allocation2 + $0xf1] sm:$0xff]
      %v648 = vld [vmem:[#allocation2 + $0xf9] sm:$0xff]
      %v649 = vld [vmem:[#allocation2 + $0x109] sm:$0xff]
      %v650 = vld [vmem:[#allocation2 + $0x111] sm:$0xff]
      %v651 = vld [vmem:[#allocation2 + $0x121] sm:$0xff]
      %v652 = vld [vmem:[#allocation2 + $0x129] sm:$0xff]
      %v653 = vld [vmem:[#allocation2 + $0x139] sm:$0xff]
      %v654 = vld [vmem:[#allocation2 + $0x141] sm:$0xff]
      %v655 = vld [vmem:[#allocation2 + $0x151] sm:$0xff]
      %v656 = vld [vmem:[#allocation2 + $0x159] sm:$0xff]
      %v657 = vld [vmem:[#allocation2 + $0x169] sm:$0xff]
      %v658 = vld [vmem:[#allocation2 + $0x171] sm:$0xff]
      %v659 = vpack.c.bf16 %v628, %v627
      %v660 = vpack.c.bf16 %v630, %v629
      %v661 = vpack.c.bf16 %v632, %v631
      %v662 = vpack.c.bf16 %v634, %v633
      %v663 = vpack.c.bf16 %v636, %v635
      %v664 = vpack.c.bf16 %v638, %v637
      %v665 = vpack.c.bf16 %v640, %v639
      %v666 = vpack.c.bf16 %v642, %v641
      %v667 = vpack.c.bf16 %v644, %v643
      %v668 = vpack.c.bf16 %v646, %v645
      %v669 = vpack.c.bf16 %v648, %v647
      %v670 = vpack.c.bf16 %v650, %v649
      %v671 = vpack.c.bf16 %v652, %v651
      %v672 = vpack.c.bf16 %v654, %v653
      %v673 = vpack.c.bf16 %v656, %v655
      %v674 = vpack.c.bf16 %v658, %v657
      %s675 = scalar_lea.vmem %s1, 64
      %v676 = vld [vmem:[%s675] sm:$0xf]
      %v677 = vld [vmem:[%s675 + $0x4] sm:$0xf]
      %v678 = vld [vmem:[%s675 + $0x8] sm:$0xf]
      %v679 = vld [vmem:[%s675 + $0xc] sm:$0xf]
      %v680 = vld [vmem:[%s675 + $0x10] sm:$0xf]
      %v681 = vld [vmem:[%s675 + $0x14] sm:$0xf]
      %v682 = vld [vmem:[%s675 + $0x18] sm:$0xf]
      %v683 = vld [vmem:[%s675 + $0x1c] sm:$0xf]
      %v684 = vld [vmem:[%s675 + $0x20] sm:$0xf]
      %v685 = vld [vmem:[%s675 + $0x24] sm:$0xf]
      %v686 = vld [vmem:[%s675 + $0x28] sm:$0xf]
      %v687 = vld [vmem:[%s675 + $0x2c] sm:$0xf]
      %v688 = vld [vmem:[%s675 + $0x30] sm:$0xf]
      %v689 = vld [vmem:[%s675 + $0x34] sm:$0xf]
      %v690 = vld [vmem:[%s675 + $0x38] sm:$0xf]
      %v691 = vld [vmem:[%s675 + $0x3c] sm:$0xf]
      %v708 = vunpack.c.l.b16 %v676
      %v709 = vunpack.c.l.b16 %v677
      %v710 = vunpack.c.l.b16 %v678
      %v711 = vunpack.c.l.b16 %v679
      %v712 = vunpack.c.l.b16 %v680
      %v713 = vunpack.c.l.b16 %v681
      %v714 = vunpack.c.l.b16 %v682
      %v715 = vunpack.c.l.b16 %v683
      %v716 = vunpack.c.l.b16 %v684
      %v717 = vunpack.c.l.b16 %v685
      %v718 = vunpack.c.l.b16 %v686
      %v719 = vunpack.c.l.b16 %v687
      %v720 = vunpack.c.l.b16 %v688
      %v721 = vunpack.c.l.b16 %v689
      %v722 = vunpack.c.l.b16 %v690
      %v723 = vunpack.c.l.b16 %v691
      %v724 = vpack.c.b16 %v709, %v708
      %v725 = vpack.c.b16 %v711, %v710
      %v726 = vpack.c.b16 %v713, %v712
      %v727 = vpack.c.b16 %v715, %v714
      %v728 = vpack.c.b16 %v717, %v716
      %v729 = vpack.c.b16 %v719, %v718
      %v730 = vpack.c.b16 %v721, %v720
      %v731 = vpack.c.b16 %v723, %v722
      %740 = vmatprep.subr.bf16.mxu0 0
      %741 = vmatpush1.bf16.msra.mxu0 %v724
      %742 = vmatprep.subr.bf16.mxu0 0
      %743 = vmatpush1.bf16.msra.mxu0 %v725
      %744 = vmatprep.subr.bf16.mxu0 0
      %745 = vmatpush1.bf16.msra.mxu0 %v726
      %746 = vmatprep.subr.bf16.mxu0 0
      %747 = vmatpush1.bf16.msra.mxu0 %v727
      %748 = vmatprep.subr.bf16.mxu0 0
      %749 = vmatpush1.bf16.msra.mxu0 %v728
      %750 = vmatprep.subr.bf16.mxu0 0
      %751 = vmatpush1.bf16.msra.mxu0 %v729
      %752 = vmatprep.subr.bf16.mxu0 0
      %753 = vmatpush1.bf16.msra.mxu0 %v730
      %754 = vmatprep.subr.bf16.mxu0 0
      %755 = vmatpush1.bf16.msra.mxu0 %v731
      %756 = vmatprep.subr.bf16.mxu0 0
      %757 = vmatpush1.bf16.msra.mxu0 0
      %758 = vmatprep.subr.bf16.mxu0 0
      %759 = vmatpush1.bf16.msra.mxu0 0
      %760 = vmatprep.subr.bf16.mxu0 0
      %761 = vmatpush1.bf16.msra.mxu0 0
      %762 = vmatprep.subr.bf16.mxu0 0
      %763 = vmatpush1.bf16.msra.mxu0 0
      %764 = vmatprep.subr.bf16.mxu0 0
      %765 = vmatpush1.bf16.msra.mxu0 0
      %766 = vmatprep.subr.bf16.mxu0 0
      %767 = vmatpush1.bf16.msra.mxu0 0
      %768 = vmatprep.subr.bf16.mxu0 0
      %769 = vmatpush1.bf16.msra.mxu0 0
      %770 = vmatprep.subr.bf16.mxu0 0
      %771 = vmatpush1.bf16.msra.mxu0 0
      %772 = vmatprep.mubr.bf16.mxu0 0
      %773 = vmatmul.mubr.bf16.gmra.mrb[0].mxu0 %v659
      %v774 = vpop.f32.mrb[0].mxu0
      %v775 = vadd.f32 0.0, %v774
      %v776 = vpop.f32.mrb[0].mxu0
      %v777 = vpop.f32.mrb[0].mxu0
      %v778 = vadd.f32 0.0, %v777
      %v779 = vpop.f32.mrb[0].mxu0
      %780 = vmatprep.mubr.bf16.mxu0 0
      %781 = vmatmul.mubr.bf16.gmra.mrb[0].mxu0 %v660
      %v782 = vpop.f32.mrb[0].mxu0
      %v783 = vadd.f32 0.0, %v782
      %v784 = vpop.f32.mrb[0].mxu0
      %v785 = vpop.f32.mrb[0].mxu0
      %v786 = vadd.f32 0.0, %v785
      %v787 = vpop.f32.mrb[0].mxu0
      %788 = vmatprep.mubr.bf16.mxu0 0
      %789 = vmatmul.mubr.bf16.gmra.mrb[0].mxu0 %v661
      %v790 = vpop.f32.mrb[0].mxu0
      %v791 = vadd.f32 0.0, %v790
      %v792 = vpop.f32.mrb[0].mxu0
      %v793 = vpop.f32.mrb[0].mxu0
      %v794 = vadd.f32 0.0, %v793
      %v795 = vpop.f32.mrb[0].mxu0
      %796 = vmatprep.mubr.bf16.mxu0 0
      %797 = vmatmul.mubr.bf16.gmra.mrb[0].mxu0 %v662
      %v798 = vpop.f32.mrb[0].mxu0
      %v799 = vadd.f32 0.0, %v798
      %v800 = vpop.f32.mrb[0].mxu0
      %v801 = vpop.f32.mrb[0].mxu0
      %v802 = vadd.f32 0.0, %v801
      %v803 = vpop.f32.mrb[0].mxu0
      %804 = vmatprep.mubr.bf16.mxu0 0
      %805 = vmatmul.mubr.bf16.gmra.mrb[0].mxu0 %v663
      %v806 = vpop.f32.mrb[0].mxu0
      %v807 = vadd.f32 0.0, %v806
      %v808 = vpop.f32.mrb[0].mxu0
      %v809 = vpop.f32.mrb[0].mxu0
      %v810 = vadd.f32 0.0, %v809
      %v811 = vpop.f32.mrb[0].mxu0
      %812 = vmatprep.mubr.bf16.mxu0 0
      %813 = vmatmul.mubr.bf16.gmra.mrb[0].mxu0 %v664
      %v814 = vpop.f32.mrb[0].mxu0
      %v815 = vadd.f32 0.0, %v814
      %v816 = vpop.f32.mrb[0].mxu0
      %v817 = vpop.f32.mrb[0].mxu0
      %v818 = vadd.f32 0.0, %v817
      %v819 = vpop.f32.mrb[0].mxu0
      %820 = vmatprep.mubr.bf16.mxu0 0
      %821 = vmatmul.mubr.bf16.gmra.mrb[0].mxu0 %v665
      %v822 = vpop.f32.mrb[0].mxu0
      %v823 = vadd.f32 0.0, %v822
      %v824 = vpop.f32.mrb[0].mxu0
      %v825 = vpop.f32.mrb[0].mxu0
      %v826 = vadd.f32 0.0, %v825
      %v827 = vpop.f32.mrb[0].mxu0
      %828 = vmatprep.mubr.bf16.mxu0 0
      %829 = vmatmul.mubr.bf16.gmra.mrb[0].mxu0 %v666
      %v830 = vpop.f32.mrb[0].mxu0
      %v831 = vadd.f32 0.0, %v830
      %v832 = vpop.f32.mrb[0].mxu0
      %v833 = vpop.f32.mrb[0].mxu0
      %v834 = vadd.f32 0.0, %v833
      %v835 = vpop.f32.mrb[0].mxu0
      %836 = vmatprep.mubr.bf16.mxu0 0
      %837 = vmatmul.mubr.bf16.gmra.mrb[0].mxu0 %v667
      %v838 = vpop.f32.mrb[0].mxu0
      %v839 = vadd.f32 0.0, %v838
      %v840 = vpop.f32.mrb[0].mxu0
      %v841 = vpop.f32.mrb[0].mxu0
      %v842 = vadd.f32 0.0, %v841
      %v843 = vpop.f32.mrb[0].mxu0
      %844 = vmatprep.mubr.bf16.mxu0 0
      %845 = vmatmul.mubr.bf16.gmra.mrb[0].mxu0 %v668
      %v846 = vpop.f32.mrb[0].mxu0
      %v847 = vadd.f32 0.0, %v846
      %v848 = vpop.f32.mrb[0].mxu0
      %v849 = vpop.f32.mrb[0].mxu0
      %v850 = vadd.f32 0.0, %v849
      %v851 = vpop.f32.mrb[0].mxu0
      %852 = vmatprep.mubr.bf16.mxu0 0
      %853 = vmatmul.mubr.bf16.gmra.mrb[0].mxu0 %v669
      %v854 = vpop.f32.mrb[0].mxu0
      %v855 = vadd.f32 0.0, %v854
      %v856 = vpop.f32.mrb[0].mxu0
      %v857 = vpop.f32.mrb[0].mxu0
      %v858 = vadd.f32 0.0, %v857
      %v859 = vpop.f32.mrb[0].mxu0
      %860 = vmatprep.mubr.bf16.mxu0 0
      %861 = vmatmul.mubr.bf16.gmra.mrb[0].mxu0 %v670
      %v862 = vpop.f32.mrb[0].mxu0
      %v863 = vadd.f32 0.0, %v862
      %v864 = vpop.f32.mrb[0].mxu0
      %v865 = vpop.f32.mrb[0].mxu0
      %v866 = vadd.f32 0.0, %v865
      %v867 = vpop.f32.mrb[0].mxu0
      %868 = vmatprep.mubr.bf16.mxu0 0
      %869 = vmatmul.mubr.bf16.gmra.mrb[0].mxu0 %v671
      %v870 = vpop.f32.mrb[0].mxu0
      %v871 = vadd.f32 0.0, %v870
      %v872 = vpop.f32.mrb[0].mxu0
      %v873 = vpop.f32.mrb[0].mxu0
      %v874 = vadd.f32 0.0, %v873
      %v875 = vpop.f32.mrb[0].mxu0
      %876 = vmatprep.mubr.bf16.mxu0 0
      %877 = vmatmul.mubr.bf16.gmra.mrb[0].mxu0 %v672
      %v878 = vpop.f32.mrb[0].mxu0
      %v879 = vadd.f32 0.0, %v878
      %v880 = vpop.f32.mrb[0].mxu0
      %v881 = vpop.f32.mrb[0].mxu0
      %v882 = vadd.f32 0.0, %v881
      %v883 = vpop.f32.mrb[0].mxu0
      %884 = vmatprep.mubr.bf16.mxu0 0
      %885 = vmatmul.mubr.bf16.gmra.mrb[0].mxu0 %v673
      %v886 = vpop.f32.mrb[0].mxu0
      %v887 = vadd.f32 0.0, %v886
      %v888 = vpop.f32.mrb[0].mxu0
      %v889 = vpop.f32.mrb[0].mxu0
      %v890 = vadd.f32 0.0, %v889
      %v891 = vpop.f32.mrb[0].mxu0
      %892 = vmatprep.mubr.bf16.mxu0 0
      %893 = vmatmul.mubr.bf16.gmra.mrb[0].mxu0 %v674
      %v894 = vpop.f32.mrb[0].mxu0
      %v895 = vadd.f32 0.0, %v894
      %v896 = vpop.f32.mrb[0].mxu0
      %v897 = vpop.f32.mrb[0].mxu0
      %v898 = vadd.f32 0.0, %v897
      %v899 = vpop.f32.mrb[0].mxu0
      %900 = vdwg.mxu0
      %v917 = vunpack.c.l.b16 %v611
      %v918 = vunpack.c.l.b16 %v612
      %v919 = vunpack.c.l.b16 %v613
      %v920 = vunpack.c.l.b16 %v614
      %v921 = vunpack.c.l.b16 %v615
      %v922 = vunpack.c.l.b16 %v616
      %v923 = vunpack.c.l.b16 %v617
      %v924 = vunpack.c.l.b16 %v618
      %v925 = vunpack.c.l.b16 %v619
      %v926 = vunpack.c.l.b16 %v620
      %v927 = vunpack.c.l.b16 %v621
      %v928 = vunpack.c.l.b16 %v622
      %v929 = vunpack.c.l.b16 %v623
      %v930 = vunpack.c.l.b16 %v624
      %v931 = vunpack.c.l.b16 %v625
      %v932 = vunpack.c.l.b16 %v626
      %v933 = vpack.c.b16 %v918, %v917
      %v934 = vpack.c.b16 %v920, %v919
      %v935 = vpack.c.b16 %v922, %v921
      %v936 = vpack.c.b16 %v924, %v923
      %v937 = vpack.c.b16 %v926, %v925
      %v938 = vpack.c.b16 %v928, %v927
      %v939 = vpack.c.b16 %v930, %v929
      %v940 = vpack.c.b16 %v932, %v931
      %949 = vmatprep.subr.bf16.mxu0 0
      %950 = vmatpush1.bf16.msra.mxu0 %v933
      %951 = vmatprep.subr.bf16.mxu0 0
      %952 = vmatpush1.bf16.msra.mxu0 %v934
      %953 = vmatprep.subr.bf16.mxu0 0
      %954 = vmatpush1.bf16.msra.mxu0 %v935
      %955 = vmatprep.subr.bf16.mxu0 0
      %956 = vmatpush1.bf16.msra.mxu0 %v936
      %957 = vmatprep.subr.bf16.mxu0 0
      %958 = vmatpush1.bf16.msra.mxu0 %v937
      %959 = vmatprep.subr.bf16.mxu0 0
      %960 = vmatpush1.bf16.msra.mxu0 %v938
      %961 = vmatprep.subr.bf16.mxu0 0
      %962 = vmatpush1.bf16.msra.mxu0 %v939
      %963 = vmatprep.subr.bf16.mxu0 0
      %964 = vmatpush1.bf16.msra.mxu0 %v940
      %965 = vmatprep.subr.bf16.mxu0 0
      %966 = vmatpush1.bf16.msra.mxu0 0
      %967 = vmatprep.subr.bf16.mxu0 0
      %968 = vmatpush1.bf16.msra.mxu0 0
      %969 = vmatprep.subr.bf16.mxu0 0
      %970 = vmatpush1.bf16.msra.mxu0 0
      %971 = vmatprep.subr.bf16.mxu0 0
      %972 = vmatpush1.bf16.msra.mxu0 0
      %973 = vmatprep.subr.bf16.mxu0 0
      %974 = vmatpush1.bf16.msra.mxu0 0
      %975 = vmatprep.subr.bf16.mxu0 0
      %976 = vmatpush1.bf16.msra.mxu0 0
      %977 = vmatprep.subr.bf16.mxu0 0
      %978 = vmatpush1.bf16.msra.mxu0 0
      %979 = vmatprep.subr.bf16.mxu0 0
      %980 = vmatpush1.bf16.msra.mxu0 0
      %981 = vmatprep.mubr.bf16.mxu0 0
      %982 = vmatmul.mubr.bf16.gmra.mrb[0].mxu0 %v595
      %v983 = vpop.f32.mrb[0].mxu0
      %v984 = vadd.f32 %v775, %v983
      %v985 = vpop.f32.mrb[0].mxu0
      %v986 = vpop.f32.mrb[0].mxu0
      %v987 = vadd.f32 %v778, %v986
      %v988 = vpop.f32.mrb[0].mxu0
      %989 = vmatprep.mubr.bf16.mxu0 0
      %990 = vmatmul.mubr.bf16.gmra.mrb[0].mxu0 %v596
      %v991 = vpop.f32.mrb[0].mxu0
      %v992 = vadd.f32 %v783, %v991
      %v993 = vpop.f32.mrb[0].mxu0
      %v994 = vpop.f32.mrb[0].mxu0
      %v995 = vadd.f32 %v786, %v994
      %v996 = vpop.f32.mrb[0].mxu0
      %997 = vmatprep.mubr.bf16.mxu0 0
      %998 = vmatmul.mubr.bf16.gmra.mrb[0].mxu0 %v597
      %v999 = vpop.f32.mrb[0].mxu0
      %v1000 = vadd.f32 %v791, %v999
      %v1001 = vpop.f32.mrb[0].mxu0
      %v1002 = vpop.f32.mrb[0].mxu0
      %v1003 = vadd.f32 %v794, %v1002
      %v1004 = vpop.f32.mrb[0].mxu0
      %1005 = vmatprep.mubr.bf16.mxu0 0
      %1006 = vmatmul.mubr.bf16.gmra.mrb[0].mxu0 %v598
      %v1007 = vpop.f32.mrb[0].mxu0
      %v1008 = vadd.f32 %v799, %v1007
      %v1009 = vpop.f32.mrb[0].mxu0
      %v1010 = vpop.f32.mrb[0].mxu0
      %v1011 = vadd.f32 %v802, %v1010
      %v1012 = vpop.f32.mrb[0].mxu0
      %1013 = vmatprep.mubr.bf16.mxu0 0
      %1014 = vmatmul.mubr.bf16.gmra.mrb[0].mxu0 %v599
      %v1015 = vpop.f32.mrb[0].mxu0
      %v1016 = vadd.f32 %v807, %v1015
      %v1017 = vpop.f32.mrb[0].mxu0
      %v1018 = vpop.f32.mrb[0].mxu0
      %v1019 = vadd.f32 %v810, %v1018
      %v1020 = vpop.f32.mrb[0].mxu0
      %1021 = vmatprep.mubr.bf16.mxu0 0
      %1022 = vmatmul.mubr.bf16.gmra.mrb[0].mxu0 %v600
      %v1023 = vpop.f32.mrb[0].mxu0
      %v1024 = vadd.f32 %v815, %v1023
      %v1025 = vpop.f32.mrb[0].mxu0
      %v1026 = vpop.f32.mrb[0].mxu0
      %v1027 = vadd.f32 %v818, %v1026
      %v1028 = vpop.f32.mrb[0].mxu0
      %1029 = vmatprep.mubr.bf16.mxu0 0
      %1030 = vmatmul.mubr.bf16.gmra.mrb[0].mxu0 %v601
      %v1031 = vpop.f32.mrb[0].mxu0
      %v1032 = vadd.f32 %v823, %v1031
      %v1033 = vpop.f32.mrb[0].mxu0
      %v1034 = vpop.f32.mrb[0].mxu0
      %v1035 = vadd.f32 %v826, %v1034
      %v1036 = vpop.f32.mrb[0].mxu0
      %1037 = vmatprep.mubr.bf16.mxu0 0
      %1038 = vmatmul.mubr.bf16.gmra.mrb[0].mxu0 %v602
      %v1039 = vpop.f32.mrb[0].mxu0
      %v1040 = vadd.f32 %v831, %v1039
      %v1041 = vpop.f32.mrb[0].mxu0
      %v1042 = vpop.f32.mrb[0].mxu0
      %v1043 = vadd.f32 %v834, %v1042
      %v1044 = vpop.f32.mrb[0].mxu0
      %1045 = vmatprep.mubr.bf16.mxu0 0
      %1046 = vmatmul.mubr.bf16.gmra.mrb[0].mxu0 %v603
      %v1047 = vpop.f32.mrb[0].mxu0
      %v1048 = vadd.f32 %v839, %v1047
      %v1049 = vpop.f32.mrb[0].mxu0
      %v1050 = vpop.f32.mrb[0].mxu0
      %v1051 = vadd.f32 %v842, %v1050
      %v1052 = vpop.f32.mrb[0].mxu0
      %1053 = vmatprep.mubr.bf16.mxu0 0
      %1054 = vmatmul.mubr.bf16.gmra.mrb[0].mxu0 %v604
      %v1055 = vpop.f32.mrb[0].mxu0
      %v1056 = vadd.f32 %v847, %v1055
      %v1057 = vpop.f32.mrb[0].mxu0
      %v1058 = vpop.f32.mrb[0].mxu0
      %v1059 = vadd.f32 %v850, %v1058
      %v1060 = vpop.f32.mrb[0].mxu0
      %1061 = vmatprep.mubr.bf16.mxu0 0
      %1062 = vmatmul.mubr.bf16.gmra.mrb[0].mxu0 %v605
      %v1063 = vpop.f32.mrb[0].mxu0
      %v1064 = vadd.f32 %v855, %v1063
      %v1065 = vpop.f32.mrb[0].mxu0
      %v1066 = vpop.f32.mrb[0].mxu0
      %v1067 = vadd.f32 %v858, %v1066
      %v1068 = vpop.f32.mrb[0].mxu0
      %1069 = vmatprep.mubr.bf16.mxu0 0
      %1070 = vmatmul.mubr.bf16.gmra.mrb[0].mxu0 %v606
      %v1071 = vpop.f32.mrb[0].mxu0
      %v1072 = vadd.f32 %v863, %v1071
      %v1073 = vpop.f32.mrb[0].mxu0
      %v1074 = vpop.f32.mrb[0].mxu0
      %v1075 = vadd.f32 %v866, %v1074
      %v1076 = vpop.f32.mrb[0].mxu0
      %1077 = vmatprep.mubr.bf16.mxu0 0
      %1078 = vmatmul.mubr.bf16.gmra.mrb[0].mxu0 %v607
      %v1079 = vpop.f32.mrb[0].mxu0
      %v1080 = vadd.f32 %v871, %v1079
      %v1081 = vpop.f32.mrb[0].mxu0
      %v1082 = vpop.f32.mrb[0].mxu0
      %v1083 = vadd.f32 %v874, %v1082
      %v1084 = vpop.f32.mrb[0].mxu0
      %1085 = vmatprep.mubr.bf16.mxu0 0
      %1086 = vmatmul.mubr.bf16.gmra.mrb[0].mxu0 %v608
      %v1087 = vpop.f32.mrb[0].mxu0
      %v1088 = vadd.f32 %v879, %v1087
      %v1089 = vpop.f32.mrb[0].mxu0
      %v1090 = vpop.f32.mrb[0].mxu0
      %v1091 = vadd.f32 %v882, %v1090
      %v1092 = vpop.f32.mrb[0].mxu0
      %1093 = vmatprep.mubr.bf16.mxu0 0
      %1094 = vmatmul.mubr.bf16.gmra.mrb[0].mxu0 %v609
      %v1095 = vpop.f32.mrb[0].mxu0
      %v1096 = vadd.f32 %v887, %v1095
      %v1097 = vpop.f32.mrb[0].mxu0
      %v1098 = vpop.f32.mrb[0].mxu0
      %v1099 = vadd.f32 %v890, %v1098
      %v1100 = vpop.f32.mrb[0].mxu0
      %1101 = vmatprep.mubr.bf16.mxu0 0
      %1102 = vmatmul.mubr.bf16.gmra.mrb[0].mxu0 %v610
      %v1103 = vpop.f32.mrb[0].mxu0
      %v1104 = vadd.f32 %v895, %v1103
      %v1105 = vpop.f32.mrb[0].mxu0
      %v1106 = vpop.f32.mrb[0].mxu0
      %v1107 = vadd.f32 %v898, %v1106
      %v1108 = vpop.f32.mrb[0].mxu0
      %1109 = vdwg.mxu0
      %v1110 = vld [vmem:[#allocation2 + $0x2] sm:$0xff]
      %v1111 = vld [vmem:[#allocation2 + $0xa] sm:$0xff]
      %v1112 = vld [vmem:[#allocation2 + $0x1a] sm:$0xff]
      %v1113 = vld [vmem:[#allocation2 + $0x22] sm:$0xff]
      %v1114 = vld [vmem:[#allocation2 + $0x32] sm:$0xff]
      %v1115 = vld [vmem:[#allocation2 + $0x3a] sm:$0xff]
      %v1116 = vld [vmem:[#allocation2 + $0x4a] sm:$0xff]
      %v1117 = vld [vmem:[#allocation2 + $0x52] sm:$0xff]
      %v1118 = vld [vmem:[#allocation2 + $0x62] sm:$0xff]
      %v1119 = vld [vmem:[#allocation2 + $0x6a] sm:$0xff]
      %v1120 = vld [vmem:[#allocation2 + $0x7a] sm:$0xff]
      %v1121 = vld [vmem:[#allocation2 + $0x82] sm:$0xff]
      %v1122 = vld [vmem:[#allocation2 + $0x92] sm:$0xff]
      %v1123 = vld [vmem:[#allocation2 + $0x9a] sm:$0xff]
      %v1124 = vld [vmem:[#allocation2 + $0xaa] sm:$0xff]
      %v1125 = vld [vmem:[#allocation2 + $0xb2] sm:$0xff]
      %v1126 = vld [vmem:[#allocation2 + $0xc2] sm:$0xff]
      %v1127 = vld [vmem:[#allocation2 + $0xca] sm:$0xff]
      %v1128 = vld [vmem:[#allocation2 + $0xda] sm:$0xff]
      %v1129 = vld [vmem:[#allocation2 + $0xe2] sm:$0xff]
      %v1130 = vld [vmem:[#allocation2 + $0xf2] sm:$0xff]
      %v1131 = vld [vmem:[#allocation2 + $0xfa] sm:$0xff]
      %v1132 = vld [vmem:[#allocation2 + $0x10a] sm:$0xff]
      %v1133 = vld [vmem:[#allocation2 + $0x112] sm:$0xff]
      %v1134 = vld [vmem:[#allocation2 + $0x122] sm:$0xff]
      %v1135 = vld [vmem:[#allocation2 + $0x12a] sm:$0xff]
      %v1136 = vld [vmem:[#allocation2 + $0x13a] sm:$0xff]
      %v1137 = vld [vmem:[#allocation2 + $0x142] sm:$0xff]
      %v1138 = vld [vmem:[#allocation2 + $0x152] sm:$0xff]
      %v1139 = vld [vmem:[#allocation2 + $0x15a] sm:$0xff]
      %v1140 = vld [vmem:[#allocation2 + $0x16a] sm:$0xff]
      %v1141 = vld [vmem:[#allocation2 + $0x172] sm:$0xff]
      %v1142 = vpack.c.bf16 %v1111, %v1110
      %v1143 = vpack.c.bf16 %v1113, %v1112
      %v1144 = vpack.c.bf16 %v1115, %v1114
      %v1145 = vpack.c.bf16 %v1117, %v1116
      %v1146 = vpack.c.bf16 %v1119, %v1118
      %v1147 = vpack.c.bf16 %v1121, %v1120
      %v1148 = vpack.c.bf16 %v1123, %v1122
      %v1149 = vpack.c.bf16 %v1125, %v1124
      %v1150 = vpack.c.bf16 %v1127, %v1126
      %v1151 = vpack.c.bf16 %v1129, %v1128
      %v1152 = vpack.c.bf16 %v1131, %v1130
      %v1153 = vpack.c.bf16 %v1133, %v1132
      %v1154 = vpack.c.bf16 %v1135, %v1134
      %v1155 = vpack.c.bf16 %v1137, %v1136
      %v1156 = vpack.c.bf16 %v1139, %v1138
      %v1157 = vpack.c.bf16 %v1141, %v1140
      %s1158 = scalar_lea.vmem %s1, 128
      %v1159 = vld [vmem:[%s1158] sm:$0xf]
      %v1160 = vld [vmem:[%s1158 + $0x4] sm:$0xf]
      %v1161 = vld [vmem:[%s1158 + $0x8] sm:$0xf]
      %v1162 = vld [vmem:[%s1158 + $0xc] sm:$0xf]
      %v1163 = vld [vmem:[%s1158 + $0x10] sm:$0xf]
      %v1164 = vld [vmem:[%s1158 + $0x14] sm:$0xf]
      %v1165 = vld [vmem:[%s1158 + $0x18] sm:$0xf]
      %v1166 = vld [vmem:[%s1158 + $0x1c] sm:$0xf]
      %v1167 = vld [vmem:[%s1158 + $0x20] sm:$0xf]
      %v1168 = vld [vmem:[%s1158 + $0x24] sm:$0xf]
      %v1169 = vld [vmem:[%s1158 + $0x28] sm:$0xf]
      %v1170 = vld [vmem:[%s1158 + $0x2c] sm:$0xf]
      %v1171 = vld [vmem:[%s1158 + $0x30] sm:$0xf]
      %v1172 = vld [vmem:[%s1158 + $0x34] sm:$0xf]
      %v1173 = vld [vmem:[%s1158 + $0x38] sm:$0xf]
      %v1174 = vld [vmem:[%s1158 + $0x3c] sm:$0xf]
      %v1191 = vunpack.c.l.b16 %v1159
      %v1192 = vunpack.c.l.b16 %v1160
      %v1193 = vunpack.c.l.b16 %v1161
      %v1194 = vunpack.c.l.b16 %v1162
      %v1195 = vunpack.c.l.b16 %v1163
      %v1196 = vunpack.c.l.b16 %v1164
      %v1197 = vunpack.c.l.b16 %v1165
      %v1198 = vunpack.c.l.b16 %v1166
      %v1199 = vunpack.c.l.b16 %v1167
      %v1200 = vunpack.c.l.b16 %v1168
      %v1201 = vunpack.c.l.b16 %v1169
      %v1202 = vunpack.c.l.b16 %v1170
      %v1203 = vunpack.c.l.b16 %v1171
      %v1204 = vunpack.c.l.b16 %v1172
      %v1205 = vunpack.c.l.b16 %v1173
      %v1206 = vunpack.c.l.b16 %v1174
      %v1207 = vpack.c.b16 %v1192, %v1191
      %v1208 = vpack.c.b16 %v1194, %v1193
      %v1209 = vpack.c.b16 %v1196, %v1195
      %v1210 = vpack.c.b16 %v1198, %v1197
      %v1211 = vpack.c.b16 %v1200, %v1199
      %v1212 = vpack.c.b16 %v1202, %v1201
      %v1213 = vpack.c.b16 %v1204, %v1203
      %v1214 = vpack.c.b16 %v1206, %v1205
      %1223 = vmatprep.subr.bf16.mxu0 0
      %1224 = vmatpush1.bf16.msra.mxu0 %v1207
      %1225 = vmatprep.subr.bf16.mxu0 0
      %1226 = vmatpush1.bf16.msra.mxu0 %v1208
      %1227 = vmatprep.subr.bf16.mxu0 0
      %1228 = vmatpush1.bf16.msra.mxu0 %v1209
      %1229 = vmatprep.subr.bf16.mxu0 0
      %1230 = vmatpush1.bf16.msra.mxu0 %v1210
      %1231 = vmatprep.subr.bf16.mxu0 0
      %1232 = vmatpush1.bf16.msra.mxu0 %v1211
      %1233 = vmatprep.subr.bf16.mxu0 0
      %1234 = vmatpush1.bf16.msra.mxu0 %v1212
      %1235 = vmatprep.subr.bf16.mxu0 0
      %1236 = vmatpush1.bf16.msra.mxu0 %v1213
      %1237 = vmatprep.subr.bf16.mxu0 0
      %1238 = vmatpush1.bf16.msra.mxu0 %v1214
      %1239 = vmatprep.subr.bf16.mxu0 0
      %1240 = vmatpush1.bf16.msra.mxu0 0
      %1241 = vmatprep.subr.bf16.mxu0 0
      %1242 = vmatpush1.bf16.msra.mxu0 0
      %1243 = vmatprep.subr.bf16.mxu0 0
      %1244 = vmatpush1.bf16.msra.mxu0 0
      %1245 = vmatprep.subr.bf16.mxu0 0
      %1246 = vmatpush1.bf16.msra.mxu0 0
      %1247 = vmatprep.subr.bf16.mxu0 0
      %1248 = vmatpush1.bf16.msra.mxu0 0
      %1249 = vmatprep.subr.bf16.mxu0 0
      %1250 = vmatpush1.bf16.msra.mxu0 0
      %1251 = vmatprep.subr.bf16.mxu0 0
      %1252 = vmatpush1.bf16.msra.mxu0 0
      %1253 = vmatprep.subr.bf16.mxu0 0
      %1254 = vmatpush1.bf16.msra.mxu0 0
      %1255 = vmatprep.mubr.bf16.mxu0 0
      %1256 = vmatmul.mubr.bf16.gmra.mrb[0].mxu0 %v1142
      %v1257 = vpop.f32.mrb[0].mxu0
      %v1258 = vadd.f32 0.0, %v1257
      %v1259 = vpop.f32.mrb[0].mxu0
      %v1260 = vpop.f32.mrb[0].mxu0
      %v1261 = vadd.f32 0.0, %v1260
      %v1262 = vpop.f32.mrb[0].mxu0
      %1263 = vmatprep.mubr.bf16.mxu0 0
      %1264 = vmatmul.mubr.bf16.gmra.mrb[0].mxu0 %v1143
      %v1265 = vpop.f32.mrb[0].mxu0
      %v1266 = vadd.f32 0.0, %v1265
      %v1267 = vpop.f32.mrb[0].mxu0
      %v1268 = vpop.f32.mrb[0].mxu0
      %v1269 = vadd.f32 0.0, %v1268
      %v1270 = vpop.f32.mrb[0].mxu0
      %1271 = vmatprep.mubr.bf16.mxu0 0
      %1272 = vmatmul.mubr.bf16.gmra.mrb[0].mxu0 %v1144
      %v1273 = vpop.f32.mrb[0].mxu0
      %v1274 = vadd.f32 0.0, %v1273
      %v1275 = vpop.f32.mrb[0].mxu0
      %v1276 = vpop.f32.mrb[0].mxu0
      %v1277 = vadd.f32 0.0, %v1276
      %v1278 = vpop.f32.mrb[0].mxu0
      %1279 = vmatprep.mubr.bf16.mxu0 0
      %1280 = vmatmul.mubr.bf16.gmra.mrb[0].mxu0 %v1145
      %v1281 = vpop.f32.mrb[0].mxu0
      %v1282 = vadd.f32 0.0, %v1281
      %v1283 = vpop.f32.mrb[0].mxu0
      %v1284 = vpop.f32.mrb[0].mxu0
      %v1285 = vadd.f32 0.0, %v1284
      %v1286 = vpop.f32.mrb[0].mxu0
      %1287 = vmatprep.mubr.bf16.mxu0 0
      %1288 = vmatmul.mubr.bf16.gmra.mrb[0].mxu0 %v1146
      %v1289 = vpop.f32.mrb[0].mxu0
      %v1290 = vadd.f32 0.0, %v1289
      %v1291 = vpop.f32.mrb[0].mxu0
      %v1292 = vpop.f32.mrb[0].mxu0
      %v1293 = vadd.f32 0.0, %v1292
      %v1294 = vpop.f32.mrb[0].mxu0
      %1295 = vmatprep.mubr.bf16.mxu0 0
      %1296 = vmatmul.mubr.bf16.gmra.mrb[0].mxu0 %v1147
      %v1297 = vpop.f32.mrb[0].mxu0
      %v1298 = vadd.f32 0.0, %v1297
      %v1299 = vpop.f32.mrb[0].mxu0
      %v1300 = vpop.f32.mrb[0].mxu0
      %v1301 = vadd.f32 0.0, %v1300
      %v1302 = vpop.f32.mrb[0].mxu0
      %1303 = vmatprep.mubr.bf16.mxu0 0
      %1304 = vmatmul.mubr.bf16.gmra.mrb[0].mxu0 %v1148
      %v1305 = vpop.f32.mrb[0].mxu0
      %v1306 = vadd.f32 0.0, %v1305
      %v1307 = vpop.f32.mrb[0].mxu0
      %v1308 = vpop.f32.mrb[0].mxu0
      %v1309 = vadd.f32 0.0, %v1308
      %v1310 = vpop.f32.mrb[0].mxu0
      %1311 = vmatprep.mubr.bf16.mxu0 0
      %1312 = vmatmul.mubr.bf16.gmra.mrb[0].mxu0 %v1149
      %v1313 = vpop.f32.mrb[0].mxu0
      %v1314 = vadd.f32 0.0, %v1313
      %v1315 = vpop.f32.mrb[0].mxu0
      %v1316 = vpop.f32.mrb[0].mxu0
      %v1317 = vadd.f32 0.0, %v1316
      %v1318 = vpop.f32.mrb[0].mxu0
      %1319 = vmatprep.mubr.bf16.mxu0 0
      %1320 = vmatmul.mubr.bf16.gmra.mrb[0].mxu0 %v1150
      %v1321 = vpop.f32.mrb[0].mxu0
      %v1322 = vadd.f32 0.0, %v1321
      %v1323 = vpop.f32.mrb[0].mxu0
      %v1324 = vpop.f32.mrb[0].mxu0
      %v1325 = vadd.f32 0.0, %v1324
      %v1326 = vpop.f32.mrb[0].mxu0
      %1327 = vmatprep.mubr.bf16.mxu0 0
      %1328 = vmatmul.mubr.bf16.gmra.mrb[0].mxu0 %v1151
      %v1329 = vpop.f32.mrb[0].mxu0
      %v1330 = vadd.f32 0.0, %v1329
      %v1331 = vpop.f32.mrb[0].mxu0
      %v1332 = vpop.f32.mrb[0].mxu0
      %v1333 = vadd.f32 0.0, %v1332
      %v1334 = vpop.f32.mrb[0].mxu0
      %1335 = vmatprep.mubr.bf16.mxu0 0
      %1336 = vmatmul.mubr.bf16.gmra.mrb[0].mxu0 %v1152
      %v1337 = vpop.f32.mrb[0].mxu0
      %v1338 = vadd.f32 0.0, %v1337
      %v1339 = vpop.f32.mrb[0].mxu0
      %v1340 = vpop.f32.mrb[0].mxu0
      %v1341 = vadd.f32 0.0, %v1340
      %v1342 = vpop.f32.mrb[0].mxu0
      %1343 = vmatprep.mubr.bf16.mxu0 0
      %1344 = vmatmul.mubr.bf16.gmra.mrb[0].mxu0 %v1153
      %v1345 = vpop.f32.mrb[0].mxu0
      %v1346 = vadd.f32 0.0, %v1345
      %v1347 = vpop.f32.mrb[0].mxu0
      %v1348 = vpop.f32.mrb[0].mxu0
      %v1349 = vadd.f32 0.0, %v1348
      %v1350 = vpop.f32.mrb[0].mxu0
      %1351 = vmatprep.mubr.bf16.mxu0 0
      %1352 = vmatmul.mubr.bf16.gmra.mrb[0].mxu0 %v1154
      %v1353 = vpop.f32.mrb[0].mxu0
      %v1354 = vadd.f32 0.0, %v1353
      %v1355 = vpop.f32.mrb[0].mxu0
      %v1356 = vpop.f32.mrb[0].mxu0
      %v1357 = vadd.f32 0.0, %v1356
      %v1358 = vpop.f32.mrb[0].mxu0
      %1359 = vmatprep.mubr.bf16.mxu0 0
      %1360 = vmatmul.mubr.bf16.gmra.mrb[0].mxu0 %v1155
      %v1361 = vpop.f32.mrb[0].mxu0
      %v1362 = vadd.f32 0.0, %v1361
      %v1363 = vpop.f32.mrb[0].mxu0
      %v1364 = vpop.f32.mrb[0].mxu0
      %v1365 = vadd.f32 0.0, %v1364
      %v1366 = vpop.f32.mrb[0].mxu0
      %1367 = vmatprep.mubr.bf16.mxu0 0
      %1368 = vmatmul.mubr.bf16.gmra.mrb[0].mxu0 %v1156
      %v1369 = vpop.f32.mrb[0].mxu0
      %v1370 = vadd.f32 0.0, %v1369
      %v1371 = vpop.f32.mrb[0].mxu0
      %v1372 = vpop.f32.mrb[0].mxu0
      %v1373 = vadd.f32 0.0, %v1372
      %v1374 = vpop.f32.mrb[0].mxu0
      %1375 = vmatprep.mubr.bf16.mxu0 0
      %1376 = vmatmul.mubr.bf16.gmra.mrb[0].mxu0 %v1157
      %v1377 = vpop.f32.mrb[0].mxu0
      %v1378 = vadd.f32 0.0, %v1377
      %v1379 = vpop.f32.mrb[0].mxu0
      %v1380 = vpop.f32.mrb[0].mxu0
      %v1381 = vadd.f32 0.0, %v1380
      %v1382 = vpop.f32.mrb[0].mxu0
      %1383 = vdwg.mxu0
      %v1384 = vadd.f32 %v984, %v1258
      %v1385 = vadd.f32 %v987, %v1261
      %v1386 = vadd.f32 %v992, %v1266
      %v1387 = vadd.f32 %v995, %v1269
      %v1388 = vadd.f32 %v1000, %v1274
      %v1389 = vadd.f32 %v1003, %v1277
      %v1390 = vadd.f32 %v1008, %v1282
      %v1391 = vadd.f32 %v1011, %v1285
      %v1392 = vadd.f32 %v1016, %v1290
      %v1393 = vadd.f32 %v1019, %v1293
      %v1394 = vadd.f32 %v1024, %v1298
      %v1395 = vadd.f32 %v1027, %v1301
      %v1396 = vadd.f32 %v1032, %v1306
      %v1397 = vadd.f32 %v1035, %v1309
      %v1398 = vadd.f32 %v1040, %v1314
      %v1399 = vadd.f32 %v1043, %v1317
      %v1400 = vadd.f32 %v1048, %v1322
      %v1401 = vadd.f32 %v1051, %v1325
      %v1402 = vadd.f32 %v1056, %v1330
      %v1403 = vadd.f32 %v1059, %v1333
      %v1404 = vadd.f32 %v1064, %v1338
      %v1405 = vadd.f32 %v1067, %v1341
      %v1406 = vadd.f32 %v1072, %v1346
      %v1407 = vadd.f32 %v1075, %v1349
      %v1408 = vadd.f32 %v1080, %v1354
      %v1409 = vadd.f32 %v1083, %v1357
      %v1410 = vadd.f32 %v1088, %v1362
      %v1411 = vadd.f32 %v1091, %v1365
      %v1412 = vadd.f32 %v1096, %v1370
      %v1413 = vadd.f32 %v1099, %v1373
      %v1414 = vadd.f32 %v1104, %v1378
      %v1415 = vadd.f32 %v1107, %v1381
      %v1416 = vld [vmem:[%s530] sm:$0xff]
      %v1417 = vld [vmem:[%s530 + $0x8] sm:$0xff]
      %v1418 = vld [vmem:[%s530 + $0x18] sm:$0xff]
      %v1419 = vld [vmem:[%s530 + $0x20] sm:$0xff]
      %v1420 = vld [vmem:[%s530 + $0x30] sm:$0xff]
      %v1421 = vld [vmem:[%s530 + $0x38] sm:$0xff]
      %v1422 = vld [vmem:[%s530 + $0x48] sm:$0xff]
      %v1423 = vld [vmem:[%s530 + $0x50] sm:$0xff]
      %v1424 = vld [vmem:[%s530 + $0x60] sm:$0xff]
      %v1425 = vld [vmem:[%s530 + $0x68] sm:$0xff]
      %v1426 = vld [vmem:[%s530 + $0x78] sm:$0xff]
      %v1427 = vld [vmem:[%s530 + $0x80] sm:$0xff]
      %v1428 = vld [vmem:[%s530 + $0x90] sm:$0xff]
      %v1429 = vld [vmem:[%s530 + $0x98] sm:$0xff]
      %v1430 = vld [vmem:[%s530 + $0xa8] sm:$0xff]
      %v1431 = vld [vmem:[%s530 + $0xb0] sm:$0xff]
      %v1432 = vld [vmem:[%s530 + $0xc0] sm:$0xff]
      %v1433 = vld [vmem:[%s530 + $0xc8] sm:$0xff]
      %v1434 = vld [vmem:[%s530 + $0xd8] sm:$0xff]
      %v1435 = vld [vmem:[%s530 + $0xe0] sm:$0xff]
      %v1436 = vld [vmem:[%s530 + $0xf0] sm:$0xff]
      %v1437 = vld [vmem:[%s530 + $0xf8] sm:$0xff]
      %v1438 = vld [vmem:[%s530 + $0x108] sm:$0xff]
      %v1439 = vld [vmem:[%s530 + $0x110] sm:$0xff]
      %v1440 = vld [vmem:[%s530 + $0x120] sm:$0xff]
      %v1441 = vld [vmem:[%s530 + $0x128] sm:$0xff]
      %v1442 = vld [vmem:[%s530 + $0x138] sm:$0xff]
      %v1443 = vld [vmem:[%s530 + $0x140] sm:$0xff]
      %v1444 = vld [vmem:[%s530 + $0x150] sm:$0xff]
      %v1445 = vld [vmem:[%s530 + $0x158] sm:$0xff]
      %v1446 = vld [vmem:[%s530 + $0x168] sm:$0xff]
      %v1447 = vld [vmem:[%s530 + $0x170] sm:$0xff]
      %v1448 = vpack.c.bf16 %v1417, %v1416
      %v1449 = vpack.c.bf16 %v1419, %v1418
      %v1450 = vpack.c.bf16 %v1421, %v1420
      %v1451 = vpack.c.bf16 %v1423, %v1422
      %v1452 = vpack.c.bf16 %v1425, %v1424
      %v1453 = vpack.c.bf16 %v1427, %v1426
      %v1454 = vpack.c.bf16 %v1429, %v1428
      %v1455 = vpack.c.bf16 %v1431, %v1430
      %v1456 = vpack.c.bf16 %v1433, %v1432
      %v1457 = vpack.c.bf16 %v1435, %v1434
      %v1458 = vpack.c.bf16 %v1437, %v1436
      %v1459 = vpack.c.bf16 %v1439, %v1438
      %v1460 = vpack.c.bf16 %v1441, %v1440
      %v1461 = vpack.c.bf16 %v1443, %v1442
      %v1462 = vpack.c.bf16 %v1445, %v1444
      %v1463 = vpack.c.bf16 %v1447, %v1446
      %s1464 = scalar_lea.vmem %s1, 192
      %v1465 = vld [vmem:[%s1464] sm:$0xf]
      %v1466 = vld [vmem:[%s1464 + $0x4] sm:$0xf]
      %v1467 = vld [vmem:[%s1464 + $0x8] sm:$0xf]
      %v1468 = vld [vmem:[%s1464 + $0xc] sm:$0xf]
      %v1469 = vld [vmem:[%s1464 + $0x10] sm:$0xf]
      %v1470 = vld [vmem:[%s1464 + $0x14] sm:$0xf]
      %v1471 = vld [vmem:[%s1464 + $0x18] sm:$0xf]
      %v1472 = vld [vmem:[%s1464 + $0x1c] sm:$0xf]
      %v1473 = vld [vmem:[%s1464 + $0x20] sm:$0xf]
      %v1474 = vld [vmem:[%s1464 + $0x24] sm:$0xf]
      %v1475 = vld [vmem:[%s1464 + $0x28] sm:$0xf]
      %v1476 = vld [vmem:[%s1464 + $0x2c] sm:$0xf]
      %v1477 = vld [vmem:[%s1464 + $0x30] sm:$0xf]
      %v1478 = vld [vmem:[%s1464 + $0x34] sm:$0xf]
      %v1479 = vld [vmem:[%s1464 + $0x38] sm:$0xf]
      %v1480 = vld [vmem:[%s1464 + $0x3c] sm:$0xf]
      %v1497 = vunpack.c.l.b16 %v1465
      %v1498 = vunpack.c.l.b16 %v1466
      %v1499 = vunpack.c.l.b16 %v1467
      %v1500 = vunpack.c.l.b16 %v1468
      %v1501 = vunpack.c.l.b16 %v1469
      %v1502 = vunpack.c.l.b16 %v1470
      %v1503 = vunpack.c.l.b16 %v1471
      %v1504 = vunpack.c.l.b16 %v1472
      %v1505 = vunpack.c.l.b16 %v1473
      %v1506 = vunpack.c.l.b16 %v1474
      %v1507 = vunpack.c.l.b16 %v1475
      %v1508 = vunpack.c.l.b16 %v1476
      %v1509 = vunpack.c.l.b16 %v1477
      %v1510 = vunpack.c.l.b16 %v1478
      %v1511 = vunpack.c.l.b16 %v1479
      %v1512 = vunpack.c.l.b16 %v1480
      %v1513 = vpack.c.b16 %v1498, %v1497
      %v1514 = vpack.c.b16 %v1500, %v1499
      %v1515 = vpack.c.b16 %v1502, %v1501
      %v1516 = vpack.c.b16 %v1504, %v1503
      %v1517 = vpack.c.b16 %v1506, %v1505
      %v1518 = vpack.c.b16 %v1508, %v1507
      %v1519 = vpack.c.b16 %v1510, %v1509
      %v1520 = vpack.c.b16 %v1512, %v1511
      %1529 = vmatprep.subr.bf16.mxu0 0
      %1530 = vmatpush1.bf16.msra.mxu0 %v1513
      %1531 = vmatprep.subr.bf16.mxu0 0
      %1532 = vmatpush1.bf16.msra.mxu0 %v1514
      %1533 = vmatprep.subr.bf16.mxu0 0
      %1534 = vmatpush1.bf16.msra.mxu0 %v1515
      %1535 = vmatprep.subr.bf16.mxu0 0
      %1536 = vmatpush1.bf16.msra.mxu0 %v1516
      %1537 = vmatprep.subr.bf16.mxu0 0
      %1538 = vmatpush1.bf16.msra.mxu0 %v1517
      %1539 = vmatprep.subr.bf16.mxu0 0
      %1540 = vmatpush1.bf16.msra.mxu0 %v1518
      %1541 = vmatprep.subr.bf16.mxu0 0
      %1542 = vmatpush1.bf16.msra.mxu0 %v1519
      %1543 = vmatprep.subr.bf16.mxu0 0
      %1544 = vmatpush1.bf16.msra.mxu0 %v1520
      %1545 = vmatprep.subr.bf16.mxu0 0
      %1546 = vmatpush1.bf16.msra.mxu0 0
      %1547 = vmatprep.subr.bf16.mxu0 0
      %1548 = vmatpush1.bf16.msra.mxu0 0
      %1549 = vmatprep.subr.bf16.mxu0 0
      %1550 = vmatpush1.bf16.msra.mxu0 0
      %1551 = vmatprep.subr.bf16.mxu0 0
      %1552 = vmatpush1.bf16.msra.mxu0 0
      %1553 = vmatprep.subr.bf16.mxu0 0
      %1554 = vmatpush1.bf16.msra.mxu0 0
      %1555 = vmatprep.subr.bf16.mxu0 0
      %1556 = vmatpush1.bf16.msra.mxu0 0
      %1557 = vmatprep.subr.bf16.mxu0 0
      %1558 = vmatpush1.bf16.msra.mxu0 0
      %1559 = vmatprep.subr.bf16.mxu0 0
      %1560 = vmatpush1.bf16.msra.mxu0 0
      %1561 = vmatprep.mubr.bf16.mxu0 0
      %1562 = vmatmul.mubr.bf16.gmra.mrb[0].mxu0 %v1448
      %v1563 = vpop.f32.mrb[0].mxu0
      %v1564 = vadd.f32 0.0, %v1563
      %v1565 = vpop.f32.mrb[0].mxu0
      %v1566 = vpop.f32.mrb[0].mxu0
      %v1567 = vadd.f32 0.0, %v1566
      %v1568 = vpop.f32.mrb[0].mxu0
      %1569 = vmatprep.mubr.bf16.mxu0 0
      %1570 = vmatmul.mubr.bf16.gmra.mrb[0].mxu0 %v1449
      %v1571 = vpop.f32.mrb[0].mxu0
      %v1572 = vadd.f32 0.0, %v1571
      %v1573 = vpop.f32.mrb[0].mxu0
      %v1574 = vpop.f32.mrb[0].mxu0
      %v1575 = vadd.f32 0.0, %v1574
      %v1576 = vpop.f32.mrb[0].mxu0
      %1577 = vmatprep.mubr.bf16.mxu0 0
      %1578 = vmatmul.mubr.bf16.gmra.mrb[0].mxu0 %v1450
      %v1579 = vpop.f32.mrb[0].mxu0
      %v1580 = vadd.f32 0.0, %v1579
      %v1581 = vpop.f32.mrb[0].mxu0
      %v1582 = vpop.f32.mrb[0].mxu0
      %v1583 = vadd.f32 0.0, %v1582
      %v1584 = vpop.f32.mrb[0].mxu0
      %1585 = vmatprep.mubr.bf16.mxu0 0
      %1586 = vmatmul.mubr.bf16.gmra.mrb[0].mxu0 %v1451
      %v1587 = vpop.f32.mrb[0].mxu0
      %v1588 = vadd.f32 0.0, %v1587
      %v1589 = vpop.f32.mrb[0].mxu0
      %v1590 = vpop.f32.mrb[0].mxu0
      %v1591 = vadd.f32 0.0, %v1590
      %v1592 = vpop.f32.mrb[0].mxu0
      %1593 = vmatprep.mubr.bf16.mxu0 0
      %1594 = vmatmul.mubr.bf16.gmra.mrb[0].mxu0 %v1452
      %v1595 = vpop.f32.mrb[0].mxu0
      %v1596 = vadd.f32 0.0, %v1595
      %v1597 = vpop.f32.mrb[0].mxu0
      %v1598 = vpop.f32.mrb[0].mxu0
      %v1599 = vadd.f32 0.0, %v1598
      %v1600 = vpop.f32.mrb[0].mxu0
      %1601 = vmatprep.mubr.bf16.mxu0 0
      %1602 = vmatmul.mubr.bf16.gmra.mrb[0].mxu0 %v1453
      %v1603 = vpop.f32.mrb[0].mxu0
      %v1604 = vadd.f32 0.0, %v1603
      %v1605 = vpop.f32.mrb[0].mxu0
      %v1606 = vpop.f32.mrb[0].mxu0
      %v1607 = vadd.f32 0.0, %v1606
      %v1608 = vpop.f32.mrb[0].mxu0
      %1609 = vmatprep.mubr.bf16.mxu0 0
      %1610 = vmatmul.mubr.bf16.gmra.mrb[0].mxu0 %v1454
      %v1611 = vpop.f32.mrb[0].mxu0
      %v1612 = vadd.f32 0.0, %v1611
      %v1613 = vpop.f32.mrb[0].mxu0
      %v1614 = vpop.f32.mrb[0].mxu0
      %v1615 = vadd.f32 0.0, %v1614
      %v1616 = vpop.f32.mrb[0].mxu0
      %1617 = vmatprep.mubr.bf16.mxu0 0
      %1618 = vmatmul.mubr.bf16.gmra.mrb[0].mxu0 %v1455
      %v1619 = vpop.f32.mrb[0].mxu0
      %v1620 = vadd.f32 0.0, %v1619
      %v1621 = vpop.f32.mrb[0].mxu0
      %v1622 = vpop.f32.mrb[0].mxu0
      %v1623 = vadd.f32 0.0, %v1622
      %v1624 = vpop.f32.mrb[0].mxu0
      %1625 = vmatprep.mubr.bf16.mxu0 0
      %1626 = vmatmul.mubr.bf16.gmra.mrb[0].mxu0 %v1456
      %v1627 = vpop.f32.mrb[0].mxu0
      %v1628 = vadd.f32 0.0, %v1627
      %v1629 = vpop.f32.mrb[0].mxu0
      %v1630 = vpop.f32.mrb[0].mxu0
      %v1631 = vadd.f32 0.0, %v1630
      %v1632 = vpop.f32.mrb[0].mxu0
      %1633 = vmatprep.mubr.bf16.mxu0 0
      %1634 = vmatmul.mubr.bf16.gmra.mrb[0].mxu0 %v1457
      %v1635 = vpop.f32.mrb[0].mxu0
      %v1636 = vadd.f32 0.0, %v1635
      %v1637 = vpop.f32.mrb[0].mxu0
      %v1638 = vpop.f32.mrb[0].mxu0
      %v1639 = vadd.f32 0.0, %v1638
      %v1640 = vpop.f32.mrb[0].mxu0
      %1641 = vmatprep.mubr.bf16.mxu0 0
      %1642 = vmatmul.mubr.bf16.gmra.mrb[0].mxu0 %v1458
      %v1643 = vpop.f32.mrb[0].mxu0
      %v1644 = vadd.f32 0.0, %v1643
      %v1645 = vpop.f32.mrb[0].mxu0
      %v1646 = vpop.f32.mrb[0].mxu0
      %v1647 = vadd.f32 0.0, %v1646
      %v1648 = vpop.f32.mrb[0].mxu0
      %1649 = vmatprep.mubr.bf16.mxu0 0
      %1650 = vmatmul.mubr.bf16.gmra.mrb[0].mxu0 %v1459
      %v1651 = vpop.f32.mrb[0].mxu0
      %v1652 = vadd.f32 0.0, %v1651
      %v1653 = vpop.f32.mrb[0].mxu0
      %v1654 = vpop.f32.mrb[0].mxu0
      %v1655 = vadd.f32 0.0, %v1654
      %v1656 = vpop.f32.mrb[0].mxu0
      %1657 = vmatprep.mubr.bf16.mxu0 0
      %1658 = vmatmul.mubr.bf16.gmra.mrb[0].mxu0 %v1460
      %v1659 = vpop.f32.mrb[0].mxu0
      %v1660 = vadd.f32 0.0, %v1659
      %v1661 = vpop.f32.mrb[0].mxu0
      %v1662 = vpop.f32.mrb[0].mxu0
      %v1663 = vadd.f32 0.0, %v1662
      %v1664 = vpop.f32.mrb[0].mxu0
      %1665 = vmatprep.mubr.bf16.mxu0 0
      %1666 = vmatmul.mubr.bf16.gmra.mrb[0].mxu0 %v1461
      %v1667 = vpop.f32.mrb[0].mxu0
      %v1668 = vadd.f32 0.0, %v1667
      %v1669 = vpop.f32.mrb[0].mxu0
      %v1670 = vpop.f32.mrb[0].mxu0
      %v1671 = vadd.f32 0.0, %v1670
      %v1672 = vpop.f32.mrb[0].mxu0
      %1673 = vmatprep.mubr.bf16.mxu0 0
      %1674 = vmatmul.mubr.bf16.gmra.mrb[0].mxu0 %v1462
      %v1675 = vpop.f32.mrb[0].mxu0
      %v1676 = vadd.f32 0.0, %v1675
      %v1677 = vpop.f32.mrb[0].mxu0
      %v1678 = vpop.f32.mrb[0].mxu0
      %v1679 = vadd.f32 0.0, %v1678
      %v1680 = vpop.f32.mrb[0].mxu0
      %1681 = vmatprep.mubr.bf16.mxu0 0
      %1682 = vmatmul.mubr.bf16.gmra.mrb[0].mxu0 %v1463
      %v1683 = vpop.f32.mrb[0].mxu0
      %v1684 = vadd.f32 0.0, %v1683
      %v1685 = vpop.f32.mrb[0].mxu0
      %v1686 = vpop.f32.mrb[0].mxu0
      %v1687 = vadd.f32 0.0, %v1686
      %v1688 = vpop.f32.mrb[0].mxu0
      %1689 = vdwg.mxu0
      %v1690 = vadd.f32 %v1384, %v1564
      %v1691 = vadd.f32 %v1385, %v1567
      %v1692 = vadd.f32 %v1386, %v1572
      %v1693 = vadd.f32 %v1387, %v1575
      %v1694 = vadd.f32 %v1388, %v1580
      %v1695 = vadd.f32 %v1389, %v1583
      %v1696 = vadd.f32 %v1390, %v1588
      %v1697 = vadd.f32 %v1391, %v1591
      %v1698 = vadd.f32 %v1392, %v1596
      %v1699 = vadd.f32 %v1393, %v1599
      %v1700 = vadd.f32 %v1394, %v1604
      %v1701 = vadd.f32 %v1395, %v1607
      %v1702 = vadd.f32 %v1396, %v1612
      %v1703 = vadd.f32 %v1397, %v1615
      %v1704 = vadd.f32 %v1398, %v1620
      %v1705 = vadd.f32 %v1399, %v1623
      %v1706 = vadd.f32 %v1400, %v1628
      %v1707 = vadd.f32 %v1401, %v1631
      %v1708 = vadd.f32 %v1402, %v1636
      %v1709 = vadd.f32 %v1403, %v1639
      %v1710 = vadd.f32 %v1404, %v1644
      %v1711 = vadd.f32 %v1405, %v1647
      %v1712 = vadd.f32 %v1406, %v1652
      %v1713 = vadd.f32 %v1407, %v1655
      %v1714 = vadd.f32 %v1408, %v1660
      %v1715 = vadd.f32 %v1409, %v1663
      %v1716 = vadd.f32 %v1410, %v1668
      %v1717 = vadd.f32 %v1411, %v1671
      %v1718 = vadd.f32 %v1412, %v1676
      %v1719 = vadd.f32 %v1413, %v1679
      %v1720 = vadd.f32 %v1414, %v1684
      %v1721 = vadd.f32 %v1415, %v1687
      %v1722 = vld [vmem:[%s530 + $0x1] sm:$0xff]
      %v1723 = vld [vmem:[%s530 + $0x9] sm:$0xff]
      %v1724 = vld [vmem:[%s530 + $0x19] sm:$0xff]
      %v1725 = vld [vmem:[%s530 + $0x21] sm:$0xff]
      %v1726 = vld [vmem:[%s530 + $0x31] sm:$0xff]
      %v1727 = vld [vmem:[%s530 + $0x39] sm:$0xff]
      %v1728 = vld [vmem:[%s530 + $0x49] sm:$0xff]
      %v1729 = vld [vmem:[%s530 + $0x51] sm:$0xff]
      %v1730 = vld [vmem:[%s530 + $0x61] sm:$0xff]
      %v1731 = vld [vmem:[%s530 + $0x69] sm:$0xff]
      %v1732 = vld [vmem:[%s530 + $0x79] sm:$0xff]
      %v1733 = vld [vmem:[%s530 + $0x81] sm:$0xff]
      %v1734 = vld [vmem:[%s530 + $0x91] sm:$0xff]
      %v1735 = vld [vmem:[%s530 + $0x99] sm:$0xff]
      %v1736 = vld [vmem:[%s530 + $0xa9] sm:$0xff]
      %v1737 = vld [vmem:[%s530 + $0xb1] sm:$0xff]
      %v1738 = vld [vmem:[%s530 + $0xc1] sm:$0xff]
      %v1739 = vld [vmem:[%s530 + $0xc9] sm:$0xff]
      %v1740 = vld [vmem:[%s530 + $0xd9] sm:$0xff]
      %v1741 = vld [vmem:[%s530 + $0xe1] sm:$0xff]
      %v1742 = vld [vmem:[%s530 + $0xf1] sm:$0xff]
      %v1743 = vld [vmem:[%s530 + $0xf9] sm:$0xff]
      %v1744 = vld [vmem:[%s530 + $0x109] sm:$0xff]
      %v1745 = vld [vmem:[%s530 + $0x111] sm:$0xff]
      %v1746 = vld [vmem:[%s530 + $0x121] sm:$0xff]
      %v1747 = vld [vmem:[%s530 + $0x129] sm:$0xff]
      %v1748 = vld [vmem:[%s530 + $0x139] sm:$0xff]
      %v1749 = vld [vmem:[%s530 + $0x141] sm:$0xff]
      %v1750 = vld [vmem:[%s530 + $0x151] sm:$0xff]
      %v1751 = vld [vmem:[%s530 + $0x159] sm:$0xff]
      %v1752 = vld [vmem:[%s530 + $0x169] sm:$0xff]
      %v1753 = vld [vmem:[%s530 + $0x171] sm:$0xff]
      %v1754 = vpack.c.bf16 %v1723, %v1722
      %v1755 = vpack.c.bf16 %v1725, %v1724
      %v1756 = vpack.c.bf16 %v1727, %v1726
      %v1757 = vpack.c.bf16 %v1729, %v1728
      %v1758 = vpack.c.bf16 %v1731, %v1730
      %v1759 = vpack.c.bf16 %v1733, %v1732
      %v1760 = vpack.c.bf16 %v1735, %v1734
      %v1761 = vpack.c.bf16 %v1737, %v1736
      %v1762 = vpack.c.bf16 %v1739, %v1738
      %v1763 = vpack.c.bf16 %v1741, %v1740
      %v1764 = vpack.c.bf16 %v1743, %v1742
      %v1765 = vpack.c.bf16 %v1745, %v1744
      %v1766 = vpack.c.bf16 %v1747, %v1746
      %v1767 = vpack.c.bf16 %v1749, %v1748
      %v1768 = vpack.c.bf16 %v1751, %v1750
      %v1769 = vpack.c.bf16 %v1753, %v1752
      %s1770 = scalar_lea.vmem %s1, 256
      %v1771 = vld [vmem:[%s1770] sm:$0xf]
      %v1772 = vld [vmem:[%s1770 + $0x4] sm:$0xf]
      %v1773 = vld [vmem:[%s1770 + $0x8] sm:$0xf]
      %v1774 = vld [vmem:[%s1770 + $0xc] sm:$0xf]
      %v1775 = vld [vmem:[%s1770 + $0x10] sm:$0xf]
      %v1776 = vld [vmem:[%s1770 + $0x14] sm:$0xf]
      %v1777 = vld [vmem:[%s1770 + $0x18] sm:$0xf]
      %v1778 = vld [vmem:[%s1770 + $0x1c] sm:$0xf]
      %v1779 = vld [vmem:[%s1770 + $0x20] sm:$0xf]
      %v1780 = vld [vmem:[%s1770 + $0x24] sm:$0xf]
      %v1781 = vld [vmem:[%s1770 + $0x28] sm:$0xf]
      %v1782 = vld [vmem:[%s1770 + $0x2c] sm:$0xf]
      %v1783 = vld [vmem:[%s1770 + $0x30] sm:$0xf]
      %v1784 = vld [vmem:[%s1770 + $0x34] sm:$0xf]
      %v1785 = vld [vmem:[%s1770 + $0x38] sm:$0xf]
      %v1786 = vld [vmem:[%s1770 + $0x3c] sm:$0xf]
      %v1803 = vunpack.c.l.b16 %v1771
      %v1804 = vunpack.c.l.b16 %v1772
      %v1805 = vunpack.c.l.b16 %v1773
      %v1806 = vunpack.c.l.b16 %v1774
      %v1807 = vunpack.c.l.b16 %v1775
      %v1808 = vunpack.c.l.b16 %v1776
      %v1809 = vunpack.c.l.b16 %v1777
      %v1810 = vunpack.c.l.b16 %v1778
      %v1811 = vunpack.c.l.b16 %v1779
      %v1812 = vunpack.c.l.b16 %v1780
      %v1813 = vunpack.c.l.b16 %v1781
      %v1814 = vunpack.c.l.b16 %v1782
      %v1815 = vunpack.c.l.b16 %v1783
      %v1816 = vunpack.c.l.b16 %v1784
      %v1817 = vunpack.c.l.b16 %v1785
      %v1818 = vunpack.c.l.b16 %v1786
      %v1819 = vpack.c.b16 %v1804, %v1803
      %v1820 = vpack.c.b16 %v1806, %v1805
      %v1821 = vpack.c.b16 %v1808, %v1807
      %v1822 = vpack.c.b16 %v1810, %v1809
      %v1823 = vpack.c.b16 %v1812, %v1811
      %v1824 = vpack.c.b16 %v1814, %v1813
      %v1825 = vpack.c.b16 %v1816, %v1815
      %v1826 = vpack.c.b16 %v1818, %v1817
      %1835 = vmatprep.subr.bf16.mxu0 0
      %1836 = vmatpush1.bf16.msra.mxu0 %v1819
      %1837 = vmatprep.subr.bf16.mxu0 0
      %1838 = vmatpush1.bf16.msra.mxu0 %v1820
      %1839 = vmatprep.subr.bf16.mxu0 0
      %1840 = vmatpush1.bf16.msra.mxu0 %v1821
      %1841 = vmatprep.subr.bf16.mxu0 0
      %1842 = vmatpush1.bf16.msra.mxu0 %v1822
      %1843 = vmatprep.subr.bf16.mxu0 0
      %1844 = vmatpush1.bf16.msra.mxu0 %v1823
      %1845 = vmatprep.subr.bf16.mxu0 0
      %1846 = vmatpush1.bf16.msra.mxu0 %v1824
      %1847 = vmatprep.subr.bf16.mxu0 0
      %1848 = vmatpush1.bf16.msra.mxu0 %v1825
      %1849 = vmatprep.subr.bf16.mxu0 0
      %1850 = vmatpush1.bf16.msra.mxu0 %v1826
      %1851 = vmatprep.subr.bf16.mxu0 0
      %1852 = vmatpush1.bf16.msra.mxu0 0
      %1853 = vmatprep.subr.bf16.mxu0 0
      %1854 = vmatpush1.bf16.msra.mxu0 0
      %1855 = vmatprep.subr.bf16.mxu0 0
      %1856 = vmatpush1.bf16.msra.mxu0 0
      %1857 = vmatprep.subr.bf16.mxu0 0
      %1858 = vmatpush1.bf16.msra.mxu0 0
      %1859 = vmatprep.subr.bf16.mxu0 0
      %1860 = vmatpush1.bf16.msra.mxu0 0
      %1861 = vmatprep.subr.bf16.mxu0 0
      %1862 = vmatpush1.bf16.msra.mxu0 0
      %1863 = vmatprep.subr.bf16.mxu0 0
      %1864 = vmatpush1.bf16.msra.mxu0 0
      %1865 = vmatprep.subr.bf16.mxu0 0
      %1866 = vmatpush1.bf16.msra.mxu0 0
      %1867 = vmatprep.mubr.bf16.mxu0 0
      %1868 = vmatmul.mubr.bf16.gmra.mrb[0].mxu0 %v1754
      %v1869 = vpop.f32.mrb[0].mxu0
      %v1870 = vadd.f32 0.0, %v1869
      %v1871 = vpop.f32.mrb[0].mxu0
      %v1872 = vpop.f32.mrb[0].mxu0
      %v1873 = vadd.f32 0.0, %v1872
      %v1874 = vpop.f32.mrb[0].mxu0
      %1875 = vmatprep.mubr.bf16.mxu0 0
      %1876 = vmatmul.mubr.bf16.gmra.mrb[0].mxu0 %v1755
      %v1877 = vpop.f32.mrb[0].mxu0
      %v1878 = vadd.f32 0.0, %v1877
      %v1879 = vpop.f32.mrb[0].mxu0
      %v1880 = vpop.f32.mrb[0].mxu0
      %v1881 = vadd.f32 0.0, %v1880
      %v1882 = vpop.f32.mrb[0].mxu0
      %1883 = vmatprep.mubr.bf16.mxu0 0
      %1884 = vmatmul.mubr.bf16.gmra.mrb[0].mxu0 %v1756
      %v1885 = vpop.f32.mrb[0].mxu0
      %v1886 = vadd.f32 0.0, %v1885
      %v1887 = vpop.f32.mrb[0].mxu0
      %v1888 = vpop.f32.mrb[0].mxu0
      %v1889 = vadd.f32 0.0, %v1888
      %v1890 = vpop.f32.mrb[0].mxu0
      %1891 = vmatprep.mubr.bf16.mxu0 0
      %1892 = vmatmul.mubr.bf16.gmra.mrb[0].mxu0 %v1757
      %v1893 = vpop.f32.mrb[0].mxu0
      %v1894 = vadd.f32 0.0, %v1893
      %v1895 = vpop.f32.mrb[0].mxu0
      %v1896 = vpop.f32.mrb[0].mxu0
      %v1897 = vadd.f32 0.0, %v1896
      %v1898 = vpop.f32.mrb[0].mxu0
      %1899 = vmatprep.mubr.bf16.mxu0 0
      %1900 = vmatmul.mubr.bf16.gmra.mrb[0].mxu0 %v1758
      %v1901 = vpop.f32.mrb[0].mxu0
      %v1902 = vadd.f32 0.0, %v1901
      %v1903 = vpop.f32.mrb[0].mxu0
      %v1904 = vpop.f32.mrb[0].mxu0
      %v1905 = vadd.f32 0.0, %v1904
      %v1906 = vpop.f32.mrb[0].mxu0
      %1907 = vmatprep.mubr.bf16.mxu0 0
      %1908 = vmatmul.mubr.bf16.gmra.mrb[0].mxu0 %v1759
      %v1909 = vpop.f32.mrb[0].mxu0
      %v1910 = vadd.f32 0.0, %v1909
      %v1911 = vpop.f32.mrb[0].mxu0
      %v1912 = vpop.f32.mrb[0].mxu0
      %v1913 = vadd.f32 0.0, %v1912
      %v1914 = vpop.f32.mrb[0].mxu0
      %1915 = vmatprep.mubr.bf16.mxu0 0
      %1916 = vmatmul.mubr.bf16.gmra.mrb[0].mxu0 %v1760
      %v1917 = vpop.f32.mrb[0].mxu0
      %v1918 = vadd.f32 0.0, %v1917
      %v1919 = vpop.f32.mrb[0].mxu0
      %v1920 = vpop.f32.mrb[0].mxu0
      %v1921 = vadd.f32 0.0, %v1920
      %v1922 = vpop.f32.mrb[0].mxu0
      %1923 = vmatprep.mubr.bf16.mxu0 0
      %1924 = vmatmul.mubr.bf16.gmra.mrb[0].mxu0 %v1761
      %v1925 = vpop.f32.mrb[0].mxu0
      %v1926 = vadd.f32 0.0, %v1925
      %v1927 = vpop.f32.mrb[0].mxu0
      %v1928 = vpop.f32.mrb[0].mxu0
      %v1929 = vadd.f32 0.0, %v1928
      %v1930 = vpop.f32.mrb[0].mxu0
      %1931 = vmatprep.mubr.bf16.mxu0 0
      %1932 = vmatmul.mubr.bf16.gmra.mrb[0].mxu0 %v1762
      %v1933 = vpop.f32.mrb[0].mxu0
      %v1934 = vadd.f32 0.0, %v1933
      %v1935 = vpop.f32.mrb[0].mxu0
      %v1936 = vpop.f32.mrb[0].mxu0
      %v1937 = vadd.f32 0.0, %v1936
      %v1938 = vpop.f32.mrb[0].mxu0
      %1939 = vmatprep.mubr.bf16.mxu0 0
      %1940 = vmatmul.mubr.bf16.gmra.mrb[0].mxu0 %v1763
      %v1941 = vpop.f32.mrb[0].mxu0
      %v1942 = vadd.f32 0.0, %v1941
      %v1943 = vpop.f32.mrb[0].mxu0
      %v1944 = vpop.f32.mrb[0].mxu0
      %v1945 = vadd.f32 0.0, %v1944
      %v1946 = vpop.f32.mrb[0].mxu0
      %1947 = vmatprep.mubr.bf16.mxu0 0
      %1948 = vmatmul.mubr.bf16.gmra.mrb[0].mxu0 %v1764
      %v1949 = vpop.f32.mrb[0].mxu0
      %v1950 = vadd.f32 0.0, %v1949
      %v1951 = vpop.f32.mrb[0].mxu0
      %v1952 = vpop.f32.mrb[0].mxu0
      %v1953 = vadd.f32 0.0, %v1952
      %v1954 = vpop.f32.mrb[0].mxu0
      %1955 = vmatprep.mubr.bf16.mxu0 0
      %1956 = vmatmul.mubr.bf16.gmra.mrb[0].mxu0 %v1765
      %v1957 = vpop.f32.mrb[0].mxu0
      %v1958 = vadd.f32 0.0, %v1957
      %v1959 = vpop.f32.mrb[0].mxu0
      %v1960 = vpop.f32.mrb[0].mxu0
      %v1961 = vadd.f32 0.0, %v1960
      %v1962 = vpop.f32.mrb[0].mxu0
      %1963 = vmatprep.mubr.bf16.mxu0 0
      %1964 = vmatmul.mubr.bf16.gmra.mrb[0].mxu0 %v1766
      %v1965 = vpop.f32.mrb[0].mxu0
      %v1966 = vadd.f32 0.0, %v1965
      %v1967 = vpop.f32.mrb[0].mxu0
      %v1968 = vpop.f32.mrb[0].mxu0
      %v1969 = vadd.f32 0.0, %v1968
      %v1970 = vpop.f32.mrb[0].mxu0
      %1971 = vmatprep.mubr.bf16.mxu0 0
      %1972 = vmatmul.mubr.bf16.gmra.mrb[0].mxu0 %v1767
      %v1973 = vpop.f32.mrb[0].mxu0
      %v1974 = vadd.f32 0.0, %v1973
      %v1975 = vpop.f32.mrb[0].mxu0
      %v1976 = vpop.f32.mrb[0].mxu0
      %v1977 = vadd.f32 0.0, %v1976
      %v1978 = vpop.f32.mrb[0].mxu0
      %1979 = vmatprep.mubr.bf16.mxu0 0
      %1980 = vmatmul.mubr.bf16.gmra.mrb[0].mxu0 %v1768
      %v1981 = vpop.f32.mrb[0].mxu0
      %v1982 = vadd.f32 0.0, %v1981
      %v1983 = vpop.f32.mrb[0].mxu0
      %v1984 = vpop.f32.mrb[0].mxu0
      %v1985 = vadd.f32 0.0, %v1984
      %v1986 = vpop.f32.mrb[0].mxu0
      %1987 = vmatprep.mubr.bf16.mxu0 0
      %1988 = vmatmul.mubr.bf16.gmra.mrb[0].mxu0 %v1769
      %v1989 = vpop.f32.mrb[0].mxu0
      %v1990 = vadd.f32 0.0, %v1989
      %v1991 = vpop.f32.mrb[0].mxu0
      %v1992 = vpop.f32.mrb[0].mxu0
      %v1993 = vadd.f32 0.0, %v1992
      %v1994 = vpop.f32.mrb[0].mxu0
      %1995 = vdwg.mxu0
      %v1996 = vadd.f32 %v1690, %v1870
      %v1997 = vadd.f32 %v1691, %v1873
      %v1998 = vadd.f32 %v1692, %v1878
      %v1999 = vadd.f32 %v1693, %v1881
      %v2000 = vadd.f32 %v1694, %v1886
      %v2001 = vadd.f32 %v1695, %v1889
      %v2002 = vadd.f32 %v1696, %v1894
      %v2003 = vadd.f32 %v1697, %v1897
      %v2004 = vadd.f32 %v1698, %v1902
      %v2005 = vadd.f32 %v1699, %v1905
      %v2006 = vadd.f32 %v1700, %v1910
      %v2007 = vadd.f32 %v1701, %v1913
      %v2008 = vadd.f32 %v1702, %v1918
      %v2009 = vadd.f32 %v1703, %v1921
      %v2010 = vadd.f32 %v1704, %v1926
      %v2011 = vadd.f32 %v1705, %v1929
      %v2012 = vadd.f32 %v1706, %v1934
      %v2013 = vadd.f32 %v1707, %v1937
      %v2014 = vadd.f32 %v1708, %v1942
      %v2015 = vadd.f32 %v1709, %v1945
      %v2016 = vadd.f32 %v1710, %v1950
      %v2017 = vadd.f32 %v1711, %v1953
      %v2018 = vadd.f32 %v1712, %v1958
      %v2019 = vadd.f32 %v1713, %v1961
      %v2020 = vadd.f32 %v1714, %v1966
      %v2021 = vadd.f32 %v1715, %v1969
      %v2022 = vadd.f32 %v1716, %v1974
      %v2023 = vadd.f32 %v1717, %v1977
      %v2024 = vadd.f32 %v1718, %v1982
      %v2025 = vadd.f32 %v1719, %v1985
      %v2026 = vadd.f32 %v1720, %v1990
      %v2027 = vadd.f32 %v1721, %v1993
      %v2028 = vld [vmem:[%s530 + $0x2] sm:$0xff]
      %v2029 = vld [vmem:[%s530 + $0xa] sm:$0xff]
      %v2030 = vld [vmem:[%s530 + $0x1a] sm:$0xff]
      %v2031 = vld [vmem:[%s530 + $0x22] sm:$0xff]
      %v2032 = vld [vmem:[%s530 + $0x32] sm:$0xff]
      %v2033 = vld [vmem:[%s530 + $0x3a] sm:$0xff]
      %v2034 = vld [vmem:[%s530 + $0x4a] sm:$0xff]
      %v2035 = vld [vmem:[%s530 + $0x52] sm:$0xff]
      %v2036 = vld [vmem:[%s530 + $0x62] sm:$0xff]
      %v2037 = vld [vmem:[%s530 + $0x6a] sm:$0xff]
      %v2038 = vld [vmem:[%s530 + $0x7a] sm:$0xff]
      %v2039 = vld [vmem:[%s530 + $0x82] sm:$0xff]
      %v2040 = vld [vmem:[%s530 + $0x92] sm:$0xff]
      %v2041 = vld [vmem:[%s530 + $0x9a] sm:$0xff]
      %v2042 = vld [vmem:[%s530 + $0xaa] sm:$0xff]
      %v2043 = vld [vmem:[%s530 + $0xb2] sm:$0xff]
      %v2044 = vld [vmem:[%s530 + $0xc2] sm:$0xff]
      %v2045 = vld [vmem:[%s530 + $0xca] sm:$0xff]
      %v2046 = vld [vmem:[%s530 + $0xda] sm:$0xff]
      %v2047 = vld [vmem:[%s530 + $0xe2] sm:$0xff]
      %v2048 = vld [vmem:[%s530 + $0xf2] sm:$0xff]
      %v2049 = vld [vmem:[%s530 + $0xfa] sm:$0xff]
      %v2050 = vld [vmem:[%s530 + $0x10a] sm:$0xff]
      %v2051 = vld [vmem:[%s530 + $0x112] sm:$0xff]
      %v2052 = vld [vmem:[%s530 + $0x122] sm:$0xff]
      %v2053 = vld [vmem:[%s530 + $0x12a] sm:$0xff]
      %v2054 = vld [vmem:[%s530 + $0x13a] sm:$0xff]
      %v2055 = vld [vmem:[%s530 + $0x142] sm:$0xff]
      %v2056 = vld [vmem:[%s530 + $0x152] sm:$0xff]
      %v2057 = vld [vmem:[%s530 + $0x15a] sm:$0xff]
      %v2058 = vld [vmem:[%s530 + $0x16a] sm:$0xff]
      %v2059 = vld [vmem:[%s530 + $0x172] sm:$0xff]
      %v2060 = vpack.c.bf16 %v2029, %v2028
      %v2061 = vpack.c.bf16 %v2031, %v2030
      %v2062 = vpack.c.bf16 %v2033, %v2032
      %v2063 = vpack.c.bf16 %v2035, %v2034
      %v2064 = vpack.c.bf16 %v2037, %v2036
      %v2065 = vpack.c.bf16 %v2039, %v2038
      %v2066 = vpack.c.bf16 %v2041, %v2040
      %v2067 = vpack.c.bf16 %v2043, %v2042
      %v2068 = vpack.c.bf16 %v2045, %v2044
      %v2069 = vpack.c.bf16 %v2047, %v2046
      %v2070 = vpack.c.bf16 %v2049, %v2048
      %v2071 = vpack.c.bf16 %v2051, %v2050
      %v2072 = vpack.c.bf16 %v2053, %v2052
      %v2073 = vpack.c.bf16 %v2055, %v2054
      %v2074 = vpack.c.bf16 %v2057, %v2056
      %v2075 = vpack.c.bf16 %v2059, %v2058
      %s2076 = scalar_lea.vmem %s1, 320
      %v2077 = vld [vmem:[%s2076] sm:$0xf]
      %v2078 = vld [vmem:[%s2076 + $0x4] sm:$0xf]
      %v2079 = vld [vmem:[%s2076 + $0x8] sm:$0xf]
      %v2080 = vld [vmem:[%s2076 + $0xc] sm:$0xf]
      %v2081 = vld [vmem:[%s2076 + $0x10] sm:$0xf]
      %v2082 = vld [vmem:[%s2076 + $0x14] sm:$0xf]
      %v2083 = vld [vmem:[%s2076 + $0x18] sm:$0xf]
      %v2084 = vld [vmem:[%s2076 + $0x1c] sm:$0xf]
      %v2085 = vld [vmem:[%s2076 + $0x20] sm:$0xf]
      %v2086 = vld [vmem:[%s2076 + $0x24] sm:$0xf]
      %v2087 = vld [vmem:[%s2076 + $0x28] sm:$0xf]
      %v2088 = vld [vmem:[%s2076 + $0x2c] sm:$0xf]
      %v2089 = vld [vmem:[%s2076 + $0x30] sm:$0xf]
      %v2090 = vld [vmem:[%s2076 + $0x34] sm:$0xf]
      %v2091 = vld [vmem:[%s2076 + $0x38] sm:$0xf]
      %v2092 = vld [vmem:[%s2076 + $0x3c] sm:$0xf]
      %v2109 = vunpack.c.l.b16 %v2077
      %v2110 = vunpack.c.l.b16 %v2078
      %v2111 = vunpack.c.l.b16 %v2079
      %v2112 = vunpack.c.l.b16 %v2080
      %v2113 = vunpack.c.l.b16 %v2081
      %v2114 = vunpack.c.l.b16 %v2082
      %v2115 = vunpack.c.l.b16 %v2083
      %v2116 = vunpack.c.l.b16 %v2084
      %v2117 = vunpack.c.l.b16 %v2085
      %v2118 = vunpack.c.l.b16 %v2086
      %v2119 = vunpack.c.l.b16 %v2087
      %v2120 = vunpack.c.l.b16 %v2088
      %v2121 = vunpack.c.l.b16 %v2089
      %v2122 = vunpack.c.l.b16 %v2090
      %v2123 = vunpack.c.l.b16 %v2091
      %v2124 = vunpack.c.l.b16 %v2092
      %v2125 = vpack.c.b16 %v2110, %v2109
      %v2126 = vpack.c.b16 %v2112, %v2111
      %v2127 = vpack.c.b16 %v2114, %v2113
      %v2128 = vpack.c.b16 %v2116, %v2115
      %v2129 = vpack.c.b16 %v2118, %v2117
      %v2130 = vpack.c.b16 %v2120, %v2119
      %v2131 = vpack.c.b16 %v2122, %v2121
      %v2132 = vpack.c.b16 %v2124, %v2123
      %2141 = vmatprep.subr.bf16.mxu0 0
      %2142 = vmatpush1.bf16.msra.mxu0 %v2125
      %2143 = vmatprep.subr.bf16.mxu0 0
      %2144 = vmatpush1.bf16.msra.mxu0 %v2126
      %2145 = vmatprep.subr.bf16.mxu0 0
      %2146 = vmatpush1.bf16.msra.mxu0 %v2127
      %2147 = vmatprep.subr.bf16.mxu0 0
      %2148 = vmatpush1.bf16.msra.mxu0 %v2128
      %2149 = vmatprep.subr.bf16.mxu0 0
      %2150 = vmatpush1.bf16.msra.mxu0 %v2129
      %2151 = vmatprep.subr.bf16.mxu0 0
      %2152 = vmatpush1.bf16.msra.mxu0 %v2130
      %2153 = vmatprep.subr.bf16.mxu0 0
      %2154 = vmatpush1.bf16.msra.mxu0 %v2131
      %2155 = vmatprep.subr.bf16.mxu0 0
      %2156 = vmatpush1.bf16.msra.mxu0 %v2132
      %2157 = vmatprep.subr.bf16.mxu0 0
      %2158 = vmatpush1.bf16.msra.mxu0 0
      %2159 = vmatprep.subr.bf16.mxu0 0
      %2160 = vmatpush1.bf16.msra.mxu0 0
      %2161 = vmatprep.subr.bf16.mxu0 0
      %2162 = vmatpush1.bf16.msra.mxu0 0
      %2163 = vmatprep.subr.bf16.mxu0 0
      %2164 = vmatpush1.bf16.msra.mxu0 0
      %2165 = vmatprep.subr.bf16.mxu0 0
      %2166 = vmatpush1.bf16.msra.mxu0 0
      %2167 = vmatprep.subr.bf16.mxu0 0
      %2168 = vmatpush1.bf16.msra.mxu0 0
      %2169 = vmatprep.subr.bf16.mxu0 0
      %2170 = vmatpush1.bf16.msra.mxu0 0
      %2171 = vmatprep.subr.bf16.mxu0 0
      %2172 = vmatpush1.bf16.msra.mxu0 0
      %2173 = vmatprep.mubr.bf16.mxu0 0
      %2174 = vmatmul.mubr.bf16.gmra.mrb[0].mxu0 %v2060
      %v2175 = vpop.f32.mrb[0].mxu0
      %v2176 = vadd.f32 0.0, %v2175
      %v2177 = vpop.f32.mrb[0].mxu0
      %v2178 = vpop.f32.mrb[0].mxu0
      %v2179 = vadd.f32 0.0, %v2178
      %v2180 = vpop.f32.mrb[0].mxu0
      %2181 = vmatprep.mubr.bf16.mxu0 0
      %2182 = vmatmul.mubr.bf16.gmra.mrb[0].mxu0 %v2061
      %v2183 = vpop.f32.mrb[0].mxu0
      %v2184 = vadd.f32 0.0, %v2183
      %v2185 = vpop.f32.mrb[0].mxu0
      %v2186 = vpop.f32.mrb[0].mxu0
      %v2187 = vadd.f32 0.0, %v2186
      %v2188 = vpop.f32.mrb[0].mxu0
      %2189 = vmatprep.mubr.bf16.mxu0 0
      %2190 = vmatmul.mubr.bf16.gmra.mrb[0].mxu0 %v2062
      %v2191 = vpop.f32.mrb[0].mxu0
      %v2192 = vadd.f32 0.0, %v2191
      %v2193 = vpop.f32.mrb[0].mxu0
      %v2194 = vpop.f32.mrb[0].mxu0
      %v2195 = vadd.f32 0.0, %v2194
      %v2196 = vpop.f32.mrb[0].mxu0
      %2197 = vmatprep.mubr.bf16.mxu0 0
      %2198 = vmatmul.mubr.bf16.gmra.mrb[0].mxu0 %v2063
      %v2199 = vpop.f32.mrb[0].mxu0
      %v2200 = vadd.f32 0.0, %v2199
      %v2201 = vpop.f32.mrb[0].mxu0
      %v2202 = vpop.f32.mrb[0].mxu0
      %v2203 = vadd.f32 0.0, %v2202
      %v2204 = vpop.f32.mrb[0].mxu0
      %2205 = vmatprep.mubr.bf16.mxu0 0
      %2206 = vmatmul.mubr.bf16.gmra.mrb[0].mxu0 %v2064
      %v2207 = vpop.f32.mrb[0].mxu0
      %v2208 = vadd.f32 0.0, %v2207
      %v2209 = vpop.f32.mrb[0].mxu0
      %v2210 = vpop.f32.mrb[0].mxu0
      %v2211 = vadd.f32 0.0, %v2210
      %v2212 = vpop.f32.mrb[0].mxu0
      %2213 = vmatprep.mubr.bf16.mxu0 0
      %2214 = vmatmul.mubr.bf16.gmra.mrb[0].mxu0 %v2065
      %v2215 = vpop.f32.mrb[0].mxu0
      %v2216 = vadd.f32 0.0, %v2215
      %v2217 = vpop.f32.mrb[0].mxu0
      %v2218 = vpop.f32.mrb[0].mxu0
      %v2219 = vadd.f32 0.0, %v2218
      %v2220 = vpop.f32.mrb[0].mxu0
      %2221 = vmatprep.mubr.bf16.mxu0 0
      %2222 = vmatmul.mubr.bf16.gmra.mrb[0].mxu0 %v2066
      %v2223 = vpop.f32.mrb[0].mxu0
      %v2224 = vadd.f32 0.0, %v2223
      %v2225 = vpop.f32.mrb[0].mxu0
      %v2226 = vpop.f32.mrb[0].mxu0
      %v2227 = vadd.f32 0.0, %v2226
      %v2228 = vpop.f32.mrb[0].mxu0
      %2229 = vmatprep.mubr.bf16.mxu0 0
      %2230 = vmatmul.mubr.bf16.gmra.mrb[0].mxu0 %v2067
      %v2231 = vpop.f32.mrb[0].mxu0
      %v2232 = vadd.f32 0.0, %v2231
      %v2233 = vpop.f32.mrb[0].mxu0
      %v2234 = vpop.f32.mrb[0].mxu0
      %v2235 = vadd.f32 0.0, %v2234
      %v2236 = vpop.f32.mrb[0].mxu0
      %2237 = vmatprep.mubr.bf16.mxu0 0
      %2238 = vmatmul.mubr.bf16.gmra.mrb[0].mxu0 %v2068
      %v2239 = vpop.f32.mrb[0].mxu0
      %v2240 = vadd.f32 0.0, %v2239
      %v2241 = vpop.f32.mrb[0].mxu0
      %v2242 = vpop.f32.mrb[0].mxu0
      %v2243 = vadd.f32 0.0, %v2242
      %v2244 = vpop.f32.mrb[0].mxu0
      %2245 = vmatprep.mubr.bf16.mxu0 0
      %2246 = vmatmul.mubr.bf16.gmra.mrb[0].mxu0 %v2069
      %v2247 = vpop.f32.mrb[0].mxu0
      %v2248 = vadd.f32 0.0, %v2247
      %v2249 = vpop.f32.mrb[0].mxu0
      %v2250 = vpop.f32.mrb[0].mxu0
      %v2251 = vadd.f32 0.0, %v2250
      %v2252 = vpop.f32.mrb[0].mxu0
      %2253 = vmatprep.mubr.bf16.mxu0 0
      %2254 = vmatmul.mubr.bf16.gmra.mrb[0].mxu0 %v2070
      %v2255 = vpop.f32.mrb[0].mxu0
      %v2256 = vadd.f32 0.0, %v2255
      %v2257 = vpop.f32.mrb[0].mxu0
      %v2258 = vpop.f32.mrb[0].mxu0
      %v2259 = vadd.f32 0.0, %v2258
      %v2260 = vpop.f32.mrb[0].mxu0
      %2261 = vmatprep.mubr.bf16.mxu0 0
      %2262 = vmatmul.mubr.bf16.gmra.mrb[0].mxu0 %v2071
      %v2263 = vpop.f32.mrb[0].mxu0
      %v2264 = vadd.f32 0.0, %v2263
      %v2265 = vpop.f32.mrb[0].mxu0
      %v2266 = vpop.f32.mrb[0].mxu0
      %v2267 = vadd.f32 0.0, %v2266
      %v2268 = vpop.f32.mrb[0].mxu0
      %2269 = vmatprep.mubr.bf16.mxu0 0
      %2270 = vmatmul.mubr.bf16.gmra.mrb[0].mxu0 %v2072
      %v2271 = vpop.f32.mrb[0].mxu0
      %v2272 = vadd.f32 0.0, %v2271
      %v2273 = vpop.f32.mrb[0].mxu0
      %v2274 = vpop.f32.mrb[0].mxu0
      %v2275 = vadd.f32 0.0, %v2274
      %v2276 = vpop.f32.mrb[0].mxu0
      %2277 = vmatprep.mubr.bf16.mxu0 0
      %2278 = vmatmul.mubr.bf16.gmra.mrb[0].mxu0 %v2073
      %v2279 = vpop.f32.mrb[0].mxu0
      %v2280 = vadd.f32 0.0, %v2279
      %v2281 = vpop.f32.mrb[0].mxu0
      %v2282 = vpop.f32.mrb[0].mxu0
      %v2283 = vadd.f32 0.0, %v2282
      %v2284 = vpop.f32.mrb[0].mxu0
      %2285 = vmatprep.mubr.bf16.mxu0 0
      %2286 = vmatmul.mubr.bf16.gmra.mrb[0].mxu0 %v2074
      %v2287 = vpop.f32.mrb[0].mxu0
      %v2288 = vadd.f32 0.0, %v2287
      %v2289 = vpop.f32.mrb[0].mxu0
      %v2290 = vpop.f32.mrb[0].mxu0
      %v2291 = vadd.f32 0.0, %v2290
      %v2292 = vpop.f32.mrb[0].mxu0
      %2293 = vmatprep.mubr.bf16.mxu0 0
      %2294 = vmatmul.mubr.bf16.gmra.mrb[0].mxu0 %v2075
      %v2295 = vpop.f32.mrb[0].mxu0
      %v2296 = vadd.f32 0.0, %v2295
      %v2297 = vpop.f32.mrb[0].mxu0
      %v2298 = vpop.f32.mrb[0].mxu0
      %v2299 = vadd.f32 0.0, %v2298
      %v2300 = vpop.f32.mrb[0].mxu0
      %2301 = vdwg.mxu0
      %v2302 = vadd.f32 %v1996, %v2176
      %v2303 = vadd.f32 %v1997, %v2179
      %v2304 = vadd.f32 %v1998, %v2184
      %v2305 = vadd.f32 %v1999, %v2187
      %v2306 = vadd.f32 %v2000, %v2192
      %v2307 = vadd.f32 %v2001, %v2195
      %v2308 = vadd.f32 %v2002, %v2200
      %v2309 = vadd.f32 %v2003, %v2203
      %v2310 = vadd.f32 %v2004, %v2208
      %v2311 = vadd.f32 %v2005, %v2211
      %v2312 = vadd.f32 %v2006, %v2216
      %v2313 = vadd.f32 %v2007, %v2219
      %v2314 = vadd.f32 %v2008, %v2224
      %v2315 = vadd.f32 %v2009, %v2227
      %v2316 = vadd.f32 %v2010, %v2232
      %v2317 = vadd.f32 %v2011, %v2235
      %v2318 = vadd.f32 %v2012, %v2240
      %v2319 = vadd.f32 %v2013, %v2243
      %v2320 = vadd.f32 %v2014, %v2248
      %v2321 = vadd.f32 %v2015, %v2251
      %v2322 = vadd.f32 %v2016, %v2256
      %v2323 = vadd.f32 %v2017, %v2259
      %v2324 = vadd.f32 %v2018, %v2264
      %v2325 = vadd.f32 %v2019, %v2267
      %v2326 = vadd.f32 %v2020, %v2272
      %v2327 = vadd.f32 %v2021, %v2275
      %v2328 = vadd.f32 %v2022, %v2280
      %v2329 = vadd.f32 %v2023, %v2283
      %v2330 = vadd.f32 %v2024, %v2288
      %v2331 = vadd.f32 %v2025, %v2291
      %v2332 = vadd.f32 %v2026, %v2296
      %v2333 = vadd.f32 %v2027, %v2299
      %s2334 = scalar_lea.vmem [#allocation2], 48
      %v2335 = vld [vmem:[%s2334] sm:$0xff]
      %v2336 = vld [vmem:[%s2334 + $0x8] sm:$0xff]
      %v2337 = vld [vmem:[%s2334 + $0x18] sm:$0xff]
      %v2338 = vld [vmem:[%s2334 + $0x20] sm:$0xff]
      %v2339 = vld [vmem:[%s2334 + $0x30] sm:$0xff]
      %v2340 = vld [vmem:[%s2334 + $0x38] sm:$0xff]
      %v2341 = vld [vmem:[%s2334 + $0x48] sm:$0xff]
      %v2342 = vld [vmem:[%s2334 + $0x50] sm:$0xff]
      %v2343 = vld [vmem:[%s2334 + $0x60] sm:$0xff]
      %v2344 = vld [vmem:[%s2334 + $0x68] sm:$0xff]
      %v2345 = vld [vmem:[%s2334 + $0x78] sm:$0xff]
      %v2346 = vld [vmem:[%s2334 + $0x80] sm:$0xff]
      %v2347 = vld [vmem:[%s2334 + $0x90] sm:$0xff]
      %v2348 = vld [vmem:[%s2334 + $0x98] sm:$0xff]
      %v2349 = vld [vmem:[%s2334 + $0xa8] sm:$0xff]
      %v2350 = vld [vmem:[%s2334 + $0xb0] sm:$0xff]
      %v2351 = vld [vmem:[%s2334 + $0xc0] sm:$0xff]
      %v2352 = vld [vmem:[%s2334 + $0xc8] sm:$0xff]
      %v2353 = vld [vmem:[%s2334 + $0xd8] sm:$0xff]
      %v2354 = vld [vmem:[%s2334 + $0xe0] sm:$0xff]
      %v2355 = vld [vmem:[%s2334 + $0xf0] sm:$0xff]
      %v2356 = vld [vmem:[%s2334 + $0xf8] sm:$0xff]
      %v2357 = vld [vmem:[%s2334 + $0x108] sm:$0xff]
      %v2358 = vld [vmem:[%s2334 + $0x110] sm:$0xff]
      %v2359 = vld [vmem:[%s2334 + $0x120] sm:$0xff]
      %v2360 = vld [vmem:[%s2334 + $0x128] sm:$0xff]
      %v2361 = vld [vmem:[%s2334 + $0x138] sm:$0xff]
      %v2362 = vld [vmem:[%s2334 + $0x140] sm:$0xff]
      %v2363 = vld [vmem:[%s2334 + $0x150] sm:$0xff]
      %v2364 = vld [vmem:[%s2334 + $0x158] sm:$0xff]
      %v2365 = vld [vmem:[%s2334 + $0x168] sm:$0xff]
      %v2366 = vld [vmem:[%s2334 + $0x170] sm:$0xff]
      %v2367 = vpack.c.bf16 %v2336, %v2335
      %v2368 = vpack.c.bf16 %v2338, %v2337
      %v2369 = vpack.c.bf16 %v2340, %v2339
      %v2370 = vpack.c.bf16 %v2342, %v2341
      %v2371 = vpack.c.bf16 %v2344, %v2343
      %v2372 = vpack.c.bf16 %v2346, %v2345
      %v2373 = vpack.c.bf16 %v2348, %v2347
      %v2374 = vpack.c.bf16 %v2350, %v2349
      %v2375 = vpack.c.bf16 %v2352, %v2351
      %v2376 = vpack.c.bf16 %v2354, %v2353
      %v2377 = vpack.c.bf16 %v2356, %v2355
      %v2378 = vpack.c.bf16 %v2358, %v2357
      %v2379 = vpack.c.bf16 %v2360, %v2359
      %v2380 = vpack.c.bf16 %v2362, %v2361
      %v2381 = vpack.c.bf16 %v2364, %v2363
      %v2382 = vpack.c.bf16 %v2366, %v2365
      %s2383 = scalar_lea.vmem %s1, 384
      %v2384 = vld [vmem:[%s2383] sm:$0xf]
      %v2385 = vld [vmem:[%s2383 + $0x4] sm:$0xf]
      %v2386 = vld [vmem:[%s2383 + $0x8] sm:$0xf]
      %v2387 = vld [vmem:[%s2383 + $0xc] sm:$0xf]
      %v2388 = vld [vmem:[%s2383 + $0x10] sm:$0xf]
      %v2389 = vld [vmem:[%s2383 + $0x14] sm:$0xf]
      %v2390 = vld [vmem:[%s2383 + $0x18] sm:$0xf]
      %v2391 = vld [vmem:[%s2383 + $0x1c] sm:$0xf]
      %v2392 = vld [vmem:[%s2383 + $0x20] sm:$0xf]
      %v2393 = vld [vmem:[%s2383 + $0x24] sm:$0xf]
      %v2394 = vld [vmem:[%s2383 + $0x28] sm:$0xf]
      %v2395 = vld [vmem:[%s2383 + $0x2c] sm:$0xf]
      %v2396 = vld [vmem:[%s2383 + $0x30] sm:$0xf]
      %v2397 = vld [vmem:[%s2383 + $0x34] sm:$0xf]
      %v2398 = vld [vmem:[%s2383 + $0x38] sm:$0xf]
      %v2399 = vld [vmem:[%s2383 + $0x3c] sm:$0xf]
      %v2416 = vunpack.c.l.b16 %v2384
      %v2417 = vunpack.c.l.b16 %v2385
      %v2418 = vunpack.c.l.b16 %v2386
      %v2419 = vunpack.c.l.b16 %v2387
      %v2420 = vunpack.c.l.b16 %v2388
      %v2421 = vunpack.c.l.b16 %v2389
      %v2422 = vunpack.c.l.b16 %v2390
      %v2423 = vunpack.c.l.b16 %v2391
      %v2424 = vunpack.c.l.b16 %v2392
      %v2425 = vunpack.c.l.b16 %v2393
      %v2426 = vunpack.c.l.b16 %v2394
      %v2427 = vunpack.c.l.b16 %v2395
      %v2428 = vunpack.c.l.b16 %v2396
      %v2429 = vunpack.c.l.b16 %v2397
      %v2430 = vunpack.c.l.b16 %v2398
      %v2431 = vunpack.c.l.b16 %v2399
      %v2432 = vpack.c.b16 %v2417, %v2416
      %v2433 = vpack.c.b16 %v2419, %v2418
      %v2434 = vpack.c.b16 %v2421, %v2420
      %v2435 = vpack.c.b16 %v2423, %v2422
      %v2436 = vpack.c.b16 %v2425, %v2424
      %v2437 = vpack.c.b16 %v2427, %v2426
      %v2438 = vpack.c.b16 %v2429, %v2428
      %v2439 = vpack.c.b16 %v2431, %v2430
      %2448 = vmatprep.subr.bf16.mxu0 0
      %2449 = vmatpush1.bf16.msra.mxu0 %v2432
      %2450 = vmatprep.subr.bf16.mxu0 0
      %2451 = vmatpush1.bf16.msra.mxu0 %v2433
      %2452 = vmatprep.subr.bf16.mxu0 0
      %2453 = vmatpush1.bf16.msra.mxu0 %v2434
      %2454 = vmatprep.subr.bf16.mxu0 0
      %2455 = vmatpush1.bf16.msra.mxu0 %v2435
      %2456 = vmatprep.subr.bf16.mxu0 0
      %2457 = vmatpush1.bf16.msra.mxu0 %v2436
      %2458 = vmatprep.subr.bf16.mxu0 0
      %2459 = vmatpush1.bf16.msra.mxu0 %v2437
      %2460 = vmatprep.subr.bf16.mxu0 0
      %2461 = vmatpush1.bf16.msra.mxu0 %v2438
      %2462 = vmatprep.subr.bf16.mxu0 0
      %2463 = vmatpush1.bf16.msra.mxu0 %v2439
      %2464 = vmatprep.subr.bf16.mxu0 0
      %2465 = vmatpush1.bf16.msra.mxu0 0
      %2466 = vmatprep.subr.bf16.mxu0 0
      %2467 = vmatpush1.bf16.msra.mxu0 0
      %2468 = vmatprep.subr.bf16.mxu0 0
      %2469 = vmatpush1.bf16.msra.mxu0 0
      %2470 = vmatprep.subr.bf16.mxu0 0
      %2471 = vmatpush1.bf16.msra.mxu0 0
      %2472 = vmatprep.subr.bf16.mxu0 0
      %2473 = vmatpush1.bf16.msra.mxu0 0
      %2474 = vmatprep.subr.bf16.mxu0 0
      %2475 = vmatpush1.bf16.msra.mxu0 0
      %2476 = vmatprep.subr.bf16.mxu0 0
      %2477 = vmatpush1.bf16.msra.mxu0 0
      %2478 = vmatprep.subr.bf16.mxu0 0
      %2479 = vmatpush1.bf16.msra.mxu0 0
      %2480 = vmatprep.mubr.bf16.mxu0 0
      %2481 = vmatmul.mubr.bf16.gmra.mrb[0].mxu0 %v2367
      %v2482 = vpop.f32.mrb[0].mxu0
      %v2483 = vadd.f32 0.0, %v2482
      %v2484 = vpop.f32.mrb[0].mxu0
      %v2485 = vpop.f32.mrb[0].mxu0
      %v2486 = vadd.f32 0.0, %v2485
      %v2487 = vpop.f32.mrb[0].mxu0
      %2488 = vmatprep.mubr.bf16.mxu0 0
      %2489 = vmatmul.mubr.bf16.gmra.mrb[0].mxu0 %v2368
      %v2490 = vpop.f32.mrb[0].mxu0
      %v2491 = vadd.f32 0.0, %v2490
      %v2492 = vpop.f32.mrb[0].mxu0
      %v2493 = vpop.f32.mrb[0].mxu0
      %v2494 = vadd.f32 0.0, %v2493
      %v2495 = vpop.f32.mrb[0].mxu0
      %2496 = vmatprep.mubr.bf16.mxu0 0
      %2497 = vmatmul.mubr.bf16.gmra.mrb[0].mxu0 %v2369
      %v2498 = vpop.f32.mrb[0].mxu0
      %v2499 = vadd.f32 0.0, %v2498
      %v2500 = vpop.f32.mrb[0].mxu0
      %v2501 = vpop.f32.mrb[0].mxu0
      %v2502 = vadd.f32 0.0, %v2501
      %v2503 = vpop.f32.mrb[0].mxu0
      %2504 = vmatprep.mubr.bf16.mxu0 0
      %2505 = vmatmul.mubr.bf16.gmra.mrb[0].mxu0 %v2370
      %v2506 = vpop.f32.mrb[0].mxu0
      %v2507 = vadd.f32 0.0, %v2506
      %v2508 = vpop.f32.mrb[0].mxu0
      %v2509 = vpop.f32.mrb[0].mxu0
      %v2510 = vadd.f32 0.0, %v2509
      %v2511 = vpop.f32.mrb[0].mxu0
      %2512 = vmatprep.mubr.bf16.mxu0 0
      %2513 = vmatmul.mubr.bf16.gmra.mrb[0].mxu0 %v2371
      %v2514 = vpop.f32.mrb[0].mxu0
      %v2515 = vadd.f32 0.0, %v2514
      %v2516 = vpop.f32.mrb[0].mxu0
      %v2517 = vpop.f32.mrb[0].mxu0
      %v2518 = vadd.f32 0.0, %v2517
      %v2519 = vpop.f32.mrb[0].mxu0
      %2520 = vmatprep.mubr.bf16.mxu0 0
      %2521 = vmatmul.mubr.bf16.gmra.mrb[0].mxu0 %v2372
      %v2522 = vpop.f32.mrb[0].mxu0
      %v2523 = vadd.f32 0.0, %v2522
      %v2524 = vpop.f32.mrb[0].mxu0
      %v2525 = vpop.f32.mrb[0].mxu0
      %v2526 = vadd.f32 0.0, %v2525
      %v2527 = vpop.f32.mrb[0].mxu0
      %2528 = vmatprep.mubr.bf16.mxu0 0
      %2529 = vmatmul.mubr.bf16.gmra.mrb[0].mxu0 %v2373
      %v2530 = vpop.f32.mrb[0].mxu0
      %v2531 = vadd.f32 0.0, %v2530
      %v2532 = vpop.f32.mrb[0].mxu0
      %v2533 = vpop.f32.mrb[0].mxu0
      %v2534 = vadd.f32 0.0, %v2533
      %v2535 = vpop.f32.mrb[0].mxu0
      %2536 = vmatprep.mubr.bf16.mxu0 0
      %2537 = vmatmul.mubr.bf16.gmra.mrb[0].mxu0 %v2374
      %v2538 = vpop.f32.mrb[0].mxu0
      %v2539 = vadd.f32 0.0, %v2538
      %v2540 = vpop.f32.mrb[0].mxu0
      %v2541 = vpop.f32.mrb[0].mxu0
      %v2542 = vadd.f32 0.0, %v2541
      %v2543 = vpop.f32.mrb[0].mxu0
      %2544 = vmatprep.mubr.bf16.mxu0 0
      %2545 = vmatmul.mubr.bf16.gmra.mrb[0].mxu0 %v2375
      %v2546 = vpop.f32.mrb[0].mxu0
      %v2547 = vadd.f32 0.0, %v2546
      %v2548 = vpop.f32.mrb[0].mxu0
      %v2549 = vpop.f32.mrb[0].mxu0
      %v2550 = vadd.f32 0.0, %v2549
      %v2551 = vpop.f32.mrb[0].mxu0
      %2552 = vmatprep.mubr.bf16.mxu0 0
      %2553 = vmatmul.mubr.bf16.gmra.mrb[0].mxu0 %v2376
      %v2554 = vpop.f32.mrb[0].mxu0
      %v2555 = vadd.f32 0.0, %v2554
      %v2556 = vpop.f32.mrb[0].mxu0
      %v2557 = vpop.f32.mrb[0].mxu0
      %v2558 = vadd.f32 0.0, %v2557
      %v2559 = vpop.f32.mrb[0].mxu0
      %2560 = vmatprep.mubr.bf16.mxu0 0
      %2561 = vmatmul.mubr.bf16.gmra.mrb[0].mxu0 %v2377
      %v2562 = vpop.f32.mrb[0].mxu0
      %v2563 = vadd.f32 0.0, %v2562
      %v2564 = vpop.f32.mrb[0].mxu0
      %v2565 = vpop.f32.mrb[0].mxu0
      %v2566 = vadd.f32 0.0, %v2565
      %v2567 = vpop.f32.mrb[0].mxu0
      %2568 = vmatprep.mubr.bf16.mxu0 0
      %2569 = vmatmul.mubr.bf16.gmra.mrb[0].mxu0 %v2378
      %v2570 = vpop.f32.mrb[0].mxu0
      %v2571 = vadd.f32 0.0, %v2570
      %v2572 = vpop.f32.mrb[0].mxu0
      %v2573 = vpop.f32.mrb[0].mxu0
      %v2574 = vadd.f32 0.0, %v2573
      %v2575 = vpop.f32.mrb[0].mxu0
      %2576 = vmatprep.mubr.bf16.mxu0 0
      %2577 = vmatmul.mubr.bf16.gmra.mrb[0].mxu0 %v2379
      %v2578 = vpop.f32.mrb[0].mxu0
      %v2579 = vadd.f32 0.0, %v2578
      %v2580 = vpop.f32.mrb[0].mxu0
      %v2581 = vpop.f32.mrb[0].mxu0
      %v2582 = vadd.f32 0.0, %v2581
      %v2583 = vpop.f32.mrb[0].mxu0
      %2584 = vmatprep.mubr.bf16.mxu0 0
      %2585 = vmatmul.mubr.bf16.gmra.mrb[0].mxu0 %v2380
      %v2586 = vpop.f32.mrb[0].mxu0
      %v2587 = vadd.f32 0.0, %v2586
      %v2588 = vpop.f32.mrb[0].mxu0
      %v2589 = vpop.f32.mrb[0].mxu0
      %v2590 = vadd.f32 0.0, %v2589
      %v2591 = vpop.f32.mrb[0].mxu0
      %2592 = vmatprep.mubr.bf16.mxu0 0
      %2593 = vmatmul.mubr.bf16.gmra.mrb[0].mxu0 %v2381
      %v2594 = vpop.f32.mrb[0].mxu0
      %v2595 = vadd.f32 0.0, %v2594
      %v2596 = vpop.f32.mrb[0].mxu0
      %v2597 = vpop.f32.mrb[0].mxu0
      %v2598 = vadd.f32 0.0, %v2597
      %v2599 = vpop.f32.mrb[0].mxu0
      %2600 = vmatprep.mubr.bf16.mxu0 0
      %2601 = vmatmul.mubr.bf16.gmra.mrb[0].mxu0 %v2382
      %v2602 = vpop.f32.mrb[0].mxu0
      %v2603 = vadd.f32 0.0, %v2602
      %v2604 = vpop.f32.mrb[0].mxu0
      %v2605 = vpop.f32.mrb[0].mxu0
      %v2606 = vadd.f32 0.0, %v2605
      %v2607 = vpop.f32.mrb[0].mxu0
      %2608 = vdwg.mxu0
      %v2609 = vadd.f32 %v2302, %v2483
      %v2610 = vadd.f32 %v2303, %v2486
      %v2611 = vadd.f32 %v2304, %v2491
      %v2612 = vadd.f32 %v2305, %v2494
      %v2613 = vadd.f32 %v2306, %v2499
      %v2614 = vadd.f32 %v2307, %v2502
      %v2615 = vadd.f32 %v2308, %v2507
      %v2616 = vadd.f32 %v2309, %v2510
      %v2617 = vadd.f32 %v2310, %v2515
      %v2618 = vadd.f32 %v2311, %v2518
      %v2619 = vadd.f32 %v2312, %v2523
      %v2620 = vadd.f32 %v2313, %v2526
      %v2621 = vadd.f32 %v2314, %v2531
      %v2622 = vadd.f32 %v2315, %v2534
      %v2623 = vadd.f32 %v2316, %v2539
      %v2624 = vadd.f32 %v2317, %v2542
      %v2625 = vadd.f32 %v2318, %v2547
      %v2626 = vadd.f32 %v2319, %v2550
      %v2627 = vadd.f32 %v2320, %v2555
      %v2628 = vadd.f32 %v2321, %v2558
      %v2629 = vadd.f32 %v2322, %v2563
      %v2630 = vadd.f32 %v2323, %v2566
      %v2631 = vadd.f32 %v2324, %v2571
      %v2632 = vadd.f32 %v2325, %v2574
      %v2633 = vadd.f32 %v2326, %v2579
      %v2634 = vadd.f32 %v2327, %v2582
      %v2635 = vadd.f32 %v2328, %v2587
      %v2636 = vadd.f32 %v2329, %v2590
      %v2637 = vadd.f32 %v2330, %v2595
      %v2638 = vadd.f32 %v2331, %v2598
      %v2639 = vadd.f32 %v2332, %v2603
      %v2640 = vadd.f32 %v2333, %v2606
      %v2641 = vld [vmem:[%s2334 + $0x1] sm:$0xff]
      %v2642 = vld [vmem:[%s2334 + $0x9] sm:$0xff]
      %v2643 = vld [vmem:[%s2334 + $0x19] sm:$0xff]
      %v2644 = vld [vmem:[%s2334 + $0x21] sm:$0xff]
      %v2645 = vld [vmem:[%s2334 + $0x31] sm:$0xff]
      %v2646 = vld [vmem:[%s2334 + $0x39] sm:$0xff]
      %v2647 = vld [vmem:[%s2334 + $0x49] sm:$0xff]
      %v2648 = vld [vmem:[%s2334 + $0x51] sm:$0xff]
      %v2649 = vld [vmem:[%s2334 + $0x61] sm:$0xff]
      %v2650 = vld [vmem:[%s2334 + $0x69] sm:$0xff]
      %v2651 = vld [vmem:[%s2334 + $0x79] sm:$0xff]
      %v2652 = vld [vmem:[%s2334 + $0x81] sm:$0xff]
      %v2653 = vld [vmem:[%s2334 + $0x91] sm:$0xff]
      %v2654 = vld [vmem:[%s2334 + $0x99] sm:$0xff]
      %v2655 = vld [vmem:[%s2334 + $0xa9] sm:$0xff]
      %v2656 = vld [vmem:[%s2334 + $0xb1] sm:$0xff]
      %v2657 = vld [vmem:[%s2334 + $0xc1] sm:$0xff]
      %v2658 = vld [vmem:[%s2334 + $0xc9] sm:$0xff]
      %v2659 = vld [vmem:[%s2334 + $0xd9] sm:$0xff]
      %v2660 = vld [vmem:[%s2334 + $0xe1] sm:$0xff]
      %v2661 = vld [vmem:[%s2334 + $0xf1] sm:$0xff]
      %v2662 = vld [vmem:[%s2334 + $0xf9] sm:$0xff]
      %v2663 = vld [vmem:[%s2334 + $0x109] sm:$0xff]
      %v2664 = vld [vmem:[%s2334 + $0x111] sm:$0xff]
      %v2665 = vld [vmem:[%s2334 + $0x121] sm:$0xff]
      %v2666 = vld [vmem:[%s2334 + $0x129] sm:$0xff]
      %v2667 = vld [vmem:[%s2334 + $0x139] sm:$0xff]
      %v2668 = vld [vmem:[%s2334 + $0x141] sm:$0xff]
      %v2669 = vld [vmem:[%s2334 + $0x151] sm:$0xff]
      %v2670 = vld [vmem:[%s2334 + $0x159] sm:$0xff]
      %v2671 = vld [vmem:[%s2334 + $0x169] sm:$0xff]
      %v2672 = vld [vmem:[%s2334 + $0x171] sm:$0xff]
      %v2673 = vpack.c.bf16 %v2642, %v2641
      %v2674 = vpack.c.bf16 %v2644, %v2643
      %v2675 = vpack.c.bf16 %v2646, %v2645
      %v2676 = vpack.c.bf16 %v2648, %v2647
      %v2677 = vpack.c.bf16 %v2650, %v2649
      %v2678 = vpack.c.bf16 %v2652, %v2651
      %v2679 = vpack.c.bf16 %v2654, %v2653
      %v2680 = vpack.c.bf16 %v2656, %v2655
      %v2681 = vpack.c.bf16 %v2658, %v2657
      %v2682 = vpack.c.bf16 %v2660, %v2659
      %v2683 = vpack.c.bf16 %v2662, %v2661
      %v2684 = vpack.c.bf16 %v2664, %v2663
      %v2685 = vpack.c.bf16 %v2666, %v2665
      %v2686 = vpack.c.bf16 %v2668, %v2667
      %v2687 = vpack.c.bf16 %v2670, %v2669
      %v2688 = vpack.c.bf16 %v2672, %v2671
      %s2689 = scalar_lea.vmem %s1, 448
      %v2690 = vld [vmem:[%s2689] sm:$0xf]
      %v2691 = vld [vmem:[%s2689 + $0x4] sm:$0xf]
      %v2692 = vld [vmem:[%s2689 + $0x8] sm:$0xf]
      %v2693 = vld [vmem:[%s2689 + $0xc] sm:$0xf]
      %v2694 = vld [vmem:[%s2689 + $0x10] sm:$0xf]
      %v2695 = vld [vmem:[%s2689 + $0x14] sm:$0xf]
      %v2696 = vld [vmem:[%s2689 + $0x18] sm:$0xf]
      %v2697 = vld [vmem:[%s2689 + $0x1c] sm:$0xf]
      %v2698 = vld [vmem:[%s2689 + $0x20] sm:$0xf]
      %v2699 = vld [vmem:[%s2689 + $0x24] sm:$0xf]
      %v2700 = vld [vmem:[%s2689 + $0x28] sm:$0xf]
      %v2701 = vld [vmem:[%s2689 + $0x2c] sm:$0xf]
      %v2702 = vld [vmem:[%s2689 + $0x30] sm:$0xf]
      %v2703 = vld [vmem:[%s2689 + $0x34] sm:$0xf]
      %v2704 = vld [vmem:[%s2689 + $0x38] sm:$0xf]
      %v2705 = vld [vmem:[%s2689 + $0x3c] sm:$0xf]
      %v2722 = vunpack.c.l.b16 %v2690
      %v2723 = vunpack.c.l.b16 %v2691
      %v2724 = vunpack.c.l.b16 %v2692
      %v2725 = vunpack.c.l.b16 %v2693
      %v2726 = vunpack.c.l.b16 %v2694
      %v2727 = vunpack.c.l.b16 %v2695
      %v2728 = vunpack.c.l.b16 %v2696
      %v2729 = vunpack.c.l.b16 %v2697
      %v2730 = vunpack.c.l.b16 %v2698
      %v2731 = vunpack.c.l.b16 %v2699
      %v2732 = vunpack.c.l.b16 %v2700
      %v2733 = vunpack.c.l.b16 %v2701
      %v2734 = vunpack.c.l.b16 %v2702
      %v2735 = vunpack.c.l.b16 %v2703
      %v2736 = vunpack.c.l.b16 %v2704
      %v2737 = vunpack.c.l.b16 %v2705
      %v2738 = vpack.c.b16 %v2723, %v2722
      %v2739 = vpack.c.b16 %v2725, %v2724
      %v2740 = vpack.c.b16 %v2727, %v2726
      %v2741 = vpack.c.b16 %v2729, %v2728
      %v2742 = vpack.c.b16 %v2731, %v2730
      %v2743 = vpack.c.b16 %v2733, %v2732
      %v2744 = vpack.c.b16 %v2735, %v2734
      %v2745 = vpack.c.b16 %v2737, %v2736
      %2754 = vmatprep.subr.bf16.mxu0 0
      %2755 = vmatpush1.bf16.msra.mxu0 %v2738
      %2756 = vmatprep.subr.bf16.mxu0 0
      %2757 = vmatpush1.bf16.msra.mxu0 %v2739
      %2758 = vmatprep.subr.bf16.mxu0 0
      %2759 = vmatpush1.bf16.msra.mxu0 %v2740
      %2760 = vmatprep.subr.bf16.mxu0 0
      %2761 = vmatpush1.bf16.msra.mxu0 %v2741
      %2762 = vmatprep.subr.bf16.mxu0 0
      %2763 = vmatpush1.bf16.msra.mxu0 %v2742
      %2764 = vmatprep.subr.bf16.mxu0 0
      %2765 = vmatpush1.bf16.msra.mxu0 %v2743
      %2766 = vmatprep.subr.bf16.mxu0 0
      %2767 = vmatpush1.bf16.msra.mxu0 %v2744
      %2768 = vmatprep.subr.bf16.mxu0 0
      %2769 = vmatpush1.bf16.msra.mxu0 %v2745
      %2770 = vmatprep.subr.bf16.mxu0 0
      %2771 = vmatpush1.bf16.msra.mxu0 0
      %2772 = vmatprep.subr.bf16.mxu0 0
      %2773 = vmatpush1.bf16.msra.mxu0 0
      %2774 = vmatprep.subr.bf16.mxu0 0
      %2775 = vmatpush1.bf16.msra.mxu0 0
      %2776 = vmatprep.subr.bf16.mxu0 0
      %2777 = vmatpush1.bf16.msra.mxu0 0
      %2778 = vmatprep.subr.bf16.mxu0 0
      %2779 = vmatpush1.bf16.msra.mxu0 0
      %2780 = vmatprep.subr.bf16.mxu0 0
      %2781 = vmatpush1.bf16.msra.mxu0 0
      %2782 = vmatprep.subr.bf16.mxu0 0
      %2783 = vmatpush1.bf16.msra.mxu0 0
      %2784 = vmatprep.subr.bf16.mxu0 0
      %2785 = vmatpush1.bf16.msra.mxu0 0
      %2786 = vmatprep.mubr.bf16.mxu0 0
      %2787 = vmatmul.mubr.bf16.gmra.mrb[0].mxu0 %v2673
      %v2788 = vpop.f32.mrb[0].mxu0
      %v2789 = vadd.f32 0.0, %v2788
      %v2790 = vpop.f32.mrb[0].mxu0
      %v2791 = vpop.f32.mrb[0].mxu0
      %v2792 = vadd.f32 0.0, %v2791
      %v2793 = vpop.f32.mrb[0].mxu0
      %2794 = vmatprep.mubr.bf16.mxu0 0
      %2795 = vmatmul.mubr.bf16.gmra.mrb[0].mxu0 %v2674
      %v2796 = vpop.f32.mrb[0].mxu0
      %v2797 = vadd.f32 0.0, %v2796
      %v2798 = vpop.f32.mrb[0].mxu0
      %v2799 = vpop.f32.mrb[0].mxu0
      %v2800 = vadd.f32 0.0, %v2799
      %v2801 = vpop.f32.mrb[0].mxu0
      %2802 = vmatprep.mubr.bf16.mxu0 0
      %2803 = vmatmul.mubr.bf16.gmra.mrb[0].mxu0 %v2675
      %v2804 = vpop.f32.mrb[0].mxu0
      %v2805 = vadd.f32 0.0, %v2804
      %v2806 = vpop.f32.mrb[0].mxu0
      %v2807 = vpop.f32.mrb[0].mxu0
      %v2808 = vadd.f32 0.0, %v2807
      %v2809 = vpop.f32.mrb[0].mxu0
      %2810 = vmatprep.mubr.bf16.mxu0 0
      %2811 = vmatmul.mubr.bf16.gmra.mrb[0].mxu0 %v2676
      %v2812 = vpop.f32.mrb[0].mxu0
      %v2813 = vadd.f32 0.0, %v2812
      %v2814 = vpop.f32.mrb[0].mxu0
      %v2815 = vpop.f32.mrb[0].mxu0
      %v2816 = vadd.f32 0.0, %v2815
      %v2817 = vpop.f32.mrb[0].mxu0
      %2818 = vmatprep.mubr.bf16.mxu0 0
      %2819 = vmatmul.mubr.bf16.gmra.mrb[0].mxu0 %v2677
      %v2820 = vpop.f32.mrb[0].mxu0
      %v2821 = vadd.f32 0.0, %v2820
      %v2822 = vpop.f32.mrb[0].mxu0
      %v2823 = vpop.f32.mrb[0].mxu0
      %v2824 = vadd.f32 0.0, %v2823
      %v2825 = vpop.f32.mrb[0].mxu0
      %2826 = vmatprep.mubr.bf16.mxu0 0
      %2827 = vmatmul.mubr.bf16.gmra.mrb[0].mxu0 %v2678
      %v2828 = vpop.f32.mrb[0].mxu0
      %v2829 = vadd.f32 0.0, %v2828
      %v2830 = vpop.f32.mrb[0].mxu0
      %v2831 = vpop.f32.mrb[0].mxu0
      %v2832 = vadd.f32 0.0, %v2831
      %v2833 = vpop.f32.mrb[0].mxu0
      %2834 = vmatprep.mubr.bf16.mxu0 0
      %2835 = vmatmul.mubr.bf16.gmra.mrb[0].mxu0 %v2679
      %v2836 = vpop.f32.mrb[0].mxu0
      %v2837 = vadd.f32 0.0, %v2836
      %v2838 = vpop.f32.mrb[0].mxu0
      %v2839 = vpop.f32.mrb[0].mxu0
      %v2840 = vadd.f32 0.0, %v2839
      %v2841 = vpop.f32.mrb[0].mxu0
      %2842 = vmatprep.mubr.bf16.mxu0 0
      %2843 = vmatmul.mubr.bf16.gmra.mrb[0].mxu0 %v2680
      %v2844 = vpop.f32.mrb[0].mxu0
      %v2845 = vadd.f32 0.0, %v2844
      %v2846 = vpop.f32.mrb[0].mxu0
      %v2847 = vpop.f32.mrb[0].mxu0
      %v2848 = vadd.f32 0.0, %v2847
      %v2849 = vpop.f32.mrb[0].mxu0
      %2850 = vmatprep.mubr.bf16.mxu0 0
      %2851 = vmatmul.mubr.bf16.gmra.mrb[0].mxu0 %v2681
      %v2852 = vpop.f32.mrb[0].mxu0
      %v2853 = vadd.f32 0.0, %v2852
      %v2854 = vpop.f32.mrb[0].mxu0
      %v2855 = vpop.f32.mrb[0].mxu0
      %v2856 = vadd.f32 0.0, %v2855
      %v2857 = vpop.f32.mrb[0].mxu0
      %2858 = vmatprep.mubr.bf16.mxu0 0
      %2859 = vmatmul.mubr.bf16.gmra.mrb[0].mxu0 %v2682
      %v2860 = vpop.f32.mrb[0].mxu0
      %v2861 = vadd.f32 0.0, %v2860
      %v2862 = vpop.f32.mrb[0].mxu0
      %v2863 = vpop.f32.mrb[0].mxu0
      %v2864 = vadd.f32 0.0, %v2863
      %v2865 = vpop.f32.mrb[0].mxu0
      %2866 = vmatprep.mubr.bf16.mxu0 0
      %2867 = vmatmul.mubr.bf16.gmra.mrb[0].mxu0 %v2683
      %v2868 = vpop.f32.mrb[0].mxu0
      %v2869 = vadd.f32 0.0, %v2868
      %v2870 = vpop.f32.mrb[0].mxu0
      %v2871 = vpop.f32.mrb[0].mxu0
      %v2872 = vadd.f32 0.0, %v2871
      %v2873 = vpop.f32.mrb[0].mxu0
      %2874 = vmatprep.mubr.bf16.mxu0 0
      %2875 = vmatmul.mubr.bf16.gmra.mrb[0].mxu0 %v2684
      %v2876 = vpop.f32.mrb[0].mxu0
      %v2877 = vadd.f32 0.0, %v2876
      %v2878 = vpop.f32.mrb[0].mxu0
      %v2879 = vpop.f32.mrb[0].mxu0
      %v2880 = vadd.f32 0.0, %v2879
      %v2881 = vpop.f32.mrb[0].mxu0
      %2882 = vmatprep.mubr.bf16.mxu0 0
      %2883 = vmatmul.mubr.bf16.gmra.mrb[0].mxu0 %v2685
      %v2884 = vpop.f32.mrb[0].mxu0
      %v2885 = vadd.f32 0.0, %v2884
      %v2886 = vpop.f32.mrb[0].mxu0
      %v2887 = vpop.f32.mrb[0].mxu0
      %v2888 = vadd.f32 0.0, %v2887
      %v2889 = vpop.f32.mrb[0].mxu0
      %2890 = vmatprep.mubr.bf16.mxu0 0
      %2891 = vmatmul.mubr.bf16.gmra.mrb[0].mxu0 %v2686
      %v2892 = vpop.f32.mrb[0].mxu0
      %v2893 = vadd.f32 0.0, %v2892
      %v2894 = vpop.f32.mrb[0].mxu0
      %v2895 = vpop.f32.mrb[0].mxu0
      %v2896 = vadd.f32 0.0, %v2895
      %v2897 = vpop.f32.mrb[0].mxu0
      %2898 = vmatprep.mubr.bf16.mxu0 0
      %2899 = vmatmul.mubr.bf16.gmra.mrb[0].mxu0 %v2687
      %v2900 = vpop.f32.mrb[0].mxu0
      %v2901 = vadd.f32 0.0, %v2900
      %v2902 = vpop.f32.mrb[0].mxu0
      %v2903 = vpop.f32.mrb[0].mxu0
      %v2904 = vadd.f32 0.0, %v2903
      %v2905 = vpop.f32.mrb[0].mxu0
      %2906 = vmatprep.mubr.bf16.mxu0 0
      %2907 = vmatmul.mubr.bf16.gmra.mrb[0].mxu0 %v2688
      %v2908 = vpop.f32.mrb[0].mxu0
      %v2909 = vadd.f32 0.0, %v2908
      %v2910 = vpop.f32.mrb[0].mxu0
      %v2911 = vpop.f32.mrb[0].mxu0
      %v2912 = vadd.f32 0.0, %v2911
      %v2913 = vpop.f32.mrb[0].mxu0
      %2914 = vdwg.mxu0
      %v2915 = vadd.f32 %v2609, %v2789
      %v2916 = vadd.f32 %v2610, %v2792
      %v2917 = vadd.f32 %v2611, %v2797
      %v2918 = vadd.f32 %v2612, %v2800
      %v2919 = vadd.f32 %v2613, %v2805
      %v2920 = vadd.f32 %v2614, %v2808
      %v2921 = vadd.f32 %v2615, %v2813
      %v2922 = vadd.f32 %v2616, %v2816
      %v2923 = vadd.f32 %v2617, %v2821
      %v2924 = vadd.f32 %v2618, %v2824
      %v2925 = vadd.f32 %v2619, %v2829
      %v2926 = vadd.f32 %v2620, %v2832
      %v2927 = vadd.f32 %v2621, %v2837
      %v2928 = vadd.f32 %v2622, %v2840
      %v2929 = vadd.f32 %v2623, %v2845
      %v2930 = vadd.f32 %v2624, %v2848
      %v2931 = vadd.f32 %v2625, %v2853
      %v2932 = vadd.f32 %v2626, %v2856
      %v2933 = vadd.f32 %v2627, %v2861
      %v2934 = vadd.f32 %v2628, %v2864
      %v2935 = vadd.f32 %v2629, %v2869
      %v2936 = vadd.f32 %v2630, %v2872
      %v2937 = vadd.f32 %v2631, %v2877
      %v2938 = vadd.f32 %v2632, %v2880
      %v2939 = vadd.f32 %v2633, %v2885
      %v2940 = vadd.f32 %v2634, %v2888
      %v2941 = vadd.f32 %v2635, %v2893
      %v2942 = vadd.f32 %v2636, %v2896
      %v2943 = vadd.f32 %v2637, %v2901
      %v2944 = vadd.f32 %v2638, %v2904
      %v2945 = vadd.f32 %v2639, %v2909
      %v2946 = vadd.f32 %v2640, %v2912
      %v2947 = vld [vmem:[%s2334 + $0x2] sm:$0xff]
      %v2948 = vld [vmem:[%s2334 + $0xa] sm:$0xff]
      %v2949 = vld [vmem:[%s2334 + $0x1a] sm:$0xff]
      %v2950 = vld [vmem:[%s2334 + $0x22] sm:$0xff]
      %v2951 = vld [vmem:[%s2334 + $0x32] sm:$0xff]
      %v2952 = vld [vmem:[%s2334 + $0x3a] sm:$0xff]
      %v2953 = vld [vmem:[%s2334 + $0x4a] sm:$0xff]
      %v2954 = vld [vmem:[%s2334 + $0x52] sm:$0xff]
      %v2955 = vld [vmem:[%s2334 + $0x62] sm:$0xff]
      %v2956 = vld [vmem:[%s2334 + $0x6a] sm:$0xff]
      %v2957 = vld [vmem:[%s2334 + $0x7a] sm:$0xff]
      %v2958 = vld [vmem:[%s2334 + $0x82] sm:$0xff]
      %v2959 = vld [vmem:[%s2334 + $0x92] sm:$0xff]
      %v2960 = vld [vmem:[%s2334 + $0x9a] sm:$0xff]
      %v2961 = vld [vmem:[%s2334 + $0xaa] sm:$0xff]
      %v2962 = vld [vmem:[%s2334 + $0xb2] sm:$0xff]
      %v2963 = vld [vmem:[%s2334 + $0xc2] sm:$0xff]
      %v2964 = vld [vmem:[%s2334 + $0xca] sm:$0xff]
      %v2965 = vld [vmem:[%s2334 + $0xda] sm:$0xff]
      %v2966 = vld [vmem:[%s2334 + $0xe2] sm:$0xff]
      %v2967 = vld [vmem:[%s2334 + $0xf2] sm:$0xff]
      %v2968 = vld [vmem:[%s2334 + $0xfa] sm:$0xff]
      %v2969 = vld [vmem:[%s2334 + $0x10a] sm:$0xff]
      %v2970 = vld [vmem:[%s2334 + $0x112] sm:$0xff]
      %v2971 = vld [vmem:[%s2334 + $0x122] sm:$0xff]
      %v2972 = vld [vmem:[%s2334 + $0x12a] sm:$0xff]
      %v2973 = vld [vmem:[%s2334 + $0x13a] sm:$0xff]
      %v2974 = vld [vmem:[%s2334 + $0x142] sm:$0xff]
      %v2975 = vld [vmem:[%s2334 + $0x152] sm:$0xff]
      %v2976 = vld [vmem:[%s2334 + $0x15a] sm:$0xff]
      %v2977 = vld [vmem:[%s2334 + $0x16a] sm:$0xff]
      %v2978 = vld [vmem:[%s2334 + $0x172] sm:$0xff]
      %v2979 = vpack.c.bf16 %v2948, %v2947
      %v2980 = vpack.c.bf16 %v2950, %v2949
      %v2981 = vpack.c.bf16 %v2952, %v2951
      %v2982 = vpack.c.bf16 %v2954, %v2953
      %v2983 = vpack.c.bf16 %v2956, %v2955
      %v2984 = vpack.c.bf16 %v2958, %v2957
      %v2985 = vpack.c.bf16 %v2960, %v2959
      %v2986 = vpack.c.bf16 %v2962, %v2961
      %v2987 = vpack.c.bf16 %v2964, %v2963
      %v2988 = vpack.c.bf16 %v2966, %v2965
      %v2989 = vpack.c.bf16 %v2968, %v2967
      %v2990 = vpack.c.bf16 %v2970, %v2969
      %v2991 = vpack.c.bf16 %v2972, %v2971
      %v2992 = vpack.c.bf16 %v2974, %v2973
      %v2993 = vpack.c.bf16 %v2976, %v2975
      %v2994 = vpack.c.bf16 %v2978, %v2977
      %s2995 = scalar_lea.vmem %s1, 512
      %v2996 = vld [vmem:[%s2995] sm:$0xf]
      %v2997 = vld [vmem:[%s2995 + $0x4] sm:$0xf]
      %v2998 = vld [vmem:[%s2995 + $0x8] sm:$0xf]
      %v2999 = vld [vmem:[%s2995 + $0xc] sm:$0xf]
      %v3000 = vld [vmem:[%s2995 + $0x10] sm:$0xf]
      %v3001 = vld [vmem:[%s2995 + $0x14] sm:$0xf]
      %v3002 = vld [vmem:[%s2995 + $0x18] sm:$0xf]
      %v3003 = vld [vmem:[%s2995 + $0x1c] sm:$0xf]
      %v3004 = vld [vmem:[%s2995 + $0x20] sm:$0xf]
      %v3005 = vld [vmem:[%s2995 + $0x24] sm:$0xf]
      %v3006 = vld [vmem:[%s2995 + $0x28] sm:$0xf]
      %v3007 = vld [vmem:[%s2995 + $0x2c] sm:$0xf]
      %v3008 = vld [vmem:[%s2995 + $0x30] sm:$0xf]
      %v3009 = vld [vmem:[%s2995 + $0x34] sm:$0xf]
      %v3010 = vld [vmem:[%s2995 + $0x38] sm:$0xf]
      %v3011 = vld [vmem:[%s2995 + $0x3c] sm:$0xf]
      %v3028 = vunpack.c.l.b16 %v2996
      %v3029 = vunpack.c.l.b16 %v2997
      %v3030 = vunpack.c.l.b16 %v2998
      %v3031 = vunpack.c.l.b16 %v2999
      %v3032 = vunpack.c.l.b16 %v3000
      %v3033 = vunpack.c.l.b16 %v3001
      %v3034 = vunpack.c.l.b16 %v3002
      %v3035 = vunpack.c.l.b16 %v3003
      %v3036 = vunpack.c.l.b16 %v3004
      %v3037 = vunpack.c.l.b16 %v3005
      %v3038 = vunpack.c.l.b16 %v3006
      %v3039 = vunpack.c.l.b16 %v3007
      %v3040 = vunpack.c.l.b16 %v3008
      %v3041 = vunpack.c.l.b16 %v3009
      %v3042 = vunpack.c.l.b16 %v3010
      %v3043 = vunpack.c.l.b16 %v3011
      %v3044 = vpack.c.b16 %v3029, %v3028
      %v3045 = vpack.c.b16 %v3031, %v3030
      %v3046 = vpack.c.b16 %v3033, %v3032
      %v3047 = vpack.c.b16 %v3035, %v3034
      %v3048 = vpack.c.b16 %v3037, %v3036
      %v3049 = vpack.c.b16 %v3039, %v3038
      %v3050 = vpack.c.b16 %v3041, %v3040
      %v3051 = vpack.c.b16 %v3043, %v3042
      %3060 = vmatprep.subr.bf16.mxu0 0
      %3061 = vmatpush1.bf16.msra.mxu0 %v3044
      %3062 = vmatprep.subr.bf16.mxu0 0
      %3063 = vmatpush1.bf16.msra.mxu0 %v3045
      %3064 = vmatprep.subr.bf16.mxu0 0
      %3065 = vmatpush1.bf16.msra.mxu0 %v3046
      %3066 = vmatprep.subr.bf16.mxu0 0
      %3067 = vmatpush1.bf16.msra.mxu0 %v3047
      %3068 = vmatprep.subr.bf16.mxu0 0
      %3069 = vmatpush1.bf16.msra.mxu0 %v3048
      %3070 = vmatprep.subr.bf16.mxu0 0
      %3071 = vmatpush1.bf16.msra.mxu0 %v3049
      %3072 = vmatprep.subr.bf16.mxu0 0
      %3073 = vmatpush1.bf16.msra.mxu0 %v3050
      %3074 = vmatprep.subr.bf16.mxu0 0
      %3075 = vmatpush1.bf16.msra.mxu0 %v3051
      %3076 = vmatprep.subr.bf16.mxu0 0
      %3077 = vmatpush1.bf16.msra.mxu0 0
      %3078 = vmatprep.subr.bf16.mxu0 0
      %3079 = vmatpush1.bf16.msra.mxu0 0
      %3080 = vmatprep.subr.bf16.mxu0 0
      %3081 = vmatpush1.bf16.msra.mxu0 0
      %3082 = vmatprep.subr.bf16.mxu0 0
      %3083 = vmatpush1.bf16.msra.mxu0 0
      %3084 = vmatprep.subr.bf16.mxu0 0
      %3085 = vmatpush1.bf16.msra.mxu0 0
      %3086 = vmatprep.subr.bf16.mxu0 0
      %3087 = vmatpush1.bf16.msra.mxu0 0
      %3088 = vmatprep.subr.bf16.mxu0 0
      %3089 = vmatpush1.bf16.msra.mxu0 0
      %3090 = vmatprep.subr.bf16.mxu0 0
      %3091 = vmatpush1.bf16.msra.mxu0 0
      %3092 = vmatprep.mubr.bf16.mxu0 0
      %3093 = vmatmul.mubr.bf16.gmra.mrb[0].mxu0 %v2979
      %v3094 = vpop.f32.mrb[0].mxu0
      %v3095 = vadd.f32 0.0, %v3094
      %v3096 = vpop.f32.mrb[0].mxu0
      %v3097 = vpop.f32.mrb[0].mxu0
      %v3098 = vadd.f32 0.0, %v3097
      %v3099 = vpop.f32.mrb[0].mxu0
      %3100 = vmatprep.mubr.bf16.mxu0 0
      %3101 = vmatmul.mubr.bf16.gmra.mrb[0].mxu0 %v2980
      %v3102 = vpop.f32.mrb[0].mxu0
      %v3103 = vadd.f32 0.0, %v3102
      %v3104 = vpop.f32.mrb[0].mxu0
      %v3105 = vpop.f32.mrb[0].mxu0
      %v3106 = vadd.f32 0.0, %v3105
      %v3107 = vpop.f32.mrb[0].mxu0
      %3108 = vmatprep.mubr.bf16.mxu0 0
      %3109 = vmatmul.mubr.bf16.gmra.mrb[0].mxu0 %v2981
      %v3110 = vpop.f32.mrb[0].mxu0
      %v3111 = vadd.f32 0.0, %v3110
      %v3112 = vpop.f32.mrb[0].mxu0
      %v3113 = vpop.f32.mrb[0].mxu0
      %v3114 = vadd.f32 0.0, %v3113
      %v3115 = vpop.f32.mrb[0].mxu0
      %3116 = vmatprep.mubr.bf16.mxu0 0
      %3117 = vmatmul.mubr.bf16.gmra.mrb[0].mxu0 %v2982
      %v3118 = vpop.f32.mrb[0].mxu0
      %v3119 = vadd.f32 0.0, %v3118
      %v3120 = vpop.f32.mrb[0].mxu0
      %v3121 = vpop.f32.mrb[0].mxu0
      %v3122 = vadd.f32 0.0, %v3121
      %v3123 = vpop.f32.mrb[0].mxu0
      %3124 = vmatprep.mubr.bf16.mxu0 0
      %3125 = vmatmul.mubr.bf16.gmra.mrb[0].mxu0 %v2983
      %v3126 = vpop.f32.mrb[0].mxu0
      %v3127 = vadd.f32 0.0, %v3126
      %v3128 = vpop.f32.mrb[0].mxu0
      %v3129 = vpop.f32.mrb[0].mxu0
      %v3130 = vadd.f32 0.0, %v3129
      %v3131 = vpop.f32.mrb[0].mxu0
      %3132 = vmatprep.mubr.bf16.mxu0 0
      %3133 = vmatmul.mubr.bf16.gmra.mrb[0].mxu0 %v2984
      %v3134 = vpop.f32.mrb[0].mxu0
      %v3135 = vadd.f32 0.0, %v3134
      %v3136 = vpop.f32.mrb[0].mxu0
      %v3137 = vpop.f32.mrb[0].mxu0
      %v3138 = vadd.f32 0.0, %v3137
      %v3139 = vpop.f32.mrb[0].mxu0
      %3140 = vmatprep.mubr.bf16.mxu0 0
      %3141 = vmatmul.mubr.bf16.gmra.mrb[0].mxu0 %v2985
      %v3142 = vpop.f32.mrb[0].mxu0
      %v3143 = vadd.f32 0.0, %v3142
      %v3144 = vpop.f32.mrb[0].mxu0
      %v3145 = vpop.f32.mrb[0].mxu0
      %v3146 = vadd.f32 0.0, %v3145
      %v3147 = vpop.f32.mrb[0].mxu0
      %3148 = vmatprep.mubr.bf16.mxu0 0
      %3149 = vmatmul.mubr.bf16.gmra.mrb[0].mxu0 %v2986
      %v3150 = vpop.f32.mrb[0].mxu0
      %v3151 = vadd.f32 0.0, %v3150
      %v3152 = vpop.f32.mrb[0].mxu0
      %v3153 = vpop.f32.mrb[0].mxu0
      %v3154 = vadd.f32 0.0, %v3153
      %v3155 = vpop.f32.mrb[0].mxu0
      %3156 = vmatprep.mubr.bf16.mxu0 0
      %3157 = vmatmul.mubr.bf16.gmra.mrb[0].mxu0 %v2987
      %v3158 = vpop.f32.mrb[0].mxu0
      %v3159 = vadd.f32 0.0, %v3158
      %v3160 = vpop.f32.mrb[0].mxu0
      %v3161 = vpop.f32.mrb[0].mxu0
      %v3162 = vadd.f32 0.0, %v3161
      %v3163 = vpop.f32.mrb[0].mxu0
      %3164 = vmatprep.mubr.bf16.mxu0 0
      %3165 = vmatmul.mubr.bf16.gmra.mrb[0].mxu0 %v2988
      %v3166 = vpop.f32.mrb[0].mxu0
      %v3167 = vadd.f32 0.0, %v3166
      %v3168 = vpop.f32.mrb[0].mxu0
      %v3169 = vpop.f32.mrb[0].mxu0
      %v3170 = vadd.f32 0.0, %v3169
      %v3171 = vpop.f32.mrb[0].mxu0
      %3172 = vmatprep.mubr.bf16.mxu0 0
      %3173 = vmatmul.mubr.bf16.gmra.mrb[0].mxu0 %v2989
      %v3174 = vpop.f32.mrb[0].mxu0
      %v3175 = vadd.f32 0.0, %v3174
      %v3176 = vpop.f32.mrb[0].mxu0
      %v3177 = vpop.f32.mrb[0].mxu0
      %v3178 = vadd.f32 0.0, %v3177
      %v3179 = vpop.f32.mrb[0].mxu0
      %3180 = vmatprep.mubr.bf16.mxu0 0
      %3181 = vmatmul.mubr.bf16.gmra.mrb[0].mxu0 %v2990
      %v3182 = vpop.f32.mrb[0].mxu0
      %v3183 = vadd.f32 0.0, %v3182
      %v3184 = vpop.f32.mrb[0].mxu0
      %v3185 = vpop.f32.mrb[0].mxu0
      %v3186 = vadd.f32 0.0, %v3185
      %v3187 = vpop.f32.mrb[0].mxu0
      %3188 = vmatprep.mubr.bf16.mxu0 0
      %3189 = vmatmul.mubr.bf16.gmra.mrb[0].mxu0 %v2991
      %v3190 = vpop.f32.mrb[0].mxu0
      %v3191 = vadd.f32 0.0, %v3190
      %v3192 = vpop.f32.mrb[0].mxu0
      %v3193 = vpop.f32.mrb[0].mxu0
      %v3194 = vadd.f32 0.0, %v3193
      %v3195 = vpop.f32.mrb[0].mxu0
      %3196 = vmatprep.mubr.bf16.mxu0 0
      %3197 = vmatmul.mubr.bf16.gmra.mrb[0].mxu0 %v2992
      %v3198 = vpop.f32.mrb[0].mxu0
      %v3199 = vadd.f32 0.0, %v3198
      %v3200 = vpop.f32.mrb[0].mxu0
      %v3201 = vpop.f32.mrb[0].mxu0
      %v3202 = vadd.f32 0.0, %v3201
      %v3203 = vpop.f32.mrb[0].mxu0
      %3204 = vmatprep.mubr.bf16.mxu0 0
      %3205 = vmatmul.mubr.bf16.gmra.mrb[0].mxu0 %v2993
      %v3206 = vpop.f32.mrb[0].mxu0
      %v3207 = vadd.f32 0.0, %v3206
      %v3208 = vpop.f32.mrb[0].mxu0
      %v3209 = vpop.f32.mrb[0].mxu0
      %v3210 = vadd.f32 0.0, %v3209
      %v3211 = vpop.f32.mrb[0].mxu0
      %3212 = vmatprep.mubr.bf16.mxu0 0
      %3213 = vmatmul.mubr.bf16.gmra.mrb[0].mxu0 %v2994
      %v3214 = vpop.f32.mrb[0].mxu0
      %v3215 = vadd.f32 0.0, %v3214
      %v3216 = vpop.f32.mrb[0].mxu0
      %v3217 = vpop.f32.mrb[0].mxu0
      %v3218 = vadd.f32 0.0, %v3217
      %v3219 = vpop.f32.mrb[0].mxu0
      %3220 = vdwg.mxu0
      %v3221 = vadd.f32 %v2915, %v3095
      %v3222 = vadd.f32 %v2916, %v3098
      %v3223 = vadd.f32 %v2917, %v3103
      %v3224 = vadd.f32 %v2918, %v3106
      %v3225 = vadd.f32 %v2919, %v3111
      %v3226 = vadd.f32 %v2920, %v3114
      %v3227 = vadd.f32 %v2921, %v3119
      %v3228 = vadd.f32 %v2922, %v3122
      %v3229 = vadd.f32 %v2923, %v3127
      %v3230 = vadd.f32 %v2924, %v3130
      %v3231 = vadd.f32 %v2925, %v3135
      %v3232 = vadd.f32 %v2926, %v3138
      %v3233 = vadd.f32 %v2927, %v3143
      %v3234 = vadd.f32 %v2928, %v3146
      %v3235 = vadd.f32 %v2929, %v3151
      %v3236 = vadd.f32 %v2930, %v3154
      %v3237 = vadd.f32 %v2931, %v3159
      %v3238 = vadd.f32 %v2932, %v3162
      %v3239 = vadd.f32 %v2933, %v3167
      %v3240 = vadd.f32 %v2934, %v3170
      %v3241 = vadd.f32 %v2935, %v3175
      %v3242 = vadd.f32 %v2936, %v3178
      %v3243 = vadd.f32 %v2937, %v3183
      %v3244 = vadd.f32 %v2938, %v3186
      %v3245 = vadd.f32 %v2939, %v3191
      %v3246 = vadd.f32 %v2940, %v3194
      %v3247 = vadd.f32 %v2941, %v3199
      %v3248 = vadd.f32 %v2942, %v3202
      %v3249 = vadd.f32 %v2943, %v3207
      %v3250 = vadd.f32 %v2944, %v3210
      %v3251 = vadd.f32 %v2945, %v3215
      %v3252 = vadd.f32 %v2946, %v3218
      %v3253 = vld [vmem:[%s5] sm:$0x1]
      %v3255 = vlaneseq
      %v3256 = vshrl.u32 %v3255, 7
      %v3257 = vsub.s32 0, %v3256
      %v3258 = vrot.slane %v3253, %v3257
      %v3260 = vmul.f32 %v3221, %v3258
      %v3261 = vmul.f32 %v3222, %v3258
      %v3262 = vmul.f32 %v3223, %v3258
      %v3263 = vmul.f32 %v3224, %v3258
      %v3264 = vmul.f32 %v3225, %v3258
      %v3265 = vmul.f32 %v3226, %v3258
      %v3266 = vmul.f32 %v3227, %v3258
      %v3267 = vmul.f32 %v3228, %v3258
      %v3268 = vmul.f32 %v3229, %v3258
      %v3269 = vmul.f32 %v3230, %v3258
      %v3270 = vmul.f32 %v3231, %v3258
      %v3271 = vmul.f32 %v3232, %v3258
      %v3272 = vmul.f32 %v3233, %v3258
      %v3273 = vmul.f32 %v3234, %v3258
      %v3274 = vmul.f32 %v3235, %v3258
      %v3275 = vmul.f32 %v3236, %v3258
      %v3276 = vmul.f32 %v3237, %v3258
      %v3277 = vmul.f32 %v3238, %v3258
      %v3278 = vmul.f32 %v3239, %v3258
      %v3279 = vmul.f32 %v3240, %v3258
      %v3280 = vmul.f32 %v3241, %v3258
      %v3281 = vmul.f32 %v3242, %v3258
      %v3282 = vmul.f32 %v3243, %v3258
      %v3283 = vmul.f32 %v3244, %v3258
      %v3284 = vmul.f32 %v3245, %v3258
      %v3285 = vmul.f32 %v3246, %v3258
      %v3286 = vmul.f32 %v3247, %v3258
      %v3287 = vmul.f32 %v3248, %v3258
      %v3288 = vmul.f32 %v3249, %v3258
      %v3289 = vmul.f32 %v3250, %v3258
      %v3290 = vmul.f32 %v3251, %v3258
      %v3291 = vmul.f32 %v3252, %v3258
      %v3292 = vld [vmem:[%s6] sm:$0x1]
      %v3294 = vlaneseq
      %v3295 = vshrl.u32 %v3294, 7
      %v3296 = vsub.s32 0, %v3295
      %v3297 = vrot.slane %v3292, %v3296
      %v3299 = vadd.f32 %v3260, %v3297
      %v3300 = vadd.f32 %v3261, %v3297
      %v3301 = vadd.f32 %v3262, %v3297
      %v3302 = vadd.f32 %v3263, %v3297
      %v3303 = vadd.f32 %v3264, %v3297
      %v3304 = vadd.f32 %v3265, %v3297
      %v3305 = vadd.f32 %v3266, %v3297
      %v3306 = vadd.f32 %v3267, %v3297
      %v3307 = vadd.f32 %v3268, %v3297
      %v3308 = vadd.f32 %v3269, %v3297
      %v3309 = vadd.f32 %v3270, %v3297
      %v3310 = vadd.f32 %v3271, %v3297
      %v3311 = vadd.f32 %v3272, %v3297
      %v3312 = vadd.f32 %v3273, %v3297
      %v3313 = vadd.f32 %v3274, %v3297
      %v3314 = vadd.f32 %v3275, %v3297
      %v3315 = vadd.f32 %v3276, %v3297
      %v3316 = vadd.f32 %v3277, %v3297
      %v3317 = vadd.f32 %v3278, %v3297
      %v3318 = vadd.f32 %v3279, %v3297
      %v3319 = vadd.f32 %v3280, %v3297
      %v3320 = vadd.f32 %v3281, %v3297
      %v3321 = vadd.f32 %v3282, %v3297
      %v3322 = vadd.f32 %v3283, %v3297
      %v3323 = vadd.f32 %v3284, %v3297
      %v3324 = vadd.f32 %v3285, %v3297
      %v3325 = vadd.f32 %v3286, %v3297
      %v3326 = vadd.f32 %v3287, %v3297
      %v3327 = vadd.f32 %v3288, %v3297
      %v3328 = vadd.f32 %v3289, %v3297
      %v3329 = vadd.f32 %v3290, %v3297
      %v3330 = vadd.f32 %v3291, %v3297
      %v3331 = vmax.f32 %v3299, 0.0
      %v3332 = vmax.f32 %v3300, 0.0
      %v3333 = vmax.f32 %v3301, 0.0
      %v3334 = vmax.f32 %v3302, 0.0
      %v3335 = vmax.f32 %v3303, 0.0
      %v3336 = vmax.f32 %v3304, 0.0
      %v3337 = vmax.f32 %v3305, 0.0
      %v3338 = vmax.f32 %v3306, 0.0
      %v3339 = vmax.f32 %v3307, 0.0
      %v3340 = vmax.f32 %v3308, 0.0
      %v3341 = vmax.f32 %v3309, 0.0
      %v3342 = vmax.f32 %v3310, 0.0
      %v3343 = vmax.f32 %v3311, 0.0
      %v3344 = vmax.f32 %v3312, 0.0
      %v3345 = vmax.f32 %v3313, 0.0
      %v3346 = vmax.f32 %v3314, 0.0
      %v3347 = vmax.f32 %v3315, 0.0
      %v3348 = vmax.f32 %v3316, 0.0
      %v3349 = vmax.f32 %v3317, 0.0
      %v3350 = vmax.f32 %v3318, 0.0
      %v3351 = vmax.f32 %v3319, 0.0
      %v3352 = vmax.f32 %v3320, 0.0
      %v3353 = vmax.f32 %v3321, 0.0
      %v3354 = vmax.f32 %v3322, 0.0
      %v3355 = vmax.f32 %v3323, 0.0
      %v3356 = vmax.f32 %v3324, 0.0
      %v3357 = vmax.f32 %v3325, 0.0
      %v3358 = vmax.f32 %v3326, 0.0
      %v3359 = vmax.f32 %v3327, 0.0
      %v3360 = vmax.f32 %v3328, 0.0
      %v3361 = vmax.f32 %v3329, 0.0
      %v3362 = vmax.f32 %v3330, 0.0
      %s3363 = scalar_lea.vmem [#allocation3], 24
      %3364 = vst [vmem:[%s3363 + $0x1] sm:$0xff] %v3331
      %3365 = vst [vmem:[%s3363 + $0x9] sm:$0xff] %v3332
      %3366 = vst [vmem:[%s3363 + $0x19] sm:$0xff] %v3333
      %3367 = vst [vmem:[%s3363 + $0x21] sm:$0xff] %v3334
      %3368 = vst [vmem:[%s3363 + $0x31] sm:$0xff] %v3335
      %3369 = vst [vmem:[%s3363 + $0x39] sm:$0xff] %v3336
      %3370 = vst [vmem:[%s3363 + $0x49] sm:$0xff] %v3337
      %3371 = vst [vmem:[%s3363 + $0x51] sm:$0xff] %v3338
      %3372 = vst [vmem:[%s3363 + $0x61] sm:$0xff] %v3339
      %3373 = vst [vmem:[%s3363 + $0x69] sm:$0xff] %v3340
      %3374 = vst [vmem:[%s3363 + $0x79] sm:$0xff] %v3341
      %3375 = vst [vmem:[%s3363 + $0x81] sm:$0xff] %v3342
      %3376 = vst [vmem:[%s3363 + $0x91] sm:$0xff] %v3343
      %3377 = vst [vmem:[%s3363 + $0x99] sm:$0xff] %v3344
      %3378 = vst [vmem:[%s3363 + $0xa9] sm:$0xff] %v3345
      %3379 = vst [vmem:[%s3363 + $0xb1] sm:$0xff] %v3346
      %3380 = vst [vmem:[%s3363 + $0xc1] sm:$0xff] %v3347
      %3381 = vst [vmem:[%s3363 + $0xc9] sm:$0xff] %v3348
      %3382 = vst [vmem:[%s3363 + $0xd9] sm:$0xff] %v3349
      %3383 = vst [vmem:[%s3363 + $0xe1] sm:$0xff] %v3350
      %3384 = vst [vmem:[%s3363 + $0xf1] sm:$0xff] %v3351
      %3385 = vst [vmem:[%s3363 + $0xf9] sm:$0xff] %v3352
      %3386 = vst [vmem:[%s3363 + $0x109] sm:$0xff] %v3353
      %3387 = vst [vmem:[%s3363 + $0x111] sm:$0xff] %v3354
      %3388 = vst [vmem:[%s3363 + $0x121] sm:$0xff] %v3355
      %3389 = vst [vmem:[%s3363 + $0x129] sm:$0xff] %v3356
      %3390 = vst [vmem:[%s3363 + $0x139] sm:$0xff] %v3357
      %3391 = vst [vmem:[%s3363 + $0x141] sm:$0xff] %v3358
      %3392 = vst [vmem:[%s3363 + $0x151] sm:$0xff] %v3359
      %3393 = vst [vmem:[%s3363 + $0x159] sm:$0xff] %v3360
      %3394 = vst [vmem:[%s3363 + $0x169] sm:$0xff] %v3361
      %3395 = vst [vmem:[%s3363 + $0x171] sm:$0xff] %v3362
      %v3396 = vld [vmem:[#allocation3] sm:$0xff]
      %v3397 = vld [vmem:[#allocation3 + $0x8] sm:$0xff]
      %v3398 = vld [vmem:[#allocation3 + $0x18] sm:$0xff]
      %v3399 = vld [vmem:[#allocation3 + $0x20] sm:$0xff]
      %v3400 = vld [vmem:[#allocation3 + $0x30] sm:$0xff]
      %v3401 = vld [vmem:[#allocation3 + $0x38] sm:$0xff]
      %v3402 = vld [vmem:[#allocation3 + $0x48] sm:$0xff]
      %v3403 = vld [vmem:[#allocation3 + $0x50] sm:$0xff]
      %v3404 = vld [vmem:[#allocation3 + $0x60] sm:$0xff]
      %v3405 = vld [vmem:[#allocation3 + $0x68] sm:$0xff]
      %v3406 = vld [vmem:[#allocation3 + $0x78] sm:$0xff]
      %v3407 = vld [vmem:[#allocation3 + $0x80] sm:$0xff]
      %v3408 = vld [vmem:[#allocation3 + $0x90] sm:$0xff]
      %v3409 = vld [vmem:[#allocation3 + $0x98] sm:$0xff]
      %v3410 = vld [vmem:[#allocation3 + $0xa8] sm:$0xff]
      %v3411 = vld [vmem:[#allocation3 + $0xb0] sm:$0xff]
      %v3412 = vld [vmem:[#allocation3 + $0xc0] sm:$0xff]
      %v3413 = vld [vmem:[#allocation3 + $0xc8] sm:$0xff]
      %v3414 = vld [vmem:[#allocation3 + $0xd8] sm:$0xff]
      %v3415 = vld [vmem:[#allocation3 + $0xe0] sm:$0xff]
      %v3416 = vld [vmem:[#allocation3 + $0xf0] sm:$0xff]
      %v3417 = vld [vmem:[#allocation3 + $0xf8] sm:$0xff]
      %v3418 = vld [vmem:[#allocation3 + $0x108] sm:$0xff]
      %v3419 = vld [vmem:[#allocation3 + $0x110] sm:$0xff]
      %v3420 = vld [vmem:[#allocation3 + $0x120] sm:$0xff]
      %v3421 = vld [vmem:[#allocation3 + $0x128] sm:$0xff]
      %v3422 = vld [vmem:[#allocation3 + $0x138] sm:$0xff]
      %v3423 = vld [vmem:[#allocation3 + $0x140] sm:$0xff]
      %v3424 = vld [vmem:[#allocation3 + $0x150] sm:$0xff]
      %v3425 = vld [vmem:[#allocation3 + $0x158] sm:$0xff]
      %v3426 = vld [vmem:[#allocation3 + $0x168] sm:$0xff]
      %v3427 = vld [vmem:[#allocation3 + $0x170] sm:$0xff]
      %v3428 = vpack.c.bf16 %v3397, %v3396
      %v3429 = vpack.c.bf16 %v3399, %v3398
      %v3430 = vpack.c.bf16 %v3401, %v3400
      %v3431 = vpack.c.bf16 %v3403, %v3402
      %v3432 = vpack.c.bf16 %v3405, %v3404
      %v3433 = vpack.c.bf16 %v3407, %v3406
      %v3434 = vpack.c.bf16 %v3409, %v3408
      %v3435 = vpack.c.bf16 %v3411, %v3410
      %v3436 = vpack.c.bf16 %v3413, %v3412
      %v3437 = vpack.c.bf16 %v3415, %v3414
      %v3438 = vpack.c.bf16 %v3417, %v3416
      %v3439 = vpack.c.bf16 %v3419, %v3418
      %v3440 = vpack.c.bf16 %v3421, %v3420
      %v3441 = vpack.c.bf16 %v3423, %v3422
      %v3442 = vpack.c.bf16 %v3425, %v3424
      %v3443 = vpack.c.bf16 %v3427, %v3426
      %v3444 = vld [vmem:[%s2] sm:$0xf]
      %v3445 = vld [vmem:[%s2 + $0x4] sm:$0xf]
      %v3446 = vld [vmem:[%s2 + $0x8] sm:$0xf]
      %v3447 = vld [vmem:[%s2 + $0xc] sm:$0xf]
      %v3448 = vld [vmem:[%s2 + $0x10] sm:$0xf]
      %v3449 = vld [vmem:[%s2 + $0x14] sm:$0xf]
      %v3450 = vld [vmem:[%s2 + $0x18] sm:$0xf]
      %v3451 = vld [vmem:[%s2 + $0x1c] sm:$0xf]
      %v3452 = vld [vmem:[%s2 + $0x20] sm:$0xf]
      %v3453 = vld [vmem:[%s2 + $0x24] sm:$0xf]
      %v3454 = vld [vmem:[%s2 + $0x28] sm:$0xf]
      %v3455 = vld [vmem:[%s2 + $0x2c] sm:$0xf]
      %v3456 = vld [vmem:[%s2 + $0x30] sm:$0xf]
      %v3457 = vld [vmem:[%s2 + $0x34] sm:$0xf]
      %v3458 = vld [vmem:[%s2 + $0x38] sm:$0xf]
      %v3459 = vld [vmem:[%s2 + $0x3c] sm:$0xf]
      %v3460 = vld [vmem:[#allocation3 + $0x1] sm:$0xff]
      %v3461 = vld [vmem:[#allocation3 + $0x9] sm:$0xff]
      %v3462 = vld [vmem:[#allocation3 + $0x19] sm:$0xff]
      %v3463 = vld [vmem:[#allocation3 + $0x21] sm:$0xff]
      %v3464 = vld [vmem:[#allocation3 + $0x31] sm:$0xff]
      %v3465 = vld [vmem:[#allocation3 + $0x39] sm:$0xff]
      %v3466 = vld [vmem:[#allocation3 + $0x49] sm:$0xff]
      %v3467 = vld [vmem:[#allocation3 + $0x51] sm:$0xff]
      %v3468 = vld [vmem:[#allocation3 + $0x61] sm:$0xff]
      %v3469 = vld [vmem:[#allocation3 + $0x69] sm:$0xff]
      %v3470 = vld [vmem:[#allocation3 + $0x79] sm:$0xff]
      %v3471 = vld [vmem:[#allocation3 + $0x81] sm:$0xff]
      %v3472 = vld [vmem:[#allocation3 + $0x91] sm:$0xff]
      %v3473 = vld [vmem:[#allocation3 + $0x99] sm:$0xff]
      %v3474 = vld [vmem:[#allocation3 + $0xa9] sm:$0xff]
      %v3475 = vld [vmem:[#allocation3 + $0xb1] sm:$0xff]
      %v3476 = vld [vmem:[#allocation3 + $0xc1] sm:$0xff]
      %v3477 = vld [vmem:[#allocation3 + $0xc9] sm:$0xff]
      %v3478 = vld [vmem:[#allocation3 + $0xd9] sm:$0xff]
      %v3479 = vld [vmem:[#allocation3 + $0xe1] sm:$0xff]
      %v3480 = vld [vmem:[#allocation3 + $0xf1] sm:$0xff]
      %v3481 = vld [vmem:[#allocation3 + $0xf9] sm:$0xff]
      %v3482 = vld [vmem:[#allocation3 + $0x109] sm:$0xff]
      %v3483 = vld [vmem:[#allocation3 + $0x111] sm:$0xff]
      %v3484 = vld [vmem:[#allocation3 + $0x121] sm:$0xff]
      %v3485 = vld [vmem:[#allocation3 + $0x129] sm:$0xff]
      %v3486 = vld [vmem:[#allocation3 + $0x139] sm:$0xff]
      %v3487 = vld [vmem:[#allocation3 + $0x141] sm:$0xff]
      %v3488 = vld [vmem:[#allocation3 + $0x151] sm:$0xff]
      %v3489 = vld [vmem:[#allocation3 + $0x159] sm:$0xff]
      %v3490 = vld [vmem:[#allocation3 + $0x169] sm:$0xff]
      %v3491 = vld [vmem:[#allocation3 + $0x171] sm:$0xff]
      %v3492 = vpack.c.bf16 %v3461, %v3460
      %v3493 = vpack.c.bf16 %v3463, %v3462
      %v3494 = vpack.c.bf16 %v3465, %v3464
      %v3495 = vpack.c.bf16 %v3467, %v3466
      %v3496 = vpack.c.bf16 %v3469, %v3468
      %v3497 = vpack.c.bf16 %v3471, %v3470
      %v3498 = vpack.c.bf16 %v3473, %v3472
      %v3499 = vpack.c.bf16 %v3475, %v3474
      %v3500 = vpack.c.bf16 %v3477, %v3476
      %v3501 = vpack.c.bf16 %v3479, %v3478
      %v3502 = vpack.c.bf16 %v3481, %v3480
      %v3503 = vpack.c.bf16 %v3483, %v3482
      %v3504 = vpack.c.bf16 %v3485, %v3484
      %v3505 = vpack.c.bf16 %v3487, %v3486
      %v3506 = vpack.c.bf16 %v3489, %v3488
      %v3507 = vpack.c.bf16 %v3491, %v3490
      %s3508 = scalar_lea.vmem %s2, 64
      %v3509 = vld [vmem:[%s3508] sm:$0xf]
      %v3510 = vld [vmem:[%s3508 + $0x4] sm:$0xf]
      %v3511 = vld [vmem:[%s3508 + $0x8] sm:$0xf]
      %v3512 = vld [vmem:[%s3508 + $0xc] sm:$0xf]
      %v3513 = vld [vmem:[%s3508 + $0x10] sm:$0xf]
      %v3514 = vld [vmem:[%s3508 + $0x14] sm:$0xf]
      %v3515 = vld [vmem:[%s3508 + $0x18] sm:$0xf]
      %v3516 = vld [vmem:[%s3508 + $0x1c] sm:$0xf]
      %v3517 = vld [vmem:[%s3508 + $0x20] sm:$0xf]
      %v3518 = vld [vmem:[%s3508 + $0x24] sm:$0xf]
      %v3519 = vld [vmem:[%s3508 + $0x28] sm:$0xf]
      %v3520 = vld [vmem:[%s3508 + $0x2c] sm:$0xf]
      %v3521 = vld [vmem:[%s3508 + $0x30] sm:$0xf]
      %v3522 = vld [vmem:[%s3508 + $0x34] sm:$0xf]
      %v3523 = vld [vmem:[%s3508 + $0x38] sm:$0xf]
      %v3524 = vld [vmem:[%s3508 + $0x3c] sm:$0xf]
      %v3541 = vunpack.c.l.b16 %v3509
      %v3542 = vunpack.c.l.b16 %v3510
      %v3543 = vunpack.c.l.b16 %v3511
      %v3544 = vunpack.c.l.b16 %v3512
      %v3545 = vunpack.c.l.b16 %v3513
      %v3546 = vunpack.c.l.b16 %v3514
      %v3547 = vunpack.c.l.b16 %v3515
      %v3548 = vunpack.c.l.b16 %v3516
      %v3549 = vunpack.c.l.b16 %v3517
      %v3550 = vunpack.c.l.b16 %v3518
      %v3551 = vunpack.c.l.b16 %v3519
      %v3552 = vunpack.c.l.b16 %v3520
      %v3553 = vunpack.c.l.b16 %v3521
      %v3554 = vunpack.c.l.b16 %v3522
      %v3555 = vunpack.c.l.b16 %v3523
      %v3556 = vunpack.c.l.b16 %v3524
      %v3557 = vpack.c.b16 %v3542, %v3541
      %v3558 = vpack.c.b16 %v3544, %v3543
      %v3559 = vpack.c.b16 %v3546, %v3545
      %v3560 = vpack.c.b16 %v3548, %v3547
      %v3561 = vpack.c.b16 %v3550, %v3549
      %v3562 = vpack.c.b16 %v3552, %v3551
      %v3563 = vpack.c.b16 %v3554, %v3553
      %v3564 = vpack.c.b16 %v3556, %v3555
      %3573 = vmatprep.subr.bf16.mxu0 0
      %3574 = vmatpush1.bf16.msra.mxu0 %v3557
      %3575 = vmatprep.subr.bf16.mxu0 0
      %3576 = vmatpush1.bf16.msra.mxu0 %v3558
      %3577 = vmatprep.subr.bf16.mxu0 0
      %3578 = vmatpush1.bf16.msra.mxu0 %v3559
      %3579 = vmatprep.subr.bf16.mxu0 0
      %3580 = vmatpush1.bf16.msra.mxu0 %v3560
      %3581 = vmatprep.subr.bf16.mxu0 0
      %3582 = vmatpush1.bf16.msra.mxu0 %v3561
      %3583 = vmatprep.subr.bf16.mxu0 0
      %3584 = vmatpush1.bf16.msra.mxu0 %v3562
      %3585 = vmatprep.subr.bf16.mxu0 0
      %3586 = vmatpush1.bf16.msra.mxu0 %v3563
      %3587 = vmatprep.subr.bf16.mxu0 0
      %3588 = vmatpush1.bf16.msra.mxu0 %v3564
      %3589 = vmatprep.subr.bf16.mxu0 0
      %3590 = vmatpush1.bf16.msra.mxu0 0
      %3591 = vmatprep.subr.bf16.mxu0 0
      %3592 = vmatpush1.bf16.msra.mxu0 0
      %3593 = vmatprep.subr.bf16.mxu0 0
      %3594 = vmatpush1.bf16.msra.mxu0 0
      %3595 = vmatprep.subr.bf16.mxu0 0
      %3596 = vmatpush1.bf16.msra.mxu0 0
      %3597 = vmatprep.subr.bf16.mxu0 0
      %3598 = vmatpush1.bf16.msra.mxu0 0
      %3599 = vmatprep.subr.bf16.mxu0 0
      %3600 = vmatpush1.bf16.msra.mxu0 0
      %3601 = vmatprep.subr.bf16.mxu0 0
      %3602 = vmatpush1.bf16.msra.mxu0 0
      %3603 = vmatprep.subr.bf16.mxu0 0
      %3604 = vmatpush1.bf16.msra.mxu0 0
      %3605 = vmatprep.mubr.bf16.mxu0 0
      %3606 = vmatmul.mubr.bf16.gmra.mrb[0].mxu0 %v3492
      %v3607 = vpop.f32.mrb[0].mxu0
      %v3608 = vadd.f32 0.0, %v3607
      %v3609 = vpop.f32.mrb[0].mxu0
      %v3610 = vpop.f32.mrb[0].mxu0
      %v3611 = vadd.f32 0.0, %v3610
      %v3612 = vpop.f32.mrb[0].mxu0
      %3613 = vmatprep.mubr.bf16.mxu0 0
      %3614 = vmatmul.mubr.bf16.gmra.mrb[0].mxu0 %v3493
      %v3615 = vpop.f32.mrb[0].mxu0
      %v3616 = vadd.f32 0.0, %v3615
      %v3617 = vpop.f32.mrb[0].mxu0
      %v3618 = vpop.f32.mrb[0].mxu0
      %v3619 = vadd.f32 0.0, %v3618
      %v3620 = vpop.f32.mrb[0].mxu0
      %3621 = vmatprep.mubr.bf16.mxu0 0
      %3622 = vmatmul.mubr.bf16.gmra.mrb[0].mxu0 %v3494
      %v3623 = vpop.f32.mrb[0].mxu0
      %v3624 = vadd.f32 0.0, %v3623
      %v3625 = vpop.f32.mrb[0].mxu0
      %v3626 = vpop.f32.mrb[0].mxu0
      %v3627 = vadd.f32 0.0, %v3626
      %v3628 = vpop.f32.mrb[0].mxu0
      %3629 = vmatprep.mubr.bf16.mxu0 0
      %3630 = vmatmul.mubr.bf16.gmra.mrb[0].mxu0 %v3495
      %v3631 = vpop.f32.mrb[0].mxu0
      %v3632 = vadd.f32 0.0, %v3631
      %v3633 = vpop.f32.mrb[0].mxu0
      %v3634 = vpop.f32.mrb[0].mxu0
      %v3635 = vadd.f32 0.0, %v3634
      %v3636 = vpop.f32.mrb[0].mxu0
      %3637 = vmatprep.mubr.bf16.mxu0 0
      %3638 = vmatmul.mubr.bf16.gmra.mrb[0].mxu0 %v3496
      %v3639 = vpop.f32.mrb[0].mxu0
      %v3640 = vadd.f32 0.0, %v3639
      %v3641 = vpop.f32.mrb[0].mxu0
      %v3642 = vpop.f32.mrb[0].mxu0
      %v3643 = vadd.f32 0.0, %v3642
      %v3644 = vpop.f32.mrb[0].mxu0
      %3645 = vmatprep.mubr.bf16.mxu0 0
      %3646 = vmatmul.mubr.bf16.gmra.mrb[0].mxu0 %v3497
      %v3647 = vpop.f32.mrb[0].mxu0
      %v3648 = vadd.f32 0.0, %v3647
      %v3649 = vpop.f32.mrb[0].mxu0
      %v3650 = vpop.f32.mrb[0].mxu0
      %v3651 = vadd.f32 0.0, %v3650
      %v3652 = vpop.f32.mrb[0].mxu0
      %3653 = vmatprep.mubr.bf16.mxu0 0
      %3654 = vmatmul.mubr.bf16.gmra.mrb[0].mxu0 %v3498
      %v3655 = vpop.f32.mrb[0].mxu0
      %v3656 = vadd.f32 0.0, %v3655
      %v3657 = vpop.f32.mrb[0].mxu0
      %v3658 = vpop.f32.mrb[0].mxu0
      %v3659 = vadd.f32 0.0, %v3658
      %v3660 = vpop.f32.mrb[0].mxu0
      %3661 = vmatprep.mubr.bf16.mxu0 0
      %3662 = vmatmul.mubr.bf16.gmra.mrb[0].mxu0 %v3499
      %v3663 = vpop.f32.mrb[0].mxu0
      %v3664 = vadd.f32 0.0, %v3663
      %v3665 = vpop.f32.mrb[0].mxu0
      %v3666 = vpop.f32.mrb[0].mxu0
      %v3667 = vadd.f32 0.0, %v3666
      %v3668 = vpop.f32.mrb[0].mxu0
      %3669 = vmatprep.mubr.bf16.mxu0 0
      %3670 = vmatmul.mubr.bf16.gmra.mrb[0].mxu0 %v3500
      %v3671 = vpop.f32.mrb[0].mxu0
      %v3672 = vadd.f32 0.0, %v3671
      %v3673 = vpop.f32.mrb[0].mxu0
      %v3674 = vpop.f32.mrb[0].mxu0
      %v3675 = vadd.f32 0.0, %v3674
      %v3676 = vpop.f32.mrb[0].mxu0
      %3677 = vmatprep.mubr.bf16.mxu0 0
      %3678 = vmatmul.mubr.bf16.gmra.mrb[0].mxu0 %v3501
      %v3679 = vpop.f32.mrb[0].mxu0
      %v3680 = vadd.f32 0.0, %v3679
      %v3681 = vpop.f32.mrb[0].mxu0
      %v3682 = vpop.f32.mrb[0].mxu0
      %v3683 = vadd.f32 0.0, %v3682
      %v3684 = vpop.f32.mrb[0].mxu0
      %3685 = vmatprep.mubr.bf16.mxu0 0
      %3686 = vmatmul.mubr.bf16.gmra.mrb[0].mxu0 %v3502
      %v3687 = vpop.f32.mrb[0].mxu0
      %v3688 = vadd.f32 0.0, %v3687
      %v3689 = vpop.f32.mrb[0].mxu0
      %v3690 = vpop.f32.mrb[0].mxu0
      %v3691 = vadd.f32 0.0, %v3690
      %v3692 = vpop.f32.mrb[0].mxu0
      %3693 = vmatprep.mubr.bf16.mxu0 0
      %3694 = vmatmul.mubr.bf16.gmra.mrb[0].mxu0 %v3503
      %v3695 = vpop.f32.mrb[0].mxu0
      %v3696 = vadd.f32 0.0, %v3695
      %v3697 = vpop.f32.mrb[0].mxu0
      %v3698 = vpop.f32.mrb[0].mxu0
      %v3699 = vadd.f32 0.0, %v3698
      %v3700 = vpop.f32.mrb[0].mxu0
      %3701 = vmatprep.mubr.bf16.mxu0 0
      %3702 = vmatmul.mubr.bf16.gmra.mrb[0].mxu0 %v3504
      %v3703 = vpop.f32.mrb[0].mxu0
      %v3704 = vadd.f32 0.0, %v3703
      %v3705 = vpop.f32.mrb[0].mxu0
      %v3706 = vpop.f32.mrb[0].mxu0
      %v3707 = vadd.f32 0.0, %v3706
      %v3708 = vpop.f32.mrb[0].mxu0
      %3709 = vmatprep.mubr.bf16.mxu0 0
      %3710 = vmatmul.mubr.bf16.gmra.mrb[0].mxu0 %v3505
      %v3711 = vpop.f32.mrb[0].mxu0
      %v3712 = vadd.f32 0.0, %v3711
      %v3713 = vpop.f32.mrb[0].mxu0
      %v3714 = vpop.f32.mrb[0].mxu0
      %v3715 = vadd.f32 0.0, %v3714
      %v3716 = vpop.f32.mrb[0].mxu0
      %3717 = vmatprep.mubr.bf16.mxu0 0
      %3718 = vmatmul.mubr.bf16.gmra.mrb[0].mxu0 %v3506
      %v3719 = vpop.f32.mrb[0].mxu0
      %v3720 = vadd.f32 0.0, %v3719
      %v3721 = vpop.f32.mrb[0].mxu0
      %v3722 = vpop.f32.mrb[0].mxu0
      %v3723 = vadd.f32 0.0, %v3722
      %v3724 = vpop.f32.mrb[0].mxu0
      %3725 = vmatprep.mubr.bf16.mxu0 0
      %3726 = vmatmul.mubr.bf16.gmra.mrb[0].mxu0 %v3507
      %v3727 = vpop.f32.mrb[0].mxu0
      %v3728 = vadd.f32 0.0, %v3727
      %v3729 = vpop.f32.mrb[0].mxu0
      %v3730 = vpop.f32.mrb[0].mxu0
      %v3731 = vadd.f32 0.0, %v3730
      %v3732 = vpop.f32.mrb[0].mxu0
      %3733 = vdwg.mxu0
      %v3750 = vunpack.c.l.b16 %v3444
      %v3751 = vunpack.c.l.b16 %v3445
      %v3752 = vunpack.c.l.b16 %v3446
      %v3753 = vunpack.c.l.b16 %v3447
      %v3754 = vunpack.c.l.b16 %v3448
      %v3755 = vunpack.c.l.b16 %v3449
      %v3756 = vunpack.c.l.b16 %v3450
      %v3757 = vunpack.c.l.b16 %v3451
      %v3758 = vunpack.c.l.b16 %v3452
      %v3759 = vunpack.c.l.b16 %v3453
      %v3760 = vunpack.c.l.b16 %v3454
      %v3761 = vunpack.c.l.b16 %v3455
      %v3762 = vunpack.c.l.b16 %v3456
      %v3763 = vunpack.c.l.b16 %v3457
      %v3764 = vunpack.c.l.b16 %v3458
      %v3765 = vunpack.c.l.b16 %v3459
      %v3766 = vpack.c.b16 %v3751, %v3750
      %v3767 = vpack.c.b16 %v3753, %v3752
      %v3768 = vpack.c.b16 %v3755, %v3754
      %v3769 = vpack.c.b16 %v3757, %v3756
      %v3770 = vpack.c.b16 %v3759, %v3758
      %v3771 = vpack.c.b16 %v3761, %v3760
      %v3772 = vpack.c.b16 %v3763, %v3762
      %v3773 = vpack.c.b16 %v3765, %v3764
      %3782 = vmatprep.subr.bf16.mxu0 0
      %3783 = vmatpush1.bf16.msra.mxu0 %v3766
      %3784 = vmatprep.subr.bf16.mxu0 0
      %3785 = vmatpush1.bf16.msra.mxu0 %v3767
      %3786 = vmatprep.subr.bf16.mxu0 0
      %3787 = vmatpush1.bf16.msra.mxu0 %v3768
      %3788 = vmatprep.subr.bf16.mxu0 0
      %3789 = vmatpush1.bf16.msra.mxu0 %v3769
      %3790 = vmatprep.subr.bf16.mxu0 0
      %3791 = vmatpush1.bf16.msra.mxu0 %v3770
      %3792 = vmatprep.subr.bf16.mxu0 0
      %3793 = vmatpush1.bf16.msra.mxu0 %v3771
      %3794 = vmatprep.subr.bf16.mxu0 0
      %3795 = vmatpush1.bf16.msra.mxu0 %v3772
      %3796 = vmatprep.subr.bf16.mxu0 0
      %3797 = vmatpush1.bf16.msra.mxu0 %v3773
      %3798 = vmatprep.subr.bf16.mxu0 0
      %3799 = vmatpush1.bf16.msra.mxu0 0
      %3800 = vmatprep.subr.bf16.mxu0 0
      %3801 = vmatpush1.bf16.msra.mxu0 0
      %3802 = vmatprep.subr.bf16.mxu0 0
      %3803 = vmatpush1.bf16.msra.mxu0 0
      %3804 = vmatprep.subr.bf16.mxu0 0
      %3805 = vmatpush1.bf16.msra.mxu0 0
      %3806 = vmatprep.subr.bf16.mxu0 0
      %3807 = vmatpush1.bf16.msra.mxu0 0
      %3808 = vmatprep.subr.bf16.mxu0 0
      %3809 = vmatpush1.bf16.msra.mxu0 0
      %3810 = vmatprep.subr.bf16.mxu0 0
      %3811 = vmatpush1.bf16.msra.mxu0 0
      %3812 = vmatprep.subr.bf16.mxu0 0
      %3813 = vmatpush1.bf16.msra.mxu0 0
      %3814 = vmatprep.mubr.bf16.mxu0 0
      %3815 = vmatmul.mubr.bf16.gmra.mrb[0].mxu0 %v3428
      %v3816 = vpop.f32.mrb[0].mxu0
      %v3817 = vadd.f32 %v3608, %v3816
      %v3818 = vpop.f32.mrb[0].mxu0
      %v3819 = vpop.f32.mrb[0].mxu0
      %v3820 = vadd.f32 %v3611, %v3819
      %v3821 = vpop.f32.mrb[0].mxu0
      %3822 = vmatprep.mubr.bf16.mxu0 0
      %3823 = vmatmul.mubr.bf16.gmra.mrb[0].mxu0 %v3429
      %v3824 = vpop.f32.mrb[0].mxu0
      %v3825 = vadd.f32 %v3616, %v3824
      %v3826 = vpop.f32.mrb[0].mxu0
      %v3827 = vpop.f32.mrb[0].mxu0
      %v3828 = vadd.f32 %v3619, %v3827
      %v3829 = vpop.f32.mrb[0].mxu0
      %3830 = vmatprep.mubr.bf16.mxu0 0
      %3831 = vmatmul.mubr.bf16.gmra.mrb[0].mxu0 %v3430
      %v3832 = vpop.f32.mrb[0].mxu0
      %v3833 = vadd.f32 %v3624, %v3832
      %v3834 = vpop.f32.mrb[0].mxu0
      %v3835 = vpop.f32.mrb[0].mxu0
      %v3836 = vadd.f32 %v3627, %v3835
      %v3837 = vpop.f32.mrb[0].mxu0
      %3838 = vmatprep.mubr.bf16.mxu0 0
      %3839 = vmatmul.mubr.bf16.gmra.mrb[0].mxu0 %v3431
      %v3840 = vpop.f32.mrb[0].mxu0
      %v3841 = vadd.f32 %v3632, %v3840
      %v3842 = vpop.f32.mrb[0].mxu0
      %v3843 = vpop.f32.mrb[0].mxu0
      %v3844 = vadd.f32 %v3635, %v3843
      %v3845 = vpop.f32.mrb[0].mxu0
      %3846 = vmatprep.mubr.bf16.mxu0 0
      %3847 = vmatmul.mubr.bf16.gmra.mrb[0].mxu0 %v3432
      %v3848 = vpop.f32.mrb[0].mxu0
      %v3849 = vadd.f32 %v3640, %v3848
      %v3850 = vpop.f32.mrb[0].mxu0
      %v3851 = vpop.f32.mrb[0].mxu0
      %v3852 = vadd.f32 %v3643, %v3851
      %v3853 = vpop.f32.mrb[0].mxu0
      %3854 = vmatprep.mubr.bf16.mxu0 0
      %3855 = vmatmul.mubr.bf16.gmra.mrb[0].mxu0 %v3433
      %v3856 = vpop.f32.mrb[0].mxu0
      %v3857 = vadd.f32 %v3648, %v3856
      %v3858 = vpop.f32.mrb[0].mxu0
      %v3859 = vpop.f32.mrb[0].mxu0
      %v3860 = vadd.f32 %v3651, %v3859
      %v3861 = vpop.f32.mrb[0].mxu0
      %3862 = vmatprep.mubr.bf16.mxu0 0
      %3863 = vmatmul.mubr.bf16.gmra.mrb[0].mxu0 %v3434
      %v3864 = vpop.f32.mrb[0].mxu0
      %v3865 = vadd.f32 %v3656, %v3864
      %v3866 = vpop.f32.mrb[0].mxu0
      %v3867 = vpop.f32.mrb[0].mxu0
      %v3868 = vadd.f32 %v3659, %v3867
      %v3869 = vpop.f32.mrb[0].mxu0
      %3870 = vmatprep.mubr.bf16.mxu0 0
      %3871 = vmatmul.mubr.bf16.gmra.mrb[0].mxu0 %v3435
      %v3872 = vpop.f32.mrb[0].mxu0
      %v3873 = vadd.f32 %v3664, %v3872
      %v3874 = vpop.f32.mrb[0].mxu0
      %v3875 = vpop.f32.mrb[0].mxu0
      %v3876 = vadd.f32 %v3667, %v3875
      %v3877 = vpop.f32.mrb[0].mxu0
      %3878 = vmatprep.mubr.bf16.mxu0 0
      %3879 = vmatmul.mubr.bf16.gmra.mrb[0].mxu0 %v3436
      %v3880 = vpop.f32.mrb[0].mxu0
      %v3881 = vadd.f32 %v3672, %v3880
      %v3882 = vpop.f32.mrb[0].mxu0
      %v3883 = vpop.f32.mrb[0].mxu0
      %v3884 = vadd.f32 %v3675, %v3883
      %v3885 = vpop.f32.mrb[0].mxu0
      %3886 = vmatprep.mubr.bf16.mxu0 0
      %3887 = vmatmul.mubr.bf16.gmra.mrb[0].mxu0 %v3437
      %v3888 = vpop.f32.mrb[0].mxu0
      %v3889 = vadd.f32 %v3680, %v3888
      %v3890 = vpop.f32.mrb[0].mxu0
      %v3891 = vpop.f32.mrb[0].mxu0
      %v3892 = vadd.f32 %v3683, %v3891
      %v3893 = vpop.f32.mrb[0].mxu0
      %3894 = vmatprep.mubr.bf16.mxu0 0
      %3895 = vmatmul.mubr.bf16.gmra.mrb[0].mxu0 %v3438
      %v3896 = vpop.f32.mrb[0].mxu0
      %v3897 = vadd.f32 %v3688, %v3896
      %v3898 = vpop.f32.mrb[0].mxu0
      %v3899 = vpop.f32.mrb[0].mxu0
      %v3900 = vadd.f32 %v3691, %v3899
      %v3901 = vpop.f32.mrb[0].mxu0
      %3902 = vmatprep.mubr.bf16.mxu0 0
      %3903 = vmatmul.mubr.bf16.gmra.mrb[0].mxu0 %v3439
      %v3904 = vpop.f32.mrb[0].mxu0
      %v3905 = vadd.f32 %v3696, %v3904
      %v3906 = vpop.f32.mrb[0].mxu0
      %v3907 = vpop.f32.mrb[0].mxu0
      %v3908 = vadd.f32 %v3699, %v3907
      %v3909 = vpop.f32.mrb[0].mxu0
      %3910 = vmatprep.mubr.bf16.mxu0 0
      %3911 = vmatmul.mubr.bf16.gmra.mrb[0].mxu0 %v3440
      %v3912 = vpop.f32.mrb[0].mxu0
      %v3913 = vadd.f32 %v3704, %v3912
      %v3914 = vpop.f32.mrb[0].mxu0
      %v3915 = vpop.f32.mrb[0].mxu0
      %v3916 = vadd.f32 %v3707, %v3915
      %v3917 = vpop.f32.mrb[0].mxu0
      %3918 = vmatprep.mubr.bf16.mxu0 0
      %3919 = vmatmul.mubr.bf16.gmra.mrb[0].mxu0 %v3441
      %v3920 = vpop.f32.mrb[0].mxu0
      %v3921 = vadd.f32 %v3712, %v3920
      %v3922 = vpop.f32.mrb[0].mxu0
      %v3923 = vpop.f32.mrb[0].mxu0
      %v3924 = vadd.f32 %v3715, %v3923
      %v3925 = vpop.f32.mrb[0].mxu0
      %3926 = vmatprep.mubr.bf16.mxu0 0
      %3927 = vmatmul.mubr.bf16.gmra.mrb[0].mxu0 %v3442
      %v3928 = vpop.f32.mrb[0].mxu0
      %v3929 = vadd.f32 %v3720, %v3928
      %v3930 = vpop.f32.mrb[0].mxu0
      %v3931 = vpop.f32.mrb[0].mxu0
      %v3932 = vadd.f32 %v3723, %v3931
      %v3933 = vpop.f32.mrb[0].mxu0
      %3934 = vmatprep.mubr.bf16.mxu0 0
      %3935 = vmatmul.mubr.bf16.gmra.mrb[0].mxu0 %v3443
      %v3936 = vpop.f32.mrb[0].mxu0
      %v3937 = vadd.f32 %v3728, %v3936
      %v3938 = vpop.f32.mrb[0].mxu0
      %v3939 = vpop.f32.mrb[0].mxu0
      %v3940 = vadd.f32 %v3731, %v3939
      %v3941 = vpop.f32.mrb[0].mxu0
      %3942 = vdwg.mxu0
      %v3943 = vld [vmem:[#allocation3 + $0x2] sm:$0xff]
      %v3944 = vld [vmem:[#allocation3 + $0xa] sm:$0xff]
      %v3945 = vld [vmem:[#allocation3 + $0x1a] sm:$0xff]
      %v3946 = vld [vmem:[#allocation3 + $0x22] sm:$0xff]
      %v3947 = vld [vmem:[#allocation3 + $0x32] sm:$0xff]
      %v3948 = vld [vmem:[#allocation3 + $0x3a] sm:$0xff]
      %v3949 = vld [vmem:[#allocation3 + $0x4a] sm:$0xff]
      %v3950 = vld [vmem:[#allocation3 + $0x52] sm:$0xff]
      %v3951 = vld [vmem:[#allocation3 + $0x62] sm:$0xff]
      %v3952 = vld [vmem:[#allocation3 + $0x6a] sm:$0xff]
      %v3953 = vld [vmem:[#allocation3 + $0x7a] sm:$0xff]
      %v3954 = vld [vmem:[#allocation3 + $0x82] sm:$0xff]
      %v3955 = vld [vmem:[#allocation3 + $0x92] sm:$0xff]
      %v3956 = vld [vmem:[#allocation3 + $0x9a] sm:$0xff]
      %v3957 = vld [vmem:[#allocation3 + $0xaa] sm:$0xff]
      %v3958 = vld [vmem:[#allocation3 + $0xb2] sm:$0xff]
      %v3959 = vld [vmem:[#allocation3 + $0xc2] sm:$0xff]
      %v3960 = vld [vmem:[#allocation3 + $0xca] sm:$0xff]
      %v3961 = vld [vmem:[#allocation3 + $0xda] sm:$0xff]
      %v3962 = vld [vmem:[#allocation3 + $0xe2] sm:$0xff]
      %v3963 = vld [vmem:[#allocation3 + $0xf2] sm:$0xff]
      %v3964 = vld [vmem:[#allocation3 + $0xfa] sm:$0xff]
      %v3965 = vld [vmem:[#allocation3 + $0x10a] sm:$0xff]
      %v3966 = vld [vmem:[#allocation3 + $0x112] sm:$0xff]
      %v3967 = vld [vmem:[#allocation3 + $0x122] sm:$0xff]
      %v3968 = vld [vmem:[#allocation3 + $0x12a] sm:$0xff]
      %v3969 = vld [vmem:[#allocation3 + $0x13a] sm:$0xff]
      %v3970 = vld [vmem:[#allocation3 + $0x142] sm:$0xff]
      %v3971 = vld [vmem:[#allocation3 + $0x152] sm:$0xff]
      %v3972 = vld [vmem:[#allocation3 + $0x15a] sm:$0xff]
      %v3973 = vld [vmem:[#allocation3 + $0x16a] sm:$0xff]
      %v3974 = vld [vmem:[#allocation3 + $0x172] sm:$0xff]
      %v3975 = vpack.c.bf16 %v3944, %v3943
      %v3976 = vpack.c.bf16 %v3946, %v3945
      %v3977 = vpack.c.bf16 %v3948, %v3947
      %v3978 = vpack.c.bf16 %v3950, %v3949
      %v3979 = vpack.c.bf16 %v3952, %v3951
      %v3980 = vpack.c.bf16 %v3954, %v3953
      %v3981 = vpack.c.bf16 %v3956, %v3955
      %v3982 = vpack.c.bf16 %v3958, %v3957
      %v3983 = vpack.c.bf16 %v3960, %v3959
      %v3984 = vpack.c.bf16 %v3962, %v3961
      %v3985 = vpack.c.bf16 %v3964, %v3963
      %v3986 = vpack.c.bf16 %v3966, %v3965
      %v3987 = vpack.c.bf16 %v3968, %v3967
      %v3988 = vpack.c.bf16 %v3970, %v3969
      %v3989 = vpack.c.bf16 %v3972, %v3971
      %v3990 = vpack.c.bf16 %v3974, %v3973
      %s3991 = scalar_lea.vmem %s2, 128
      %v3992 = vld [vmem:[%s3991] sm:$0xf]
      %v3993 = vld [vmem:[%s3991 + $0x4] sm:$0xf]
      %v3994 = vld [vmem:[%s3991 + $0x8] sm:$0xf]
      %v3995 = vld [vmem:[%s3991 + $0xc] sm:$0xf]
      %v3996 = vld [vmem:[%s3991 + $0x10] sm:$0xf]
      %v3997 = vld [vmem:[%s3991 + $0x14] sm:$0xf]
      %v3998 = vld [vmem:[%s3991 + $0x18] sm:$0xf]
      %v3999 = vld [vmem:[%s3991 + $0x1c] sm:$0xf]
      %v4000 = vld [vmem:[%s3991 + $0x20] sm:$0xf]
      %v4001 = vld [vmem:[%s3991 + $0x24] sm:$0xf]
      %v4002 = vld [vmem:[%s3991 + $0x28] sm:$0xf]
      %v4003 = vld [vmem:[%s3991 + $0x2c] sm:$0xf]
      %v4004 = vld [vmem:[%s3991 + $0x30] sm:$0xf]
      %v4005 = vld [vmem:[%s3991 + $0x34] sm:$0xf]
      %v4006 = vld [vmem:[%s3991 + $0x38] sm:$0xf]
      %v4007 = vld [vmem:[%s3991 + $0x3c] sm:$0xf]
      %v4024 = vunpack.c.l.b16 %v3992
      %v4025 = vunpack.c.l.b16 %v3993
      %v4026 = vunpack.c.l.b16 %v3994
      %v4027 = vunpack.c.l.b16 %v3995
      %v4028 = vunpack.c.l.b16 %v3996
      %v4029 = vunpack.c.l.b16 %v3997
      %v4030 = vunpack.c.l.b16 %v3998
      %v4031 = vunpack.c.l.b16 %v3999
      %v4032 = vunpack.c.l.b16 %v4000
      %v4033 = vunpack.c.l.b16 %v4001
      %v4034 = vunpack.c.l.b16 %v4002
      %v4035 = vunpack.c.l.b16 %v4003
      %v4036 = vunpack.c.l.b16 %v4004
      %v4037 = vunpack.c.l.b16 %v4005
      %v4038 = vunpack.c.l.b16 %v4006
      %v4039 = vunpack.c.l.b16 %v4007
      %v4040 = vpack.c.b16 %v4025, %v4024
      %v4041 = vpack.c.b16 %v4027, %v4026
      %v4042 = vpack.c.b16 %v4029, %v4028
      %v4043 = vpack.c.b16 %v4031, %v4030
      %v4044 = vpack.c.b16 %v4033, %v4032
      %v4045 = vpack.c.b16 %v4035, %v4034
      %v4046 = vpack.c.b16 %v4037, %v4036
      %v4047 = vpack.c.b16 %v4039, %v4038
      %4056 = vmatprep.subr.bf16.mxu0 0
      %4057 = vmatpush1.bf16.msra.mxu0 %v4040
      %4058 = vmatprep.subr.bf16.mxu0 0
      %4059 = vmatpush1.bf16.msra.mxu0 %v4041
      %4060 = vmatprep.subr.bf16.mxu0 0
      %4061 = vmatpush1.bf16.msra.mxu0 %v4042
      %4062 = vmatprep.subr.bf16.mxu0 0
      %4063 = vmatpush1.bf16.msra.mxu0 %v4043
      %4064 = vmatprep.subr.bf16.mxu0 0
      %4065 = vmatpush1.bf16.msra.mxu0 %v4044
      %4066 = vmatprep.subr.bf16.mxu0 0
      %4067 = vmatpush1.bf16.msra.mxu0 %v4045
      %4068 = vmatprep.subr.bf16.mxu0 0
      %4069 = vmatpush1.bf16.msra.mxu0 %v4046
      %4070 = vmatprep.subr.bf16.mxu0 0
      %4071 = vmatpush1.bf16.msra.mxu0 %v4047
      %4072 = vmatprep.subr.bf16.mxu0 0
      %4073 = vmatpush1.bf16.msra.mxu0 0
      %4074 = vmatprep.subr.bf16.mxu0 0
      %4075 = vmatpush1.bf16.msra.mxu0 0
      %4076 = vmatprep.subr.bf16.mxu0 0
      %4077 = vmatpush1.bf16.msra.mxu0 0
      %4078 = vmatprep.subr.bf16.mxu0 0
      %4079 = vmatpush1.bf16.msra.mxu0 0
      %4080 = vmatprep.subr.bf16.mxu0 0
      %4081 = vmatpush1.bf16.msra.mxu0 0
      %4082 = vmatprep.subr.bf16.mxu0 0
      %4083 = vmatpush1.bf16.msra.mxu0 0
      %4084 = vmatprep.subr.bf16.mxu0 0
      %4085 = vmatpush1.bf16.msra.mxu0 0
      %4086 = vmatprep.subr.bf16.mxu0 0
      %4087 = vmatpush1.bf16.msra.mxu0 0
      %4088 = vmatprep.mubr.bf16.mxu0 0
      %4089 = vmatmul.mubr.bf16.gmra.mrb[0].mxu0 %v3975
      %v4090 = vpop.f32.mrb[0].mxu0
      %v4091 = vadd.f32 0.0, %v4090
      %v4092 = vpop.f32.mrb[0].mxu0
      %v4093 = vpop.f32.mrb[0].mxu0
      %v4094 = vadd.f32 0.0, %v4093
      %v4095 = vpop.f32.mrb[0].mxu0
      %4096 = vmatprep.mubr.bf16.mxu0 0
      %4097 = vmatmul.mubr.bf16.gmra.mrb[0].mxu0 %v3976
      %v4098 = vpop.f32.mrb[0].mxu0
      %v4099 = vadd.f32 0.0, %v4098
      %v4100 = vpop.f32.mrb[0].mxu0
      %v4101 = vpop.f32.mrb[0].mxu0
      %v4102 = vadd.f32 0.0, %v4101
      %v4103 = vpop.f32.mrb[0].mxu0
      %4104 = vmatprep.mubr.bf16.mxu0 0
      %4105 = vmatmul.mubr.bf16.gmra.mrb[0].mxu0 %v3977
      %v4106 = vpop.f32.mrb[0].mxu0
      %v4107 = vadd.f32 0.0, %v4106
      %v4108 = vpop.f32.mrb[0].mxu0
      %v4109 = vpop.f32.mrb[0].mxu0
      %v4110 = vadd.f32 0.0, %v4109
      %v4111 = vpop.f32.mrb[0].mxu0
      %4112 = vmatprep.mubr.bf16.mxu0 0
      %4113 = vmatmul.mubr.bf16.gmra.mrb[0].mxu0 %v3978
      %v4114 = vpop.f32.mrb[0].mxu0
      %v4115 = vadd.f32 0.0, %v4114
      %v4116 = vpop.f32.mrb[0].mxu0
      %v4117 = vpop.f32.mrb[0].mxu0
      %v4118 = vadd.f32 0.0, %v4117
      %v4119 = vpop.f32.mrb[0].mxu0
      %4120 = vmatprep.mubr.bf16.mxu0 0
      %4121 = vmatmul.mubr.bf16.gmra.mrb[0].mxu0 %v3979
      %v4122 = vpop.f32.mrb[0].mxu0
      %v4123 = vadd.f32 0.0, %v4122
      %v4124 = vpop.f32.mrb[0].mxu0
      %v4125 = vpop.f32.mrb[0].mxu0
      %v4126 = vadd.f32 0.0, %v4125
      %v4127 = vpop.f32.mrb[0].mxu0
      %4128 = vmatprep.mubr.bf16.mxu0 0
      %4129 = vmatmul.mubr.bf16.gmra.mrb[0].mxu0 %v3980
      %v4130 = vpop.f32.mrb[0].mxu0
      %v4131 = vadd.f32 0.0, %v4130
      %v4132 = vpop.f32.mrb[0].mxu0
      %v4133 = vpop.f32.mrb[0].mxu0
      %v4134 = vadd.f32 0.0, %v4133
      %v4135 = vpop.f32.mrb[0].mxu0
      %4136 = vmatprep.mubr.bf16.mxu0 0
      %4137 = vmatmul.mubr.bf16.gmra.mrb[0].mxu0 %v3981
      %v4138 = vpop.f32.mrb[0].mxu0
      %v4139 = vadd.f32 0.0, %v4138
      %v4140 = vpop.f32.mrb[0].mxu0
      %v4141 = vpop.f32.mrb[0].mxu0
      %v4142 = vadd.f32 0.0, %v4141
      %v4143 = vpop.f32.mrb[0].mxu0
      %4144 = vmatprep.mubr.bf16.mxu0 0
      %4145 = vmatmul.mubr.bf16.gmra.mrb[0].mxu0 %v3982
      %v4146 = vpop.f32.mrb[0].mxu0
      %v4147 = vadd.f32 0.0, %v4146
      %v4148 = vpop.f32.mrb[0].mxu0
      %v4149 = vpop.f32.mrb[0].mxu0
      %v4150 = vadd.f32 0.0, %v4149
      %v4151 = vpop.f32.mrb[0].mxu0
      %4152 = vmatprep.mubr.bf16.mxu0 0
      %4153 = vmatmul.mubr.bf16.gmra.mrb[0].mxu0 %v3983
      %v4154 = vpop.f32.mrb[0].mxu0
      %v4155 = vadd.f32 0.0, %v4154
      %v4156 = vpop.f32.mrb[0].mxu0
      %v4157 = vpop.f32.mrb[0].mxu0
      %v4158 = vadd.f32 0.0, %v4157
      %v4159 = vpop.f32.mrb[0].mxu0
      %4160 = vmatprep.mubr.bf16.mxu0 0
      %4161 = vmatmul.mubr.bf16.gmra.mrb[0].mxu0 %v3984
      %v4162 = vpop.f32.mrb[0].mxu0
      %v4163 = vadd.f32 0.0, %v4162
      %v4164 = vpop.f32.mrb[0].mxu0
      %v4165 = vpop.f32.mrb[0].mxu0
      %v4166 = vadd.f32 0.0, %v4165
      %v4167 = vpop.f32.mrb[0].mxu0
      %4168 = vmatprep.mubr.bf16.mxu0 0
      %4169 = vmatmul.mubr.bf16.gmra.mrb[0].mxu0 %v3985
      %v4170 = vpop.f32.mrb[0].mxu0
      %v4171 = vadd.f32 0.0, %v4170
      %v4172 = vpop.f32.mrb[0].mxu0
      %v4173 = vpop.f32.mrb[0].mxu0
      %v4174 = vadd.f32 0.0, %v4173
      %v4175 = vpop.f32.mrb[0].mxu0
      %4176 = vmatprep.mubr.bf16.mxu0 0
      %4177 = vmatmul.mubr.bf16.gmra.mrb[0].mxu0 %v3986
      %v4178 = vpop.f32.mrb[0].mxu0
      %v4179 = vadd.f32 0.0, %v4178
      %v4180 = vpop.f32.mrb[0].mxu0
      %v4181 = vpop.f32.mrb[0].mxu0
      %v4182 = vadd.f32 0.0, %v4181
      %v4183 = vpop.f32.mrb[0].mxu0
      %4184 = vmatprep.mubr.bf16.mxu0 0
      %4185 = vmatmul.mubr.bf16.gmra.mrb[0].mxu0 %v3987
      %v4186 = vpop.f32.mrb[0].mxu0
      %v4187 = vadd.f32 0.0, %v4186
      %v4188 = vpop.f32.mrb[0].mxu0
      %v4189 = vpop.f32.mrb[0].mxu0
      %v4190 = vadd.f32 0.0, %v4189
      %v4191 = vpop.f32.mrb[0].mxu0
      %4192 = vmatprep.mubr.bf16.mxu0 0
      %4193 = vmatmul.mubr.bf16.gmra.mrb[0].mxu0 %v3988
      %v4194 = vpop.f32.mrb[0].mxu0
      %v4195 = vadd.f32 0.0, %v4194
      %v4196 = vpop.f32.mrb[0].mxu0
      %v4197 = vpop.f32.mrb[0].mxu0
      %v4198 = vadd.f32 0.0, %v4197
      %v4199 = vpop.f32.mrb[0].mxu0
      %4200 = vmatprep.mubr.bf16.mxu0 0
      %4201 = vmatmul.mubr.bf16.gmra.mrb[0].mxu0 %v3989
      %v4202 = vpop.f32.mrb[0].mxu0
      %v4203 = vadd.f32 0.0, %v4202
      %v4204 = vpop.f32.mrb[0].mxu0
      %v4205 = vpop.f32.mrb[0].mxu0
      %v4206 = vadd.f32 0.0, %v4205
      %v4207 = vpop.f32.mrb[0].mxu0
      %4208 = vmatprep.mubr.bf16.mxu0 0
      %4209 = vmatmul.mubr.bf16.gmra.mrb[0].mxu0 %v3990
      %v4210 = vpop.f32.mrb[0].mxu0
      %v4211 = vadd.f32 0.0, %v4210
      %v4212 = vpop.f32.mrb[0].mxu0
      %v4213 = vpop.f32.mrb[0].mxu0
      %v4214 = vadd.f32 0.0, %v4213
      %v4215 = vpop.f32.mrb[0].mxu0
      %4216 = vdwg.mxu0
      %v4217 = vadd.f32 %v3817, %v4091
      %v4218 = vadd.f32 %v3820, %v4094
      %v4219 = vadd.f32 %v3825, %v4099
      %v4220 = vadd.f32 %v3828, %v4102
      %v4221 = vadd.f32 %v3833, %v4107
      %v4222 = vadd.f32 %v3836, %v4110
      %v4223 = vadd.f32 %v3841, %v4115
      %v4224 = vadd.f32 %v3844, %v4118
      %v4225 = vadd.f32 %v3849, %v4123
      %v4226 = vadd.f32 %v3852, %v4126
      %v4227 = vadd.f32 %v3857, %v4131
      %v4228 = vadd.f32 %v3860, %v4134
      %v4229 = vadd.f32 %v3865, %v4139
      %v4230 = vadd.f32 %v3868, %v4142
      %v4231 = vadd.f32 %v3873, %v4147
      %v4232 = vadd.f32 %v3876, %v4150
      %v4233 = vadd.f32 %v3881, %v4155
      %v4234 = vadd.f32 %v3884, %v4158
      %v4235 = vadd.f32 %v3889, %v4163
      %v4236 = vadd.f32 %v3892, %v4166
      %v4237 = vadd.f32 %v3897, %v4171
      %v4238 = vadd.f32 %v3900, %v4174
      %v4239 = vadd.f32 %v3905, %v4179
      %v4240 = vadd.f32 %v3908, %v4182
      %v4241 = vadd.f32 %v3913, %v4187
      %v4242 = vadd.f32 %v3916, %v4190
      %v4243 = vadd.f32 %v3921, %v4195
      %v4244 = vadd.f32 %v3924, %v4198
      %v4245 = vadd.f32 %v3929, %v4203
      %v4246 = vadd.f32 %v3932, %v4206
      %v4247 = vadd.f32 %v3937, %v4211
      %v4248 = vadd.f32 %v3940, %v4214
      %v4249 = vld [vmem:[%s3363] sm:$0xff]
      %v4250 = vld [vmem:[%s3363 + $0x8] sm:$0xff]
      %v4251 = vld [vmem:[%s3363 + $0x18] sm:$0xff]
      %v4252 = vld [vmem:[%s3363 + $0x20] sm:$0xff]
      %v4253 = vld [vmem:[%s3363 + $0x30] sm:$0xff]
      %v4254 = vld [vmem:[%s3363 + $0x38] sm:$0xff]
      %v4255 = vld [vmem:[%s3363 + $0x48] sm:$0xff]
      %v4256 = vld [vmem:[%s3363 + $0x50] sm:$0xff]
      %v4257 = vld [vmem:[%s3363 + $0x60] sm:$0xff]
      %v4258 = vld [vmem:[%s3363 + $0x68] sm:$0xff]
      %v4259 = vld [vmem:[%s3363 + $0x78] sm:$0xff]
      %v4260 = vld [vmem:[%s3363 + $0x80] sm:$0xff]
      %v4261 = vld [vmem:[%s3363 + $0x90] sm:$0xff]
      %v4262 = vld [vmem:[%s3363 + $0x98] sm:$0xff]
      %v4263 = vld [vmem:[%s3363 + $0xa8] sm:$0xff]
      %v4264 = vld [vmem:[%s3363 + $0xb0] sm:$0xff]
      %v4265 = vld [vmem:[%s3363 + $0xc0] sm:$0xff]
      %v4266 = vld [vmem:[%s3363 + $0xc8] sm:$0xff]
      %v4267 = vld [vmem:[%s3363 + $0xd8] sm:$0xff]
      %v4268 = vld [vmem:[%s3363 + $0xe0] sm:$0xff]
      %v4269 = vld [vmem:[%s3363 + $0xf0] sm:$0xff]
      %v4270 = vld [vmem:[%s3363 + $0xf8] sm:$0xff]
      %v4271 = vld [vmem:[%s3363 + $0x108] sm:$0xff]
      %v4272 = vld [vmem:[%s3363 + $0x110] sm:$0xff]
      %v4273 = vld [vmem:[%s3363 + $0x120] sm:$0xff]
      %v4274 = vld [vmem:[%s3363 + $0x128] sm:$0xff]
      %v4275 = vld [vmem:[%s3363 + $0x138] sm:$0xff]
      %v4276 = vld [vmem:[%s3363 + $0x140] sm:$0xff]
      %v4277 = vld [vmem:[%s3363 + $0x150] sm:$0xff]
      %v4278 = vld [vmem:[%s3363 + $0x158] sm:$0xff]
      %v4279 = vld [vmem:[%s3363 + $0x168] sm:$0xff]
      %v4280 = vld [vmem:[%s3363 + $0x170] sm:$0xff]
      %v4281 = vpack.c.bf16 %v4250, %v4249
      %v4282 = vpack.c.bf16 %v4252, %v4251
      %v4283 = vpack.c.bf16 %v4254, %v4253
      %v4284 = vpack.c.bf16 %v4256, %v4255
      %v4285 = vpack.c.bf16 %v4258, %v4257
      %v4286 = vpack.c.bf16 %v4260, %v4259
      %v4287 = vpack.c.bf16 %v4262, %v4261
      %v4288 = vpack.c.bf16 %v4264, %v4263
      %v4289 = vpack.c.bf16 %v4266, %v4265
      %v4290 = vpack.c.bf16 %v4268, %v4267
      %v4291 = vpack.c.bf16 %v4270, %v4269
      %v4292 = vpack.c.bf16 %v4272, %v4271
      %v4293 = vpack.c.bf16 %v4274, %v4273
      %v4294 = vpack.c.bf16 %v4276, %v4275
      %v4295 = vpack.c.bf16 %v4278, %v4277
      %v4296 = vpack.c.bf16 %v4280, %v4279
      %s4297 = scalar_lea.vmem %s2, 192
      %v4298 = vld [vmem:[%s4297] sm:$0xf]
      %v4299 = vld [vmem:[%s4297 + $0x4] sm:$0xf]
      %v4300 = vld [vmem:[%s4297 + $0x8] sm:$0xf]
      %v4301 = vld [vmem:[%s4297 + $0xc] sm:$0xf]
      %v4302 = vld [vmem:[%s4297 + $0x10] sm:$0xf]
      %v4303 = vld [vmem:[%s4297 + $0x14] sm:$0xf]
      %v4304 = vld [vmem:[%s4297 + $0x18] sm:$0xf]
      %v4305 = vld [vmem:[%s4297 + $0x1c] sm:$0xf]
      %v4306 = vld [vmem:[%s4297 + $0x20] sm:$0xf]
      %v4307 = vld [vmem:[%s4297 + $0x24] sm:$0xf]
      %v4308 = vld [vmem:[%s4297 + $0x28] sm:$0xf]
      %v4309 = vld [vmem:[%s4297 + $0x2c] sm:$0xf]
      %v4310 = vld [vmem:[%s4297 + $0x30] sm:$0xf]
      %v4311 = vld [vmem:[%s4297 + $0x34] sm:$0xf]
      %v4312 = vld [vmem:[%s4297 + $0x38] sm:$0xf]
      %v4313 = vld [vmem:[%s4297 + $0x3c] sm:$0xf]
      %v4330 = vunpack.c.l.b16 %v4298
      %v4331 = vunpack.c.l.b16 %v4299
      %v4332 = vunpack.c.l.b16 %v4300
      %v4333 = vunpack.c.l.b16 %v4301
      %v4334 = vunpack.c.l.b16 %v4302
      %v4335 = vunpack.c.l.b16 %v4303
      %v4336 = vunpack.c.l.b16 %v4304
      %v4337 = vunpack.c.l.b16 %v4305
      %v4338 = vunpack.c.l.b16 %v4306
      %v4339 = vunpack.c.l.b16 %v4307
      %v4340 = vunpack.c.l.b16 %v4308
      %v4341 = vunpack.c.l.b16 %v4309
      %v4342 = vunpack.c.l.b16 %v4310
      %v4343 = vunpack.c.l.b16 %v4311
      %v4344 = vunpack.c.l.b16 %v4312
      %v4345 = vunpack.c.l.b16 %v4313
      %v4346 = vpack.c.b16 %v4331, %v4330
      %v4347 = vpack.c.b16 %v4333, %v4332
      %v4348 = vpack.c.b16 %v4335, %v4334
      %v4349 = vpack.c.b16 %v4337, %v4336
      %v4350 = vpack.c.b16 %v4339, %v4338
      %v4351 = vpack.c.b16 %v4341, %v4340
      %v4352 = vpack.c.b16 %v4343, %v4342
      %v4353 = vpack.c.b16 %v4345, %v4344
      %4362 = vmatprep.subr.bf16.mxu0 0
      %4363 = vmatpush1.bf16.msra.mxu0 %v4346
      %4364 = vmatprep.subr.bf16.mxu0 0
      %4365 = vmatpush1.bf16.msra.mxu0 %v4347
      %4366 = vmatprep.subr.bf16.mxu0 0
      %4367 = vmatpush1.bf16.msra.mxu0 %v4348
      %4368 = vmatprep.subr.bf16.mxu0 0
      %4369 = vmatpush1.bf16.msra.mxu0 %v4349
      %4370 = vmatprep.subr.bf16.mxu0 0
      %4371 = vmatpush1.bf16.msra.mxu0 %v4350
      %4372 = vmatprep.subr.bf16.mxu0 0
      %4373 = vmatpush1.bf16.msra.mxu0 %v4351
      %4374 = vmatprep.subr.bf16.mxu0 0
      %4375 = vmatpush1.bf16.msra.mxu0 %v4352
      %4376 = vmatprep.subr.bf16.mxu0 0
      %4377 = vmatpush1.bf16.msra.mxu0 %v4353
      %4378 = vmatprep.subr.bf16.mxu0 0
      %4379 = vmatpush1.bf16.msra.mxu0 0
      %4380 = vmatprep.subr.bf16.mxu0 0
      %4381 = vmatpush1.bf16.msra.mxu0 0
      %4382 = vmatprep.subr.bf16.mxu0 0
      %4383 = vmatpush1.bf16.msra.mxu0 0
      %4384 = vmatprep.subr.bf16.mxu0 0
      %4385 = vmatpush1.bf16.msra.mxu0 0
      %4386 = vmatprep.subr.bf16.mxu0 0
      %4387 = vmatpush1.bf16.msra.mxu0 0
      %4388 = vmatprep.subr.bf16.mxu0 0
      %4389 = vmatpush1.bf16.msra.mxu0 0
      %4390 = vmatprep.subr.bf16.mxu0 0
      %4391 = vmatpush1.bf16.msra.mxu0 0
      %4392 = vmatprep.subr.bf16.mxu0 0
      %4393 = vmatpush1.bf16.msra.mxu0 0
      %4394 = vmatprep.mubr.bf16.mxu0 0
      %4395 = vmatmul.mubr.bf16.gmra.mrb[0].mxu0 %v4281
      %v4396 = vpop.f32.mrb[0].mxu0
      %v4397 = vadd.f32 0.0, %v4396
      %v4398 = vpop.f32.mrb[0].mxu0
      %v4399 = vpop.f32.mrb[0].mxu0
      %v4400 = vadd.f32 0.0, %v4399
      %v4401 = vpop.f32.mrb[0].mxu0
      %4402 = vmatprep.mubr.bf16.mxu0 0
      %4403 = vmatmul.mubr.bf16.gmra.mrb[0].mxu0 %v4282
      %v4404 = vpop.f32.mrb[0].mxu0
      %v4405 = vadd.f32 0.0, %v4404
      %v4406 = vpop.f32.mrb[0].mxu0
      %v4407 = vpop.f32.mrb[0].mxu0
      %v4408 = vadd.f32 0.0, %v4407
      %v4409 = vpop.f32.mrb[0].mxu0
      %4410 = vmatprep.mubr.bf16.mxu0 0
      %4411 = vmatmul.mubr.bf16.gmra.mrb[0].mxu0 %v4283
      %v4412 = vpop.f32.mrb[0].mxu0
      %v4413 = vadd.f32 0.0, %v4412
      %v4414 = vpop.f32.mrb[0].mxu0
      %v4415 = vpop.f32.mrb[0].mxu0
      %v4416 = vadd.f32 0.0, %v4415
      %v4417 = vpop.f32.mrb[0].mxu0
      %4418 = vmatprep.mubr.bf16.mxu0 0
      %4419 = vmatmul.mubr.bf16.gmra.mrb[0].mxu0 %v4284
      %v4420 = vpop.f32.mrb[0].mxu0
      %v4421 = vadd.f32 0.0, %v4420
      %v4422 = vpop.f32.mrb[0].mxu0
      %v4423 = vpop.f32.mrb[0].mxu0
      %v4424 = vadd.f32 0.0, %v4423
      %v4425 = vpop.f32.mrb[0].mxu0
      %4426 = vmatprep.mubr.bf16.mxu0 0
      %4427 = vmatmul.mubr.bf16.gmra.mrb[0].mxu0 %v4285
      %v4428 = vpop.f32.mrb[0].mxu0
      %v4429 = vadd.f32 0.0, %v4428
      %v4430 = vpop.f32.mrb[0].mxu0
      %v4431 = vpop.f32.mrb[0].mxu0
      %v4432 = vadd.f32 0.0, %v4431
      %v4433 = vpop.f32.mrb[0].mxu0
      %4434 = vmatprep.mubr.bf16.mxu0 0
      %4435 = vmatmul.mubr.bf16.gmra.mrb[0].mxu0 %v4286
      %v4436 = vpop.f32.mrb[0].mxu0
      %v4437 = vadd.f32 0.0, %v4436
      %v4438 = vpop.f32.mrb[0].mxu0
      %v4439 = vpop.f32.mrb[0].mxu0
      %v4440 = vadd.f32 0.0, %v4439
      %v4441 = vpop.f32.mrb[0].mxu0
      %4442 = vmatprep.mubr.bf16.mxu0 0
      %4443 = vmatmul.mubr.bf16.gmra.mrb[0].mxu0 %v4287
      %v4444 = vpop.f32.mrb[0].mxu0
      %v4445 = vadd.f32 0.0, %v4444
      %v4446 = vpop.f32.mrb[0].mxu0
      %v4447 = vpop.f32.mrb[0].mxu0
      %v4448 = vadd.f32 0.0, %v4447
      %v4449 = vpop.f32.mrb[0].mxu0
      %4450 = vmatprep.mubr.bf16.mxu0 0
      %4451 = vmatmul.mubr.bf16.gmra.mrb[0].mxu0 %v4288
      %v4452 = vpop.f32.mrb[0].mxu0
      %v4453 = vadd.f32 0.0, %v4452
      %v4454 = vpop.f32.mrb[0].mxu0
      %v4455 = vpop.f32.mrb[0].mxu0
      %v4456 = vadd.f32 0.0, %v4455
      %v4457 = vpop.f32.mrb[0].mxu0
      %4458 = vmatprep.mubr.bf16.mxu0 0
      %4459 = vmatmul.mubr.bf16.gmra.mrb[0].mxu0 %v4289
      %v4460 = vpop.f32.mrb[0].mxu0
      %v4461 = vadd.f32 0.0, %v4460
      %v4462 = vpop.f32.mrb[0].mxu0
      %v4463 = vpop.f32.mrb[0].mxu0
      %v4464 = vadd.f32 0.0, %v4463
      %v4465 = vpop.f32.mrb[0].mxu0
      %4466 = vmatprep.mubr.bf16.mxu0 0
      %4467 = vmatmul.mubr.bf16.gmra.mrb[0].mxu0 %v4290
      %v4468 = vpop.f32.mrb[0].mxu0
      %v4469 = vadd.f32 0.0, %v4468
      %v4470 = vpop.f32.mrb[0].mxu0
      %v4471 = vpop.f32.mrb[0].mxu0
      %v4472 = vadd.f32 0.0, %v4471
      %v4473 = vpop.f32.mrb[0].mxu0
      %4474 = vmatprep.mubr.bf16.mxu0 0
      %4475 = vmatmul.mubr.bf16.gmra.mrb[0].mxu0 %v4291
      %v4476 = vpop.f32.mrb[0].mxu0
      %v4477 = vadd.f32 0.0, %v4476
      %v4478 = vpop.f32.mrb[0].mxu0
      %v4479 = vpop.f32.mrb[0].mxu0
      %v4480 = vadd.f32 0.0, %v4479
      %v4481 = vpop.f32.mrb[0].mxu0
      %4482 = vmatprep.mubr.bf16.mxu0 0
      %4483 = vmatmul.mubr.bf16.gmra.mrb[0].mxu0 %v4292
      %v4484 = vpop.f32.mrb[0].mxu0
      %v4485 = vadd.f32 0.0, %v4484
      %v4486 = vpop.f32.mrb[0].mxu0
      %v4487 = vpop.f32.mrb[0].mxu0
      %v4488 = vadd.f32 0.0, %v4487
      %v4489 = vpop.f32.mrb[0].mxu0
      %4490 = vmatprep.mubr.bf16.mxu0 0
      %4491 = vmatmul.mubr.bf16.gmra.mrb[0].mxu0 %v4293
      %v4492 = vpop.f32.mrb[0].mxu0
      %v4493 = vadd.f32 0.0, %v4492
      %v4494 = vpop.f32.mrb[0].mxu0
      %v4495 = vpop.f32.mrb[0].mxu0
      %v4496 = vadd.f32 0.0, %v4495
      %v4497 = vpop.f32.mrb[0].mxu0
      %4498 = vmatprep.mubr.bf16.mxu0 0
      %4499 = vmatmul.mubr.bf16.gmra.mrb[0].mxu0 %v4294
      %v4500 = vpop.f32.mrb[0].mxu0
      %v4501 = vadd.f32 0.0, %v4500
      %v4502 = vpop.f32.mrb[0].mxu0
      %v4503 = vpop.f32.mrb[0].mxu0
      %v4504 = vadd.f32 0.0, %v4503
      %v4505 = vpop.f32.mrb[0].mxu0
      %4506 = vmatprep.mubr.bf16.mxu0 0
      %4507 = vmatmul.mubr.bf16.gmra.mrb[0].mxu0 %v4295
      %v4508 = vpop.f32.mrb[0].mxu0
      %v4509 = vadd.f32 0.0, %v4508
      %v4510 = vpop.f32.mrb[0].mxu0
      %v4511 = vpop.f32.mrb[0].mxu0
      %v4512 = vadd.f32 0.0, %v4511
      %v4513 = vpop.f32.mrb[0].mxu0
      %4514 = vmatprep.mubr.bf16.mxu0 0
      %4515 = vmatmul.mubr.bf16.gmra.mrb[0].mxu0 %v4296
      %v4516 = vpop.f32.mrb[0].mxu0
      %v4517 = vadd.f32 0.0, %v4516
      %v4518 = vpop.f32.mrb[0].mxu0
      %v4519 = vpop.f32.mrb[0].mxu0
      %v4520 = vadd.f32 0.0, %v4519
      %v4521 = vpop.f32.mrb[0].mxu0
      %4522 = vdwg.mxu0
      %v4523 = vadd.f32 %v4217, %v4397
      %v4524 = vadd.f32 %v4218, %v4400
      %v4525 = vadd.f32 %v4219, %v4405
      %v4526 = vadd.f32 %v4220, %v4408
      %v4527 = vadd.f32 %v4221, %v4413
      %v4528 = vadd.f32 %v4222, %v4416
      %v4529 = vadd.f32 %v4223, %v4421
      %v4530 = vadd.f32 %v4224, %v4424
      %v4531 = vadd.f32 %v4225, %v4429
      %v4532 = vadd.f32 %v4226, %v4432
      %v4533 = vadd.f32 %v4227, %v4437
      %v4534 = vadd.f32 %v4228, %v4440
      %v4535 = vadd.f32 %v4229, %v4445
      %v4536 = vadd.f32 %v4230, %v4448
      %v4537 = vadd.f32 %v4231, %v4453
      %v4538 = vadd.f32 %v4232, %v4456
      %v4539 = vadd.f32 %v4233, %v4461
      %v4540 = vadd.f32 %v4234, %v4464
      %v4541 = vadd.f32 %v4235, %v4469
      %v4542 = vadd.f32 %v4236, %v4472
      %v4543 = vadd.f32 %v4237, %v4477
      %v4544 = vadd.f32 %v4238, %v4480
      %v4545 = vadd.f32 %v4239, %v4485
      %v4546 = vadd.f32 %v4240, %v4488
      %v4547 = vadd.f32 %v4241, %v4493
      %v4548 = vadd.f32 %v4242, %v4496
      %v4549 = vadd.f32 %v4243, %v4501
      %v4550 = vadd.f32 %v4244, %v4504
      %v4551 = vadd.f32 %v4245, %v4509
      %v4552 = vadd.f32 %v4246, %v4512
      %v4553 = vadd.f32 %v4247, %v4517
      %v4554 = vadd.f32 %v4248, %v4520
      %v4555 = vld [vmem:[%s3363 + $0x1] sm:$0xff]
      %v4556 = vld [vmem:[%s3363 + $0x9] sm:$0xff]
      %v4557 = vld [vmem:[%s3363 + $0x19] sm:$0xff]
      %v4558 = vld [vmem:[%s3363 + $0x21] sm:$0xff]
      %v4559 = vld [vmem:[%s3363 + $0x31] sm:$0xff]
      %v4560 = vld [vmem:[%s3363 + $0x39] sm:$0xff]
      %v4561 = vld [vmem:[%s3363 + $0x49] sm:$0xff]
      %v4562 = vld [vmem:[%s3363 + $0x51] sm:$0xff]
      %v4563 = vld [vmem:[%s3363 + $0x61] sm:$0xff]
      %v4564 = vld [vmem:[%s3363 + $0x69] sm:$0xff]
      %v4565 = vld [vmem:[%s3363 + $0x79] sm:$0xff]
      %v4566 = vld [vmem:[%s3363 + $0x81] sm:$0xff]
      %v4567 = vld [vmem:[%s3363 + $0x91] sm:$0xff]
      %v4568 = vld [vmem:[%s3363 + $0x99] sm:$0xff]
      %v4569 = vld [vmem:[%s3363 + $0xa9] sm:$0xff]
      %v4570 = vld [vmem:[%s3363 + $0xb1] sm:$0xff]
      %v4571 = vld [vmem:[%s3363 + $0xc1] sm:$0xff]
      %v4572 = vld [vmem:[%s3363 + $0xc9] sm:$0xff]
      %v4573 = vld [vmem:[%s3363 + $0xd9] sm:$0xff]
      %v4574 = vld [vmem:[%s3363 + $0xe1] sm:$0xff]
      %v4575 = vld [vmem:[%s3363 + $0xf1] sm:$0xff]
      %v4576 = vld [vmem:[%s3363 + $0xf9] sm:$0xff]
      %v4577 = vld [vmem:[%s3363 + $0x109] sm:$0xff]
      %v4578 = vld [vmem:[%s3363 + $0x111] sm:$0xff]
      %v4579 = vld [vmem:[%s3363 + $0x121] sm:$0xff]
      %v4580 = vld [vmem:[%s3363 + $0x129] sm:$0xff]
      %v4581 = vld [vmem:[%s3363 + $0x139] sm:$0xff]
      %v4582 = vld [vmem:[%s3363 + $0x141] sm:$0xff]
      %v4583 = vld [vmem:[%s3363 + $0x151] sm:$0xff]
      %v4584 = vld [vmem:[%s3363 + $0x159] sm:$0xff]
      %v4585 = vld [vmem:[%s3363 + $0x169] sm:$0xff]
      %v4586 = vld [vmem:[%s3363 + $0x171] sm:$0xff]
      %v4587 = vpack.c.bf16 %v4556, %v4555
      %v4588 = vpack.c.bf16 %v4558, %v4557
      %v4589 = vpack.c.bf16 %v4560, %v4559
      %v4590 = vpack.c.bf16 %v4562, %v4561
      %v4591 = vpack.c.bf16 %v4564, %v4563
      %v4592 = vpack.c.bf16 %v4566, %v4565
      %v4593 = vpack.c.bf16 %v4568, %v4567
      %v4594 = vpack.c.bf16 %v4570, %v4569
      %v4595 = vpack.c.bf16 %v4572, %v4571
      %v4596 = vpack.c.bf16 %v4574, %v4573
      %v4597 = vpack.c.bf16 %v4576, %v4575
      %v4598 = vpack.c.bf16 %v4578, %v4577
      %v4599 = vpack.c.bf16 %v4580, %v4579
      %v4600 = vpack.c.bf16 %v4582, %v4581
      %v4601 = vpack.c.bf16 %v4584, %v4583
      %v4602 = vpack.c.bf16 %v4586, %v4585
      %s4603 = scalar_lea.vmem %s2, 256
      %v4604 = vld [vmem:[%s4603] sm:$0xf]
      %v4605 = vld [vmem:[%s4603 + $0x4] sm:$0xf]
      %v4606 = vld [vmem:[%s4603 + $0x8] sm:$0xf]
      %v4607 = vld [vmem:[%s4603 + $0xc] sm:$0xf]
      %v4608 = vld [vmem:[%s4603 + $0x10] sm:$0xf]
      %v4609 = vld [vmem:[%s4603 + $0x14] sm:$0xf]
      %v4610 = vld [vmem:[%s4603 + $0x18] sm:$0xf]
      %v4611 = vld [vmem:[%s4603 + $0x1c] sm:$0xf]
      %v4612 = vld [vmem:[%s4603 + $0x20] sm:$0xf]
      %v4613 = vld [vmem:[%s4603 + $0x24] sm:$0xf]
      %v4614 = vld [vmem:[%s4603 + $0x28] sm:$0xf]
      %v4615 = vld [vmem:[%s4603 + $0x2c] sm:$0xf]
      %v4616 = vld [vmem:[%s4603 + $0x30] sm:$0xf]
      %v4617 = vld [vmem:[%s4603 + $0x34] sm:$0xf]
      %v4618 = vld [vmem:[%s4603 + $0x38] sm:$0xf]
      %v4619 = vld [vmem:[%s4603 + $0x3c] sm:$0xf]
      %v4636 = vunpack.c.l.b16 %v4604
      %v4637 = vunpack.c.l.b16 %v4605
      %v4638 = vunpack.c.l.b16 %v4606
      %v4639 = vunpack.c.l.b16 %v4607
      %v4640 = vunpack.c.l.b16 %v4608
      %v4641 = vunpack.c.l.b16 %v4609
      %v4642 = vunpack.c.l.b16 %v4610
      %v4643 = vunpack.c.l.b16 %v4611
      %v4644 = vunpack.c.l.b16 %v4612
      %v4645 = vunpack.c.l.b16 %v4613
      %v4646 = vunpack.c.l.b16 %v4614
      %v4647 = vunpack.c.l.b16 %v4615
      %v4648 = vunpack.c.l.b16 %v4616
      %v4649 = vunpack.c.l.b16 %v4617
      %v4650 = vunpack.c.l.b16 %v4618
      %v4651 = vunpack.c.l.b16 %v4619
      %v4652 = vpack.c.b16 %v4637, %v4636
      %v4653 = vpack.c.b16 %v4639, %v4638
      %v4654 = vpack.c.b16 %v4641, %v4640
      %v4655 = vpack.c.b16 %v4643, %v4642
      %v4656 = vpack.c.b16 %v4645, %v4644
      %v4657 = vpack.c.b16 %v4647, %v4646
      %v4658 = vpack.c.b16 %v4649, %v4648
      %v4659 = vpack.c.b16 %v4651, %v4650
      %4668 = vmatprep.subr.bf16.mxu0 0
      %4669 = vmatpush1.bf16.msra.mxu0 %v4652
      %4670 = vmatprep.subr.bf16.mxu0 0
      %4671 = vmatpush1.bf16.msra.mxu0 %v4653
      %4672 = vmatprep.subr.bf16.mxu0 0
      %4673 = vmatpush1.bf16.msra.mxu0 %v4654
      %4674 = vmatprep.subr.bf16.mxu0 0
      %4675 = vmatpush1.bf16.msra.mxu0 %v4655
      %4676 = vmatprep.subr.bf16.mxu0 0
      %4677 = vmatpush1.bf16.msra.mxu0 %v4656
      %4678 = vmatprep.subr.bf16.mxu0 0
      %4679 = vmatpush1.bf16.msra.mxu0 %v4657
      %4680 = vmatprep.subr.bf16.mxu0 0
      %4681 = vmatpush1.bf16.msra.mxu0 %v4658
      %4682 = vmatprep.subr.bf16.mxu0 0
      %4683 = vmatpush1.bf16.msra.mxu0 %v4659
      %4684 = vmatprep.subr.bf16.mxu0 0
      %4685 = vmatpush1.bf16.msra.mxu0 0
      %4686 = vmatprep.subr.bf16.mxu0 0
      %4687 = vmatpush1.bf16.msra.mxu0 0
      %4688 = vmatprep.subr.bf16.mxu0 0
      %4689 = vmatpush1.bf16.msra.mxu0 0
      %4690 = vmatprep.subr.bf16.mxu0 0
      %4691 = vmatpush1.bf16.msra.mxu0 0
      %4692 = vmatprep.subr.bf16.mxu0 0
      %4693 = vmatpush1.bf16.msra.mxu0 0
      %4694 = vmatprep.subr.bf16.mxu0 0
      %4695 = vmatpush1.bf16.msra.mxu0 0
      %4696 = vmatprep.subr.bf16.mxu0 0
      %4697 = vmatpush1.bf16.msra.mxu0 0
      %4698 = vmatprep.subr.bf16.mxu0 0
      %4699 = vmatpush1.bf16.msra.mxu0 0
      %4700 = vmatprep.mubr.bf16.mxu0 0
      %4701 = vmatmul.mubr.bf16.gmra.mrb[0].mxu0 %v4587
      %v4702 = vpop.f32.mrb[0].mxu0
      %v4703 = vadd.f32 0.0, %v4702
      %v4704 = vpop.f32.mrb[0].mxu0
      %v4705 = vpop.f32.mrb[0].mxu0
      %v4706 = vadd.f32 0.0, %v4705
      %v4707 = vpop.f32.mrb[0].mxu0
      %4708 = vmatprep.mubr.bf16.mxu0 0
      %4709 = vmatmul.mubr.bf16.gmra.mrb[0].mxu0 %v4588
      %v4710 = vpop.f32.mrb[0].mxu0
      %v4711 = vadd.f32 0.0, %v4710
      %v4712 = vpop.f32.mrb[0].mxu0
      %v4713 = vpop.f32.mrb[0].mxu0
      %v4714 = vadd.f32 0.0, %v4713
      %v4715 = vpop.f32.mrb[0].mxu0
      %4716 = vmatprep.mubr.bf16.mxu0 0
      %4717 = vmatmul.mubr.bf16.gmra.mrb[0].mxu0 %v4589
      %v4718 = vpop.f32.mrb[0].mxu0
      %v4719 = vadd.f32 0.0, %v4718
      %v4720 = vpop.f32.mrb[0].mxu0
      %v4721 = vpop.f32.mrb[0].mxu0
      %v4722 = vadd.f32 0.0, %v4721
      %v4723 = vpop.f32.mrb[0].mxu0
      %4724 = vmatprep.mubr.bf16.mxu0 0
      %4725 = vmatmul.mubr.bf16.gmra.mrb[0].mxu0 %v4590
      %v4726 = vpop.f32.mrb[0].mxu0
      %v4727 = vadd.f32 0.0, %v4726
      %v4728 = vpop.f32.mrb[0].mxu0
      %v4729 = vpop.f32.mrb[0].mxu0
      %v4730 = vadd.f32 0.0, %v4729
      %v4731 = vpop.f32.mrb[0].mxu0
      %4732 = vmatprep.mubr.bf16.mxu0 0
      %4733 = vmatmul.mubr.bf16.gmra.mrb[0].mxu0 %v4591
      %v4734 = vpop.f32.mrb[0].mxu0
      %v4735 = vadd.f32 0.0, %v4734
      %v4736 = vpop.f32.mrb[0].mxu0
      %v4737 = vpop.f32.mrb[0].mxu0
      %v4738 = vadd.f32 0.0, %v4737
      %v4739 = vpop.f32.mrb[0].mxu0
      %4740 = vmatprep.mubr.bf16.mxu0 0
      %4741 = vmatmul.mubr.bf16.gmra.mrb[0].mxu0 %v4592
      %v4742 = vpop.f32.mrb[0].mxu0
      %v4743 = vadd.f32 0.0, %v4742
      %v4744 = vpop.f32.mrb[0].mxu0
      %v4745 = vpop.f32.mrb[0].mxu0
      %v4746 = vadd.f32 0.0, %v4745
      %v4747 = vpop.f32.mrb[0].mxu0
      %4748 = vmatprep.mubr.bf16.mxu0 0
      %4749 = vmatmul.mubr.bf16.gmra.mrb[0].mxu0 %v4593
      %v4750 = vpop.f32.mrb[0].mxu0
      %v4751 = vadd.f32 0.0, %v4750
      %v4752 = vpop.f32.mrb[0].mxu0
      %v4753 = vpop.f32.mrb[0].mxu0
      %v4754 = vadd.f32 0.0, %v4753
      %v4755 = vpop.f32.mrb[0].mxu0
      %4756 = vmatprep.mubr.bf16.mxu0 0
      %4757 = vmatmul.mubr.bf16.gmra.mrb[0].mxu0 %v4594
      %v4758 = vpop.f32.mrb[0].mxu0
      %v4759 = vadd.f32 0.0, %v4758
      %v4760 = vpop.f32.mrb[0].mxu0
      %v4761 = vpop.f32.mrb[0].mxu0
      %v4762 = vadd.f32 0.0, %v4761
      %v4763 = vpop.f32.mrb[0].mxu0
      %4764 = vmatprep.mubr.bf16.mxu0 0
      %4765 = vmatmul.mubr.bf16.gmra.mrb[0].mxu0 %v4595
      %v4766 = vpop.f32.mrb[0].mxu0
      %v4767 = vadd.f32 0.0, %v4766
      %v4768 = vpop.f32.mrb[0].mxu0
      %v4769 = vpop.f32.mrb[0].mxu0
      %v4770 = vadd.f32 0.0, %v4769
      %v4771 = vpop.f32.mrb[0].mxu0
      %4772 = vmatprep.mubr.bf16.mxu0 0
      %4773 = vmatmul.mubr.bf16.gmra.mrb[0].mxu0 %v4596
      %v4774 = vpop.f32.mrb[0].mxu0
      %v4775 = vadd.f32 0.0, %v4774
      %v4776 = vpop.f32.mrb[0].mxu0
      %v4777 = vpop.f32.mrb[0].mxu0
      %v4778 = vadd.f32 0.0, %v4777
      %v4779 = vpop.f32.mrb[0].mxu0
      %4780 = vmatprep.mubr.bf16.mxu0 0
      %4781 = vmatmul.mubr.bf16.gmra.mrb[0].mxu0 %v4597
      %v4782 = vpop.f32.mrb[0].mxu0
      %v4783 = vadd.f32 0.0, %v4782
      %v4784 = vpop.f32.mrb[0].mxu0
      %v4785 = vpop.f32.mrb[0].mxu0
      %v4786 = vadd.f32 0.0, %v4785
      %v4787 = vpop.f32.mrb[0].mxu0
      %4788 = vmatprep.mubr.bf16.mxu0 0
      %4789 = vmatmul.mubr.bf16.gmra.mrb[0].mxu0 %v4598
      %v4790 = vpop.f32.mrb[0].mxu0
      %v4791 = vadd.f32 0.0, %v4790
      %v4792 = vpop.f32.mrb[0].mxu0
      %v4793 = vpop.f32.mrb[0].mxu0
      %v4794 = vadd.f32 0.0, %v4793
      %v4795 = vpop.f32.mrb[0].mxu0
      %4796 = vmatprep.mubr.bf16.mxu0 0
      %4797 = vmatmul.mubr.bf16.gmra.mrb[0].mxu0 %v4599
      %v4798 = vpop.f32.mrb[0].mxu0
      %v4799 = vadd.f32 0.0, %v4798
      %v4800 = vpop.f32.mrb[0].mxu0
      %v4801 = vpop.f32.mrb[0].mxu0
      %v4802 = vadd.f32 0.0, %v4801
      %v4803 = vpop.f32.mrb[0].mxu0
      %4804 = vmatprep.mubr.bf16.mxu0 0
      %4805 = vmatmul.mubr.bf16.gmra.mrb[0].mxu0 %v4600
      %v4806 = vpop.f32.mrb[0].mxu0
      %v4807 = vadd.f32 0.0, %v4806
      %v4808 = vpop.f32.mrb[0].mxu0
      %v4809 = vpop.f32.mrb[0].mxu0
      %v4810 = vadd.f32 0.0, %v4809
      %v4811 = vpop.f32.mrb[0].mxu0
      %4812 = vmatprep.mubr.bf16.mxu0 0
      %4813 = vmatmul.mubr.bf16.gmra.mrb[0].mxu0 %v4601
      %v4814 = vpop.f32.mrb[0].mxu0
      %v4815 = vadd.f32 0.0, %v4814
      %v4816 = vpop.f32.mrb[0].mxu0
      %v4817 = vpop.f32.mrb[0].mxu0
      %v4818 = vadd.f32 0.0, %v4817
      %v4819 = vpop.f32.mrb[0].mxu0
      %4820 = vmatprep.mubr.bf16.mxu0 0
      %4821 = vmatmul.mubr.bf16.gmra.mrb[0].mxu0 %v4602
      %v4822 = vpop.f32.mrb[0].mxu0
      %v4823 = vadd.f32 0.0, %v4822
      %v4824 = vpop.f32.mrb[0].mxu0
      %v4825 = vpop.f32.mrb[0].mxu0
      %v4826 = vadd.f32 0.0, %v4825
      %v4827 = vpop.f32.mrb[0].mxu0
      %4828 = vdwg.mxu0
      %v4829 = vadd.f32 %v4523, %v4703
      %v4830 = vadd.f32 %v4524, %v4706
      %v4831 = vadd.f32 %v4525, %v4711
      %v4832 = vadd.f32 %v4526, %v4714
      %v4833 = vadd.f32 %v4527, %v4719
      %v4834 = vadd.f32 %v4528, %v4722
      %v4835 = vadd.f32 %v4529, %v4727
      %v4836 = vadd.f32 %v4530, %v4730
      %v4837 = vadd.f32 %v4531, %v4735
      %v4838 = vadd.f32 %v4532, %v4738
      %v4839 = vadd.f32 %v4533, %v4743
      %v4840 = vadd.f32 %v4534, %v4746
      %v4841 = vadd.f32 %v4535, %v4751
      %v4842 = vadd.f32 %v4536, %v4754
      %v4843 = vadd.f32 %v4537, %v4759
      %v4844 = vadd.f32 %v4538, %v4762
      %v4845 = vadd.f32 %v4539, %v4767
      %v4846 = vadd.f32 %v4540, %v4770
      %v4847 = vadd.f32 %v4541, %v4775
      %v4848 = vadd.f32 %v4542, %v4778
      %v4849 = vadd.f32 %v4543, %v4783
      %v4850 = vadd.f32 %v4544, %v4786
      %v4851 = vadd.f32 %v4545, %v4791
      %v4852 = vadd.f32 %v4546, %v4794
      %v4853 = vadd.f32 %v4547, %v4799
      %v4854 = vadd.f32 %v4548, %v4802
      %v4855 = vadd.f32 %v4549, %v4807
      %v4856 = vadd.f32 %v4550, %v4810
      %v4857 = vadd.f32 %v4551, %v4815
      %v4858 = vadd.f32 %v4552, %v4818
      %v4859 = vadd.f32 %v4553, %v4823
      %v4860 = vadd.f32 %v4554, %v4826
      %v4861 = vld [vmem:[%s3363 + $0x2] sm:$0xff]
      %v4862 = vld [vmem:[%s3363 + $0xa] sm:$0xff]
      %v4863 = vld [vmem:[%s3363 + $0x1a] sm:$0xff]
      %v4864 = vld [vmem:[%s3363 + $0x22] sm:$0xff]
      %v4865 = vld [vmem:[%s3363 + $0x32] sm:$0xff]
      %v4866 = vld [vmem:[%s3363 + $0x3a] sm:$0xff]
      %v4867 = vld [vmem:[%s3363 + $0x4a] sm:$0xff]
      %v4868 = vld [vmem:[%s3363 + $0x52] sm:$0xff]
      %v4869 = vld [vmem:[%s3363 + $0x62] sm:$0xff]
      %v4870 = vld [vmem:[%s3363 + $0x6a] sm:$0xff]
      %v4871 = vld [vmem:[%s3363 + $0x7a] sm:$0xff]
      %v4872 = vld [vmem:[%s3363 + $0x82] sm:$0xff]
      %v4873 = vld [vmem:[%s3363 + $0x92] sm:$0xff]
      %v4874 = vld [vmem:[%s3363 + $0x9a] sm:$0xff]
      %v4875 = vld [vmem:[%s3363 + $0xaa] sm:$0xff]
      %v4876 = vld [vmem:[%s3363 + $0xb2] sm:$0xff]
      %v4877 = vld [vmem:[%s3363 + $0xc2] sm:$0xff]
      %v4878 = vld [vmem:[%s3363 + $0xca] sm:$0xff]
      %v4879 = vld [vmem:[%s3363 + $0xda] sm:$0xff]
      %v4880 = vld [vmem:[%s3363 + $0xe2] sm:$0xff]
      %v4881 = vld [vmem:[%s3363 + $0xf2] sm:$0xff]
      %v4882 = vld [vmem:[%s3363 + $0xfa] sm:$0xff]
      %v4883 = vld [vmem:[%s3363 + $0x10a] sm:$0xff]
      %v4884 = vld [vmem:[%s3363 + $0x112] sm:$0xff]
      %v4885 = vld [vmem:[%s3363 + $0x122] sm:$0xff]
      %v4886 = vld [vmem:[%s3363 + $0x12a] sm:$0xff]
      %v4887 = vld [vmem:[%s3363 + $0x13a] sm:$0xff]
      %v4888 = vld [vmem:[%s3363 + $0x142] sm:$0xff]
      %v4889 = vld [vmem:[%s3363 + $0x152] sm:$0xff]
      %v4890 = vld [vmem:[%s3363 + $0x15a] sm:$0xff]
      %v4891 = vld [vmem:[%s3363 + $0x16a] sm:$0xff]
      %v4892 = vld [vmem:[%s3363 + $0x172] sm:$0xff]
      %v4893 = vpack.c.bf16 %v4862, %v4861
      %v4894 = vpack.c.bf16 %v4864, %v4863
      %v4895 = vpack.c.bf16 %v4866, %v4865
      %v4896 = vpack.c.bf16 %v4868, %v4867
      %v4897 = vpack.c.bf16 %v4870, %v4869
      %v4898 = vpack.c.bf16 %v4872, %v4871
      %v4899 = vpack.c.bf16 %v4874, %v4873
      %v4900 = vpack.c.bf16 %v4876, %v4875
      %v4901 = vpack.c.bf16 %v4878, %v4877
      %v4902 = vpack.c.bf16 %v4880, %v4879
      %v4903 = vpack.c.bf16 %v4882, %v4881
      %v4904 = vpack.c.bf16 %v4884, %v4883
      %v4905 = vpack.c.bf16 %v4886, %v4885
      %v4906 = vpack.c.bf16 %v4888, %v4887
      %v4907 = vpack.c.bf16 %v4890, %v4889
      %v4908 = vpack.c.bf16 %v4892, %v4891
      %s4909 = scalar_lea.vmem %s2, 320
      %v4910 = vld [vmem:[%s4909] sm:$0xf]
      %v4911 = vld [vmem:[%s4909 + $0x4] sm:$0xf]
      %v4912 = vld [vmem:[%s4909 + $0x8] sm:$0xf]
      %v4913 = vld [vmem:[%s4909 + $0xc] sm:$0xf]
      %v4914 = vld [vmem:[%s4909 + $0x10] sm:$0xf]
      %v4915 = vld [vmem:[%s4909 + $0x14] sm:$0xf]
      %v4916 = vld [vmem:[%s4909 + $0x18] sm:$0xf]
      %v4917 = vld [vmem:[%s4909 + $0x1c] sm:$0xf]
      %v4918 = vld [vmem:[%s4909 + $0x20] sm:$0xf]
      %v4919 = vld [vmem:[%s4909 + $0x24] sm:$0xf]
      %v4920 = vld [vmem:[%s4909 + $0x28] sm:$0xf]
      %v4921 = vld [vmem:[%s4909 + $0x2c] sm:$0xf]
      %v4922 = vld [vmem:[%s4909 + $0x30] sm:$0xf]
      %v4923 = vld [vmem:[%s4909 + $0x34] sm:$0xf]
      %v4924 = vld [vmem:[%s4909 + $0x38] sm:$0xf]
      %v4925 = vld [vmem:[%s4909 + $0x3c] sm:$0xf]
      %v4942 = vunpack.c.l.b16 %v4910
      %v4943 = vunpack.c.l.b16 %v4911
      %v4944 = vunpack.c.l.b16 %v4912
      %v4945 = vunpack.c.l.b16 %v4913
      %v4946 = vunpack.c.l.b16 %v4914
      %v4947 = vunpack.c.l.b16 %v4915
      %v4948 = vunpack.c.l.b16 %v4916
      %v4949 = vunpack.c.l.b16 %v4917
      %v4950 = vunpack.c.l.b16 %v4918
      %v4951 = vunpack.c.l.b16 %v4919
      %v4952 = vunpack.c.l.b16 %v4920
      %v4953 = vunpack.c.l.b16 %v4921
      %v4954 = vunpack.c.l.b16 %v4922
      %v4955 = vunpack.c.l.b16 %v4923
      %v4956 = vunpack.c.l.b16 %v4924
      %v4957 = vunpack.c.l.b16 %v4925
      %v4958 = vpack.c.b16 %v4943, %v4942
      %v4959 = vpack.c.b16 %v4945, %v4944
      %v4960 = vpack.c.b16 %v4947, %v4946
      %v4961 = vpack.c.b16 %v4949, %v4948
      %v4962 = vpack.c.b16 %v4951, %v4950
      %v4963 = vpack.c.b16 %v4953, %v4952
      %v4964 = vpack.c.b16 %v4955, %v4954
      %v4965 = vpack.c.b16 %v4957, %v4956
      %4974 = vmatprep.subr.bf16.mxu0 0
      %4975 = vmatpush1.bf16.msra.mxu0 %v4958
      %4976 = vmatprep.subr.bf16.mxu0 0
      %4977 = vmatpush1.bf16.msra.mxu0 %v4959
      %4978 = vmatprep.subr.bf16.mxu0 0
      %4979 = vmatpush1.bf16.msra.mxu0 %v4960
      %4980 = vmatprep.subr.bf16.mxu0 0
      %4981 = vmatpush1.bf16.msra.mxu0 %v4961
      %4982 = vmatprep.subr.bf16.mxu0 0
      %4983 = vmatpush1.bf16.msra.mxu0 %v4962
      %4984 = vmatprep.subr.bf16.mxu0 0
      %4985 = vmatpush1.bf16.msra.mxu0 %v4963
      %4986 = vmatprep.subr.bf16.mxu0 0
      %4987 = vmatpush1.bf16.msra.mxu0 %v4964
      %4988 = vmatprep.subr.bf16.mxu0 0
      %4989 = vmatpush1.bf16.msra.mxu0 %v4965
      %4990 = vmatprep.subr.bf16.mxu0 0
      %4991 = vmatpush1.bf16.msra.mxu0 0
      %4992 = vmatprep.subr.bf16.mxu0 0
      %4993 = vmatpush1.bf16.msra.mxu0 0
      %4994 = vmatprep.subr.bf16.mxu0 0
      %4995 = vmatpush1.bf16.msra.mxu0 0
      %4996 = vmatprep.subr.bf16.mxu0 0
      %4997 = vmatpush1.bf16.msra.mxu0 0
      %4998 = vmatprep.subr.bf16.mxu0 0
      %4999 = vmatpush1.bf16.msra.mxu0 0
      %5000 = vmatprep.subr.bf16.mxu0 0
      %5001 = vmatpush1.bf16.msra.mxu0 0
      %5002 = vmatprep.subr.bf16.mxu0 0
      %5003 = vmatpush1.bf16.msra.mxu0 0
      %5004 = vmatprep.subr.bf16.mxu0 0
      %5005 = vmatpush1.bf16.msra.mxu0 0
      %5006 = vmatprep.mubr.bf16.mxu0 0
      %5007 = vmatmul.mubr.bf16.gmra.mrb[0].mxu0 %v4893
      %v5008 = vpop.f32.mrb[0].mxu0
      %v5009 = vadd.f32 0.0, %v5008
      %v5010 = vpop.f32.mrb[0].mxu0
      %v5011 = vpop.f32.mrb[0].mxu0
      %v5012 = vadd.f32 0.0, %v5011
      %v5013 = vpop.f32.mrb[0].mxu0
      %5014 = vmatprep.mubr.bf16.mxu0 0
      %5015 = vmatmul.mubr.bf16.gmra.mrb[0].mxu0 %v4894
      %v5016 = vpop.f32.mrb[0].mxu0
      %v5017 = vadd.f32 0.0, %v5016
      %v5018 = vpop.f32.mrb[0].mxu0
      %v5019 = vpop.f32.mrb[0].mxu0
      %v5020 = vadd.f32 0.0, %v5019
      %v5021 = vpop.f32.mrb[0].mxu0
      %5022 = vmatprep.mubr.bf16.mxu0 0
      %5023 = vmatmul.mubr.bf16.gmra.mrb[0].mxu0 %v4895
      %v5024 = vpop.f32.mrb[0].mxu0
      %v5025 = vadd.f32 0.0, %v5024
      %v5026 = vpop.f32.mrb[0].mxu0
      %v5027 = vpop.f32.mrb[0].mxu0
      %v5028 = vadd.f32 0.0, %v5027
      %v5029 = vpop.f32.mrb[0].mxu0
      %5030 = vmatprep.mubr.bf16.mxu0 0
      %5031 = vmatmul.mubr.bf16.gmra.mrb[0].mxu0 %v4896
      %v5032 = vpop.f32.mrb[0].mxu0
      %v5033 = vadd.f32 0.0, %v5032
      %v5034 = vpop.f32.mrb[0].mxu0
      %v5035 = vpop.f32.mrb[0].mxu0
      %v5036 = vadd.f32 0.0, %v5035
      %v5037 = vpop.f32.mrb[0].mxu0
      %5038 = vmatprep.mubr.bf16.mxu0 0
      %5039 = vmatmul.mubr.bf16.gmra.mrb[0].mxu0 %v4897
      %v5040 = vpop.f32.mrb[0].mxu0
      %v5041 = vadd.f32 0.0, %v5040
      %v5042 = vpop.f32.mrb[0].mxu0
      %v5043 = vpop.f32.mrb[0].mxu0
      %v5044 = vadd.f32 0.0, %v5043
      %v5045 = vpop.f32.mrb[0].mxu0
      %5046 = vmatprep.mubr.bf16.mxu0 0
      %5047 = vmatmul.mubr.bf16.gmra.mrb[0].mxu0 %v4898
      %v5048 = vpop.f32.mrb[0].mxu0
      %v5049 = vadd.f32 0.0, %v5048
      %v5050 = vpop.f32.mrb[0].mxu0
      %v5051 = vpop.f32.mrb[0].mxu0
      %v5052 = vadd.f32 0.0, %v5051
      %v5053 = vpop.f32.mrb[0].mxu0
      %5054 = vmatprep.mubr.bf16.mxu0 0
      %5055 = vmatmul.mubr.bf16.gmra.mrb[0].mxu0 %v4899
      %v5056 = vpop.f32.mrb[0].mxu0
      %v5057 = vadd.f32 0.0, %v5056
      %v5058 = vpop.f32.mrb[0].mxu0
      %v5059 = vpop.f32.mrb[0].mxu0
      %v5060 = vadd.f32 0.0, %v5059
      %v5061 = vpop.f32.mrb[0].mxu0
      %5062 = vmatprep.mubr.bf16.mxu0 0
      %5063 = vmatmul.mubr.bf16.gmra.mrb[0].mxu0 %v4900
      %v5064 = vpop.f32.mrb[0].mxu0
      %v5065 = vadd.f32 0.0, %v5064
      %v5066 = vpop.f32.mrb[0].mxu0
      %v5067 = vpop.f32.mrb[0].mxu0
      %v5068 = vadd.f32 0.0, %v5067
      %v5069 = vpop.f32.mrb[0].mxu0
      %5070 = vmatprep.mubr.bf16.mxu0 0
      %5071 = vmatmul.mubr.bf16.gmra.mrb[0].mxu0 %v4901
      %v5072 = vpop.f32.mrb[0].mxu0
      %v5073 = vadd.f32 0.0, %v5072
      %v5074 = vpop.f32.mrb[0].mxu0
      %v5075 = vpop.f32.mrb[0].mxu0
      %v5076 = vadd.f32 0.0, %v5075
      %v5077 = vpop.f32.mrb[0].mxu0
      %5078 = vmatprep.mubr.bf16.mxu0 0
      %5079 = vmatmul.mubr.bf16.gmra.mrb[0].mxu0 %v4902
      %v5080 = vpop.f32.mrb[0].mxu0
      %v5081 = vadd.f32 0.0, %v5080
      %v5082 = vpop.f32.mrb[0].mxu0
      %v5083 = vpop.f32.mrb[0].mxu0
      %v5084 = vadd.f32 0.0, %v5083
      %v5085 = vpop.f32.mrb[0].mxu0
      %5086 = vmatprep.mubr.bf16.mxu0 0
      %5087 = vmatmul.mubr.bf16.gmra.mrb[0].mxu0 %v4903
      %v5088 = vpop.f32.mrb[0].mxu0
      %v5089 = vadd.f32 0.0, %v5088
      %v5090 = vpop.f32.mrb[0].mxu0
      %v5091 = vpop.f32.mrb[0].mxu0
      %v5092 = vadd.f32 0.0, %v5091
      %v5093 = vpop.f32.mrb[0].mxu0
      %5094 = vmatprep.mubr.bf16.mxu0 0
      %5095 = vmatmul.mubr.bf16.gmra.mrb[0].mxu0 %v4904
      %v5096 = vpop.f32.mrb[0].mxu0
      %v5097 = vadd.f32 0.0, %v5096
      %v5098 = vpop.f32.mrb[0].mxu0
      %v5099 = vpop.f32.mrb[0].mxu0
      %v5100 = vadd.f32 0.0, %v5099
      %v5101 = vpop.f32.mrb[0].mxu0
      %5102 = vmatprep.mubr.bf16.mxu0 0
      %5103 = vmatmul.mubr.bf16.gmra.mrb[0].mxu0 %v4905
      %v5104 = vpop.f32.mrb[0].mxu0
      %v5105 = vadd.f32 0.0, %v5104
      %v5106 = vpop.f32.mrb[0].mxu0
      %v5107 = vpop.f32.mrb[0].mxu0
      %v5108 = vadd.f32 0.0, %v5107
      %v5109 = vpop.f32.mrb[0].mxu0
      %5110 = vmatprep.mubr.bf16.mxu0 0
      %5111 = vmatmul.mubr.bf16.gmra.mrb[0].mxu0 %v4906
      %v5112 = vpop.f32.mrb[0].mxu0
      %v5113 = vadd.f32 0.0, %v5112
      %v5114 = vpop.f32.mrb[0].mxu0
      %v5115 = vpop.f32.mrb[0].mxu0
      %v5116 = vadd.f32 0.0, %v5115
      %v5117 = vpop.f32.mrb[0].mxu0
      %5118 = vmatprep.mubr.bf16.mxu0 0
      %5119 = vmatmul.mubr.bf16.gmra.mrb[0].mxu0 %v4907
      %v5120 = vpop.f32.mrb[0].mxu0
      %v5121 = vadd.f32 0.0, %v5120
      %v5122 = vpop.f32.mrb[0].mxu0
      %v5123 = vpop.f32.mrb[0].mxu0
      %v5124 = vadd.f32 0.0, %v5123
      %v5125 = vpop.f32.mrb[0].mxu0
      %5126 = vmatprep.mubr.bf16.mxu0 0
      %5127 = vmatmul.mubr.bf16.gmra.mrb[0].mxu0 %v4908
      %v5128 = vpop.f32.mrb[0].mxu0
      %v5129 = vadd.f32 0.0, %v5128
      %v5130 = vpop.f32.mrb[0].mxu0
      %v5131 = vpop.f32.mrb[0].mxu0
      %v5132 = vadd.f32 0.0, %v5131
      %v5133 = vpop.f32.mrb[0].mxu0
      %5134 = vdwg.mxu0
      %v5135 = vadd.f32 %v4829, %v5009
      %v5136 = vadd.f32 %v4830, %v5012
      %v5137 = vadd.f32 %v4831, %v5017
      %v5138 = vadd.f32 %v4832, %v5020
      %v5139 = vadd.f32 %v4833, %v5025
      %v5140 = vadd.f32 %v4834, %v5028
      %v5141 = vadd.f32 %v4835, %v5033
      %v5142 = vadd.f32 %v4836, %v5036
      %v5143 = vadd.f32 %v4837, %v5041
      %v5144 = vadd.f32 %v4838, %v5044
      %v5145 = vadd.f32 %v4839, %v5049
      %v5146 = vadd.f32 %v4840, %v5052
      %v5147 = vadd.f32 %v4841, %v5057
      %v5148 = vadd.f32 %v4842, %v5060
      %v5149 = vadd.f32 %v4843, %v5065
      %v5150 = vadd.f32 %v4844, %v5068
      %v5151 = vadd.f32 %v4845, %v5073
      %v5152 = vadd.f32 %v4846, %v5076
      %v5153 = vadd.f32 %v4847, %v5081
      %v5154 = vadd.f32 %v4848, %v5084
      %v5155 = vadd.f32 %v4849, %v5089
      %v5156 = vadd.f32 %v4850, %v5092
      %v5157 = vadd.f32 %v4851, %v5097
      %v5158 = vadd.f32 %v4852, %v5100
      %v5159 = vadd.f32 %v4853, %v5105
      %v5160 = vadd.f32 %v4854, %v5108
      %v5161 = vadd.f32 %v4855, %v5113
      %v5162 = vadd.f32 %v4856, %v5116
      %v5163 = vadd.f32 %v4857, %v5121
      %v5164 = vadd.f32 %v4858, %v5124
      %v5165 = vadd.f32 %v4859, %v5129
      %v5166 = vadd.f32 %v4860, %v5132
      %s5167 = scalar_lea.vmem [#allocation3], 48
      %v5168 = vld [vmem:[%s5167] sm:$0xff]
      %v5169 = vld [vmem:[%s5167 + $0x8] sm:$0xff]
      %v5170 = vld [vmem:[%s5167 + $0x18] sm:$0xff]
      %v5171 = vld [vmem:[%s5167 + $0x20] sm:$0xff]
      %v5172 = vld [vmem:[%s5167 + $0x30] sm:$0xff]
      %v5173 = vld [vmem:[%s5167 + $0x38] sm:$0xff]
      %v5174 = vld [vmem:[%s5167 + $0x48] sm:$0xff]
      %v5175 = vld [vmem:[%s5167 + $0x50] sm:$0xff]
      %v5176 = vld [vmem:[%s5167 + $0x60] sm:$0xff]
      %v5177 = vld [vmem:[%s5167 + $0x68] sm:$0xff]
      %v5178 = vld [vmem:[%s5167 + $0x78] sm:$0xff]
      %v5179 = vld [vmem:[%s5167 + $0x80] sm:$0xff]
      %v5180 = vld [vmem:[%s5167 + $0x90] sm:$0xff]
      %v5181 = vld [vmem:[%s5167 + $0x98] sm:$0xff]
      %v5182 = vld [vmem:[%s5167 + $0xa8] sm:$0xff]
      %v5183 = vld [vmem:[%s5167 + $0xb0] sm:$0xff]
      %v5184 = vld [vmem:[%s5167 + $0xc0] sm:$0xff]
      %v5185 = vld [vmem:[%s5167 + $0xc8] sm:$0xff]
      %v5186 = vld [vmem:[%s5167 + $0xd8] sm:$0xff]
      %v5187 = vld [vmem:[%s5167 + $0xe0] sm:$0xff]
      %v5188 = vld [vmem:[%s5167 + $0xf0] sm:$0xff]
      %v5189 = vld [vmem:[%s5167 + $0xf8] sm:$0xff]
      %v5190 = vld [vmem:[%s5167 + $0x108] sm:$0xff]
      %v5191 = vld [vmem:[%s5167 + $0x110] sm:$0xff]
      %v5192 = vld [vmem:[%s5167 + $0x120] sm:$0xff]
      %v5193 = vld [vmem:[%s5167 + $0x128] sm:$0xff]
      %v5194 = vld [vmem:[%s5167 + $0x138] sm:$0xff]
      %v5195 = vld [vmem:[%s5167 + $0x140] sm:$0xff]
      %v5196 = vld [vmem:[%s5167 + $0x150] sm:$0xff]
      %v5197 = vld [vmem:[%s5167 + $0x158] sm:$0xff]
      %v5198 = vld [vmem:[%s5167 + $0x168] sm:$0xff]
      %v5199 = vld [vmem:[%s5167 + $0x170] sm:$0xff]
      %v5200 = vpack.c.bf16 %v5169, %v5168
      %v5201 = vpack.c.bf16 %v5171, %v5170
      %v5202 = vpack.c.bf16 %v5173, %v5172
      %v5203 = vpack.c.bf16 %v5175, %v5174
      %v5204 = vpack.c.bf16 %v5177, %v5176
      %v5205 = vpack.c.bf16 %v5179, %v5178
      %v5206 = vpack.c.bf16 %v5181, %v5180
      %v5207 = vpack.c.bf16 %v5183, %v5182
      %v5208 = vpack.c.bf16 %v5185, %v5184
      %v5209 = vpack.c.bf16 %v5187, %v5186
      %v5210 = vpack.c.bf16 %v5189, %v5188
      %v5211 = vpack.c.bf16 %v5191, %v5190
      %v5212 = vpack.c.bf16 %v5193, %v5192
      %v5213 = vpack.c.bf16 %v5195, %v5194
      %v5214 = vpack.c.bf16 %v5197, %v5196
      %v5215 = vpack.c.bf16 %v5199, %v5198
      %s5216 = scalar_lea.vmem %s2, 384
      %v5217 = vld [vmem:[%s5216] sm:$0xf]
      %v5218 = vld [vmem:[%s5216 + $0x4] sm:$0xf]
      %v5219 = vld [vmem:[%s5216 + $0x8] sm:$0xf]
      %v5220 = vld [vmem:[%s5216 + $0xc] sm:$0xf]
      %v5221 = vld [vmem:[%s5216 + $0x10] sm:$0xf]
      %v5222 = vld [vmem:[%s5216 + $0x14] sm:$0xf]
      %v5223 = vld [vmem:[%s5216 + $0x18] sm:$0xf]
      %v5224 = vld [vmem:[%s5216 + $0x1c] sm:$0xf]
      %v5225 = vld [vmem:[%s5216 + $0x20] sm:$0xf]
      %v5226 = vld [vmem:[%s5216 + $0x24] sm:$0xf]
      %v5227 = vld [vmem:[%s5216 + $0x28] sm:$0xf]
      %v5228 = vld [vmem:[%s5216 + $0x2c] sm:$0xf]
      %v5229 = vld [vmem:[%s5216 + $0x30] sm:$0xf]
      %v5230 = vld [vmem:[%s5216 + $0x34] sm:$0xf]
      %v5231 = vld [vmem:[%s5216 + $0x38] sm:$0xf]
      %v5232 = vld [vmem:[%s5216 + $0x3c] sm:$0xf]
      %v5249 = vunpack.c.l.b16 %v5217
      %v5250 = vunpack.c.l.b16 %v5218
      %v5251 = vunpack.c.l.b16 %v5219
      %v5252 = vunpack.c.l.b16 %v5220
      %v5253 = vunpack.c.l.b16 %v5221
      %v5254 = vunpack.c.l.b16 %v5222
      %v5255 = vunpack.c.l.b16 %v5223
      %v5256 = vunpack.c.l.b16 %v5224
      %v5257 = vunpack.c.l.b16 %v5225
      %v5258 = vunpack.c.l.b16 %v5226
      %v5259 = vunpack.c.l.b16 %v5227
      %v5260 = vunpack.c.l.b16 %v5228
      %v5261 = vunpack.c.l.b16 %v5229
      %v5262 = vunpack.c.l.b16 %v5230
      %v5263 = vunpack.c.l.b16 %v5231
      %v5264 = vunpack.c.l.b16 %v5232
      %v5265 = vpack.c.b16 %v5250, %v5249
      %v5266 = vpack.c.b16 %v5252, %v5251
      %v5267 = vpack.c.b16 %v5254, %v5253
      %v5268 = vpack.c.b16 %v5256, %v5255
      %v5269 = vpack.c.b16 %v5258, %v5257
      %v5270 = vpack.c.b16 %v5260, %v5259
      %v5271 = vpack.c.b16 %v5262, %v5261
      %v5272 = vpack.c.b16 %v5264, %v5263
      %5281 = vmatprep.subr.bf16.mxu0 0
      %5282 = vmatpush1.bf16.msra.mxu0 %v5265
      %5283 = vmatprep.subr.bf16.mxu0 0
      %5284 = vmatpush1.bf16.msra.mxu0 %v5266
      %5285 = vmatprep.subr.bf16.mxu0 0
      %5286 = vmatpush1.bf16.msra.mxu0 %v5267
      %5287 = vmatprep.subr.bf16.mxu0 0
      %5288 = vmatpush1.bf16.msra.mxu0 %v5268
      %5289 = vmatprep.subr.bf16.mxu0 0
      %5290 = vmatpush1.bf16.msra.mxu0 %v5269
      %5291 = vmatprep.subr.bf16.mxu0 0
      %5292 = vmatpush1.bf16.msra.mxu0 %v5270
      %5293 = vmatprep.subr.bf16.mxu0 0
      %5294 = vmatpush1.bf16.msra.mxu0 %v5271
      %5295 = vmatprep.subr.bf16.mxu0 0
      %5296 = vmatpush1.bf16.msra.mxu0 %v5272
      %5297 = vmatprep.subr.bf16.mxu0 0
      %5298 = vmatpush1.bf16.msra.mxu0 0
      %5299 = vmatprep.subr.bf16.mxu0 0
      %5300 = vmatpush1.bf16.msra.mxu0 0
      %5301 = vmatprep.subr.bf16.mxu0 0
      %5302 = vmatpush1.bf16.msra.mxu0 0
      %5303 = vmatprep.subr.bf16.mxu0 0
      %5304 = vmatpush1.bf16.msra.mxu0 0
      %5305 = vmatprep.subr.bf16.mxu0 0
      %5306 = vmatpush1.bf16.msra.mxu0 0
      %5307 = vmatprep.subr.bf16.mxu0 0
      %5308 = vmatpush1.bf16.msra.mxu0 0
      %5309 = vmatprep.subr.bf16.mxu0 0
      %5310 = vmatpush1.bf16.msra.mxu0 0
      %5311 = vmatprep.subr.bf16.mxu0 0
      %5312 = vmatpush1.bf16.msra.mxu0 0
      %5313 = vmatprep.mubr.bf16.mxu0 0
      %5314 = vmatmul.mubr.bf16.gmra.mrb[0].mxu0 %v5200
      %v5315 = vpop.f32.mrb[0].mxu0
      %v5316 = vadd.f32 0.0, %v5315
      %v5317 = vpop.f32.mrb[0].mxu0
      %v5318 = vpop.f32.mrb[0].mxu0
      %v5319 = vadd.f32 0.0, %v5318
      %v5320 = vpop.f32.mrb[0].mxu0
      %5321 = vmatprep.mubr.bf16.mxu0 0
      %5322 = vmatmul.mubr.bf16.gmra.mrb[0].mxu0 %v5201
      %v5323 = vpop.f32.mrb[0].mxu0
      %v5324 = vadd.f32 0.0, %v5323
      %v5325 = vpop.f32.mrb[0].mxu0
      %v5326 = vpop.f32.mrb[0].mxu0
      %v5327 = vadd.f32 0.0, %v5326
      %v5328 = vpop.f32.mrb[0].mxu0
      %5329 = vmatprep.mubr.bf16.mxu0 0
      %5330 = vmatmul.mubr.bf16.gmra.mrb[0].mxu0 %v5202
      %v5331 = vpop.f32.mrb[0].mxu0
      %v5332 = vadd.f32 0.0, %v5331
      %v5333 = vpop.f32.mrb[0].mxu0
      %v5334 = vpop.f32.mrb[0].mxu0
      %v5335 = vadd.f32 0.0, %v5334
      %v5336 = vpop.f32.mrb[0].mxu0
      %5337 = vmatprep.mubr.bf16.mxu0 0
      %5338 = vmatmul.mubr.bf16.gmra.mrb[0].mxu0 %v5203
      %v5339 = vpop.f32.mrb[0].mxu0
      %v5340 = vadd.f32 0.0, %v5339
      %v5341 = vpop.f32.mrb[0].mxu0
      %v5342 = vpop.f32.mrb[0].mxu0
      %v5343 = vadd.f32 0.0, %v5342
      %v5344 = vpop.f32.mrb[0].mxu0
      %5345 = vmatprep.mubr.bf16.mxu0 0
      %5346 = vmatmul.mubr.bf16.gmra.mrb[0].mxu0 %v5204
      %v5347 = vpop.f32.mrb[0].mxu0
      %v5348 = vadd.f32 0.0, %v5347
      %v5349 = vpop.f32.mrb[0].mxu0
      %v5350 = vpop.f32.mrb[0].mxu0
      %v5351 = vadd.f32 0.0, %v5350
      %v5352 = vpop.f32.mrb[0].mxu0
      %5353 = vmatprep.mubr.bf16.mxu0 0
      %5354 = vmatmul.mubr.bf16.gmra.mrb[0].mxu0 %v5205
      %v5355 = vpop.f32.mrb[0].mxu0
      %v5356 = vadd.f32 0.0, %v5355
      %v5357 = vpop.f32.mrb[0].mxu0
      %v5358 = vpop.f32.mrb[0].mxu0
      %v5359 = vadd.f32 0.0, %v5358
      %v5360 = vpop.f32.mrb[0].mxu0
      %5361 = vmatprep.mubr.bf16.mxu0 0
      %5362 = vmatmul.mubr.bf16.gmra.mrb[0].mxu0 %v5206
      %v5363 = vpop.f32.mrb[0].mxu0
      %v5364 = vadd.f32 0.0, %v5363
      %v5365 = vpop.f32.mrb[0].mxu0
      %v5366 = vpop.f32.mrb[0].mxu0
      %v5367 = vadd.f32 0.0, %v5366
      %v5368 = vpop.f32.mrb[0].mxu0
      %5369 = vmatprep.mubr.bf16.mxu0 0
      %5370 = vmatmul.mubr.bf16.gmra.mrb[0].mxu0 %v5207
      %v5371 = vpop.f32.mrb[0].mxu0
      %v5372 = vadd.f32 0.0, %v5371
      %v5373 = vpop.f32.mrb[0].mxu0
      %v5374 = vpop.f32.mrb[0].mxu0
      %v5375 = vadd.f32 0.0, %v5374
      %v5376 = vpop.f32.mrb[0].mxu0
      %5377 = vmatprep.mubr.bf16.mxu0 0
      %5378 = vmatmul.mubr.bf16.gmra.mrb[0].mxu0 %v5208
      %v5379 = vpop.f32.mrb[0].mxu0
      %v5380 = vadd.f32 0.0, %v5379
      %v5381 = vpop.f32.mrb[0].mxu0
      %v5382 = vpop.f32.mrb[0].mxu0
      %v5383 = vadd.f32 0.0, %v5382
      %v5384 = vpop.f32.mrb[0].mxu0
      %5385 = vmatprep.mubr.bf16.mxu0 0
      %5386 = vmatmul.mubr.bf16.gmra.mrb[0].mxu0 %v5209
      %v5387 = vpop.f32.mrb[0].mxu0
      %v5388 = vadd.f32 0.0, %v5387
      %v5389 = vpop.f32.mrb[0].mxu0
      %v5390 = vpop.f32.mrb[0].mxu0
      %v5391 = vadd.f32 0.0, %v5390
      %v5392 = vpop.f32.mrb[0].mxu0
      %5393 = vmatprep.mubr.bf16.mxu0 0
      %5394 = vmatmul.mubr.bf16.gmra.mrb[0].mxu0 %v5210
      %v5395 = vpop.f32.mrb[0].mxu0
      %v5396 = vadd.f32 0.0, %v5395
      %v5397 = vpop.f32.mrb[0].mxu0
      %v5398 = vpop.f32.mrb[0].mxu0
      %v5399 = vadd.f32 0.0, %v5398
      %v5400 = vpop.f32.mrb[0].mxu0
      %5401 = vmatprep.mubr.bf16.mxu0 0
      %5402 = vmatmul.mubr.bf16.gmra.mrb[0].mxu0 %v5211
      %v5403 = vpop.f32.mrb[0].mxu0
      %v5404 = vadd.f32 0.0, %v5403
      %v5405 = vpop.f32.mrb[0].mxu0
      %v5406 = vpop.f32.mrb[0].mxu0
      %v5407 = vadd.f32 0.0, %v5406
      %v5408 = vpop.f32.mrb[0].mxu0
      %5409 = vmatprep.mubr.bf16.mxu0 0
      %5410 = vmatmul.mubr.bf16.gmra.mrb[0].mxu0 %v5212
      %v5411 = vpop.f32.mrb[0].mxu0
      %v5412 = vadd.f32 0.0, %v5411
      %v5413 = vpop.f32.mrb[0].mxu0
      %v5414 = vpop.f32.mrb[0].mxu0
      %v5415 = vadd.f32 0.0, %v5414
      %v5416 = vpop.f32.mrb[0].mxu0
      %5417 = vmatprep.mubr.bf16.mxu0 0
      %5418 = vmatmul.mubr.bf16.gmra.mrb[0].mxu0 %v5213
      %v5419 = vpop.f32.mrb[0].mxu0
      %v5420 = vadd.f32 0.0, %v5419
      %v5421 = vpop.f32.mrb[0].mxu0
      %v5422 = vpop.f32.mrb[0].mxu0
      %v5423 = vadd.f32 0.0, %v5422
      %v5424 = vpop.f32.mrb[0].mxu0
      %5425 = vmatprep.mubr.bf16.mxu0 0
      %5426 = vmatmul.mubr.bf16.gmra.mrb[0].mxu0 %v5214
      %v5427 = vpop.f32.mrb[0].mxu0
      %v5428 = vadd.f32 0.0, %v5427
      %v5429 = vpop.f32.mrb[0].mxu0
      %v5430 = vpop.f32.mrb[0].mxu0
      %v5431 = vadd.f32 0.0, %v5430
      %v5432 = vpop.f32.mrb[0].mxu0
      %5433 = vmatprep.mubr.bf16.mxu0 0
      %5434 = vmatmul.mubr.bf16.gmra.mrb[0].mxu0 %v5215
      %v5435 = vpop.f32.mrb[0].mxu0
      %v5436 = vadd.f32 0.0, %v5435
      %v5437 = vpop.f32.mrb[0].mxu0
      %v5438 = vpop.f32.mrb[0].mxu0
      %v5439 = vadd.f32 0.0, %v5438
      %v5440 = vpop.f32.mrb[0].mxu0
      %5441 = vdwg.mxu0
      %v5442 = vadd.f32 %v5135, %v5316
      %v5443 = vadd.f32 %v5136, %v5319
      %v5444 = vadd.f32 %v5137, %v5324
      %v5445 = vadd.f32 %v5138, %v5327
      %v5446 = vadd.f32 %v5139, %v5332
      %v5447 = vadd.f32 %v5140, %v5335
      %v5448 = vadd.f32 %v5141, %v5340
      %v5449 = vadd.f32 %v5142, %v5343
      %v5450 = vadd.f32 %v5143, %v5348
      %v5451 = vadd.f32 %v5144, %v5351
      %v5452 = vadd.f32 %v5145, %v5356
      %v5453 = vadd.f32 %v5146, %v5359
      %v5454 = vadd.f32 %v5147, %v5364
      %v5455 = vadd.f32 %v5148, %v5367
      %v5456 = vadd.f32 %v5149, %v5372
      %v5457 = vadd.f32 %v5150, %v5375
      %v5458 = vadd.f32 %v5151, %v5380
      %v5459 = vadd.f32 %v5152, %v5383
      %v5460 = vadd.f32 %v5153, %v5388
      %v5461 = vadd.f32 %v5154, %v5391
      %v5462 = vadd.f32 %v5155, %v5396
      %v5463 = vadd.f32 %v5156, %v5399
      %v5464 = vadd.f32 %v5157, %v5404
      %v5465 = vadd.f32 %v5158, %v5407
      %v5466 = vadd.f32 %v5159, %v5412
      %v5467 = vadd.f32 %v5160, %v5415
      %v5468 = vadd.f32 %v5161, %v5420
      %v5469 = vadd.f32 %v5162, %v5423
      %v5470 = vadd.f32 %v5163, %v5428
      %v5471 = vadd.f32 %v5164, %v5431
      %v5472 = vadd.f32 %v5165, %v5436
      %v5473 = vadd.f32 %v5166, %v5439
      %v5474 = vld [vmem:[%s5167 + $0x1] sm:$0xff]
      %v5475 = vld [vmem:[%s5167 + $0x9] sm:$0xff]
      %v5476 = vld [vmem:[%s5167 + $0x19] sm:$0xff]
      %v5477 = vld [vmem:[%s5167 + $0x21] sm:$0xff]
      %v5478 = vld [vmem:[%s5167 + $0x31] sm:$0xff]
      %v5479 = vld [vmem:[%s5167 + $0x39] sm:$0xff]
      %v5480 = vld [vmem:[%s5167 + $0x49] sm:$0xff]
      %v5481 = vld [vmem:[%s5167 + $0x51] sm:$0xff]
      %v5482 = vld [vmem:[%s5167 + $0x61] sm:$0xff]
      %v5483 = vld [vmem:[%s5167 + $0x69] sm:$0xff]
      %v5484 = vld [vmem:[%s5167 + $0x79] sm:$0xff]
      %v5485 = vld [vmem:[%s5167 + $0x81] sm:$0xff]
      %v5486 = vld [vmem:[%s5167 + $0x91] sm:$0xff]
      %v5487 = vld [vmem:[%s5167 + $0x99] sm:$0xff]
      %v5488 = vld [vmem:[%s5167 + $0xa9] sm:$0xff]
      %v5489 = vld [vmem:[%s5167 + $0xb1] sm:$0xff]
      %v5490 = vld [vmem:[%s5167 + $0xc1] sm:$0xff]
      %v5491 = vld [vmem:[%s5167 + $0xc9] sm:$0xff]
      %v5492 = vld [vmem:[%s5167 + $0xd9] sm:$0xff]
      %v5493 = vld [vmem:[%s5167 + $0xe1] sm:$0xff]
      %v5494 = vld [vmem:[%s5167 + $0xf1] sm:$0xff]
      %v5495 = vld [vmem:[%s5167 + $0xf9] sm:$0xff]
      %v5496 = vld [vmem:[%s5167 + $0x109] sm:$0xff]
      %v5497 = vld [vmem:[%s5167 + $0x111] sm:$0xff]
      %v5498 = vld [vmem:[%s5167 + $0x121] sm:$0xff]
      %v5499 = vld [vmem:[%s5167 + $0x129] sm:$0xff]
      %v5500 = vld [vmem:[%s5167 + $0x139] sm:$0xff]
      %v5501 = vld [vmem:[%s5167 + $0x141] sm:$0xff]
      %v5502 = vld [vmem:[%s5167 + $0x151] sm:$0xff]
      %v5503 = vld [vmem:[%s5167 + $0x159] sm:$0xff]
      %v5504 = vld [vmem:[%s5167 + $0x169] sm:$0xff]
      %v5505 = vld [vmem:[%s5167 + $0x171] sm:$0xff]
      %v5506 = vpack.c.bf16 %v5475, %v5474
      %v5507 = vpack.c.bf16 %v5477, %v5476
      %v5508 = vpack.c.bf16 %v5479, %v5478
      %v5509 = vpack.c.bf16 %v5481, %v5480
      %v5510 = vpack.c.bf16 %v5483, %v5482
      %v5511 = vpack.c.bf16 %v5485, %v5484
      %v5512 = vpack.c.bf16 %v5487, %v5486
      %v5513 = vpack.c.bf16 %v5489, %v5488
      %v5514 = vpack.c.bf16 %v5491, %v5490
      %v5515 = vpack.c.bf16 %v5493, %v5492
      %v5516 = vpack.c.bf16 %v5495, %v5494
      %v5517 = vpack.c.bf16 %v5497, %v5496
      %v5518 = vpack.c.bf16 %v5499, %v5498
      %v5519 = vpack.c.bf16 %v5501, %v5500
      %v5520 = vpack.c.bf16 %v5503, %v5502
      %v5521 = vpack.c.bf16 %v5505, %v5504
      %s5522 = scalar_lea.vmem %s2, 448
      %v5523 = vld [vmem:[%s5522] sm:$0xf]
      %v5524 = vld [vmem:[%s5522 + $0x4] sm:$0xf]
      %v5525 = vld [vmem:[%s5522 + $0x8] sm:$0xf]
      %v5526 = vld [vmem:[%s5522 + $0xc] sm:$0xf]
      %v5527 = vld [vmem:[%s5522 + $0x10] sm:$0xf]
      %v5528 = vld [vmem:[%s5522 + $0x14] sm:$0xf]
      %v5529 = vld [vmem:[%s5522 + $0x18] sm:$0xf]
      %v5530 = vld [vmem:[%s5522 + $0x1c] sm:$0xf]
      %v5531 = vld [vmem:[%s5522 + $0x20] sm:$0xf]
      %v5532 = vld [vmem:[%s5522 + $0x24] sm:$0xf]
      %v5533 = vld [vmem:[%s5522 + $0x28] sm:$0xf]
      %v5534 = vld [vmem:[%s5522 + $0x2c] sm:$0xf]
      %v5535 = vld [vmem:[%s5522 + $0x30] sm:$0xf]
      %v5536 = vld [vmem:[%s5522 + $0x34] sm:$0xf]
      %v5537 = vld [vmem:[%s5522 + $0x38] sm:$0xf]
      %v5538 = vld [vmem:[%s5522 + $0x3c] sm:$0xf]
      %v5555 = vunpack.c.l.b16 %v5523
      %v5556 = vunpack.c.l.b16 %v5524
      %v5557 = vunpack.c.l.b16 %v5525
      %v5558 = vunpack.c.l.b16 %v5526
      %v5559 = vunpack.c.l.b16 %v5527
      %v5560 = vunpack.c.l.b16 %v5528
      %v5561 = vunpack.c.l.b16 %v5529
      %v5562 = vunpack.c.l.b16 %v5530
      %v5563 = vunpack.c.l.b16 %v5531
      %v5564 = vunpack.c.l.b16 %v5532
      %v5565 = vunpack.c.l.b16 %v5533
      %v5566 = vunpack.c.l.b16 %v5534
      %v5567 = vunpack.c.l.b16 %v5535
      %v5568 = vunpack.c.l.b16 %v5536
      %v5569 = vunpack.c.l.b16 %v5537
      %v5570 = vunpack.c.l.b16 %v5538
      %v5571 = vpack.c.b16 %v5556, %v5555
      %v5572 = vpack.c.b16 %v5558, %v5557
      %v5573 = vpack.c.b16 %v5560, %v5559
      %v5574 = vpack.c.b16 %v5562, %v5561
      %v5575 = vpack.c.b16 %v5564, %v5563
      %v5576 = vpack.c.b16 %v5566, %v5565
      %v5577 = vpack.c.b16 %v5568, %v5567
      %v5578 = vpack.c.b16 %v5570, %v5569
      %5587 = vmatprep.subr.bf16.mxu0 0
      %5588 = vmatpush1.bf16.msra.mxu0 %v5571
      %5589 = vmatprep.subr.bf16.mxu0 0
      %5590 = vmatpush1.bf16.msra.mxu0 %v5572
      %5591 = vmatprep.subr.bf16.mxu0 0
      %5592 = vmatpush1.bf16.msra.mxu0 %v5573
      %5593 = vmatprep.subr.bf16.mxu0 0
      %5594 = vmatpush1.bf16.msra.mxu0 %v5574
      %5595 = vmatprep.subr.bf16.mxu0 0
      %5596 = vmatpush1.bf16.msra.mxu0 %v5575
      %5597 = vmatprep.subr.bf16.mxu0 0
      %5598 = vmatpush1.bf16.msra.mxu0 %v5576
      %5599 = vmatprep.subr.bf16.mxu0 0
      %5600 = vmatpush1.bf16.msra.mxu0 %v5577
      %5601 = vmatprep.subr.bf16.mxu0 0
      %5602 = vmatpush1.bf16.msra.mxu0 %v5578
      %5603 = vmatprep.subr.bf16.mxu0 0
      %5604 = vmatpush1.bf16.msra.mxu0 0
      %5605 = vmatprep.subr.bf16.mxu0 0
      %5606 = vmatpush1.bf16.msra.mxu0 0
      %5607 = vmatprep.subr.bf16.mxu0 0
      %5608 = vmatpush1.bf16.msra.mxu0 0
      %5609 = vmatprep.subr.bf16.mxu0 0
      %5610 = vmatpush1.bf16.msra.mxu0 0
      %5611 = vmatprep.subr.bf16.mxu0 0
      %5612 = vmatpush1.bf16.msra.mxu0 0
      %5613 = vmatprep.subr.bf16.mxu0 0
      %5614 = vmatpush1.bf16.msra.mxu0 0
      %5615 = vmatprep.subr.bf16.mxu0 0
      %5616 = vmatpush1.bf16.msra.mxu0 0
      %5617 = vmatprep.subr.bf16.mxu0 0
      %5618 = vmatpush1.bf16.msra.mxu0 0
      %5619 = vmatprep.mubr.bf16.mxu0 0
      %5620 = vmatmul.mubr.bf16.gmra.mrb[0].mxu0 %v5506
      %v5621 = vpop.f32.mrb[0].mxu0
      %v5622 = vadd.f32 0.0, %v5621
      %v5623 = vpop.f32.mrb[0].mxu0
      %v5624 = vpop.f32.mrb[0].mxu0
      %v5625 = vadd.f32 0.0, %v5624
      %v5626 = vpop.f32.mrb[0].mxu0
      %5627 = vmatprep.mubr.bf16.mxu0 0
      %5628 = vmatmul.mubr.bf16.gmra.mrb[0].mxu0 %v5507
      %v5629 = vpop.f32.mrb[0].mxu0
      %v5630 = vadd.f32 0.0, %v5629
      %v5631 = vpop.f32.mrb[0].mxu0
      %v5632 = vpop.f32.mrb[0].mxu0
      %v5633 = vadd.f32 0.0, %v5632
      %v5634 = vpop.f32.mrb[0].mxu0
      %5635 = vmatprep.mubr.bf16.mxu0 0
      %5636 = vmatmul.mubr.bf16.gmra.mrb[0].mxu0 %v5508
      %v5637 = vpop.f32.mrb[0].mxu0
      %v5638 = vadd.f32 0.0, %v5637
      %v5639 = vpop.f32.mrb[0].mxu0
      %v5640 = vpop.f32.mrb[0].mxu0
      %v5641 = vadd.f32 0.0, %v5640
      %v5642 = vpop.f32.mrb[0].mxu0
      %5643 = vmatprep.mubr.bf16.mxu0 0
      %5644 = vmatmul.mubr.bf16.gmra.mrb[0].mxu0 %v5509
      %v5645 = vpop.f32.mrb[0].mxu0
      %v5646 = vadd.f32 0.0, %v5645
      %v5647 = vpop.f32.mrb[0].mxu0
      %v5648 = vpop.f32.mrb[0].mxu0
      %v5649 = vadd.f32 0.0, %v5648
      %v5650 = vpop.f32.mrb[0].mxu0
      %5651 = vmatprep.mubr.bf16.mxu0 0
      %5652 = vmatmul.mubr.bf16.gmra.mrb[0].mxu0 %v5510
      %v5653 = vpop.f32.mrb[0].mxu0
      %v5654 = vadd.f32 0.0, %v5653
      %v5655 = vpop.f32.mrb[0].mxu0
      %v5656 = vpop.f32.mrb[0].mxu0
      %v5657 = vadd.f32 0.0, %v5656
      %v5658 = vpop.f32.mrb[0].mxu0
      %5659 = vmatprep.mubr.bf16.mxu0 0
      %5660 = vmatmul.mubr.bf16.gmra.mrb[0].mxu0 %v5511
      %v5661 = vpop.f32.mrb[0].mxu0
      %v5662 = vadd.f32 0.0, %v5661
      %v5663 = vpop.f32.mrb[0].mxu0
      %v5664 = vpop.f32.mrb[0].mxu0
      %v5665 = vadd.f32 0.0, %v5664
      %v5666 = vpop.f32.mrb[0].mxu0
      %5667 = vmatprep.mubr.bf16.mxu0 0
      %5668 = vmatmul.mubr.bf16.gmra.mrb[0].mxu0 %v5512
      %v5669 = vpop.f32.mrb[0].mxu0
      %v5670 = vadd.f32 0.0, %v5669
      %v5671 = vpop.f32.mrb[0].mxu0
      %v5672 = vpop.f32.mrb[0].mxu0
      %v5673 = vadd.f32 0.0, %v5672
      %v5674 = vpop.f32.mrb[0].mxu0
      %5675 = vmatprep.mubr.bf16.mxu0 0
      %5676 = vmatmul.mubr.bf16.gmra.mrb[0].mxu0 %v5513
      %v5677 = vpop.f32.mrb[0].mxu0
      %v5678 = vadd.f32 0.0, %v5677
      %v5679 = vpop.f32.mrb[0].mxu0
      %v5680 = vpop.f32.mrb[0].mxu0
      %v5681 = vadd.f32 0.0, %v5680
      %v5682 = vpop.f32.mrb[0].mxu0
      %5683 = vmatprep.mubr.bf16.mxu0 0
      %5684 = vmatmul.mubr.bf16.gmra.mrb[0].mxu0 %v5514
      %v5685 = vpop.f32.mrb[0].mxu0
      %v5686 = vadd.f32 0.0, %v5685
      %v5687 = vpop.f32.mrb[0].mxu0
      %v5688 = vpop.f32.mrb[0].mxu0
      %v5689 = vadd.f32 0.0, %v5688
      %v5690 = vpop.f32.mrb[0].mxu0
      %5691 = vmatprep.mubr.bf16.mxu0 0
      %5692 = vmatmul.mubr.bf16.gmra.mrb[0].mxu0 %v5515
      %v5693 = vpop.f32.mrb[0].mxu0
      %v5694 = vadd.f32 0.0, %v5693
      %v5695 = vpop.f32.mrb[0].mxu0
      %v5696 = vpop.f32.mrb[0].mxu0
      %v5697 = vadd.f32 0.0, %v5696
      %v5698 = vpop.f32.mrb[0].mxu0
      %5699 = vmatprep.mubr.bf16.mxu0 0
      %5700 = vmatmul.mubr.bf16.gmra.mrb[0].mxu0 %v5516
      %v5701 = vpop.f32.mrb[0].mxu0
      %v5702 = vadd.f32 0.0, %v5701
      %v5703 = vpop.f32.mrb[0].mxu0
      %v5704 = vpop.f32.mrb[0].mxu0
      %v5705 = vadd.f32 0.0, %v5704
      %v5706 = vpop.f32.mrb[0].mxu0
      %5707 = vmatprep.mubr.bf16.mxu0 0
      %5708 = vmatmul.mubr.bf16.gmra.mrb[0].mxu0 %v5517
      %v5709 = vpop.f32.mrb[0].mxu0
      %v5710 = vadd.f32 0.0, %v5709
      %v5711 = vpop.f32.mrb[0].mxu0
      %v5712 = vpop.f32.mrb[0].mxu0
      %v5713 = vadd.f32 0.0, %v5712
      %v5714 = vpop.f32.mrb[0].mxu0
      %5715 = vmatprep.mubr.bf16.mxu0 0
      %5716 = vmatmul.mubr.bf16.gmra.mrb[0].mxu0 %v5518
      %v5717 = vpop.f32.mrb[0].mxu0
      %v5718 = vadd.f32 0.0, %v5717
      %v5719 = vpop.f32.mrb[0].mxu0
      %v5720 = vpop.f32.mrb[0].mxu0
      %v5721 = vadd.f32 0.0, %v5720
      %v5722 = vpop.f32.mrb[0].mxu0
      %5723 = vmatprep.mubr.bf16.mxu0 0
      %5724 = vmatmul.mubr.bf16.gmra.mrb[0].mxu0 %v5519
      %v5725 = vpop.f32.mrb[0].mxu0
      %v5726 = vadd.f32 0.0, %v5725
      %v5727 = vpop.f32.mrb[0].mxu0
      %v5728 = vpop.f32.mrb[0].mxu0
      %v5729 = vadd.f32 0.0, %v5728
      %v5730 = vpop.f32.mrb[0].mxu0
      %5731 = vmatprep.mubr.bf16.mxu0 0
      %5732 = vmatmul.mubr.bf16.gmra.mrb[0].mxu0 %v5520
      %v5733 = vpop.f32.mrb[0].mxu0
      %v5734 = vadd.f32 0.0, %v5733
      %v5735 = vpop.f32.mrb[0].mxu0
      %v5736 = vpop.f32.mrb[0].mxu0
      %v5737 = vadd.f32 0.0, %v5736
      %v5738 = vpop.f32.mrb[0].mxu0
      %5739 = vmatprep.mubr.bf16.mxu0 0
      %5740 = vmatmul.mubr.bf16.gmra.mrb[0].mxu0 %v5521
      %v5741 = vpop.f32.mrb[0].mxu0
      %v5742 = vadd.f32 0.0, %v5741
      %v5743 = vpop.f32.mrb[0].mxu0
      %v5744 = vpop.f32.mrb[0].mxu0
      %v5745 = vadd.f32 0.0, %v5744
      %v5746 = vpop.f32.mrb[0].mxu0
      %5747 = vdwg.mxu0
      %v5748 = vadd.f32 %v5442, %v5622
      %v5749 = vadd.f32 %v5443, %v5625
      %v5750 = vadd.f32 %v5444, %v5630
      %v5751 = vadd.f32 %v5445, %v5633
      %v5752 = vadd.f32 %v5446, %v5638
      %v5753 = vadd.f32 %v5447, %v5641
      %v5754 = vadd.f32 %v5448, %v5646
      %v5755 = vadd.f32 %v5449, %v5649
      %v5756 = vadd.f32 %v5450, %v5654
      %v5757 = vadd.f32 %v5451, %v5657
      %v5758 = vadd.f32 %v5452, %v5662
      %v5759 = vadd.f32 %v5453, %v5665
      %v5760 = vadd.f32 %v5454, %v5670
      %v5761 = vadd.f32 %v5455, %v5673
      %v5762 = vadd.f32 %v5456, %v5678
      %v5763 = vadd.f32 %v5457, %v5681
      %v5764 = vadd.f32 %v5458, %v5686
      %v5765 = vadd.f32 %v5459, %v5689
      %v5766 = vadd.f32 %v5460, %v5694
      %v5767 = vadd.f32 %v5461, %v5697
      %v5768 = vadd.f32 %v5462, %v5702
      %v5769 = vadd.f32 %v5463, %v5705
      %v5770 = vadd.f32 %v5464, %v5710
      %v5771 = vadd.f32 %v5465, %v5713
      %v5772 = vadd.f32 %v5466, %v5718
      %v5773 = vadd.f32 %v5467, %v5721
      %v5774 = vadd.f32 %v5468, %v5726
      %v5775 = vadd.f32 %v5469, %v5729
      %v5776 = vadd.f32 %v5470, %v5734
      %v5777 = vadd.f32 %v5471, %v5737
      %v5778 = vadd.f32 %v5472, %v5742
      %v5779 = vadd.f32 %v5473, %v5745
      %v5780 = vld [vmem:[%s5167 + $0x2] sm:$0xff]
      %v5781 = vld [vmem:[%s5167 + $0xa] sm:$0xff]
      %v5782 = vld [vmem:[%s5167 + $0x1a] sm:$0xff]
      %v5783 = vld [vmem:[%s5167 + $0x22] sm:$0xff]
      %v5784 = vld [vmem:[%s5167 + $0x32] sm:$0xff]
      %v5785 = vld [vmem:[%s5167 + $0x3a] sm:$0xff]
      %v5786 = vld [vmem:[%s5167 + $0x4a] sm:$0xff]
      %v5787 = vld [vmem:[%s5167 + $0x52] sm:$0xff]
      %v5788 = vld [vmem:[%s5167 + $0x62] sm:$0xff]
      %v5789 = vld [vmem:[%s5167 + $0x6a] sm:$0xff]
      %v5790 = vld [vmem:[%s5167 + $0x7a] sm:$0xff]
      %v5791 = vld [vmem:[%s5167 + $0x82] sm:$0xff]
      %v5792 = vld [vmem:[%s5167 + $0x92] sm:$0xff]
      %v5793 = vld [vmem:[%s5167 + $0x9a] sm:$0xff]
      %v5794 = vld [vmem:[%s5167 + $0xaa] sm:$0xff]
      %v5795 = vld [vmem:[%s5167 + $0xb2] sm:$0xff]
      %v5796 = vld [vmem:[%s5167 + $0xc2] sm:$0xff]
      %v5797 = vld [vmem:[%s5167 + $0xca] sm:$0xff]
      %v5798 = vld [vmem:[%s5167 + $0xda] sm:$0xff]
      %v5799 = vld [vmem:[%s5167 + $0xe2] sm:$0xff]
      %v5800 = vld [vmem:[%s5167 + $0xf2] sm:$0xff]
      %v5801 = vld [vmem:[%s5167 + $0xfa] sm:$0xff]
      %v5802 = vld [vmem:[%s5167 + $0x10a] sm:$0xff]
      %v5803 = vld [vmem:[%s5167 + $0x112] sm:$0xff]
      %v5804 = vld [vmem:[%s5167 + $0x122] sm:$0xff]
      %v5805 = vld [vmem:[%s5167 + $0x12a] sm:$0xff]
      %v5806 = vld [vmem:[%s5167 + $0x13a] sm:$0xff]
      %v5807 = vld [vmem:[%s5167 + $0x142] sm:$0xff]
      %v5808 = vld [vmem:[%s5167 + $0x152] sm:$0xff]
      %v5809 = vld [vmem:[%s5167 + $0x15a] sm:$0xff]
      %v5810 = vld [vmem:[%s5167 + $0x16a] sm:$0xff]
      %v5811 = vld [vmem:[%s5167 + $0x172] sm:$0xff]
      %v5812 = vpack.c.bf16 %v5781, %v5780
      %v5813 = vpack.c.bf16 %v5783, %v5782
      %v5814 = vpack.c.bf16 %v5785, %v5784
      %v5815 = vpack.c.bf16 %v5787, %v5786
      %v5816 = vpack.c.bf16 %v5789, %v5788
      %v5817 = vpack.c.bf16 %v5791, %v5790
      %v5818 = vpack.c.bf16 %v5793, %v5792
      %v5819 = vpack.c.bf16 %v5795, %v5794
      %v5820 = vpack.c.bf16 %v5797, %v5796
      %v5821 = vpack.c.bf16 %v5799, %v5798
      %v5822 = vpack.c.bf16 %v5801, %v5800
      %v5823 = vpack.c.bf16 %v5803, %v5802
      %v5824 = vpack.c.bf16 %v5805, %v5804
      %v5825 = vpack.c.bf16 %v5807, %v5806
      %v5826 = vpack.c.bf16 %v5809, %v5808
      %v5827 = vpack.c.bf16 %v5811, %v5810
      %s5828 = scalar_lea.vmem %s2, 512
      %v5829 = vld [vmem:[%s5828] sm:$0xf]
      %v5830 = vld [vmem:[%s5828 + $0x4] sm:$0xf]
      %v5831 = vld [vmem:[%s5828 + $0x8] sm:$0xf]
      %v5832 = vld [vmem:[%s5828 + $0xc] sm:$0xf]
      %v5833 = vld [vmem:[%s5828 + $0x10] sm:$0xf]
      %v5834 = vld [vmem:[%s5828 + $0x14] sm:$0xf]
      %v5835 = vld [vmem:[%s5828 + $0x18] sm:$0xf]
      %v5836 = vld [vmem:[%s5828 + $0x1c] sm:$0xf]
      %v5837 = vld [vmem:[%s5828 + $0x20] sm:$0xf]
      %v5838 = vld [vmem:[%s5828 + $0x24] sm:$0xf]
      %v5839 = vld [vmem:[%s5828 + $0x28] sm:$0xf]
      %v5840 = vld [vmem:[%s5828 + $0x2c] sm:$0xf]
      %v5841 = vld [vmem:[%s5828 + $0x30] sm:$0xf]
      %v5842 = vld [vmem:[%s5828 + $0x34] sm:$0xf]
      %v5843 = vld [vmem:[%s5828 + $0x38] sm:$0xf]
      %v5844 = vld [vmem:[%s5828 + $0x3c] sm:$0xf]
      %v5861 = vunpack.c.l.b16 %v5829
      %v5862 = vunpack.c.l.b16 %v5830
      %v5863 = vunpack.c.l.b16 %v5831
      %v5864 = vunpack.c.l.b16 %v5832
      %v5865 = vunpack.c.l.b16 %v5833
      %v5866 = vunpack.c.l.b16 %v5834
      %v5867 = vunpack.c.l.b16 %v5835
      %v5868 = vunpack.c.l.b16 %v5836
      %v5869 = vunpack.c.l.b16 %v5837
      %v5870 = vunpack.c.l.b16 %v5838
      %v5871 = vunpack.c.l.b16 %v5839
      %v5872 = vunpack.c.l.b16 %v5840
      %v5873 = vunpack.c.l.b16 %v5841
      %v5874 = vunpack.c.l.b16 %v5842
      %v5875 = vunpack.c.l.b16 %v5843
      %v5876 = vunpack.c.l.b16 %v5844
      %v5877 = vpack.c.b16 %v5862, %v5861
      %v5878 = vpack.c.b16 %v5864, %v5863
      %v5879 = vpack.c.b16 %v5866, %v5865
      %v5880 = vpack.c.b16 %v5868, %v5867
      %v5881 = vpack.c.b16 %v5870, %v5869
      %v5882 = vpack.c.b16 %v5872, %v5871
      %v5883 = vpack.c.b16 %v5874, %v5873
      %v5884 = vpack.c.b16 %v5876, %v5875
      %5893 = vmatprep.subr.bf16.mxu0 0
      %5894 = vmatpush1.bf16.msra.mxu0 %v5877
      %5895 = vmatprep.subr.bf16.mxu0 0
      %5896 = vmatpush1.bf16.msra.mxu0 %v5878
      %5897 = vmatprep.subr.bf16.mxu0 0
      %5898 = vmatpush1.bf16.msra.mxu0 %v5879
      %5899 = vmatprep.subr.bf16.mxu0 0
      %5900 = vmatpush1.bf16.msra.mxu0 %v5880
      %5901 = vmatprep.subr.bf16.mxu0 0
      %5902 = vmatpush1.bf16.msra.mxu0 %v5881
      %5903 = vmatprep.subr.bf16.mxu0 0
      %5904 = vmatpush1.bf16.msra.mxu0 %v5882
      %5905 = vmatprep.subr.bf16.mxu0 0
      %5906 = vmatpush1.bf16.msra.mxu0 %v5883
      %5907 = vmatprep.subr.bf16.mxu0 0
      %5908 = vmatpush1.bf16.msra.mxu0 %v5884
      %5909 = vmatprep.subr.bf16.mxu0 0
      %5910 = vmatpush1.bf16.msra.mxu0 0
      %5911 = vmatprep.subr.bf16.mxu0 0
      %5912 = vmatpush1.bf16.msra.mxu0 0
      %5913 = vmatprep.subr.bf16.mxu0 0
      %5914 = vmatpush1.bf16.msra.mxu0 0
      %5915 = vmatprep.subr.bf16.mxu0 0
      %5916 = vmatpush1.bf16.msra.mxu0 0
      %5917 = vmatprep.subr.bf16.mxu0 0
      %5918 = vmatpush1.bf16.msra.mxu0 0
      %5919 = vmatprep.subr.bf16.mxu0 0
      %5920 = vmatpush1.bf16.msra.mxu0 0
      %5921 = vmatprep.subr.bf16.mxu0 0
      %5922 = vmatpush1.bf16.msra.mxu0 0
      %5923 = vmatprep.subr.bf16.mxu0 0
      %5924 = vmatpush1.bf16.msra.mxu0 0
      %5925 = vmatprep.mubr.bf16.mxu0 0
      %5926 = vmatmul.mubr.bf16.gmra.mrb[0].mxu0 %v5812
      %v5927 = vpop.f32.mrb[0].mxu0
      %v5928 = vadd.f32 0.0, %v5927
      %v5929 = vpop.f32.mrb[0].mxu0
      %v5930 = vpop.f32.mrb[0].mxu0
      %v5931 = vadd.f32 0.0, %v5930
      %v5932 = vpop.f32.mrb[0].mxu0
      %5933 = vmatprep.mubr.bf16.mxu0 0
      %5934 = vmatmul.mubr.bf16.gmra.mrb[0].mxu0 %v5813
      %v5935 = vpop.f32.mrb[0].mxu0
      %v5936 = vadd.f32 0.0, %v5935
      %v5937 = vpop.f32.mrb[0].mxu0
      %v5938 = vpop.f32.mrb[0].mxu0
      %v5939 = vadd.f32 0.0, %v5938
      %v5940 = vpop.f32.mrb[0].mxu0
      %5941 = vmatprep.mubr.bf16.mxu0 0
      %5942 = vmatmul.mubr.bf16.gmra.mrb[0].mxu0 %v5814
      %v5943 = vpop.f32.mrb[0].mxu0
      %v5944 = vadd.f32 0.0, %v5943
      %v5945 = vpop.f32.mrb[0].mxu0
      %v5946 = vpop.f32.mrb[0].mxu0
      %v5947 = vadd.f32 0.0, %v5946
      %v5948 = vpop.f32.mrb[0].mxu0
      %5949 = vmatprep.mubr.bf16.mxu0 0
      %5950 = vmatmul.mubr.bf16.gmra.mrb[0].mxu0 %v5815
      %v5951 = vpop.f32.mrb[0].mxu0
      %v5952 = vadd.f32 0.0, %v5951
      %v5953 = vpop.f32.mrb[0].mxu0
      %v5954 = vpop.f32.mrb[0].mxu0
      %v5955 = vadd.f32 0.0, %v5954
      %v5956 = vpop.f32.mrb[0].mxu0
      %5957 = vmatprep.mubr.bf16.mxu0 0
      %5958 = vmatmul.mubr.bf16.gmra.mrb[0].mxu0 %v5816
      %v5959 = vpop.f32.mrb[0].mxu0
      %v5960 = vadd.f32 0.0, %v5959
      %v5961 = vpop.f32.mrb[0].mxu0
      %v5962 = vpop.f32.mrb[0].mxu0
      %v5963 = vadd.f32 0.0, %v5962
      %v5964 = vpop.f32.mrb[0].mxu0
      %5965 = vmatprep.mubr.bf16.mxu0 0
      %5966 = vmatmul.mubr.bf16.gmra.mrb[0].mxu0 %v5817
      %v5967 = vpop.f32.mrb[0].mxu0
      %v5968 = vadd.f32 0.0, %v5967
      %v5969 = vpop.f32.mrb[0].mxu0
      %v5970 = vpop.f32.mrb[0].mxu0
      %v5971 = vadd.f32 0.0, %v5970
      %v5972 = vpop.f32.mrb[0].mxu0
      %5973 = vmatprep.mubr.bf16.mxu0 0
      %5974 = vmatmul.mubr.bf16.gmra.mrb[0].mxu0 %v5818
      %v5975 = vpop.f32.mrb[0].mxu0
      %v5976 = vadd.f32 0.0, %v5975
      %v5977 = vpop.f32.mrb[0].mxu0
      %v5978 = vpop.f32.mrb[0].mxu0
      %v5979 = vadd.f32 0.0, %v5978
      %v5980 = vpop.f32.mrb[0].mxu0
      %5981 = vmatprep.mubr.bf16.mxu0 0
      %5982 = vmatmul.mubr.bf16.gmra.mrb[0].mxu0 %v5819
      %v5983 = vpop.f32.mrb[0].mxu0
      %v5984 = vadd.f32 0.0, %v5983
      %v5985 = vpop.f32.mrb[0].mxu0
      %v5986 = vpop.f32.mrb[0].mxu0
      %v5987 = vadd.f32 0.0, %v5986
      %v5988 = vpop.f32.mrb[0].mxu0
      %5989 = vmatprep.mubr.bf16.mxu0 0
      %5990 = vmatmul.mubr.bf16.gmra.mrb[0].mxu0 %v5820
      %v5991 = vpop.f32.mrb[0].mxu0
      %v5992 = vadd.f32 0.0, %v5991
      %v5993 = vpop.f32.mrb[0].mxu0
      %v5994 = vpop.f32.mrb[0].mxu0
      %v5995 = vadd.f32 0.0, %v5994
      %v5996 = vpop.f32.mrb[0].mxu0
      %5997 = vmatprep.mubr.bf16.mxu0 0
      %5998 = vmatmul.mubr.bf16.gmra.mrb[0].mxu0 %v5821
      %v5999 = vpop.f32.mrb[0].mxu0
      %v6000 = vadd.f32 0.0, %v5999
      %v6001 = vpop.f32.mrb[0].mxu0
      %v6002 = vpop.f32.mrb[0].mxu0
      %v6003 = vadd.f32 0.0, %v6002
      %v6004 = vpop.f32.mrb[0].mxu0
      %6005 = vmatprep.mubr.bf16.mxu0 0
      %6006 = vmatmul.mubr.bf16.gmra.mrb[0].mxu0 %v5822
      %v6007 = vpop.f32.mrb[0].mxu0
      %v6008 = vadd.f32 0.0, %v6007
      %v6009 = vpop.f32.mrb[0].mxu0
      %v6010 = vpop.f32.mrb[0].mxu0
      %v6011 = vadd.f32 0.0, %v6010
      %v6012 = vpop.f32.mrb[0].mxu0
      %6013 = vmatprep.mubr.bf16.mxu0 0
      %6014 = vmatmul.mubr.bf16.gmra.mrb[0].mxu0 %v5823
      %v6015 = vpop.f32.mrb[0].mxu0
      %v6016 = vadd.f32 0.0, %v6015
      %v6017 = vpop.f32.mrb[0].mxu0
      %v6018 = vpop.f32.mrb[0].mxu0
      %v6019 = vadd.f32 0.0, %v6018
      %v6020 = vpop.f32.mrb[0].mxu0
      %6021 = vmatprep.mubr.bf16.mxu0 0
      %6022 = vmatmul.mubr.bf16.gmra.mrb[0].mxu0 %v5824
      %v6023 = vpop.f32.mrb[0].mxu0
      %v6024 = vadd.f32 0.0, %v6023
      %v6025 = vpop.f32.mrb[0].mxu0
      %v6026 = vpop.f32.mrb[0].mxu0
      %v6027 = vadd.f32 0.0, %v6026
      %v6028 = vpop.f32.mrb[0].mxu0
      %6029 = vmatprep.mubr.bf16.mxu0 0
      %6030 = vmatmul.mubr.bf16.gmra.mrb[0].mxu0 %v5825
      %v6031 = vpop.f32.mrb[0].mxu0
      %v6032 = vadd.f32 0.0, %v6031
      %v6033 = vpop.f32.mrb[0].mxu0
      %v6034 = vpop.f32.mrb[0].mxu0
      %v6035 = vadd.f32 0.0, %v6034
      %v6036 = vpop.f32.mrb[0].mxu0
      %6037 = vmatprep.mubr.bf16.mxu0 0
      %6038 = vmatmul.mubr.bf16.gmra.mrb[0].mxu0 %v5826
      %v6039 = vpop.f32.mrb[0].mxu0
      %v6040 = vadd.f32 0.0, %v6039
      %v6041 = vpop.f32.mrb[0].mxu0
      %v6042 = vpop.f32.mrb[0].mxu0
      %v6043 = vadd.f32 0.0, %v6042
      %v6044 = vpop.f32.mrb[0].mxu0
      %6045 = vmatprep.mubr.bf16.mxu0 0
      %6046 = vmatmul.mubr.bf16.gmra.mrb[0].mxu0 %v5827
      %v6047 = vpop.f32.mrb[0].mxu0
      %v6048 = vadd.f32 0.0, %v6047
      %v6049 = vpop.f32.mrb[0].mxu0
      %v6050 = vpop.f32.mrb[0].mxu0
      %v6051 = vadd.f32 0.0, %v6050
      %v6052 = vpop.f32.mrb[0].mxu0
      %6053 = vdwg.mxu0
      %v6054 = vadd.f32 %v5748, %v5928
      %v6055 = vadd.f32 %v5749, %v5931
      %v6056 = vadd.f32 %v5750, %v5936
      %v6057 = vadd.f32 %v5751, %v5939
      %v6058 = vadd.f32 %v5752, %v5944
      %v6059 = vadd.f32 %v5753, %v5947
      %v6060 = vadd.f32 %v5754, %v5952
      %v6061 = vadd.f32 %v5755, %v5955
      %v6062 = vadd.f32 %v5756, %v5960
      %v6063 = vadd.f32 %v5757, %v5963
      %v6064 = vadd.f32 %v5758, %v5968
      %v6065 = vadd.f32 %v5759, %v5971
      %v6066 = vadd.f32 %v5760, %v5976
      %v6067 = vadd.f32 %v5761, %v5979
      %v6068 = vadd.f32 %v5762, %v5984
      %v6069 = vadd.f32 %v5763, %v5987
      %v6070 = vadd.f32 %v5764, %v5992
      %v6071 = vadd.f32 %v5765, %v5995
      %v6072 = vadd.f32 %v5766, %v6000
      %v6073 = vadd.f32 %v5767, %v6003
      %v6074 = vadd.f32 %v5768, %v6008
      %v6075 = vadd.f32 %v5769, %v6011
      %v6076 = vadd.f32 %v5770, %v6016
      %v6077 = vadd.f32 %v5771, %v6019
      %v6078 = vadd.f32 %v5772, %v6024
      %v6079 = vadd.f32 %v5773, %v6027
      %v6080 = vadd.f32 %v5774, %v6032
      %v6081 = vadd.f32 %v5775, %v6035
      %v6082 = vadd.f32 %v5776, %v6040
      %v6083 = vadd.f32 %v5777, %v6043
      %v6084 = vadd.f32 %v5778, %v6048
      %v6085 = vadd.f32 %v5779, %v6051
      %v6086 = vadd.f32 %v6054, %v388
      %v6087 = vadd.f32 %v6055, %v389
      %v6088 = vadd.f32 %v6056, %v390
      %v6089 = vadd.f32 %v6057, %v391
      %v6090 = vadd.f32 %v6058, %v392
      %v6091 = vadd.f32 %v6059, %v393
      %v6092 = vadd.f32 %v6060, %v394
      %v6093 = vadd.f32 %v6061, %v395
      %v6094 = vadd.f32 %v6062, %v396
      %v6095 = vadd.f32 %v6063, %v397
      %v6096 = vadd.f32 %v6064, %v398
      %v6097 = vadd.f32 %v6065, %v399
      %v6098 = vadd.f32 %v6066, %v400
      %v6099 = vadd.f32 %v6067, %v401
      %v6100 = vadd.f32 %v6068, %v402
      %v6101 = vadd.f32 %v6069, %v403
      %v6102 = vadd.f32 %v6070, %v404
      %v6103 = vadd.f32 %v6071, %v405
      %v6104 = vadd.f32 %v6072, %v406
      %v6105 = vadd.f32 %v6073, %v407
      %v6106 = vadd.f32 %v6074, %v408
      %v6107 = vadd.f32 %v6075, %v409
      %v6108 = vadd.f32 %v6076, %v410
      %v6109 = vadd.f32 %v6077, %v411
      %v6110 = vadd.f32 %v6078, %v412
      %v6111 = vadd.f32 %v6079, %v413
      %v6112 = vadd.f32 %v6080, %v414
      %v6113 = vadd.f32 %v6081, %v415
      %v6114 = vadd.f32 %v6082, %v416
      %v6115 = vadd.f32 %v6083, %v417
      %v6116 = vadd.f32 %v6084, %v418
      %v6117 = vadd.f32 %v6085, %v419
      %6118 = vst [vmem:[%s278] sm:$0xff] %v6086
      %6119 = vst [vmem:[%s278 + $0x8] sm:$0xff] %v6087
      %6120 = vst [vmem:[%s278 + $0x10] sm:$0xff] %v6088
      %6121 = vst [vmem:[%s278 + $0x18] sm:$0xff] %v6089
      %6122 = vst [vmem:[%s278 + $0x20] sm:$0xff] %v6090
      %6123 = vst [vmem:[%s278 + $0x28] sm:$0xff] %v6091
      %6124 = vst [vmem:[%s278 + $0x30] sm:$0xff] %v6092
      %6125 = vst [vmem:[%s278 + $0x38] sm:$0xff] %v6093
      %6126 = vst [vmem:[%s278 + $0x40] sm:$0xff] %v6094
      %6127 = vst [vmem:[%s278 + $0x48] sm:$0xff] %v6095
      %6128 = vst [vmem:[%s278 + $0x50] sm:$0xff] %v6096
      %6129 = vst [vmem:[%s278 + $0x58] sm:$0xff] %v6097
      %6130 = vst [vmem:[%s278 + $0x60] sm:$0xff] %v6098
      %6131 = vst [vmem:[%s278 + $0x68] sm:$0xff] %v6099
      %6132 = vst [vmem:[%s278 + $0x70] sm:$0xff] %v6100
      %6133 = vst [vmem:[%s278 + $0x78] sm:$0xff] %v6101
      %6134 = vst [vmem:[%s278 + $0x80] sm:$0xff] %v6102
      %6135 = vst [vmem:[%s278 + $0x88] sm:$0xff] %v6103
      %6136 = vst [vmem:[%s278 + $0x90] sm:$0xff] %v6104
      %6137 = vst [vmem:[%s278 + $0x98] sm:$0xff] %v6105
      %6138 = vst [vmem:[%s278 + $0xa0] sm:$0xff] %v6106
      %6139 = vst [vmem:[%s278 + $0xa8] sm:$0xff] %v6107
      %6140 = vst [vmem:[%s278 + $0xb0] sm:$0xff] %v6108
      %6141 = vst [vmem:[%s278 + $0xb8] sm:$0xff] %v6109
      %6142 = vst [vmem:[%s278 + $0xc0] sm:$0xff] %v6110
      %6143 = vst [vmem:[%s278 + $0xc8] sm:$0xff] %v6111
      %6144 = vst [vmem:[%s278 + $0xd0] sm:$0xff] %v6112
      %6145 = vst [vmem:[%s278 + $0xd8] sm:$0xff] %v6113
      %6146 = vst [vmem:[%s278 + $0xe0] sm:$0xff] %v6114
      %6147 = vst [vmem:[%s278 + $0xe8] sm:$0xff] %v6115
      %6148 = vst [vmem:[%s278 + $0xf0] sm:$0xff] %v6116
      %6149 = vst [vmem:[%s278 + $0xf8] sm:$0xff] %v6117
      %p6150 = scmp.lt.s32.totalorder %s18, 1
      %s6151 = scalar_select %p6150, %s18, 1
      %s6152 = smul.addr %s6151, 32
      %s6153 = smul.addr %s6152, 8
      %s6154 = scalar_lea.vmem %s7, %s6153
      // Predicated region
      $region49: #{preact_block_forward.1} parent=47 // pred_check
        %p6155 = pneg %p188
      $region50: #{preact_block_forward.1} parent=47 // pred_check_branch
        %6157 = sbr.rel (%p6155) target = $region52
      $region51: #{preact_block_forward.1} parent=47 // pred_region
        _
      $region52: #{preact_block_forward.1} parent=47 // pred_fallthru
        _
    $region48: #{preact_block_forward.1} parent=5 // pred_fallthru
      _
    %p6158 = scmp.le.s32.totalorder 2, %s13
    // Predicated region
    $region53: #{preact_block_forward.1} parent=5 // pred_check
      %p6159 = pneg %p6158
    $region54: #{preact_block_forward.1} parent=5 // pred_check_branch
      %6161 = sbr.rel (%p6159) target = $region56
    $region55: #{preact_block_forward.1} parent=5 // pred_region
      %s6162 = ssub.s32 %s13, 2
      // Predicated region
      $region57: #{preact_block_forward.1} parent=55 // pred_check
        %p6163 = pneg %p194
      $region58: #{preact_block_forward.1} parent=55 // pred_check_branch
        %6165 = sbr.rel (%p6163) target = $region60
      $region59: #{preact_block_forward.1} parent=55 // pred_region
        %p6166 = scmp.lt.s32.totalorder %s19, 1
        %s6167 = scalar_select %p6166, %s19, 1
        %s6168 = smul.addr %s6167, 32
        %s6169 = smul.addr %s6168, 8
        %s6170 = scalar_lea.vmem %s7, %s6169
      $region60: #{preact_block_forward.1} parent=55 // pred_fallthru
        _
    $region56: #{preact_block_forward.1} parent=5 // pred_fallthru
      _
  $region6: #{preact_block_forward.1} parent=0 // loop_footer
    %s17 = sadd.s32 1, %s13
  $region7: #{preact_block_forward.1} parent=0 // loop_footer_branch
    %12 = sbr.rel target = $region3
  $region8: #{preact_block_forward.1} parent=0 // loop_exit
    _

</llo_original>
